<compile_context>
chip_gen: v7x
topology: tpu7x:2x2x1
jax: 0.10.0
libtpu: 0.0.40
codegen_flags: <defaults>
</compile_context>

<pallas_src>
import functools

import numpy as np

import jax
import jax.numpy as jnp
from jax.experimental import pallas as pl
from jax.experimental.pallas import tpu as pltpu


# ---------------------------------------------------------------------------
# Static per-image geometry (batch independent)
# ---------------------------------------------------------------------------
K1 = 64            # conv1 im2col features (5*5*2 = 50, zero-padded to 64)
CP = 128           # channel dim padded to one full lane tile
NH = 256           # fc1 hidden width
NCLS = 10          # number of classes
GRID1 = 18         # conv2 input grid side (16x16 conv1 output + 1-pixel ring)
GRID2 = 10         # conv3 input grid side ( 8x8 pooled output + 1-pixel ring)
CHUNK = 128        # row chunk for the shifted-tap accumulation loops


def _ceil8(x):
    return (x + 7) // 8 * 8


# Row counts of the per-image activation rasters.  Static invariants:
#   * a1 rows [0, 324) hold the zero-ringed conv1 output on the 18x18 grid; rows
#     above are zero slack so every conv2 tap read  r + di*18 + dj  (<= 325)
#     stays in-bounds of A1_ROWS.
#   * act2 row r = oi*18 + oj holds conv2 output pixel (oi, oj); only rows
#     selected by the 0/0.25 pool matrix (interior pixels) are meaningful.
#   * a2 row (pi+1)*10 + (pj+1) holds pooled pixel (pi, pj); ring + slack rows
#     are written as exact zeros by the pool matmul, so conv3 tap reads of them
#     (<= row 101) are in-bounds, finite and correct.
A1_ROWS = _ceil8(GRID1 * GRID1 + 2 * GRID1 + 2)          # 368
ACT2_ROWS = _ceil8(15 * GRID1 + 15 + 1)                  # 288
ACT3_ROWS = _ceil8(7 * GRID2 + 7 + 1)                    # 80
A2_ROWS = _ceil8(ACT3_ROWS + 2 * GRID2 + 2)              # 104


# ---------------------------------------------------------------------------
# The fused Pallas kernel: one image per grid step.
# conv1 -> conv2 -> pool -> conv3 -> pool -> flatten -> fc1 -> fc2 (all + ReLU)
# ---------------------------------------------------------------------------
def _fused_ann_kernel(cols1_ref, w1_ref, w2_ref, p2_ref, w3_ref, p3_ref,
                      wfc1_ref, wfc2_ref, o_ref, a1_ref, act2_ref, a2_ref):
    f32, bf16 = jnp.float32, jnp.bfloat16

    # --- conv1 (im2col GEMM) + ReLU, chunked; slack rows come out as 0 -------
    for c0 in range(0, A1_ROWS, CHUNK):
        m = min(CHUNK, A1_ROWS - c0)
        acc = jnp.dot(cols1_ref[pl.ds(c0, m), :], w1_ref[...],
                      preferred_element_type=f32)
        a1_ref[pl.ds(c0, m), :] = jnp.maximum(acc, 0.0)

    # --- conv2 3x3/s1/p1: 9 shifted-row GEMMs, accumulated per row chunk -----
    for c0 in range(0, ACT2_ROWS, CHUNK):
        m = min(CHUNK, ACT2_ROWS - c0)
        acc = None
        for di in range(3):
            for dj in range(3):
                lhs = a1_ref[pl.ds(c0 + di * GRID1 + dj, m), :16].astype(bf16)
                part = jnp.dot(lhs, w2_ref[di * 3 + dj],
                               preferred_element_type=f32)
                acc = part if acc is None else acc + part
        act2_ref[pl.ds(c0, m), :] = jnp.maximum(acc, 0.0).astype(bf16)

    # --- AvgPool2d(2,2) + scatter into the zero-ringed 10x10 grid (bf16 GEMM) -
    a2_ref[...] = jnp.dot(p2_ref[...], act2_ref[...], preferred_element_type=f32)

    # --- conv3 3x3/s1/p1: 9 shifted-row GEMMs, single 80-row chunk -----------
    acc = None
    for di in range(3):
        for dj in range(3):
            lhs = a2_ref[pl.ds(di * GRID2 + dj, ACT3_ROWS), :16].astype(bf16)
            part = jnp.dot(lhs, w3_ref[di * 3 + dj], preferred_element_type=f32)
            acc = part if acc is None else acc + part
    act3 = jnp.maximum(acc, 0.0).astype(bf16)                      # (80, 128)

    # --- AvgPool2d(2,2) + spatial (y*4+x) ordering for the NCHW flatten ------
    pooled = jnp.dot(p3_ref[...], act3, preferred_element_type=f32)  # (16, 128)

    # --- fc1: contract 16 spatial positions x 8 channels, then ReLU ----------
    h = None
    for s in range(16):
        blk = pooled[s:s + 1, :8].astype(bf16)                     # (1, 8)
        part = jnp.dot(blk, wfc1_ref[s], preferred_element_type=f32)
        h = part if h is None else h + part
    h = jnp.maximum(h, 0.0).astype(bf16)                           # (1, 256)

    # --- fc2 + final ReLU (the reference Sequential really ends with ReLU) ---
    out = jnp.dot(h, wfc2_ref[...], preferred_element_type=f32)    # (1, 128)
    o_ref[...] = jnp.broadcast_to(jnp.maximum(out, 0.0), o_ref.shape)


def _vmem_limit_bytes():
    in_bytes = (A1_ROWS * K1 * 2 + K1 * CP * 2 + 2 * 9 * 16 * CP * 2
                + A2_ROWS * ACT2_ROWS * 2 + 16 * ACT3_ROWS * 2
                + 16 * 8 * NH * 2 + NH * CP * 2)
    scratch_bytes = A1_ROWS * CP * 4 + ACT2_ROWS * CP * 2 + A2_ROWS * CP * 4
    out_bytes = 8 * CP * 4
    total = 2 * (in_bytes + out_bytes) + scratch_bytes   # x2: pipeline buffers
    # Generous headroom for compiler temporaries; still far below the 64 MiB
    # (v7x) / 128 MiB (v5e/v6e) physical VMEM since the per-step set is ~1 MiB.
    return int(min(96 * 2 ** 20, max(16 * 2 ** 20, 4 * total)))


@functools.lru_cache(maxsize=None)
def _build_fused_call(batch):
    return pl.pallas_call(
        _fused_ann_kernel,
        out_shape=jax.ShapeDtypeStruct((batch * 8, CP), jnp.float32),
        grid=(batch,),
        in_specs=[
            pl.BlockSpec((A1_ROWS, K1), lambda i: (i, 0)),         # conv1 patches
            pl.BlockSpec((K1, CP), lambda i: (0, 0)),              # w1
            pl.BlockSpec((9, 16, CP), lambda i: (0, 0, 0)),        # w2 taps
            pl.BlockSpec((A2_ROWS, ACT2_ROWS), lambda i: (0, 0)),  # pool2 matrix
            pl.BlockSpec((9, 16, CP), lambda i: (0, 0, 0)),        # w3 taps
            pl.BlockSpec((16, ACT3_ROWS), lambda i: (0, 0)),       # pool3 matrix
            pl.BlockSpec((16, 8, NH), lambda i: (0, 0, 0)),        # fc1 per spatial
            pl.BlockSpec((NH, CP), lambda i: (0, 0)),              # fc2
        ],
        out_specs=pl.BlockSpec((8, CP), lambda i: (i, 0)),
        scratch_shapes=[pltpu.VMEM((A1_ROWS, CP), jnp.float32),    # conv2 input grid
                        pltpu.VMEM((ACT2_ROWS, CP), jnp.bfloat16),  # conv2 output
                        pltpu.VMEM((A2_ROWS, CP), jnp.float32)],    # conv3 input grid
        compiler_params=pltpu.CompilerParams(
            dimension_semantics=("parallel",),
            vmem_limit_bytes=_vmem_limit_bytes()),
    )


# ---------------------------------------------------------------------------
# Glue: conv1 im2col on the raw frame (cheap, runs once before the kernel)
# ---------------------------------------------------------------------------
def _conv1_patches(frame_nchw):
    """(B, 2, 34, 34) -> (B*A1_ROWS, K1) bf16 patches on the padded 18x18 grid."""
    batch = frame_nchw.shape[0]
    x = jnp.transpose(frame_nchw.astype(jnp.float32), (0, 2, 3, 1))   # NHWC
    x = jnp.pad(x, ((0, 0), (1, 1), (1, 1), (0, 0)))                  # pad=1 -> 36x36
    taps = [x[:, ki:ki + 31:2, kj:kj + 31:2, :]                       # stride 2
            for ki in range(5) for kj in range(5)]
    cols = jnp.stack(taps, axis=3).reshape(batch, 16, 16, 50)         # (ki,kj,cin)
    cols = jnp.pad(cols, ((0, 0), (1, 1), (1, 1), (0, 0)))            # 18x18 grid
    cols = cols.reshape(batch, GRID1 * GRID1, 50)
    cols = jnp.pad(cols, ((0, 0), (0, A1_ROWS - GRID1 * GRID1), (0, K1 - 50)))
    return cols.reshape(batch * A1_ROWS, K1).astype(jnp.bfloat16)


# ---------------------------------------------------------------------------
# One-time parameter packing into kernel-ready layouts (batch independent)
# ---------------------------------------------------------------------------
def _pool_matrices():
    # P2: pooled 8x8 result scattered into the zero-ringed 10x10 grid, from the
    # conv2-output raster (row = oi*18 + oj).  Values are exactly 0 / 0.25.
    p2 = np.zeros((A2_ROWS, ACT2_ROWS), np.float32)
    for pi in range(8):
        for pj in range(8):
            row = (pi + 1) * GRID2 + (pj + 1)
            for u in range(2):
                for v in range(2):
                    p2[row, (2 * pi + u) * GRID1 + (2 * pj + v)] = 0.25
    # P3: 16 pooled spatial positions (y*4+x) from the conv3-output raster.
    p3 = np.zeros((16, ACT3_ROWS), np.float32)
    for y in range(4):
        for x in range(4):
            for u in range(2):
                for v in range(2):
                    p3[y * 4 + x, (2 * y + u) * GRID2 + (2 * x + v)] = 0.25
    return (jnp.asarray(p2, dtype=jnp.bfloat16),
            jnp.asarray(p3, dtype=jnp.bfloat16))


def pack_params(params):
    """PyTorch-layout f32 weights -> padding-trimmed, pre-transposed bf16."""
    bf16 = jnp.bfloat16
    # conv1 (Cout,Cin,5,5) -> (K1, CP); feature order (ki, kj, cin).
    w1 = jnp.transpose(params["conv1"], (2, 3, 1, 0)).reshape(50, 16)
    w1 = jnp.pad(w1, ((0, K1 - 50), (0, CP - 16))).astype(bf16)
    # conv2 (16,16,3,3) -> (9, 16, CP) per-tap (cin, cout); cin padding trimmed.
    w2 = jnp.transpose(params["conv2"], (2, 3, 1, 0)).reshape(9, 16, 16)
    w2 = jnp.pad(w2, ((0, 0), (0, 0), (0, CP - 16))).astype(bf16)
    # conv3 (8,16,3,3) -> (9, 16, CP).
    w3 = jnp.transpose(params["conv3"], (2, 3, 1, 0)).reshape(9, 16, 8)
    w3 = jnp.pad(w3, ((0, 0), (0, 0), (0, CP - 8))).astype(bf16)
    # fc1 (256, 128 = c*16 + s) -> (16, 8, 256) indexed [s, c, n] (NCHW flatten).
    wfc1 = jnp.transpose(params["fc1"].reshape(NH, 8, 16), (2, 1, 0)).astype(bf16)
    # fc2 (10, 256) -> (256, CP).
    wfc2 = jnp.pad(jnp.transpose(params["fc2"]),
                   ((0, 0), (0, CP - NCLS))).astype(bf16)
    p2, p3 = _pool_matrices()
    return dict(w1=w1, w2=w2, w3=w3, wfc1=wfc1, wfc2=wfc2, p2=p2, p3=p3)


# ---------------------------------------------------------------------------
# Deterministic init (matches shapes / xavier_uniform_ of ProxyAnnSnn.__init__)
# ---------------------------------------------------------------------------
def _xavier_uniform(key, shape, fan_in, fan_out):
    bound = (6.0 / (fan_in + fan_out)) ** 0.5
    return jax.random.uniform(key, shape, jnp.float32, -bound, bound)


def init_params(key):
    k = jax.random.split(key, 5)
    return {
        "conv1": _xavier_uniform(k[0], (16, 2, 5, 5), 2 * 25, 16 * 25),
        "conv2": _xavier_uniform(k[1], (16, 16, 3, 3), 16 * 9, 16 * 9),
        "conv3": _xavier_uniform(k[2], (8, 16, 3, 3), 16 * 9, 8 * 9),
        "fc1": _xavier_uniform(k[3], (NH, 4 * 4 * 8), 4 * 4 * 8, NH),
        "fc2": _xavier_uniform(k[4], (NCLS, NH), NH, NCLS),
    }


# ---------------------------------------------------------------------------
# Forward pass (the ANN branch of ProxyAnnSnn.forward)
# ---------------------------------------------------------------------------
def proxy_ann_forward(frame_nchw, packed):
    batch = frame_nchw.shape[0]
    cols1 = _conv1_patches(frame_nchw)
    out = _build_fused_call(batch)(
        cols1, packed["w1"], packed["w2"], packed["p2"], packed["w3"],
        packed["p3"], packed["wfc1"], packed["wfc2"])
    # TODO(synk): the SNN branch (xytp -> Event2d stream -> sinabs/DynapCNN
    # event-driven simulator -> spike counts) is an external event simulator
    # with no Pallas equivalent; only the ANN output is produced here.
    return out.reshape(batch, 8, CP)[:, 0, :NCLS]


# Pure-JAX f32 reference (mirrors the PyTorch Sequential) for a parity check.
def reference_forward(frame_nchw, params):
    dn = ("NCHW", "OIHW", "NCHW")
    x = frame_nchw.astype(jnp.float32)
    x = jnp.maximum(jax.lax.conv_general_dilated(
        x, params["conv1"], (2, 2), ((1, 1), (1, 1)), dimension_numbers=dn), 0.0)
    x = jnp.maximum(jax.lax.conv_general_dilated(
        x, params["conv2"], (1, 1), ((1, 1), (1, 1)), dimension_numbers=dn), 0.0)
    b, c, h, w = x.shape
    x = x.reshape(b, c, h // 2, 2, w // 2, 2).mean(axis=(3, 5))
    x = jnp.maximum(jax.lax.conv_general_dilated(
        x, params["conv3"], (1, 1), ((1, 1), (1, 1)), dimension_numbers=dn), 0.0)
    b, c, h, w = x.shape
    x = x.reshape(b, c, h // 2, 2, w // 2, 2).mean(axis=(3, 5))
    x = x.reshape(b, -1)
    x = jnp.maximum(x @ params["fc1"].T, 0.0)
    x = jnp.maximum(x @ params["fc2"].T, 0.0)
    return x


if __name__ == "__main__":
    key = jax.random.PRNGKey(0)
    pkey, dkey = jax.random.split(key)
    B = 2

    params = init_params(pkey)        # PyTorch-layout f32 (as in the module)
    packed = pack_params(params)      # one-time, batch-independent relayout

    # NMNIST-style frame, NCHW: batch=2, 2 polarity channels, 34x34 pixels.
    frame = jax.random.uniform(dkey, (B, 2, 34, 34), jnp.float32)

    fwd = jax.jit(proxy_ann_forward)
    out = jax.block_until_ready(fwd(frame, packed))

    assert out.shape == (B, NCLS)
    assert bool(jnp.all(out >= 0.0))          # final ReLU of the Sequential
    ref = reference_forward(frame, params)    # numerical parity (bf16 tolerance)
    err = float(jnp.max(jnp.abs(out - ref)))
    assert err < 5e-2, f"parity check failed: max|diff|={err}"
    print("KERNEL_OK")
</pallas_src>

<mosaic_0001>
module attributes {stable_mosaic.version = 11 : i64} {
  func.func @_fused_ann_kernel(%arg0: i32, %arg1: memref<368x64xbf16, #tpu.memory_space<vmem>>, %arg2: memref<64x128xbf16, #tpu.memory_space<vmem>>, %arg3: memref<9x16x128xbf16, #tpu.memory_space<vmem>>, %arg4: memref<104x288xbf16, #tpu.memory_space<vmem>>, %arg5: memref<9x16x128xbf16, #tpu.memory_space<vmem>>, %arg6: memref<16x80xbf16, #tpu.memory_space<vmem>>, %arg7: memref<16x8x256xbf16, #tpu.memory_space<vmem>>, %arg8: memref<256x128xbf16, #tpu.memory_space<vmem>>, %arg9: memref<8x128xf32, #tpu.memory_space<vmem>>, %arg10: memref<368x128xf32, #tpu.memory_space<vmem>>, %arg11: memref<288x128xbf16, #tpu.memory_space<vmem>>, %arg12: memref<104x128xf32, #tpu.memory_space<vmem>>) attributes {dimension_semantics = [#tpu.dimension_semantics<parallel>], iteration_bounds = array<i64: 2>, scalar_prefetch = 0 : i64, scratch_operands = 3 : i64, tpu.core_type = #tpu.core_type<tc>, window_params = [{transform_indices = @transform_0, window_bounds = array<i64: 368, 64>}, {pipeline_mode = #tpu.pipeline_mode<synchronous>, transform_indices = @transform_1, window_bounds = array<i64: 64, 128>}, {pipeline_mode = #tpu.pipeline_mode<synchronous>, transform_indices = @transform_2, window_bounds = array<i64: 9, 16, 128>}, {pipeline_mode = #tpu.pipeline_mode<synchronous>, transform_indices = @transform_3, window_bounds = array<i64: 104, 288>}, {pipeline_mode = #tpu.pipeline_mode<synchronous>, transform_indices = @transform_4, window_bounds = array<i64: 9, 16, 128>}, {pipeline_mode = #tpu.pipeline_mode<synchronous>, transform_indices = @transform_5, window_bounds = array<i64: 16, 80>}, {pipeline_mode = #tpu.pipeline_mode<synchronous>, transform_indices = @transform_6, window_bounds = array<i64: 16, 8, 256>}, {pipeline_mode = #tpu.pipeline_mode<synchronous>, transform_indices = @transform_7, window_bounds = array<i64: 256, 128>}, {transform_indices = @transform_8, window_bounds = array<i64: 8, 128>}]} {
    %c0 = arith.constant 0 : index
    %c0_0 = arith.constant 0 : index
    %0 = vector.load %arg1[%c0, %c0_0] : memref<368x64xbf16, #tpu.memory_space<vmem>>, vector<128x64xbf16>
    %c0_1 = arith.constant 0 : index
    %c0_2 = arith.constant 0 : index
    %1 = vector.load %arg2[%c0_1, %c0_2] : memref<64x128xbf16, #tpu.memory_space<vmem>>, vector<64x128xbf16>
    %cst = arith.constant dense<0.000000e+00> : vector<128x128xf32>
    %2 = tpu.matmul %0, %1, %cst {dimension_numbers = #tpu.dot_dimension_numbers<[1], [0], [0], [1], [0, 0, 1, 1], [], []>} : vector<128x64xbf16>, vector<64x128xbf16>, vector<128x128xf32> -> vector<128x128xf32>
    %cst_3 = arith.constant 0.000000e+00 : f32
    %3 = vector.broadcast %cst_3 : f32 to vector<128x128xf32>
    %4 = arith.maximumf %2, %3 : vector<128x128xf32>
    %c0_4 = arith.constant 0 : index
    %c0_5 = arith.constant 0 : index
    %5 = vector.load %arg10[%c0_4, %c0_5] : memref<368x128xf32, #tpu.memory_space<vmem>>, vector<128x128xf32>
    tpu.vector_store %arg10[%c0_4, %c0_5], %4 {strides = array<i32>} : memref<368x128xf32, #tpu.memory_space<vmem>>, vector<128x128xf32>,
    %c128 = arith.constant 128 : index
    %c0_6 = arith.constant 0 : index
    %6 = vector.load %arg1[%c128, %c0_6] : memref<368x64xbf16, #tpu.memory_space<vmem>>, vector<128x64xbf16>
    %c0_7 = arith.constant 0 : index
    %c0_8 = arith.constant 0 : index
    %7 = vector.load %arg2[%c0_7, %c0_8] : memref<64x128xbf16, #tpu.memory_space<vmem>>, vector<64x128xbf16>
    %cst_9 = arith.constant dense<0.000000e+00> : vector<128x128xf32>
    %8 = tpu.matmul %6, %7, %cst_9 {dimension_numbers = #tpu.dot_dimension_numbers<[1], [0], [0], [1], [0, 0, 1, 1], [], []>} : vector<128x64xbf16>, vector<64x128xbf16>, vector<128x128xf32> -> vector<128x128xf32>
    %cst_10 = arith.constant 0.000000e+00 : f32
    %9 = vector.broadcast %cst_10 : f32 to vector<128x128xf32>
    %10 = arith.maximumf %8, %9 : vector<128x128xf32>
    %c128_11 = arith.constant 128 : index
    %c0_12 = arith.constant 0 : index
    %11 = vector.load %arg10[%c128_11, %c0_12] : memref<368x128xf32, #tpu.memory_space<vmem>>, vector<128x128xf32>
    tpu.vector_store %arg10[%c128_11, %c0_12], %10 {strides = array<i32>} : memref<368x128xf32, #tpu.memory_space<vmem>>, vector<128x128xf32>,
    %c256 = arith.constant 256 : index
    %c0_13 = arith.constant 0 : index
    %12 = vector.load %arg1[%c256, %c0_13] : memref<368x64xbf16, #tpu.memory_space<vmem>>, vector<112x64xbf16>
    %c0_14 = arith.constant 0 : index
    %c0_15 = arith.constant 0 : index
    %13 = vector.load %arg2[%c0_14, %c0_15] : memref<64x128xbf16, #tpu.memory_space<vmem>>, vector<64x128xbf16>
    %cst_16 = arith.constant dense<0.000000e+00> : vector<112x128xf32>
    %14 = tpu.matmul %12, %13, %cst_16 {dimension_numbers = #tpu.dot_dimension_numbers<[1], [0], [0], [1], [0, 0, 1, 1], [], []>} : vector<112x64xbf16>, vector<64x128xbf16>, vector<112x128xf32> -> vector<112x128xf32>
    %cst_17 = arith.constant 0.000000e+00 : f32
    %15 = vector.broadcast %cst_17 : f32 to vector<112x128xf32>
    %16 = arith.maximumf %14, %15 : vector<112x128xf32>
    %c256_18 = arith.constant 256 : index
    %c0_19 = arith.constant 0 : index
    %17 = vector.load %arg10[%c256_18, %c0_19] : memref<368x128xf32, #tpu.memory_space<vmem>>, vector<112x128xf32>
    tpu.vector_store %arg10[%c256_18, %c0_19], %16 {strides = array<i32>} : memref<368x128xf32, #tpu.memory_space<vmem>>, vector<112x128xf32>,
    %c0_20 = arith.constant 0 : index
    %c0_21 = arith.constant 0 : index
    %18 = vector.load %arg10[%c0_20, %c0_21] : memref<368x128xf32, #tpu.memory_space<vmem>>, vector<128x16xf32>
    %19 = arith.truncf %18 : vector<128x16xf32> to vector<128x16xbf16>
    %c0_22 = arith.constant 0 : index
    %c0_23 = arith.constant 0 : index
    %c0_24 = arith.constant 0 : index
    %20 = vector.load %arg3[%c0_22, %c0_23, %c0_24] : memref<9x16x128xbf16, #tpu.memory_space<vmem>>, vector<1x16x128xbf16>
    %21 = vector.shape_cast %20 : vector<1x16x128xbf16> to vector<16x128xbf16>
    %cst_25 = arith.constant dense<0.000000e+00> : vector<128x128xf32>
    %22 = tpu.matmul %19, %21, %cst_25 {dimension_numbers = #tpu.dot_dimension_numbers<[1], [0], [0], [1], [0, 0, 1, 1], [], []>} : vector<128x16xbf16>, vector<16x128xbf16>, vector<128x128xf32> -> vector<128x128xf32>
    %c1 = arith.constant 1 : index
    %c0_26 = arith.constant 0 : index
    %23 = vector.load %arg10[%c1, %c0_26] : memref<368x128xf32, #tpu.memory_space<vmem>>, vector<128x16xf32>
    %24 = arith.truncf %23 : vector<128x16xf32> to vector<128x16xbf16>
    %c1_27 = arith.constant 1 : index
    %c0_28 = arith.constant 0 : index
    %c0_29 = arith.constant 0 : index
    %25 = vector.load %arg3[%c1_27, %c0_28, %c0_29] : memref<9x16x128xbf16, #tpu.memory_space<vmem>>, vector<1x16x128xbf16>
    %26 = vector.shape_cast %25 : vector<1x16x128xbf16> to vector<16x128xbf16>
    %cst_30 = arith.constant dense<0.000000e+00> : vector<128x128xf32>
    %27 = tpu.matmul %24, %26, %cst_30 {dimension_numbers = #tpu.dot_dimension_numbers<[1], [0], [0], [1], [0, 0, 1, 1], [], []>} : vector<128x16xbf16>, vector<16x128xbf16>, vector<128x128xf32> -> vector<128x128xf32>
    %28 = arith.addf %22, %27 : vector<128x128xf32>
    %c2 = arith.constant 2 : index
    %c0_31 = arith.constant 0 : index
    %29 = vector.load %arg10[%c2, %c0_31] : memref<368x128xf32, #tpu.memory_space<vmem>>, vector<128x16xf32>
    %30 = arith.truncf %29 : vector<128x16xf32> to vector<128x16xbf16>
    %c2_32 = arith.constant 2 : index
    %c0_33 = arith.constant 0 : index
    %c0_34 = arith.constant 0 : index
    %31 = vector.load %arg3[%c2_32, %c0_33, %c0_34] : memref<9x16x128xbf16, #tpu.memory_space<vmem>>, vector<1x16x128xbf16>
    %32 = vector.shape_cast %31 : vector<1x16x128xbf16> to vector<16x128xbf16>
    %cst_35 = arith.constant dense<0.000000e+00> : vector<128x128xf32>
    %33 = tpu.matmul %30, %32, %cst_35 {dimension_numbers = #tpu.dot_dimension_numbers<[1], [0], [0], [1], [0, 0, 1, 1], [], []>} : vector<128x16xbf16>, vector<16x128xbf16>, vector<128x128xf32> -> vector<128x128xf32>
    %34 = arith.addf %28, %33 : vector<128x128xf32>
    %c18 = arith.constant 18 : index
    %c0_36 = arith.constant 0 : index
    %35 = vector.load %arg10[%c18, %c0_36] : memref<368x128xf32, #tpu.memory_space<vmem>>, vector<128x16xf32>
    %36 = arith.truncf %35 : vector<128x16xf32> to vector<128x16xbf16>
    %c3 = arith.constant 3 : index
    %c0_37 = arith.constant 0 : index
    %c0_38 = arith.constant 0 : index
    %37 = vector.load %arg3[%c3, %c0_37, %c0_38] : memref<9x16x128xbf16, #tpu.memory_space<vmem>>, vector<1x16x128xbf16>
    %38 = vector.shape_cast %37 : vector<1x16x128xbf16> to vector<16x128xbf16>
    %cst_39 = arith.constant dense<0.000000e+00> : vector<128x128xf32>
    %39 = tpu.matmul %36, %38, %cst_39 {dimension_numbers = #tpu.dot_dimension_numbers<[1], [0], [0], [1], [0, 0, 1, 1], [], []>} : vector<128x16xbf16>, vector<16x128xbf16>, vector<128x128xf32> -> vector<128x128xf32>
    %40 = arith.addf %34, %39 : vector<128x128xf32>
    %c19 = arith.constant 19 : index
    %c0_40 = arith.constant 0 : index
    %41 = vector.load %arg10[%c19, %c0_40] : memref<368x128xf32, #tpu.memory_space<vmem>>, vector<128x16xf32>
    %42 = arith.truncf %41 : vector<128x16xf32> to vector<128x16xbf16>
    %c4 = arith.constant 4 : index
    %c0_41 = arith.constant 0 : index
    %c0_42 = arith.constant 0 : index
    %43 = vector.load %arg3[%c4, %c0_41, %c0_42] : memref<9x16x128xbf16, #tpu.memory_space<vmem>>, vector<1x16x128xbf16>
    %44 = vector.shape_cast %43 : vector<1x16x128xbf16> to vector<16x128xbf16>
    %cst_43 = arith.constant dense<0.000000e+00> : vector<128x128xf32>
    %45 = tpu.matmul %42, %44, %cst_43 {dimension_numbers = #tpu.dot_dimension_numbers<[1], [0], [0], [1], [0, 0, 1, 1], [], []>} : vector<128x16xbf16>, vector<16x128xbf16>, vector<128x128xf32> -> vector<128x128xf32>
    %46 = arith.addf %40, %45 : vector<128x128xf32>
    %c20 = arith.constant 20 : index
    %c0_44 = arith.constant 0 : index
    %47 = vector.load %arg10[%c20, %c0_44] : memref<368x128xf32, #tpu.memory_space<vmem>>, vector<128x16xf32>
    %48 = arith.truncf %47 : vector<128x16xf32> to vector<128x16xbf16>
    %c5 = arith.constant 5 : index
    %c0_45 = arith.constant 0 : index
    %c0_46 = arith.constant 0 : index
    %49 = vector.load %arg3[%c5, %c0_45, %c0_46] : memref<9x16x128xbf16, #tpu.memory_space<vmem>>, vector<1x16x128xbf16>
    %50 = vector.shape_cast %49 : vector<1x16x128xbf16> to vector<16x128xbf16>
    %cst_47 = arith.constant dense<0.000000e+00> : vector<128x128xf32>
    %51 = tpu.matmul %48, %50, %cst_47 {dimension_numbers = #tpu.dot_dimension_numbers<[1], [0], [0], [1], [0, 0, 1, 1], [], []>} : vector<128x16xbf16>, vector<16x128xbf16>, vector<128x128xf32> -> vector<128x128xf32>
    %52 = arith.addf %46, %51 : vector<128x128xf32>
    %c36 = arith.constant 36 : index
    %c0_48 = arith.constant 0 : index
    %53 = vector.load %arg10[%c36, %c0_48] : memref<368x128xf32, #tpu.memory_space<vmem>>, vector<128x16xf32>
    %54 = arith.truncf %53 : vector<128x16xf32> to vector<128x16xbf16>
    %c6 = arith.constant 6 : index
    %c0_49 = arith.constant 0 : index
    %c0_50 = arith.constant 0 : index
    %55 = vector.load %arg3[%c6, %c0_49, %c0_50] : memref<9x16x128xbf16, #tpu.memory_space<vmem>>, vector<1x16x128xbf16>
    %56 = vector.shape_cast %55 : vector<1x16x128xbf16> to vector<16x128xbf16>
    %cst_51 = arith.constant dense<0.000000e+00> : vector<128x128xf32>
    %57 = tpu.matmul %54, %56, %cst_51 {dimension_numbers = #tpu.dot_dimension_numbers<[1], [0], [0], [1], [0, 0, 1, 1], [], []>} : vector<128x16xbf16>, vector<16x128xbf16>, vector<128x128xf32> -> vector<128x128xf32>
    %58 = arith.addf %52, %57 : vector<128x128xf32>
    %c37 = arith.constant 37 : index
    %c0_52 = arith.constant 0 : index
    %59 = vector.load %arg10[%c37, %c0_52] : memref<368x128xf32, #tpu.memory_space<vmem>>, vector<128x16xf32>
    %60 = arith.truncf %59 : vector<128x16xf32> to vector<128x16xbf16>
    %c7 = arith.constant 7 : index
    %c0_53 = arith.constant 0 : index
    %c0_54 = arith.constant 0 : index
    %61 = vector.load %arg3[%c7, %c0_53, %c0_54] : memref<9x16x128xbf16, #tpu.memory_space<vmem>>, vector<1x16x128xbf16>
    %62 = vector.shape_cast %61 : vector<1x16x128xbf16> to vector<16x128xbf16>
    %cst_55 = arith.constant dense<0.000000e+00> : vector<128x128xf32>
    %63 = tpu.matmul %60, %62, %cst_55 {dimension_numbers = #tpu.dot_dimension_numbers<[1], [0], [0], [1], [0, 0, 1, 1], [], []>} : vector<128x16xbf16>, vector<16x128xbf16>, vector<128x128xf32> -> vector<128x128xf32>
    %64 = arith.addf %58, %63 : vector<128x128xf32>
    %c38 = arith.constant 38 : index
    %c0_56 = arith.constant 0 : index
    %65 = vector.load %arg10[%c38, %c0_56] : memref<368x128xf32, #tpu.memory_space<vmem>>, vector<128x16xf32>
    %66 = arith.truncf %65 : vector<128x16xf32> to vector<128x16xbf16>
    %c8 = arith.constant 8 : index
    %c0_57 = arith.constant 0 : index
    %c0_58 = arith.constant 0 : index
    %67 = vector.load %arg3[%c8, %c0_57, %c0_58] : memref<9x16x128xbf16, #tpu.memory_space<vmem>>, vector<1x16x128xbf16>
    %68 = vector.shape_cast %67 : vector<1x16x128xbf16> to vector<16x128xbf16>
    %cst_59 = arith.constant dense<0.000000e+00> : vector<128x128xf32>
    %69 = tpu.matmul %66, %68, %cst_59 {dimension_numbers = #tpu.dot_dimension_numbers<[1], [0], [0], [1], [0, 0, 1, 1], [], []>} : vector<128x16xbf16>, vector<16x128xbf16>, vector<128x128xf32> -> vector<128x128xf32>
    %70 = arith.addf %64, %69 : vector<128x128xf32>
    %cst_60 = arith.constant 0.000000e+00 : f32
    %71 = vector.broadcast %cst_60 : f32 to vector<128x128xf32>
    %72 = arith.maximumf %70, %71 : vector<128x128xf32>
    %73 = arith.truncf %72 : vector<128x128xf32> to vector<128x128xbf16>
    %c0_61 = arith.constant 0 : index
    %c0_62 = arith.constant 0 : index
    %74 = vector.load %arg11[%c0_61, %c0_62] : memref<288x128xbf16, #tpu.memory_space<vmem>>, vector<128x128xbf16>
    tpu.vector_store %arg11[%c0_61, %c0_62], %73 {strides = array<i32>} : memref<288x128xbf16, #tpu.memory_space<vmem>>, vector<128x128xbf16>,
    %c128_63 = arith.constant 128 : index
    %c0_64 = arith.constant 0 : index
    %75 = vector.load %arg10[%c128_63, %c0_64] : memref<368x128xf32, #tpu.memory_space<vmem>>, vector<128x16xf32>
    %76 = arith.truncf %75 : vector<128x16xf32> to vector<128x16xbf16>
    %c0_65 = arith.constant 0 : index
    %c0_66 = arith.constant 0 : index
    %c0_67 = arith.constant 0 : index
    %77 = vector.load %arg3[%c0_65, %c0_66, %c0_67] : memref<9x16x128xbf16, #tpu.memory_space<vmem>>, vector<1x16x128xbf16>
    %78 = vector.shape_cast %77 : vector<1x16x128xbf16> to vector<16x128xbf16>
    %cst_68 = arith.constant dense<0.000000e+00> : vector<128x128xf32>
    %79 = tpu.matmul %76, %78, %cst_68 {dimension_numbers = #tpu.dot_dimension_numbers<[1], [0], [0], [1], [0, 0, 1, 1], [], []>} : vector<128x16xbf16>, vector<16x128xbf16>, vector<128x128xf32> -> vector<128x128xf32>
    %c129 = arith.constant 129 : index
    %c0_69 = arith.constant 0 : index
    %80 = vector.load %arg10[%c129, %c0_69] : memref<368x128xf32, #tpu.memory_space<vmem>>, vector<128x16xf32>
    %81 = arith.truncf %80 : vector<128x16xf32> to vector<128x16xbf16>
    %c1_70 = arith.constant 1 : index
    %c0_71 = arith.constant 0 : index
    %c0_72 = arith.constant 0 : index
    %82 = vector.load %arg3[%c1_70, %c0_71, %c0_72] : memref<9x16x128xbf16, #tpu.memory_space<vmem>>, vector<1x16x128xbf16>
    %83 = vector.shape_cast %82 : vector<1x16x128xbf16> to vector<16x128xbf16>
    %cst_73 = arith.constant dense<0.000000e+00> : vector<128x128xf32>
    %84 = tpu.matmul %81, %83, %cst_73 {dimension_numbers = #tpu.dot_dimension_numbers<[1], [0], [0], [1], [0, 0, 1, 1], [], []>} : vector<128x16xbf16>, vector<16x128xbf16>, vector<128x128xf32> -> vector<128x128xf32>
    %85 = arith.addf %79, %84 : vector<128x128xf32>
    %c130 = arith.constant 130 : index
    %c0_74 = arith.constant 0 : index
    %86 = vector.load %arg10[%c130, %c0_74] : memref<368x128xf32, #tpu.memory_space<vmem>>, vector<128x16xf32>
    %87 = arith.truncf %86 : vector<128x16xf32> to vector<128x16xbf16>
    %c2_75 = arith.constant 2 : index
    %c0_76 = arith.constant 0 : index
    %c0_77 = arith.constant 0 : index
    %88 = vector.load %arg3[%c2_75, %c0_76, %c0_77] : memref<9x16x128xbf16, #tpu.memory_space<vmem>>, vector<1x16x128xbf16>
    %89 = vector.shape_cast %88 : vector<1x16x128xbf16> to vector<16x128xbf16>
    %cst_78 = arith.constant dense<0.000000e+00> : vector<128x128xf32>
    %90 = tpu.matmul %87, %89, %cst_78 {dimension_numbers = #tpu.dot_dimension_numbers<[1], [0], [0], [1], [0, 0, 1, 1], [], []>} : vector<128x16xbf16>, vector<16x128xbf16>, vector<128x128xf32> -> vector<128x128xf32>
    %91 = arith.addf %85, %90 : vector<128x128xf32>
    %c146 = arith.constant 146 : index
    %c0_79 = arith.constant 0 : index
    %92 = vector.load %arg10[%c146, %c0_79] : memref<368x128xf32, #tpu.memory_space<vmem>>, vector<128x16xf32>
    %93 = arith.truncf %92 : vector<128x16xf32> to vector<128x16xbf16>
    %c3_80 = arith.constant 3 : index
    %c0_81 = arith.constant 0 : index
    %c0_82 = arith.constant 0 : index
    %94 = vector.load %arg3[%c3_80, %c0_81, %c0_82] : memref<9x16x128xbf16, #tpu.memory_space<vmem>>, vector<1x16x128xbf16>
    %95 = vector.shape_cast %94 : vector<1x16x128xbf16> to vector<16x128xbf16>
    %cst_83 = arith.constant dense<0.000000e+00> : vector<128x128xf32>
    %96 = tpu.matmul %93, %95, %cst_83 {dimension_numbers = #tpu.dot_dimension_numbers<[1], [0], [0], [1], [0, 0, 1, 1], [], []>} : vector<128x16xbf16>, vector<16x128xbf16>, vector<128x128xf32> -> vector<128x128xf32>
    %97 = arith.addf %91, %96 : vector<128x128xf32>
    %c147 = arith.constant 147 : index
    %c0_84 = arith.constant 0 : index
    %98 = vector.load %arg10[%c147, %c0_84] : memref<368x128xf32, #tpu.memory_space<vmem>>, vector<128x16xf32>
    %99 = arith.truncf %98 : vector<128x16xf32> to vector<128x16xbf16>
    %c4_85 = arith.constant 4 : index
    %c0_86 = arith.constant 0 : index
    %c0_87 = arith.constant 0 : index
    %100 = vector.load %arg3[%c4_85, %c0_86, %c0_87] : memref<9x16x128xbf16, #tpu.memory_space<vmem>>, vector<1x16x128xbf16>
    %101 = vector.shape_cast %100 : vector<1x16x128xbf16> to vector<16x128xbf16>
    %cst_88 = arith.constant dense<0.000000e+00> : vector<128x128xf32>
    %102 = tpu.matmul %99, %101, %cst_88 {dimension_numbers = #tpu.dot_dimension_numbers<[1], [0], [0], [1], [0, 0, 1, 1], [], []>} : vector<128x16xbf16>, vector<16x128xbf16>, vector<128x128xf32> -> vector<128x128xf32>
    %103 = arith.addf %97, %102 : vector<128x128xf32>
    %c148 = arith.constant 148 : index
    %c0_89 = arith.constant 0 : index
    %104 = vector.load %arg10[%c148, %c0_89] : memref<368x128xf32, #tpu.memory_space<vmem>>, vector<128x16xf32>
    %105 = arith.truncf %104 : vector<128x16xf32> to vector<128x16xbf16>
    %c5_90 = arith.constant 5 : index
    %c0_91 = arith.constant 0 : index
    %c0_92 = arith.constant 0 : index
    %106 = vector.load %arg3[%c5_90, %c0_91, %c0_92] : memref<9x16x128xbf16, #tpu.memory_space<vmem>>, vector<1x16x128xbf16>
    %107 = vector.shape_cast %106 : vector<1x16x128xbf16> to vector<16x128xbf16>
    %cst_93 = arith.constant dense<0.000000e+00> : vector<128x128xf32>
    %108 = tpu.matmul %105, %107, %cst_93 {dimension_numbers = #tpu.dot_dimension_numbers<[1], [0], [0], [1], [0, 0, 1, 1], [], []>} : vector<128x16xbf16>, vector<16x128xbf16>, vector<128x128xf32> -> vector<128x128xf32>
    %109 = arith.addf %103, %108 : vector<128x128xf32>
    %c164 = arith.constant 164 : index
    %c0_94 = arith.constant 0 : index
    %110 = vector.load %arg10[%c164, %c0_94] : memref<368x128xf32, #tpu.memory_space<vmem>>, vector<128x16xf32>
    %111 = arith.truncf %110 : vector<128x16xf32> to vector<128x16xbf16>
    %c6_95 = arith.constant 6 : index
    %c0_96 = arith.constant 0 : index
    %c0_97 = arith.constant 0 : index
    %112 = vector.load %arg3[%c6_95, %c0_96, %c0_97] : memref<9x16x128xbf16, #tpu.memory_space<vmem>>, vector<1x16x128xbf16>
    %113 = vector.shape_cast %112 : vector<1x16x128xbf16> to vector<16x128xbf16>
    %cst_98 = arith.constant dense<0.000000e+00> : vector<128x128xf32>
    %114 = tpu.matmul %111, %113, %cst_98 {dimension_numbers = #tpu.dot_dimension_numbers<[1], [0], [0], [1], [0, 0, 1, 1], [], []>} : vector<128x16xbf16>, vector<16x128xbf16>, vector<128x128xf32> -> vector<128x128xf32>
    %115 = arith.addf %109, %114 : vector<128x128xf32>
    %c165 = arith.constant 165 : index
    %c0_99 = arith.constant 0 : index
    %116 = vector.load %arg10[%c165, %c0_99] : memref<368x128xf32, #tpu.memory_space<vmem>>, vector<128x16xf32>
    %117 = arith.truncf %116 : vector<128x16xf32> to vector<128x16xbf16>
    %c7_100 = arith.constant 7 : index
    %c0_101 = arith.constant 0 : index
    %c0_102 = arith.constant 0 : index
    %118 = vector.load %arg3[%c7_100, %c0_101, %c0_102] : memref<9x16x128xbf16, #tpu.memory_space<vmem>>, vector<1x16x128xbf16>
    %119 = vector.shape_cast %118 : vector<1x16x128xbf16> to vector<16x128xbf16>
    %cst_103 = arith.constant dense<0.000000e+00> : vector<128x128xf32>
    %120 = tpu.matmul %117, %119, %cst_103 {dimension_numbers = #tpu.dot_dimension_numbers<[1], [0], [0], [1], [0, 0, 1, 1], [], []>} : vector<128x16xbf16>, vector<16x128xbf16>, vector<128x128xf32> -> vector<128x128xf32>
    %121 = arith.addf %115, %120 : vector<128x128xf32>
    %c166 = arith.constant 166 : index
    %c0_104 = arith.constant 0 : index
    %122 = vector.load %arg10[%c166, %c0_104] : memref<368x128xf32, #tpu.memory_space<vmem>>, vector<128x16xf32>
    %123 = arith.truncf %122 : vector<128x16xf32> to vector<128x16xbf16>
    %c8_105 = arith.constant 8 : index
    %c0_106 = arith.constant 0 : index
    %c0_107 = arith.constant 0 : index
    %124 = vector.load %arg3[%c8_105, %c0_106, %c0_107] : memref<9x16x128xbf16, #tpu.memory_space<vmem>>, vector<1x16x128xbf16>
    %125 = vector.shape_cast %124 : vector<1x16x128xbf16> to vector<16x128xbf16>
    %cst_108 = arith.constant dense<0.000000e+00> : vector<128x128xf32>
    %126 = tpu.matmul %123, %125, %cst_108 {dimension_numbers = #tpu.dot_dimension_numbers<[1], [0], [0], [1], [0, 0, 1, 1], [], []>} : vector<128x16xbf16>, vector<16x128xbf16>, vector<128x128xf32> -> vector<128x128xf32>
    %127 = arith.addf %121, %126 : vector<128x128xf32>
    %cst_109 = arith.constant 0.000000e+00 : f32
    %128 = vector.broadcast %cst_109 : f32 to vector<128x128xf32>
    %129 = arith.maximumf %127, %128 : vector<128x128xf32>
    %130 = arith.truncf %129 : vector<128x128xf32> to vector<128x128xbf16>
    %c128_110 = arith.constant 128 : index
    %c0_111 = arith.constant 0 : index
    %131 = vector.load %arg11[%c128_110, %c0_111] : memref<288x128xbf16, #tpu.memory_space<vmem>>, vector<128x128xbf16>
    tpu.vector_store %arg11[%c128_110, %c0_111], %130 {strides = array<i32>} : memref<288x128xbf16, #tpu.memory_space<vmem>>, vector<128x128xbf16>,
    %c256_112 = arith.constant 256 : index
    %c0_113 = arith.constant 0 : index
    %132 = vector.load %arg10[%c256_112, %c0_113] : memref<368x128xf32, #tpu.memory_space<vmem>>, vector<32x16xf32>
    %133 = arith.truncf %132 : vector<32x16xf32> to vector<32x16xbf16>
    %c0_114 = arith.constant 0 : index
    %c0_115 = arith.constant 0 : index
    %c0_116 = arith.constant 0 : index
    %134 = vector.load %arg3[%c0_114, %c0_115, %c0_116] : memref<9x16x128xbf16, #tpu.memory_space<vmem>>, vector<1x16x128xbf16>
    %135 = vector.shape_cast %134 : vector<1x16x128xbf16> to vector<16x128xbf16>
    %cst_117 = arith.constant dense<0.000000e+00> : vector<32x128xf32>
    %136 = tpu.matmul %133, %135, %cst_117 {dimension_numbers = #tpu.dot_dimension_numbers<[1], [0], [0], [1], [0, 0, 1, 1], [], []>} : vector<32x16xbf16>, vector<16x128xbf16>, vector<32x128xf32> -> vector<32x128xf32>
    %c257 = arith.constant 257 : index
    %c0_118 = arith.constant 0 : index
    %137 = vector.load %arg10[%c257, %c0_118] : memref<368x128xf32, #tpu.memory_space<vmem>>, vector<32x16xf32>
    %138 = arith.truncf %137 : vector<32x16xf32> to vector<32x16xbf16>
    %c1_119 = arith.constant 1 : index
    %c0_120 = arith.constant 0 : index
    %c0_121 = arith.constant 0 : index
    %139 = vector.load %arg3[%c1_119, %c0_120, %c0_121] : memref<9x16x128xbf16, #tpu.memory_space<vmem>>, vector<1x16x128xbf16>
    %140 = vector.shape_cast %139 : vector<1x16x128xbf16> to vector<16x128xbf16>
    %cst_122 = arith.constant dense<0.000000e+00> : vector<32x128xf32>
    %141 = tpu.matmul %138, %140, %cst_122 {dimension_numbers = #tpu.dot_dimension_numbers<[1], [0], [0], [1], [0, 0, 1, 1], [], []>} : vector<32x16xbf16>, vector<16x128xbf16>, vector<32x128xf32> -> vector<32x128xf32>
    %142 = arith.addf %136, %141 : vector<32x128xf32>
    %c258 = arith.constant 258 : index
    %c0_123 = arith.constant 0 : index
    %143 = vector.load %arg10[%c258, %c0_123] : memref<368x128xf32, #tpu.memory_space<vmem>>, vector<32x16xf32>
    %144 = arith.truncf %143 : vector<32x16xf32> to vector<32x16xbf16>
    %c2_124 = arith.constant 2 : index
    %c0_125 = arith.constant 0 : index
    %c0_126 = arith.constant 0 : index
    %145 = vector.load %arg3[%c2_124, %c0_125, %c0_126] : memref<9x16x128xbf16, #tpu.memory_space<vmem>>, vector<1x16x128xbf16>
    %146 = vector.shape_cast %145 : vector<1x16x128xbf16> to vector<16x128xbf16>
    %cst_127 = arith.constant dense<0.000000e+00> : vector<32x128xf32>
    %147 = tpu.matmul %144, %146, %cst_127 {dimension_numbers = #tpu.dot_dimension_numbers<[1], [0], [0], [1], [0, 0, 1, 1], [], []>} : vector<32x16xbf16>, vector<16x128xbf16>, vector<32x128xf32> -> vector<32x128xf32>
    %148 = arith.addf %142, %147 : vector<32x128xf32>
    %c274 = arith.constant 274 : index
    %c0_128 = arith.constant 0 : index
    %149 = vector.load %arg10[%c274, %c0_128] : memref<368x128xf32, #tpu.memory_space<vmem>>, vector<32x16xf32>
    %150 = arith.truncf %149 : vector<32x16xf32> to vector<32x16xbf16>
    %c3_129 = arith.constant 3 : index
    %c0_130 = arith.constant 0 : index
    %c0_131 = arith.constant 0 : index
    %151 = vector.load %arg3[%c3_129, %c0_130, %c0_131] : memref<9x16x128xbf16, #tpu.memory_space<vmem>>, vector<1x16x128xbf16>
    %152 = vector.shape_cast %151 : vector<1x16x128xbf16> to vector<16x128xbf16>
    %cst_132 = arith.constant dense<0.000000e+00> : vector<32x128xf32>
    %153 = tpu.matmul %150, %152, %cst_132 {dimension_numbers = #tpu.dot_dimension_numbers<[1], [0], [0], [1], [0, 0, 1, 1], [], []>} : vector<32x16xbf16>, vector<16x128xbf16>, vector<32x128xf32> -> vector<32x128xf32>
    %154 = arith.addf %148, %153 : vector<32x128xf32>
    %c275 = arith.constant 275 : index
    %c0_133 = arith.constant 0 : index
    %155 = vector.load %arg10[%c275, %c0_133] : memref<368x128xf32, #tpu.memory_space<vmem>>, vector<32x16xf32>
    %156 = arith.truncf %155 : vector<32x16xf32> to vector<32x16xbf16>
    %c4_134 = arith.constant 4 : index
    %c0_135 = arith.constant 0 : index
    %c0_136 = arith.constant 0 : index
    %157 = vector.load %arg3[%c4_134, %c0_135, %c0_136] : memref<9x16x128xbf16, #tpu.memory_space<vmem>>, vector<1x16x128xbf16>
    %158 = vector.shape_cast %157 : vector<1x16x128xbf16> to vector<16x128xbf16>
    %cst_137 = arith.constant dense<0.000000e+00> : vector<32x128xf32>
    %159 = tpu.matmul %156, %158, %cst_137 {dimension_numbers = #tpu.dot_dimension_numbers<[1], [0], [0], [1], [0, 0, 1, 1], [], []>} : vector<32x16xbf16>, vector<16x128xbf16>, vector<32x128xf32> -> vector<32x128xf32>
    %160 = arith.addf %154, %159 : vector<32x128xf32>
    %c276 = arith.constant 276 : index
    %c0_138 = arith.constant 0 : index
    %161 = vector.load %arg10[%c276, %c0_138] : memref<368x128xf32, #tpu.memory_space<vmem>>, vector<32x16xf32>
    %162 = arith.truncf %161 : vector<32x16xf32> to vector<32x16xbf16>
    %c5_139 = arith.constant 5 : index
    %c0_140 = arith.constant 0 : index
    %c0_141 = arith.constant 0 : index
    %163 = vector.load %arg3[%c5_139, %c0_140, %c0_141] : memref<9x16x128xbf16, #tpu.memory_space<vmem>>, vector<1x16x128xbf16>
    %164 = vector.shape_cast %163 : vector<1x16x128xbf16> to vector<16x128xbf16>
    %cst_142 = arith.constant dense<0.000000e+00> : vector<32x128xf32>
    %165 = tpu.matmul %162, %164, %cst_142 {dimension_numbers = #tpu.dot_dimension_numbers<[1], [0], [0], [1], [0, 0, 1, 1], [], []>} : vector<32x16xbf16>, vector<16x128xbf16>, vector<32x128xf32> -> vector<32x128xf32>
    %166 = arith.addf %160, %165 : vector<32x128xf32>
    %c292 = arith.constant 292 : index
    %c0_143 = arith.constant 0 : index
    %167 = vector.load %arg10[%c292, %c0_143] : memref<368x128xf32, #tpu.memory_space<vmem>>, vector<32x16xf32>
    %168 = arith.truncf %167 : vector<32x16xf32> to vector<32x16xbf16>
    %c6_144 = arith.constant 6 : index
    %c0_145 = arith.constant 0 : index
    %c0_146 = arith.constant 0 : index
    %169 = vector.load %arg3[%c6_144, %c0_145, %c0_146] : memref<9x16x128xbf16, #tpu.memory_space<vmem>>, vector<1x16x128xbf16>
    %170 = vector.shape_cast %169 : vector<1x16x128xbf16> to vector<16x128xbf16>
    %cst_147 = arith.constant dense<0.000000e+00> : vector<32x128xf32>
    %171 = tpu.matmul %168, %170, %cst_147 {dimension_numbers = #tpu.dot_dimension_numbers<[1], [0], [0], [1], [0, 0, 1, 1], [], []>} : vector<32x16xbf16>, vector<16x128xbf16>, vector<32x128xf32> -> vector<32x128xf32>
    %172 = arith.addf %166, %171 : vector<32x128xf32>
    %c293 = arith.constant 293 : index
    %c0_148 = arith.constant 0 : index
    %173 = vector.load %arg10[%c293, %c0_148] : memref<368x128xf32, #tpu.memory_space<vmem>>, vector<32x16xf32>
    %174 = arith.truncf %173 : vector<32x16xf32> to vector<32x16xbf16>
    %c7_149 = arith.constant 7 : index
    %c0_150 = arith.constant 0 : index
    %c0_151 = arith.constant 0 : index
    %175 = vector.load %arg3[%c7_149, %c0_150, %c0_151] : memref<9x16x128xbf16, #tpu.memory_space<vmem>>, vector<1x16x128xbf16>
    %176 = vector.shape_cast %175 : vector<1x16x128xbf16> to vector<16x128xbf16>
    %cst_152 = arith.constant dense<0.000000e+00> : vector<32x128xf32>
    %177 = tpu.matmul %174, %176, %cst_152 {dimension_numbers = #tpu.dot_dimension_numbers<[1], [0], [0], [1], [0, 0, 1, 1], [], []>} : vector<32x16xbf16>, vector<16x128xbf16>, vector<32x128xf32> -> vector<32x128xf32>
    %178 = arith.addf %172, %177 : vector<32x128xf32>
    %c294 = arith.constant 294 : index
    %c0_153 = arith.constant 0 : index
    %179 = vector.load %arg10[%c294, %c0_153] : memref<368x128xf32, #tpu.memory_space<vmem>>, vector<32x16xf32>
    %180 = arith.truncf %179 : vector<32x16xf32> to vector<32x16xbf16>
    %c8_154 = arith.constant 8 : index
    %c0_155 = arith.constant 0 : index
    %c0_156 = arith.constant 0 : index
    %181 = vector.load %arg3[%c8_154, %c0_155, %c0_156] : memref<9x16x128xbf16, #tpu.memory_space<vmem>>, vector<1x16x128xbf16>
    %182 = vector.shape_cast %181 : vector<1x16x128xbf16> to vector<16x128xbf16>
    %cst_157 = arith.constant dense<0.000000e+00> : vector<32x128xf32>
    %183 = tpu.matmul %180, %182, %cst_157 {dimension_numbers = #tpu.dot_dimension_numbers<[1], [0], [0], [1], [0, 0, 1, 1], [], []>} : vector<32x16xbf16>, vector<16x128xbf16>, vector<32x128xf32> -> vector<32x128xf32>
    %184 = arith.addf %178, %183 : vector<32x128xf32>
    %cst_158 = arith.constant 0.000000e+00 : f32
    %185 = vector.broadcast %cst_158 : f32 to vector<32x128xf32>
    %186 = arith.maximumf %184, %185 : vector<32x128xf32>
    %187 = arith.truncf %186 : vector<32x128xf32> to vector<32x128xbf16>
    %c256_159 = arith.constant 256 : index
    %c0_160 = arith.constant 0 : index
    %188 = vector.load %arg11[%c256_159, %c0_160] : memref<288x128xbf16, #tpu.memory_space<vmem>>, vector<32x128xbf16>
    tpu.vector_store %arg11[%c256_159, %c0_160], %187 {strides = array<i32>} : memref<288x128xbf16, #tpu.memory_space<vmem>>, vector<32x128xbf16>,
    %c0_161 = arith.constant 0 : index
    %c0_162 = arith.constant 0 : index
    %189 = vector.load %arg4[%c0_161, %c0_162] : memref<104x288xbf16, #tpu.memory_space<vmem>>, vector<104x288xbf16>
    %c0_163 = arith.constant 0 : index
    %c0_164 = arith.constant 0 : index
    %190 = vector.load %arg11[%c0_163, %c0_164] : memref<288x128xbf16, #tpu.memory_space<vmem>>, vector<288x128xbf16>
    %cst_165 = arith.constant dense<0.000000e+00> : vector<104x128xf32>
    %191 = tpu.matmul %189, %190, %cst_165 {dimension_numbers = #tpu.dot_dimension_numbers<[1], [0], [0], [1], [0, 0, 1, 1], [], []>} : vector<104x288xbf16>, vector<288x128xbf16>, vector<104x128xf32> -> vector<104x128xf32>
    %c0_166 = arith.constant 0 : index
    %c0_167 = arith.constant 0 : index
    %192 = vector.load %arg12[%c0_166, %c0_167] : memref<104x128xf32, #tpu.memory_space<vmem>>, vector<104x128xf32>
    tpu.vector_store %arg12[%c0_166, %c0_167], %191 {strides = array<i32>} : memref<104x128xf32, #tpu.memory_space<vmem>>, vector<104x128xf32>,
    %c0_168 = arith.constant 0 : index
    %c0_169 = arith.constant 0 : index
    %193 = vector.load %arg12[%c0_168, %c0_169] : memref<104x128xf32, #tpu.memory_space<vmem>>, vector<80x16xf32>
    %194 = arith.truncf %193 : vector<80x16xf32> to vector<80x16xbf16>
    %c0_170 = arith.constant 0 : index
    %c0_171 = arith.constant 0 : index
    %c0_172 = arith.constant 0 : index
    %195 = vector.load %arg5[%c0_170, %c0_171, %c0_172] : memref<9x16x128xbf16, #tpu.memory_space<vmem>>, vector<1x16x128xbf16>
    %196 = vector.shape_cast %195 : vector<1x16x128xbf16> to vector<16x128xbf16>
    %cst_173 = arith.constant dense<0.000000e+00> : vector<80x128xf32>
    %197 = tpu.matmul %194, %196, %cst_173 {dimension_numbers = #tpu.dot_dimension_numbers<[1], [0], [0], [1], [0, 0, 1, 1], [], []>} : vector<80x16xbf16>, vector<16x128xbf16>, vector<80x128xf32> -> vector<80x128xf32>
    %c1_174 = arith.constant 1 : index
    %c0_175 = arith.constant 0 : index
    %198 = vector.load %arg12[%c1_174, %c0_175] : memref<104x128xf32, #tpu.memory_space<vmem>>, vector<80x16xf32>
    %199 = arith.truncf %198 : vector<80x16xf32> to vector<80x16xbf16>
    %c1_176 = arith.constant 1 : index
    %c0_177 = arith.constant 0 : index
    %c0_178 = arith.constant 0 : index
    %200 = vector.load %arg5[%c1_176, %c0_177, %c0_178] : memref<9x16x128xbf16, #tpu.memory_space<vmem>>, vector<1x16x128xbf16>
    %201 = vector.shape_cast %200 : vector<1x16x128xbf16> to vector<16x128xbf16>
    %cst_179 = arith.constant dense<0.000000e+00> : vector<80x128xf32>
    %202 = tpu.matmul %199, %201, %cst_179 {dimension_numbers = #tpu.dot_dimension_numbers<[1], [0], [0], [1], [0, 0, 1, 1], [], []>} : vector<80x16xbf16>, vector<16x128xbf16>, vector<80x128xf32> -> vector<80x128xf32>
    %203 = arith.addf %197, %202 : vector<80x128xf32>
    %c2_180 = arith.constant 2 : index
    %c0_181 = arith.constant 0 : index
    %204 = vector.load %arg12[%c2_180, %c0_181] : memref<104x128xf32, #tpu.memory_space<vmem>>, vector<80x16xf32>
    %205 = arith.truncf %204 : vector<80x16xf32> to vector<80x16xbf16>
    %c2_182 = arith.constant 2 : index
    %c0_183 = arith.constant 0 : index
    %c0_184 = arith.constant 0 : index
    %206 = vector.load %arg5[%c2_182, %c0_183, %c0_184] : memref<9x16x128xbf16, #tpu.memory_space<vmem>>, vector<1x16x128xbf16>
    %207 = vector.shape_cast %206 : vector<1x16x128xbf16> to vector<16x128xbf16>
    %cst_185 = arith.constant dense<0.000000e+00> : vector<80x128xf32>
    %208 = tpu.matmul %205, %207, %cst_185 {dimension_numbers = #tpu.dot_dimension_numbers<[1], [0], [0], [1], [0, 0, 1, 1], [], []>} : vector<80x16xbf16>, vector<16x128xbf16>, vector<80x128xf32> -> vector<80x128xf32>
    %209 = arith.addf %203, %208 : vector<80x128xf32>
    %c10 = arith.constant 10 : index
    %c0_186 = arith.constant 0 : index
    %210 = vector.load %arg12[%c10, %c0_186] : memref<104x128xf32, #tpu.memory_space<vmem>>, vector<80x16xf32>
    %211 = arith.truncf %210 : vector<80x16xf32> to vector<80x16xbf16>
    %c3_187 = arith.constant 3 : index
    %c0_188 = arith.constant 0 : index
    %c0_189 = arith.constant 0 : index
    %212 = vector.load %arg5[%c3_187, %c0_188, %c0_189] : memref<9x16x128xbf16, #tpu.memory_space<vmem>>, vector<1x16x128xbf16>
    %213 = vector.shape_cast %212 : vector<1x16x128xbf16> to vector<16x128xbf16>
    %cst_190 = arith.constant dense<0.000000e+00> : vector<80x128xf32>
    %214 = tpu.matmul %211, %213, %cst_190 {dimension_numbers = #tpu.dot_dimension_numbers<[1], [0], [0], [1], [0, 0, 1, 1], [], []>} : vector<80x16xbf16>, vector<16x128xbf16>, vector<80x128xf32> -> vector<80x128xf32>
    %215 = arith.addf %209, %214 : vector<80x128xf32>
    %c11 = arith.constant 11 : index
    %c0_191 = arith.constant 0 : index
    %216 = vector.load %arg12[%c11, %c0_191] : memref<104x128xf32, #tpu.memory_space<vmem>>, vector<80x16xf32>
    %217 = arith.truncf %216 : vector<80x16xf32> to vector<80x16xbf16>
    %c4_192 = arith.constant 4 : index
    %c0_193 = arith.constant 0 : index
    %c0_194 = arith.constant 0 : index
    %218 = vector.load %arg5[%c4_192, %c0_193, %c0_194] : memref<9x16x128xbf16, #tpu.memory_space<vmem>>, vector<1x16x128xbf16>
    %219 = vector.shape_cast %218 : vector<1x16x128xbf16> to vector<16x128xbf16>
    %cst_195 = arith.constant dense<0.000000e+00> : vector<80x128xf32>
    %220 = tpu.matmul %217, %219, %cst_195 {dimension_numbers = #tpu.dot_dimension_numbers<[1], [0], [0], [1], [0, 0, 1, 1], [], []>} : vector<80x16xbf16>, vector<16x128xbf16>, vector<80x128xf32> -> vector<80x128xf32>
    %221 = arith.addf %215, %220 : vector<80x128xf32>
    %c12 = arith.constant 12 : index
    %c0_196 = arith.constant 0 : index
    %222 = vector.load %arg12[%c12, %c0_196] : memref<104x128xf32, #tpu.memory_space<vmem>>, vector<80x16xf32>
    %223 = arith.truncf %222 : vector<80x16xf32> to vector<80x16xbf16>
    %c5_197 = arith.constant 5 : index
    %c0_198 = arith.constant 0 : index
    %c0_199 = arith.constant 0 : index
    %224 = vector.load %arg5[%c5_197, %c0_198, %c0_199] : memref<9x16x128xbf16, #tpu.memory_space<vmem>>, vector<1x16x128xbf16>
    %225 = vector.shape_cast %224 : vector<1x16x128xbf16> to vector<16x128xbf16>
    %cst_200 = arith.constant dense<0.000000e+00> : vector<80x128xf32>
    %226 = tpu.matmul %223, %225, %cst_200 {dimension_numbers = #tpu.dot_dimension_numbers<[1], [0], [0], [1], [0, 0, 1, 1], [], []>} : vector<80x16xbf16>, vector<16x128xbf16>, vector<80x128xf32> -> vector<80x128xf32>
    %227 = arith.addf %221, %226 : vector<80x128xf32>
    %c20_201 = arith.constant 20 : index
    %c0_202 = arith.constant 0 : index
    %228 = vector.load %arg12[%c20_201, %c0_202] : memref<104x128xf32, #tpu.memory_space<vmem>>, vector<80x16xf32>
    %229 = arith.truncf %228 : vector<80x16xf32> to vector<80x16xbf16>
    %c6_203 = arith.constant 6 : index
    %c0_204 = arith.constant 0 : index
    %c0_205 = arith.constant 0 : index
    %230 = vector.load %arg5[%c6_203, %c0_204, %c0_205] : memref<9x16x128xbf16, #tpu.memory_space<vmem>>, vector<1x16x128xbf16>
    %231 = vector.shape_cast %230 : vector<1x16x128xbf16> to vector<16x128xbf16>
    %cst_206 = arith.constant dense<0.000000e+00> : vector<80x128xf32>
    %232 = tpu.matmul %229, %231, %cst_206 {dimension_numbers = #tpu.dot_dimension_numbers<[1], [0], [0], [1], [0, 0, 1, 1], [], []>} : vector<80x16xbf16>, vector<16x128xbf16>, vector<80x128xf32> -> vector<80x128xf32>
    %233 = arith.addf %227, %232 : vector<80x128xf32>
    %c21 = arith.constant 21 : index
    %c0_207 = arith.constant 0 : index
    %234 = vector.load %arg12[%c21, %c0_207] : memref<104x128xf32, #tpu.memory_space<vmem>>, vector<80x16xf32>
    %235 = arith.truncf %234 : vector<80x16xf32> to vector<80x16xbf16>
    %c7_208 = arith.constant 7 : index
    %c0_209 = arith.constant 0 : index
    %c0_210 = arith.constant 0 : index
    %236 = vector.load %arg5[%c7_208, %c0_209, %c0_210] : memref<9x16x128xbf16, #tpu.memory_space<vmem>>, vector<1x16x128xbf16>
    %237 = vector.shape_cast %236 : vector<1x16x128xbf16> to vector<16x128xbf16>
    %cst_211 = arith.constant dense<0.000000e+00> : vector<80x128xf32>
    %238 = tpu.matmul %235, %237, %cst_211 {dimension_numbers = #tpu.dot_dimension_numbers<[1], [0], [0], [1], [0, 0, 1, 1], [], []>} : vector<80x16xbf16>, vector<16x128xbf16>, vector<80x128xf32> -> vector<80x128xf32>
    %239 = arith.addf %233, %238 : vector<80x128xf32>
    %c22 = arith.constant 22 : index
    %c0_212 = arith.constant 0 : index
    %240 = vector.load %arg12[%c22, %c0_212] : memref<104x128xf32, #tpu.memory_space<vmem>>, vector<80x16xf32>
    %241 = arith.truncf %240 : vector<80x16xf32> to vector<80x16xbf16>
    %c8_213 = arith.constant 8 : index
    %c0_214 = arith.constant 0 : index
    %c0_215 = arith.constant 0 : index
    %242 = vector.load %arg5[%c8_213, %c0_214, %c0_215] : memref<9x16x128xbf16, #tpu.memory_space<vmem>>, vector<1x16x128xbf16>
    %243 = vector.shape_cast %242 : vector<1x16x128xbf16> to vector<16x128xbf16>
    %cst_216 = arith.constant dense<0.000000e+00> : vector<80x128xf32>
    %244 = tpu.matmul %241, %243, %cst_216 {dimension_numbers = #tpu.dot_dimension_numbers<[1], [0], [0], [1], [0, 0, 1, 1], [], []>} : vector<80x16xbf16>, vector<16x128xbf16>, vector<80x128xf32> -> vector<80x128xf32>
    %245 = arith.addf %239, %244 : vector<80x128xf32>
    %cst_217 = arith.constant 0.000000e+00 : f32
    %246 = vector.broadcast %cst_217 : f32 to vector<80x128xf32>
    %247 = arith.maximumf %245, %246 : vector<80x128xf32>
    %248 = arith.truncf %247 : vector<80x128xf32> to vector<80x128xbf16>
    %c0_218 = arith.constant 0 : index
    %c0_219 = arith.constant 0 : index
    %249 = vector.load %arg6[%c0_218, %c0_219] : memref<16x80xbf16, #tpu.memory_space<vmem>>, vector<16x80xbf16>
    %cst_220 = arith.constant dense<0.000000e+00> : vector<16x128xf32>
    %250 = tpu.matmul %249, %248, %cst_220 {dimension_numbers = #tpu.dot_dimension_numbers<[1], [0], [0], [1], [0, 0, 1, 1], [], []>} : vector<16x80xbf16>, vector<80x128xbf16>, vector<16x128xf32> -> vector<16x128xf32>
    %251 = vector.extract_strided_slice %250 {offsets = [0, 0], sizes = [1, 8], strides = [1, 1]} : vector<16x128xf32> to vector<1x8xf32>
    %252 = arith.truncf %251 : vector<1x8xf32> to vector<1x8xbf16>
    %c0_221 = arith.constant 0 : index
    %c0_222 = arith.constant 0 : index
    %c0_223 = arith.constant 0 : index
    %253 = vector.load %arg7[%c0_221, %c0_222, %c0_223] : memref<16x8x256xbf16, #tpu.memory_space<vmem>>, vector<1x8x256xbf16>
    %254 = vector.shape_cast %253 : vector<1x8x256xbf16> to vector<8x256xbf16>
    %cst_224 = arith.constant dense<0.000000e+00> : vector<1x256xf32>
    %255 = tpu.matmul %252, %254, %cst_224 {dimension_numbers = #tpu.dot_dimension_numbers<[1], [0], [0], [1], [0, 0, 1, 1], [], []>} : vector<1x8xbf16>, vector<8x256xbf16>, vector<1x256xf32> -> vector<1x256xf32>
    %256 = vector.extract_strided_slice %250 {offsets = [1, 0], sizes = [1, 8], strides = [1, 1]} : vector<16x128xf32> to vector<1x8xf32>
    %257 = arith.truncf %256 : vector<1x8xf32> to vector<1x8xbf16>
    %c1_225 = arith.constant 1 : index
    %c0_226 = arith.constant 0 : index
    %c0_227 = arith.constant 0 : index
    %258 = vector.load %arg7[%c1_225, %c0_226, %c0_227] : memref<16x8x256xbf16, #tpu.memory_space<vmem>>, vector<1x8x256xbf16>
    %259 = vector.shape_cast %258 : vector<1x8x256xbf16> to vector<8x256xbf16>
    %cst_228 = arith.constant dense<0.000000e+00> : vector<1x256xf32>
    %260 = tpu.matmul %257, %259, %cst_228 {dimension_numbers = #tpu.dot_dimension_numbers<[1], [0], [0], [1], [0, 0, 1, 1], [], []>} : vector<1x8xbf16>, vector<8x256xbf16>, vector<1x256xf32> -> vector<1x256xf32>
    %261 = arith.addf %255, %260 : vector<1x256xf32>
    %262 = vector.extract_strided_slice %250 {offsets = [2, 0], sizes = [1, 8], strides = [1, 1]} : vector<16x128xf32> to vector<1x8xf32>
    %263 = arith.truncf %262 : vector<1x8xf32> to vector<1x8xbf16>
    %c2_229 = arith.constant 2 : index
    %c0_230 = arith.constant 0 : index
    %c0_231 = arith.constant 0 : index
    %264 = vector.load %arg7[%c2_229, %c0_230, %c0_231] : memref<16x8x256xbf16, #tpu.memory_space<vmem>>, vector<1x8x256xbf16>
    %265 = vector.shape_cast %264 : vector<1x8x256xbf16> to vector<8x256xbf16>
    %cst_232 = arith.constant dense<0.000000e+00> : vector<1x256xf32>
    %266 = tpu.matmul %263, %265, %cst_232 {dimension_numbers = #tpu.dot_dimension_numbers<[1], [0], [0], [1], [0, 0, 1, 1], [], []>} : vector<1x8xbf16>, vector<8x256xbf16>, vector<1x256xf32> -> vector<1x256xf32>
    %267 = arith.addf %261, %266 : vector<1x256xf32>
    %268 = vector.extract_strided_slice %250 {offsets = [3, 0], sizes = [1, 8], strides = [1, 1]} : vector<16x128xf32> to vector<1x8xf32>
    %269 = arith.truncf %268 : vector<1x8xf32> to vector<1x8xbf16>
    %c3_233 = arith.constant 3 : index
    %c0_234 = arith.constant 0 : index
    %c0_235 = arith.constant 0 : index
    %270 = vector.load %arg7[%c3_233, %c0_234, %c0_235] : memref<16x8x256xbf16, #tpu.memory_space<vmem>>, vector<1x8x256xbf16>
    %271 = vector.shape_cast %270 : vector<1x8x256xbf16> to vector<8x256xbf16>
    %cst_236 = arith.constant dense<0.000000e+00> : vector<1x256xf32>
    %272 = tpu.matmul %269, %271, %cst_236 {dimension_numbers = #tpu.dot_dimension_numbers<[1], [0], [0], [1], [0, 0, 1, 1], [], []>} : vector<1x8xbf16>, vector<8x256xbf16>, vector<1x256xf32> -> vector<1x256xf32>
    %273 = arith.addf %267, %272 : vector<1x256xf32>
    %274 = vector.extract_strided_slice %250 {offsets = [4, 0], sizes = [1, 8], strides = [1, 1]} : vector<16x128xf32> to vector<1x8xf32>
    %275 = arith.truncf %274 : vector<1x8xf32> to vector<1x8xbf16>
    %c4_237 = arith.constant 4 : index
    %c0_238 = arith.constant 0 : index
    %c0_239 = arith.constant 0 : index
    %276 = vector.load %arg7[%c4_237, %c0_238, %c0_239] : memref<16x8x256xbf16, #tpu.memory_space<vmem>>, vector<1x8x256xbf16>
    %277 = vector.shape_cast %276 : vector<1x8x256xbf16> to vector<8x256xbf16>
    %cst_240 = arith.constant dense<0.000000e+00> : vector<1x256xf32>
    %278 = tpu.matmul %275, %277, %cst_240 {dimension_numbers = #tpu.dot_dimension_numbers<[1], [0], [0], [1], [0, 0, 1, 1], [], []>} : vector<1x8xbf16>, vector<8x256xbf16>, vector<1x256xf32> -> vector<1x256xf32>
    %279 = arith.addf %273, %278 : vector<1x256xf32>
    %280 = vector.extract_strided_slice %250 {offsets = [5, 0], sizes = [1, 8], strides = [1, 1]} : vector<16x128xf32> to vector<1x8xf32>
    %281 = arith.truncf %280 : vector<1x8xf32> to vector<1x8xbf16>
    %c5_241 = arith.constant 5 : index
    %c0_242 = arith.constant 0 : index
    %c0_243 = arith.constant 0 : index
    %282 = vector.load %arg7[%c5_241, %c0_242, %c0_243] : memref<16x8x256xbf16, #tpu.memory_space<vmem>>, vector<1x8x256xbf16>
    %283 = vector.shape_cast %282 : vector<1x8x256xbf16> to vector<8x256xbf16>
    %cst_244 = arith.constant dense<0.000000e+00> : vector<1x256xf32>
    %284 = tpu.matmul %281, %283, %cst_244 {dimension_numbers = #tpu.dot_dimension_numbers<[1], [0], [0], [1], [0, 0, 1, 1], [], []>} : vector<1x8xbf16>, vector<8x256xbf16>, vector<1x256xf32> -> vector<1x256xf32>
    %285 = arith.addf %279, %284 : vector<1x256xf32>
    %286 = vector.extract_strided_slice %250 {offsets = [6, 0], sizes = [1, 8], strides = [1, 1]} : vector<16x128xf32> to vector<1x8xf32>
    %287 = arith.truncf %286 : vector<1x8xf32> to vector<1x8xbf16>
    %c6_245 = arith.constant 6 : index
    %c0_246 = arith.constant 0 : index
    %c0_247 = arith.constant 0 : index
    %288 = vector.load %arg7[%c6_245, %c0_246, %c0_247] : memref<16x8x256xbf16, #tpu.memory_space<vmem>>, vector<1x8x256xbf16>
    %289 = vector.shape_cast %288 : vector<1x8x256xbf16> to vector<8x256xbf16>
    %cst_248 = arith.constant dense<0.000000e+00> : vector<1x256xf32>
    %290 = tpu.matmul %287, %289, %cst_248 {dimension_numbers = #tpu.dot_dimension_numbers<[1], [0], [0], [1], [0, 0, 1, 1], [], []>} : vector<1x8xbf16>, vector<8x256xbf16>, vector<1x256xf32> -> vector<1x256xf32>
    %291 = arith.addf %285, %290 : vector<1x256xf32>
    %292 = vector.extract_strided_slice %250 {offsets = [7, 0], sizes = [1, 8], strides = [1, 1]} : vector<16x128xf32> to vector<1x8xf32>
    %293 = arith.truncf %292 : vector<1x8xf32> to vector<1x8xbf16>
    %c7_249 = arith.constant 7 : index
    %c0_250 = arith.constant 0 : index
    %c0_251 = arith.constant 0 : index
    %294 = vector.load %arg7[%c7_249, %c0_250, %c0_251] : memref<16x8x256xbf16, #tpu.memory_space<vmem>>, vector<1x8x256xbf16>
    %295 = vector.shape_cast %294 : vector<1x8x256xbf16> to vector<8x256xbf16>
    %cst_252 = arith.constant dense<0.000000e+00> : vector<1x256xf32>
    %296 = tpu.matmul %293, %295, %cst_252 {dimension_numbers = #tpu.dot_dimension_numbers<[1], [0], [0], [1], [0, 0, 1, 1], [], []>} : vector<1x8xbf16>, vector<8x256xbf16>, vector<1x256xf32> -> vector<1x256xf32>
    %297 = arith.addf %291, %296 : vector<1x256xf32>
    %298 = vector.extract_strided_slice %250 {offsets = [8, 0], sizes = [1, 8], strides = [1, 1]} : vector<16x128xf32> to vector<1x8xf32>
    %299 = arith.truncf %298 : vector<1x8xf32> to vector<1x8xbf16>
    %c8_253 = arith.constant 8 : index
    %c0_254 = arith.constant 0 : index
    %c0_255 = arith.constant 0 : index
    %300 = vector.load %arg7[%c8_253, %c0_254, %c0_255] : memref<16x8x256xbf16, #tpu.memory_space<vmem>>, vector<1x8x256xbf16>
    %301 = vector.shape_cast %300 : vector<1x8x256xbf16> to vector<8x256xbf16>
    %cst_256 = arith.constant dense<0.000000e+00> : vector<1x256xf32>
    %302 = tpu.matmul %299, %301, %cst_256 {dimension_numbers = #tpu.dot_dimension_numbers<[1], [0], [0], [1], [0, 0, 1, 1], [], []>} : vector<1x8xbf16>, vector<8x256xbf16>, vector<1x256xf32> -> vector<1x256xf32>
    %303 = arith.addf %297, %302 : vector<1x256xf32>
    %304 = vector.extract_strided_slice %250 {offsets = [9, 0], sizes = [1, 8], strides = [1, 1]} : vector<16x128xf32> to vector<1x8xf32>
    %305 = arith.truncf %304 : vector<1x8xf32> to vector<1x8xbf16>
    %c9 = arith.constant 9 : index
    %c0_257 = arith.constant 0 : index
    %c0_258 = arith.constant 0 : index
    %306 = vector.load %arg7[%c9, %c0_257, %c0_258] : memref<16x8x256xbf16, #tpu.memory_space<vmem>>, vector<1x8x256xbf16>
    %307 = vector.shape_cast %306 : vector<1x8x256xbf16> to vector<8x256xbf16>
    %cst_259 = arith.constant dense<0.000000e+00> : vector<1x256xf32>
    %308 = tpu.matmul %305, %307, %cst_259 {dimension_numbers = #tpu.dot_dimension_numbers<[1], [0], [0], [1], [0, 0, 1, 1], [], []>} : vector<1x8xbf16>, vector<8x256xbf16>, vector<1x256xf32> -> vector<1x256xf32>
    %309 = arith.addf %303, %308 : vector<1x256xf32>
    %310 = vector.extract_strided_slice %250 {offsets = [10, 0], sizes = [1, 8], strides = [1, 1]} : vector<16x128xf32> to vector<1x8xf32>
    %311 = arith.truncf %310 : vector<1x8xf32> to vector<1x8xbf16>
    %c10_260 = arith.constant 10 : index
    %c0_261 = arith.constant 0 : index
    %c0_262 = arith.constant 0 : index
    %312 = vector.load %arg7[%c10_260, %c0_261, %c0_262] : memref<16x8x256xbf16, #tpu.memory_space<vmem>>, vector<1x8x256xbf16>
    %313 = vector.shape_cast %312 : vector<1x8x256xbf16> to vector<8x256xbf16>
    %cst_263 = arith.constant dense<0.000000e+00> : vector<1x256xf32>
    %314 = tpu.matmul %311, %313, %cst_263 {dimension_numbers = #tpu.dot_dimension_numbers<[1], [0], [0], [1], [0, 0, 1, 1], [], []>} : vector<1x8xbf16>, vector<8x256xbf16>, vector<1x256xf32> -> vector<1x256xf32>
    %315 = arith.addf %309, %314 : vector<1x256xf32>
    %316 = vector.extract_strided_slice %250 {offsets = [11, 0], sizes = [1, 8], strides = [1, 1]} : vector<16x128xf32> to vector<1x8xf32>
    %317 = arith.truncf %316 : vector<1x8xf32> to vector<1x8xbf16>
    %c11_264 = arith.constant 11 : index
    %c0_265 = arith.constant 0 : index
    %c0_266 = arith.constant 0 : index
    %318 = vector.load %arg7[%c11_264, %c0_265, %c0_266] : memref<16x8x256xbf16, #tpu.memory_space<vmem>>, vector<1x8x256xbf16>
    %319 = vector.shape_cast %318 : vector<1x8x256xbf16> to vector<8x256xbf16>
    %cst_267 = arith.constant dense<0.000000e+00> : vector<1x256xf32>
    %320 = tpu.matmul %317, %319, %cst_267 {dimension_numbers = #tpu.dot_dimension_numbers<[1], [0], [0], [1], [0, 0, 1, 1], [], []>} : vector<1x8xbf16>, vector<8x256xbf16>, vector<1x256xf32> -> vector<1x256xf32>
    %321 = arith.addf %315, %320 : vector<1x256xf32>
    %322 = vector.extract_strided_slice %250 {offsets = [12, 0], sizes = [1, 8], strides = [1, 1]} : vector<16x128xf32> to vector<1x8xf32>
    %323 = arith.truncf %322 : vector<1x8xf32> to vector<1x8xbf16>
    %c12_268 = arith.constant 12 : index
    %c0_269 = arith.constant 0 : index
    %c0_270 = arith.constant 0 : index
    %324 = vector.load %arg7[%c12_268, %c0_269, %c0_270] : memref<16x8x256xbf16, #tpu.memory_space<vmem>>, vector<1x8x256xbf16>
    %325 = vector.shape_cast %324 : vector<1x8x256xbf16> to vector<8x256xbf16>
    %cst_271 = arith.constant dense<0.000000e+00> : vector<1x256xf32>
    %326 = tpu.matmul %323, %325, %cst_271 {dimension_numbers = #tpu.dot_dimension_numbers<[1], [0], [0], [1], [0, 0, 1, 1], [], []>} : vector<1x8xbf16>, vector<8x256xbf16>, vector<1x256xf32> -> vector<1x256xf32>
    %327 = arith.addf %321, %326 : vector<1x256xf32>
    %328 = vector.extract_strided_slice %250 {offsets = [13, 0], sizes = [1, 8], strides = [1, 1]} : vector<16x128xf32> to vector<1x8xf32>
    %329 = arith.truncf %328 : vector<1x8xf32> to vector<1x8xbf16>
    %c13 = arith.constant 13 : index
    %c0_272 = arith.constant 0 : index
    %c0_273 = arith.constant 0 : index
    %330 = vector.load %arg7[%c13, %c0_272, %c0_273] : memref<16x8x256xbf16, #tpu.memory_space<vmem>>, vector<1x8x256xbf16>
    %331 = vector.shape_cast %330 : vector<1x8x256xbf16> to vector<8x256xbf16>
    %cst_274 = arith.constant dense<0.000000e+00> : vector<1x256xf32>
    %332 = tpu.matmul %329, %331, %cst_274 {dimension_numbers = #tpu.dot_dimension_numbers<[1], [0], [0], [1], [0, 0, 1, 1], [], []>} : vector<1x8xbf16>, vector<8x256xbf16>, vector<1x256xf32> -> vector<1x256xf32>
    %333 = arith.addf %327, %332 : vector<1x256xf32>
    %334 = vector.extract_strided_slice %250 {offsets = [14, 0], sizes = [1, 8], strides = [1, 1]} : vector<16x128xf32> to vector<1x8xf32>
    %335 = arith.truncf %334 : vector<1x8xf32> to vector<1x8xbf16>
    %c14 = arith.constant 14 : index
    %c0_275 = arith.constant 0 : index
    %c0_276 = arith.constant 0 : index
    %336 = vector.load %arg7[%c14, %c0_275, %c0_276] : memref<16x8x256xbf16, #tpu.memory_space<vmem>>, vector<1x8x256xbf16>
    %337 = vector.shape_cast %336 : vector<1x8x256xbf16> to vector<8x256xbf16>
    %cst_277 = arith.constant dense<0.000000e+00> : vector<1x256xf32>
    %338 = tpu.matmul %335, %337, %cst_277 {dimension_numbers = #tpu.dot_dimension_numbers<[1], [0], [0], [1], [0, 0, 1, 1], [], []>} : vector<1x8xbf16>, vector<8x256xbf16>, vector<1x256xf32> -> vector<1x256xf32>
    %339 = arith.addf %333, %338 : vector<1x256xf32>
    %340 = vector.extract_strided_slice %250 {offsets = [15, 0], sizes = [1, 8], strides = [1, 1]} : vector<16x128xf32> to vector<1x8xf32>
    %341 = arith.truncf %340 : vector<1x8xf32> to vector<1x8xbf16>
    %c15 = arith.constant 15 : index
    %c0_278 = arith.constant 0 : index
    %c0_279 = arith.constant 0 : index
    %342 = vector.load %arg7[%c15, %c0_278, %c0_279] : memref<16x8x256xbf16, #tpu.memory_space<vmem>>, vector<1x8x256xbf16>
    %343 = vector.shape_cast %342 : vector<1x8x256xbf16> to vector<8x256xbf16>
    %cst_280 = arith.constant dense<0.000000e+00> : vector<1x256xf32>
    %344 = tpu.matmul %341, %343, %cst_280 {dimension_numbers = #tpu.dot_dimension_numbers<[1], [0], [0], [1], [0, 0, 1, 1], [], []>} : vector<1x8xbf16>, vector<8x256xbf16>, vector<1x256xf32> -> vector<1x256xf32>
    %345 = arith.addf %339, %344 : vector<1x256xf32>
    %cst_281 = arith.constant 0.000000e+00 : f32
    %346 = vector.broadcast %cst_281 : f32 to vector<1x256xf32>
    %347 = arith.maximumf %345, %346 : vector<1x256xf32>
    %348 = arith.truncf %347 : vector<1x256xf32> to vector<1x256xbf16>
    %c0_282 = arith.constant 0 : index
    %c0_283 = arith.constant 0 : index
    %349 = vector.load %arg8[%c0_282, %c0_283] : memref<256x128xbf16, #tpu.memory_space<vmem>>, vector<256x128xbf16>
    %cst_284 = arith.constant dense<0.000000e+00> : vector<1x128xf32>
    %350 = tpu.matmul %348, %349, %cst_284 {dimension_numbers = #tpu.dot_dimension_numbers<[1], [0], [0], [1], [0, 0, 1, 1], [], []>} : vector<1x256xbf16>, vector<256x128xbf16>, vector<1x128xf32> -> vector<1x128xf32>
    %cst_285 = arith.constant 0.000000e+00 : f32
    %351 = vector.broadcast %cst_285 : f32 to vector<1x128xf32>
    %352 = arith.maximumf %350, %351 : vector<1x128xf32>
    %353 = vector.shape_cast %352 : vector<1x128xf32> to vector<1x128xf32>
    %354 = vector.broadcast %353 : vector<1x128xf32> to vector<8x128xf32>
    %c0_286 = arith.constant 0 : index
    %c0_287 = arith.constant 0 : index
    %355 = vector.load %arg9[%c0_286, %c0_287] : memref<8x128xf32, #tpu.memory_space<vmem>>, vector<8x128xf32>
    tpu.vector_store %arg9[%c0_286, %c0_287], %354 {strides = array<i32>} : memref<8x128xf32, #tpu.memory_space<vmem>>, vector<8x128xf32>,
    return
  }
  func.func @transform_0(%arg0: i32) -> (i32, i32) {
    %c0_i32 = arith.constant 0 : i32
    %c0_i32_0 = arith.constant 0 : i32
    return %arg0, %c0_i32 : i32, i32
  }
  func.func @transform_1(%arg0: i32) -> (i32, i32) {
    %c0_i32 = arith.constant 0 : i32
    %c0_i32_0 = arith.constant 0 : i32
    %c0_i32_1 = arith.constant 0 : i32
    return %c0_i32, %c0_i32_0 : i32, i32
  }
  func.func @transform_2(%arg0: i32) -> (i32, i32, i32) {
    %c0_i32 = arith.constant 0 : i32
    %c0_i32_0 = arith.constant 0 : i32
    %c0_i32_1 = arith.constant 0 : i32
    %c0_i32_2 = arith.constant 0 : i32
    return %c0_i32, %c0_i32_0, %c0_i32_1 : i32, i32, i32
  }
  func.func @transform_3(%arg0: i32) -> (i32, i32) {
    %c0_i32 = arith.constant 0 : i32
    %c0_i32_0 = arith.constant 0 : i32
    %c0_i32_1 = arith.constant 0 : i32
    return %c0_i32, %c0_i32_0 : i32, i32
  }
  func.func @transform_4(%arg0: i32) -> (i32, i32, i32) {
    %c0_i32 = arith.constant 0 : i32
    %c0_i32_0 = arith.constant 0 : i32
    %c0_i32_1 = arith.constant 0 : i32
    %c0_i32_2 = arith.constant 0 : i32
    return %c0_i32, %c0_i32_0, %c0_i32_1 : i32, i32, i32
  }
  func.func @transform_5(%arg0: i32) -> (i32, i32) {
    %c0_i32 = arith.constant 0 : i32
    %c0_i32_0 = arith.constant 0 : i32
    %c0_i32_1 = arith.constant 0 : i32
    return %c0_i32, %c0_i32_0 : i32, i32
  }
  func.func @transform_6(%arg0: i32) -> (i32, i32, i32) {
    %c0_i32 = arith.constant 0 : i32
    %c0_i32_0 = arith.constant 0 : i32
    %c0_i32_1 = arith.constant 0 : i32
    %c0_i32_2 = arith.constant 0 : i32
    return %c0_i32, %c0_i32_0, %c0_i32_1 : i32, i32, i32
  }
  func.func @transform_7(%arg0: i32) -> (i32, i32) {
    %c0_i32 = arith.constant 0 : i32
    %c0_i32_0 = arith.constant 0 : i32
    %c0_i32_1 = arith.constant 0 : i32
    return %c0_i32, %c0_i32_0 : i32, i32
  }
  func.func @transform_8(%arg0: i32) -> (i32, i32) {
    %c0_i32 = arith.constant 0 : i32
    %c0_i32_0 = arith.constant 0 : i32
    return %arg0, %c0_i32 : i32, i32
  }
}

</mosaic_0001>

<llo_original>
// kernel: proxy_ann_forward.1
$region0: #{proxy_ann_forward.1}
  #allocation0 [shape = 'u32[]', space=smem, size = 0x4, offset = 0x4, fixed_abs, tag = 'smem constant byte address 0x4 - core index']
  #allocation1 [shape = 'u32[144,128]{1,0:T(1,128)}', space=vmem, size = 0x12000, scoped, tag = 'internal scratch']
  #allocation2 [shape = 'f32[368,128]{1,0:T(8,128)}', space=vmem, size = 0x2e000, scoped, tag = 'scratch operand']
  #allocation3 [shape = 'bf16[288,128]{1,0:T(16,128)(2,1)}', space=vmem, size = 0x12000, scoped, tag = 'scratch operand']
  #allocation4 [shape = 'f32[104,128]{1,0:T(8,128)}', space=vmem, size = 0xd000, scoped, tag = 'scratch operand']
  %s0 = inlined_call_operand.vmem [shape: bf16[736,64], index: 0, kind: input, shape index: {}]
  %s1 = inlined_call_operand.vmem [shape: bf16[64,128], index: 1, kind: input, shape index: {}]
  %s2 = inlined_call_operand.vmem [shape: bf16[9,16,128], index: 2, kind: input, shape index: {}]
  %s3 = inlined_call_operand.vmem [shape: bf16[104,288], index: 3, kind: input, shape index: {}]
  %s4 = inlined_call_operand.vmem [shape: bf16[9,16,128], index: 4, kind: input, shape index: {}]
  %s5 = inlined_call_operand.vmem [shape: bf16[16,80], index: 5, kind: input, shape index: {}]
  %s6 = inlined_call_operand.vmem [shape: bf16[16,8,256], index: 6, kind: input, shape index: {}]
  %s7 = inlined_call_operand.vmem [shape: bf16[256,128], index: 7, kind: input, shape index: {}]
  %s8 = inlined_call_operand.vmem [shape: f32[16,128], index: 8, kind: output, shape index: {}]
  %s9 = sld [smem:[#allocation0]]
  $region65: #{proxy_ann_forward.1} parent=0
    _
  %s11 = ssub.s32 1, %s9
  %s12 = scalar_select 0, %s11, %s9
  loop: start=0, step=1, limit=4
  $region2: #{proxy_ann_forward.1} parent=0 // loop_pre_header
    _
  $region3: #{proxy_ann_forward.1} parent=0 // loop_header
    %s14 = sphi 0, %s18
    %p15 = scmp.ge.s32.totalorder %s14, 4
    %s24 = sphi 0, %s26
    %s27 = sphi 0, %s24
    %s28 = sphi 0, %s27
    %s44 = sphi 0, %s28
    %s48 = sphi 0, %s48
    %s50 = sphi 0, %s48
    %s51 = sphi 0, %s50
    %s65 = sphi 0, %s51
    %s69 = sphi 0, %s69
    %s71 = sphi 0, %s69
    %s72 = sphi 0, %s71
    %s86 = sphi 0, %s72
    %s90 = sphi 0, %s90
    %s92 = sphi 0, %s90
    %s93 = sphi 0, %s92
    %s107 = sphi 0, %s93
    %s111 = sphi 0, %s111
    %s113 = sphi 0, %s111
    %s114 = sphi 0, %s113
    %s128 = sphi 0, %s114
    %s132 = sphi 0, %s132
    %s134 = sphi 0, %s132
    %s135 = sphi 0, %s134
    %s149 = sphi 0, %s135
    %s153 = sphi 0, %s153
    %s155 = sphi 0, %s153
    %s156 = sphi 0, %s155
    %s170 = sphi 0, %s156
    %s174 = sphi 0, %s174
    %s176 = sphi 0, %s174
    %s177 = sphi 0, %s176
    %s191 = sphi 0, %s177
    %s197 = sphi 0, %s199
    %s200 = sphi 0, %s197
    %s201 = sphi 0, %s200
    %s217 = sphi 0, %s201
  $region4: #{proxy_ann_forward.1} parent=0 // loop_header_branch
    %17 = sbr.rel (%p15) target = $region8
  $region5: #{proxy_ann_forward.1} parent=0 // loop_body
    %s19 = ssub.s32 %s14, 1
    %s20 = ssub.s32 %s14, 2
    %s21 = sadd.s32 %s14, 1
    %s22 = ssub.s32 %s14, %s21
    %p23 = scmp.eq.s32.totalorder %s22, 0
    %s25 = sadd.s32 %s24, 1
    %s26 = scalar_select %p23, %s24, %s25
    %p29 = pneg %p23
    %p30 = scmp.eq.s32.totalorder %s14, 1
    %p31 = por %p29, %p30
    %p32 = scmp.ne.s32.totalorder %s24, %s27
    %p33 = scmp.eq.s32.totalorder %s14, 0
    %p34 = por %p32, %p33
    %p35 = scmp.ne.s32.totalorder %s24, %s27
    %p36 = scmp.eq.s32.totalorder %s19, 1
    %p37 = por %p35, %p36
    %p38 = scmp.ne.s32.totalorder %s27, %s28
    %p39 = scmp.eq.s32.totalorder %s19, 0
    %p40 = por %p38, %p39
    %p41 = scmp.ne.s32.totalorder %s27, %s28
    %p42 = scmp.eq.s32.totalorder %s20, 1
    %p43 = por %p41, %p42
    %p45 = scmp.ne.s32.totalorder %s28, %s44
    %p46 = scmp.eq.s32.totalorder %s20, 0
    %p47 = por %p45, %p46
    %s49 = sadd.s32 %s48, 1
    %p52 = scmp.eq.s32.totalorder %s14, 1
    %p53 = scmp.ne.s32.totalorder %s48, %s50
    %p54 = scmp.eq.s32.totalorder %s14, 0
    %p55 = por %p53, %p54
    %p56 = scmp.ne.s32.totalorder %s48, %s50
    %p57 = scmp.eq.s32.totalorder %s19, 1
    %p58 = por %p56, %p57
    %p59 = scmp.ne.s32.totalorder %s50, %s51
    %p60 = scmp.eq.s32.totalorder %s19, 0
    %p61 = por %p59, %p60
    %p62 = scmp.ne.s32.totalorder %s50, %s51
    %p63 = scmp.eq.s32.totalorder %s20, 1
    %p64 = por %p62, %p63
    %p66 = scmp.ne.s32.totalorder %s51, %s65
    %p67 = scmp.eq.s32.totalorder %s20, 0
    %p68 = por %p66, %p67
    %s70 = sadd.s32 %s69, 1
    %p73 = scmp.eq.s32.totalorder %s14, 1
    %p74 = scmp.ne.s32.totalorder %s69, %s71
    %p75 = scmp.eq.s32.totalorder %s14, 0
    %p76 = por %p74, %p75
    %p77 = scmp.ne.s32.totalorder %s69, %s71
    %p78 = scmp.eq.s32.totalorder %s19, 1
    %p79 = por %p77, %p78
    %p80 = scmp.ne.s32.totalorder %s71, %s72
    %p81 = scmp.eq.s32.totalorder %s19, 0
    %p82 = por %p80, %p81
    %p83 = scmp.ne.s32.totalorder %s71, %s72
    %p84 = scmp.eq.s32.totalorder %s20, 1
    %p85 = por %p83, %p84
    %p87 = scmp.ne.s32.totalorder %s72, %s86
    %p88 = scmp.eq.s32.totalorder %s20, 0
    %p89 = por %p87, %p88
    %s91 = sadd.s32 %s90, 1
    %p94 = scmp.eq.s32.totalorder %s14, 1
    %p95 = scmp.ne.s32.totalorder %s90, %s92
    %p96 = scmp.eq.s32.totalorder %s14, 0
    %p97 = por %p95, %p96
    %p98 = scmp.ne.s32.totalorder %s90, %s92
    %p99 = scmp.eq.s32.totalorder %s19, 1
    %p100 = por %p98, %p99
    %p101 = scmp.ne.s32.totalorder %s92, %s93
    %p102 = scmp.eq.s32.totalorder %s19, 0
    %p103 = por %p101, %p102
    %p104 = scmp.ne.s32.totalorder %s92, %s93
    %p105 = scmp.eq.s32.totalorder %s20, 1
    %p106 = por %p104, %p105
    %p108 = scmp.ne.s32.totalorder %s93, %s107
    %p109 = scmp.eq.s32.totalorder %s20, 0
    %p110 = por %p108, %p109
    %s112 = sadd.s32 %s111, 1
    %p115 = scmp.eq.s32.totalorder %s14, 1
    %p116 = scmp.ne.s32.totalorder %s111, %s113
    %p117 = scmp.eq.s32.totalorder %s14, 0
    %p118 = por %p116, %p117
    %p119 = scmp.ne.s32.totalorder %s111, %s113
    %p120 = scmp.eq.s32.totalorder %s19, 1
    %p121 = por %p119, %p120
    %p122 = scmp.ne.s32.totalorder %s113, %s114
    %p123 = scmp.eq.s32.totalorder %s19, 0
    %p124 = por %p122, %p123
    %p125 = scmp.ne.s32.totalorder %s113, %s114
    %p126 = scmp.eq.s32.totalorder %s20, 1
    %p127 = por %p125, %p126
    %p129 = scmp.ne.s32.totalorder %s114, %s128
    %p130 = scmp.eq.s32.totalorder %s20, 0
    %p131 = por %p129, %p130
    %s133 = sadd.s32 %s132, 1
    %p136 = scmp.eq.s32.totalorder %s14, 1
    %p137 = scmp.ne.s32.totalorder %s132, %s134
    %p138 = scmp.eq.s32.totalorder %s14, 0
    %p139 = por %p137, %p138
    %p140 = scmp.ne.s32.totalorder %s132, %s134
    %p141 = scmp.eq.s32.totalorder %s19, 1
    %p142 = por %p140, %p141
    %p143 = scmp.ne.s32.totalorder %s134, %s135
    %p144 = scmp.eq.s32.totalorder %s19, 0
    %p145 = por %p143, %p144
    %p146 = scmp.ne.s32.totalorder %s134, %s135
    %p147 = scmp.eq.s32.totalorder %s20, 1
    %p148 = por %p146, %p147
    %p150 = scmp.ne.s32.totalorder %s135, %s149
    %p151 = scmp.eq.s32.totalorder %s20, 0
    %p152 = por %p150, %p151
    %s154 = sadd.s32 %s153, 1
    %p157 = scmp.eq.s32.totalorder %s14, 1
    %p158 = scmp.ne.s32.totalorder %s153, %s155
    %p159 = scmp.eq.s32.totalorder %s14, 0
    %p160 = por %p158, %p159
    %p161 = scmp.ne.s32.totalorder %s153, %s155
    %p162 = scmp.eq.s32.totalorder %s19, 1
    %p163 = por %p161, %p162
    %p164 = scmp.ne.s32.totalorder %s155, %s156
    %p165 = scmp.eq.s32.totalorder %s19, 0
    %p166 = por %p164, %p165
    %p167 = scmp.ne.s32.totalorder %s155, %s156
    %p168 = scmp.eq.s32.totalorder %s20, 1
    %p169 = por %p167, %p168
    %p171 = scmp.ne.s32.totalorder %s156, %s170
    %p172 = scmp.eq.s32.totalorder %s20, 0
    %p173 = por %p171, %p172
    %s175 = sadd.s32 %s174, 1
    %p178 = scmp.eq.s32.totalorder %s14, 1
    %p179 = scmp.ne.s32.totalorder %s174, %s176
    %p180 = scmp.eq.s32.totalorder %s14, 0
    %p181 = por %p179, %p180
    %p182 = scmp.ne.s32.totalorder %s174, %s176
    %p183 = scmp.eq.s32.totalorder %s19, 1
    %p184 = por %p182, %p183
    %p185 = scmp.ne.s32.totalorder %s176, %s177
    %p186 = scmp.eq.s32.totalorder %s19, 0
    %p187 = por %p185, %p186
    %p188 = scmp.ne.s32.totalorder %s176, %s177
    %p189 = scmp.eq.s32.totalorder %s20, 1
    %p190 = por %p188, %p189
    %p192 = scmp.ne.s32.totalorder %s177, %s191
    %p193 = scmp.eq.s32.totalorder %s20, 0
    %p194 = por %p192, %p193
    %s195 = ssub.s32 %s14, %s21
    %p196 = scmp.eq.s32.totalorder %s195, 0
    %s198 = sadd.s32 %s197, 1
    %s199 = scalar_select %p196, %s197, %s198
    %p202 = pneg %p196
    %p203 = scmp.eq.s32.totalorder %s14, 1
    %p204 = por %p202, %p203
    %p205 = scmp.ne.s32.totalorder %s197, %s200
    %p206 = scmp.eq.s32.totalorder %s14, 0
    %p207 = por %p205, %p206
    %p208 = scmp.ne.s32.totalorder %s197, %s200
    %p209 = scmp.eq.s32.totalorder %s19, 1
    %p210 = por %p208, %p209
    %p211 = scmp.ne.s32.totalorder %s200, %s201
    %p212 = scmp.eq.s32.totalorder %s19, 0
    %p213 = por %p211, %p212
    %p214 = scmp.ne.s32.totalorder %s200, %s201
    %p215 = scmp.eq.s32.totalorder %s20, 1
    %p216 = por %p214, %p215
    %p218 = scmp.ne.s32.totalorder %s201, %s217
    %p219 = scmp.eq.s32.totalorder %s20, 0
    %p220 = por %p218, %p219
    %p221 = scmp.le.s32.totalorder 1, %s14
    %p222 = scmp.lt.s32.totalorder %s14, 3
    %p223 = pnand %p221, %p222
    %p224 = pneg %p223
    // Predicated region
    $region9: #{proxy_ann_forward.1} parent=5 // pred_check
      _
    $region10: #{proxy_ann_forward.1} parent=5 // pred_check_branch
      %226 = sbr.rel (%p223) target = $region12
    $region11: #{proxy_ann_forward.1} parent=5 // pred_region
      %s227 = ssub.s32 %s14, 1
      // Predicated region
      $region13: #{proxy_ann_forward.1} parent=11 // pred_check
        %p228 = pneg %p61
      $region14: #{proxy_ann_forward.1} parent=11 // pred_check_branch
        %230 = sbr.rel (%p228) target = $region16
      $region15: #{proxy_ann_forward.1} parent=11 // pred_region
        _
      $region16: #{proxy_ann_forward.1} parent=11 // pred_fallthru
        _
      // Predicated region
      $region17: #{proxy_ann_forward.1} parent=11 // pred_check
        %p231 = pneg %p82
      $region18: #{proxy_ann_forward.1} parent=11 // pred_check_branch
        %233 = sbr.rel (%p231) target = $region20
      $region19: #{proxy_ann_forward.1} parent=11 // pred_region
        _
      $region20: #{proxy_ann_forward.1} parent=11 // pred_fallthru
        _
      // Predicated region
      $region21: #{proxy_ann_forward.1} parent=11 // pred_check
        %p234 = pneg %p103
      $region22: #{proxy_ann_forward.1} parent=11 // pred_check_branch
        %236 = sbr.rel (%p234) target = $region24
      $region23: #{proxy_ann_forward.1} parent=11 // pred_region
        _
      $region24: #{proxy_ann_forward.1} parent=11 // pred_fallthru
        _
      // Predicated region
      $region25: #{proxy_ann_forward.1} parent=11 // pred_check
        %p237 = pneg %p124
      $region26: #{proxy_ann_forward.1} parent=11 // pred_check_branch
        %239 = sbr.rel (%p237) target = $region28
      $region27: #{proxy_ann_forward.1} parent=11 // pred_region
        _
      $region28: #{proxy_ann_forward.1} parent=11 // pred_fallthru
        _
      // Predicated region
      $region29: #{proxy_ann_forward.1} parent=11 // pred_check
        %p240 = pneg %p145
      $region30: #{proxy_ann_forward.1} parent=11 // pred_check_branch
        %242 = sbr.rel (%p240) target = $region32
      $region31: #{proxy_ann_forward.1} parent=11 // pred_region
        _
      $region32: #{proxy_ann_forward.1} parent=11 // pred_fallthru
        _
      // Predicated region
      $region33: #{proxy_ann_forward.1} parent=11 // pred_check
        %p243 = pneg %p166
      $region34: #{proxy_ann_forward.1} parent=11 // pred_check_branch
        %245 = sbr.rel (%p243) target = $region36
      $region35: #{proxy_ann_forward.1} parent=11 // pred_region
        _
      $region36: #{proxy_ann_forward.1} parent=11 // pred_fallthru
        _
      // Predicated region
      $region37: #{proxy_ann_forward.1} parent=11 // pred_check
        %p246 = pneg %p187
      $region38: #{proxy_ann_forward.1} parent=11 // pred_check_branch
        %248 = sbr.rel (%p246) target = $region40
      $region39: #{proxy_ann_forward.1} parent=11 // pred_region
        _
      $region40: #{proxy_ann_forward.1} parent=11 // pred_fallthru
        _
    $region12: #{proxy_ann_forward.1} parent=5 // pred_fallthru
      _
    %p249 = scmp.lt.s32.totalorder %s14, 2
    // Predicated region
    $region41: #{proxy_ann_forward.1} parent=5 // pred_check
      %p250 = pneg %p249
    $region42: #{proxy_ann_forward.1} parent=5 // pred_check_branch
      %252 = sbr.rel (%p250) target = $region44
    $region43: #{proxy_ann_forward.1} parent=5 // pred_region
      // Predicated region
      $region45: #{proxy_ann_forward.1} parent=43 // pred_check
        %p253 = pneg %p34
      $region46: #{proxy_ann_forward.1} parent=43 // pred_check_branch
        %255 = sbr.rel (%p253) target = $region48
      $region47: #{proxy_ann_forward.1} parent=43 // pred_region
        %s256 = smul.u32 46, %s14
        %p257 = scmp.lt.s32.totalorder %s256, 91
        %s258 = scalar_select %p257, %s256, 91
        %s259 = smul.addr %s258, 4
        %s260 = scalar_lea.vmem %s0, %s259
        %s261 = smul.u32 46, %s14
      $region48: #{proxy_ann_forward.1} parent=43 // pred_fallthru
        _
    $region44: #{proxy_ann_forward.1} parent=5 // pred_fallthru
      _
    %p262 = scmp.le.s32.totalorder 1, %s14
    %p263 = scmp.lt.s32.totalorder %s14, 3
    %p264 = pnand %p262, %p263
    %p265 = pneg %p264
    // Predicated region
    $region49: #{proxy_ann_forward.1} parent=5 // pred_check
      _
    $region50: #{proxy_ann_forward.1} parent=5 // pred_check_branch
      %267 = sbr.rel (%p264) target = $region52
    $region51: #{proxy_ann_forward.1} parent=5 // pred_region
      %s268 = ssub.s32 %s14, 1
      %s269 = smul.u32 46, %s19
      %p270 = scmp.lt.s32.totalorder %s269, 91
      %s271 = scalar_select %p270, %s269, 91
      %s272 = smul.addr %s271, 4
      %s273 = scalar_lea.vmem %s0, %s272
      %p274 = pneg %p40
      %p275 = pneg %p37
      %p276 = pneg %p61
      %p277 = pneg %p58
      %p278 = pneg %p82
      %p279 = pneg %p79
      %p280 = pneg %p103
      %p281 = pneg %p100
      %p282 = pneg %p124
      %p283 = pneg %p121
      %p284 = pneg %p145
      %p285 = pneg %p142
      %p286 = pneg %p166
      %p287 = pneg %p163
      %p288 = pneg %p187
      %p289 = pneg %p184
      %p290 = pneg %p213
      %p291 = pneg %p210
      %p292 = scmp.lt.s32.totalorder %s19, 1
      %s293 = scalar_select %p292, %s19, 1
      %s294 = smul.addr %s293, 8
      %s295 = scalar_lea.vmem %s8, %s294
      %s296 = smul.u32 46, %s19
      %p297 = scmp.lt.s32.totalorder %s296, 91
      %s298 = scalar_select %p297, %s296, 91
      %s299 = smul.addr %s298, 4
      %s300 = scalar_lea.vmem %s0, %s299
      %s301 = smul.u32 46, %s19
      %p302 = scmp.lt.s32.totalorder %s19, 1
      %s303 = scalar_select %p302, %s19, 1
      %s304 = smul.addr %s303, 8
      %s305 = scalar_lea.vmem %s8, %s304
      %v307 = vld [vmem:[%s300] sm:$0xf]
      %v308 = vld [vmem:[%s300 + $0x4] sm:$0xf]
      %v309 = vld [vmem:[%s300 + $0x8] sm:$0xf]
      %v310 = vld [vmem:[%s300 + $0xc] sm:$0xf]
      %v311 = vld [vmem:[%s300 + $0x10] sm:$0xf]
      %v312 = vld [vmem:[%s300 + $0x14] sm:$0xf]
      %v313 = vld [vmem:[%s300 + $0x18] sm:$0xf]
      %v314 = vld [vmem:[%s300 + $0x1c] sm:$0xf]
      %v315 = vld [vmem:[%s300 + $0x20] sm:$0xf]
      %v316 = vld [vmem:[%s300 + $0x24] sm:$0xf]
      %v317 = vld [vmem:[%s300 + $0x28] sm:$0xf]
      %v318 = vld [vmem:[%s300 + $0x2c] sm:$0xf]
      %v319 = vld [vmem:[%s300 + $0x30] sm:$0xf]
      %v320 = vld [vmem:[%s300 + $0x34] sm:$0xf]
      %v321 = vld [vmem:[%s300 + $0x38] sm:$0xf]
      %v322 = vld [vmem:[%s300 + $0x3c] sm:$0xf]
      %v323 = vld [vmem:[%s1] sm:$0xf]
      %v324 = vld [vmem:[%s1 + $0x4] sm:$0xf]
      %v325 = vld [vmem:[%s1 + $0x8] sm:$0xf]
      %v326 = vld [vmem:[%s1 + $0xc] sm:$0xf]
      %v327 = vld [vmem:[%s1 + $0x10] sm:$0xf]
      %v328 = vld [vmem:[%s1 + $0x14] sm:$0xf]
      %v329 = vld [vmem:[%s1 + $0x18] sm:$0xf]
      %v330 = vld [vmem:[%s1 + $0x1c] sm:$0xf]
      %v347 = vunpack.c.l.b16 %v307
      %v348 = vunpack.c.l.b16 %v308
      %v349 = vunpack.c.l.b16 %v309
      %v350 = vunpack.c.l.b16 %v310
      %v351 = vunpack.c.l.b16 %v311
      %v352 = vunpack.c.l.b16 %v312
      %v353 = vunpack.c.l.b16 %v313
      %v354 = vunpack.c.l.b16 %v314
      %v355 = vunpack.c.l.b16 %v315
      %v356 = vunpack.c.l.b16 %v316
      %v357 = vunpack.c.l.b16 %v317
      %v358 = vunpack.c.l.b16 %v318
      %v359 = vunpack.c.l.b16 %v319
      %v360 = vunpack.c.l.b16 %v320
      %v361 = vunpack.c.l.b16 %v321
      %v362 = vunpack.c.l.b16 %v322
      %v363 = vpack.c.b16 %v348, %v347
      %v364 = vpack.c.b16 %v350, %v349
      %v365 = vpack.c.b16 %v352, %v351
      %v366 = vpack.c.b16 %v354, %v353
      %v367 = vpack.c.b16 %v356, %v355
      %v368 = vpack.c.b16 %v358, %v357
      %v369 = vpack.c.b16 %v360, %v359
      %v370 = vpack.c.b16 %v362, %v361
      %v379 = vunpack.c.l.b16 %v323
      %v380 = vunpack.c.l.b16 %v324
      %v381 = vunpack.c.l.b16 %v325
      %v382 = vunpack.c.l.b16 %v326
      %v383 = vunpack.c.l.b16 %v327
      %v384 = vunpack.c.l.b16 %v328
      %v385 = vunpack.c.l.b16 %v329
      %v386 = vunpack.c.l.b16 %v330
      %v387 = vpack.c.b16 %v380, %v379
      %v388 = vpack.c.b16 %v382, %v381
      %v389 = vpack.c.b16 %v384, %v383
      %v390 = vpack.c.b16 %v386, %v385
      %vm395 = vcmask 523264
      %v397 = vsel %vm395, %v363, 0
      %v400 = vsel %vm395, %v364, 0
      %v403 = vsel %vm395, %v365, 0
      %v406 = vsel %vm395, %v366, 0
      %v409 = vsel %vm395, %v367, 0
      %v412 = vsel %vm395, %v368, 0
      %v415 = vsel %vm395, %v369, 0
      %v418 = vsel %vm395, %v370, 0
      %420 = vmatprep.subr.bf16.mxu0 0
      %421 = vmatpush1.bf16.msra.mxu0 %v387
      %422 = vmatprep.subr.bf16.mxu0 0
      %423 = vmatpush1.bf16.msra.mxu0 %v388
      %424 = vmatprep.subr.bf16.mxu0 0
      %425 = vmatpush1.bf16.msra.mxu0 %v389
      %426 = vmatprep.subr.bf16.mxu0 0
      %427 = vmatpush1.bf16.msra.mxu0 %v390
      %428 = vmatprep.subr.bf16.mxu0 0
      %429 = vmatpush1.bf16.msra.mxu0 0
      %430 = vmatprep.subr.bf16.mxu0 0
      %431 = vmatpush1.bf16.msra.mxu0 0
      %432 = vmatprep.subr.bf16.mxu0 0
      %433 = vmatpush1.bf16.msra.mxu0 0
      %434 = vmatprep.subr.bf16.mxu0 0
      %435 = vmatpush1.bf16.msra.mxu0 0
      %436 = vmatprep.subr.bf16.mxu0 0
      %437 = vmatpush1.bf16.msra.mxu0 0
      %438 = vmatprep.subr.bf16.mxu0 0
      %439 = vmatpush1.bf16.msra.mxu0 0
      %440 = vmatprep.subr.bf16.mxu0 0
      %441 = vmatpush1.bf16.msra.mxu0 0
      %442 = vmatprep.subr.bf16.mxu0 0
      %443 = vmatpush1.bf16.msra.mxu0 0
      %444 = vmatprep.subr.bf16.mxu0 0
      %445 = vmatpush1.bf16.msra.mxu0 0
      %446 = vmatprep.subr.bf16.mxu0 0
      %447 = vmatpush1.bf16.msra.mxu0 0
      %448 = vmatprep.subr.bf16.mxu0 0
      %449 = vmatpush1.bf16.msra.mxu0 0
      %450 = vmatprep.subr.bf16.mxu0 0
      %451 = vmatpush1.bf16.msra.mxu0 0
      %452 = vmatprep.mubr.bf16.mxu0 0
      %453 = vmatmul.mubr.bf16.gmra.mrb[0].mxu0 %v397
      %v454 = vpop.f32.mrb[0].mxu0
      %v455 = vadd.f32 0.0, %v454
      %v456 = vpop.f32.mrb[0].mxu0
      %v457 = vpop.f32.mrb[0].mxu0
      %v458 = vadd.f32 0.0, %v457
      %v459 = vpop.f32.mrb[0].mxu0
      %460 = vmatprep.mubr.bf16.mxu0 0
      %461 = vmatmul.mubr.bf16.gmra.mrb[0].mxu0 %v400
      %v462 = vpop.f32.mrb[0].mxu0
      %v463 = vadd.f32 0.0, %v462
      %v464 = vpop.f32.mrb[0].mxu0
      %v465 = vpop.f32.mrb[0].mxu0
      %v466 = vadd.f32 0.0, %v465
      %v467 = vpop.f32.mrb[0].mxu0
      %468 = vmatprep.mubr.bf16.mxu0 0
      %469 = vmatmul.mubr.bf16.gmra.mrb[0].mxu0 %v403
      %v470 = vpop.f32.mrb[0].mxu0
      %v471 = vadd.f32 0.0, %v470
      %v472 = vpop.f32.mrb[0].mxu0
      %v473 = vpop.f32.mrb[0].mxu0
      %v474 = vadd.f32 0.0, %v473
      %v475 = vpop.f32.mrb[0].mxu0
      %476 = vmatprep.mubr.bf16.mxu0 0
      %477 = vmatmul.mubr.bf16.gmra.mrb[0].mxu0 %v406
      %v478 = vpop.f32.mrb[0].mxu0
      %v479 = vadd.f32 0.0, %v478
      %v480 = vpop.f32.mrb[0].mxu0
      %v481 = vpop.f32.mrb[0].mxu0
      %v482 = vadd.f32 0.0, %v481
      %v483 = vpop.f32.mrb[0].mxu0
      %484 = vmatprep.mubr.bf16.mxu0 0
      %485 = vmatmul.mubr.bf16.gmra.mrb[0].mxu0 %v409
      %v486 = vpop.f32.mrb[0].mxu0
      %v487 = vadd.f32 0.0, %v486
      %v488 = vpop.f32.mrb[0].mxu0
      %v489 = vpop.f32.mrb[0].mxu0
      %v490 = vadd.f32 0.0, %v489
      %v491 = vpop.f32.mrb[0].mxu0
      %492 = vmatprep.mubr.bf16.mxu0 0
      %493 = vmatmul.mubr.bf16.gmra.mrb[0].mxu0 %v412
      %v494 = vpop.f32.mrb[0].mxu0
      %v495 = vadd.f32 0.0, %v494
      %v496 = vpop.f32.mrb[0].mxu0
      %v497 = vpop.f32.mrb[0].mxu0
      %v498 = vadd.f32 0.0, %v497
      %v499 = vpop.f32.mrb[0].mxu0
      %500 = vmatprep.mubr.bf16.mxu0 0
      %501 = vmatmul.mubr.bf16.gmra.mrb[0].mxu0 %v415
      %v502 = vpop.f32.mrb[0].mxu0
      %v503 = vadd.f32 0.0, %v502
      %v504 = vpop.f32.mrb[0].mxu0
      %v505 = vpop.f32.mrb[0].mxu0
      %v506 = vadd.f32 0.0, %v505
      %v507 = vpop.f32.mrb[0].mxu0
      %508 = vmatprep.mubr.bf16.mxu0 0
      %509 = vmatmul.mubr.bf16.gmra.mrb[0].mxu0 %v418
      %v510 = vpop.f32.mrb[0].mxu0
      %v511 = vadd.f32 0.0, %v510
      %v512 = vpop.f32.mrb[0].mxu0
      %v513 = vpop.f32.mrb[0].mxu0
      %v514 = vadd.f32 0.0, %v513
      %v515 = vpop.f32.mrb[0].mxu0
      %516 = vdwg.mxu0
      %v517 = vmax.f32 %v455, 0.0
      %v518 = vmax.f32 %v458, 0.0
      %v519 = vmax.f32 %v463, 0.0
      %v520 = vmax.f32 %v466, 0.0
      %v521 = vmax.f32 %v471, 0.0
      %v522 = vmax.f32 %v474, 0.0
      %v523 = vmax.f32 %v479, 0.0
      %v524 = vmax.f32 %v482, 0.0
      %v525 = vmax.f32 %v487, 0.0
      %v526 = vmax.f32 %v490, 0.0
      %v527 = vmax.f32 %v495, 0.0
      %v528 = vmax.f32 %v498, 0.0
      %v529 = vmax.f32 %v503, 0.0
      %v530 = vmax.f32 %v506, 0.0
      %v531 = vmax.f32 %v511, 0.0
      %v532 = vmax.f32 %v514, 0.0
      %533 = vst [vmem:[#allocation2] sm:$0xff] %v517
      %534 = vst [vmem:[#allocation2 + $0x8] sm:$0xff] %v518
      %535 = vst [vmem:[#allocation2 + $0x10] sm:$0xff] %v519
      %536 = vst [vmem:[#allocation2 + $0x18] sm:$0xff] %v520
      %537 = vst [vmem:[#allocation2 + $0x20] sm:$0xff] %v521
      %538 = vst [vmem:[#allocation2 + $0x28] sm:$0xff] %v522
      %539 = vst [vmem:[#allocation2 + $0x30] sm:$0xff] %v523
      %540 = vst [vmem:[#allocation2 + $0x38] sm:$0xff] %v524
      %541 = vst [vmem:[#allocation2 + $0x40] sm:$0xff] %v525
      %542 = vst [vmem:[#allocation2 + $0x48] sm:$0xff] %v526
      %543 = vst [vmem:[#allocation2 + $0x50] sm:$0xff] %v527
      %544 = vst [vmem:[#allocation2 + $0x58] sm:$0xff] %v528
      %545 = vst [vmem:[#allocation2 + $0x60] sm:$0xff] %v529
      %546 = vst [vmem:[#allocation2 + $0x68] sm:$0xff] %v530
      %547 = vst [vmem:[#allocation2 + $0x70] sm:$0xff] %v531
      %548 = vst [vmem:[#allocation2 + $0x78] sm:$0xff] %v532
      %v549 = vld [vmem:[%s300 + $0x40] sm:$0xf]
      %v550 = vld [vmem:[%s300 + $0x44] sm:$0xf]
      %v551 = vld [vmem:[%s300 + $0x48] sm:$0xf]
      %v552 = vld [vmem:[%s300 + $0x4c] sm:$0xf]
      %v553 = vld [vmem:[%s300 + $0x50] sm:$0xf]
      %v554 = vld [vmem:[%s300 + $0x54] sm:$0xf]
      %v555 = vld [vmem:[%s300 + $0x58] sm:$0xf]
      %v556 = vld [vmem:[%s300 + $0x5c] sm:$0xf]
      %v557 = vld [vmem:[%s300 + $0x60] sm:$0xf]
      %v558 = vld [vmem:[%s300 + $0x64] sm:$0xf]
      %v559 = vld [vmem:[%s300 + $0x68] sm:$0xf]
      %v560 = vld [vmem:[%s300 + $0x6c] sm:$0xf]
      %v561 = vld [vmem:[%s300 + $0x70] sm:$0xf]
      %v562 = vld [vmem:[%s300 + $0x74] sm:$0xf]
      %v563 = vld [vmem:[%s300 + $0x78] sm:$0xf]
      %v564 = vld [vmem:[%s300 + $0x7c] sm:$0xf]
      %v565 = vld [vmem:[%s1] sm:$0xf]
      %v566 = vld [vmem:[%s1 + $0x4] sm:$0xf]
      %v567 = vld [vmem:[%s1 + $0x8] sm:$0xf]
      %v568 = vld [vmem:[%s1 + $0xc] sm:$0xf]
      %v569 = vld [vmem:[%s1 + $0x10] sm:$0xf]
      %v570 = vld [vmem:[%s1 + $0x14] sm:$0xf]
      %v571 = vld [vmem:[%s1 + $0x18] sm:$0xf]
      %v572 = vld [vmem:[%s1 + $0x1c] sm:$0xf]
      %v589 = vunpack.c.l.b16 %v549
      %v590 = vunpack.c.l.b16 %v550
      %v591 = vunpack.c.l.b16 %v551
      %v592 = vunpack.c.l.b16 %v552
      %v593 = vunpack.c.l.b16 %v553
      %v594 = vunpack.c.l.b16 %v554
      %v595 = vunpack.c.l.b16 %v555
      %v596 = vunpack.c.l.b16 %v556
      %v597 = vunpack.c.l.b16 %v557
      %v598 = vunpack.c.l.b16 %v558
      %v599 = vunpack.c.l.b16 %v559
      %v600 = vunpack.c.l.b16 %v560
      %v601 = vunpack.c.l.b16 %v561
      %v602 = vunpack.c.l.b16 %v562
      %v603 = vunpack.c.l.b16 %v563
      %v604 = vunpack.c.l.b16 %v564
      %v605 = vpack.c.b16 %v590, %v589
      %v606 = vpack.c.b16 %v592, %v591
      %v607 = vpack.c.b16 %v594, %v593
      %v608 = vpack.c.b16 %v596, %v595
      %v609 = vpack.c.b16 %v598, %v597
      %v610 = vpack.c.b16 %v600, %v599
      %v611 = vpack.c.b16 %v602, %v601
      %v612 = vpack.c.b16 %v604, %v603
      %v621 = vunpack.c.l.b16 %v565
      %v622 = vunpack.c.l.b16 %v566
      %v623 = vunpack.c.l.b16 %v567
      %v624 = vunpack.c.l.b16 %v568
      %v625 = vunpack.c.l.b16 %v569
      %v626 = vunpack.c.l.b16 %v570
      %v627 = vunpack.c.l.b16 %v571
      %v628 = vunpack.c.l.b16 %v572
      %v629 = vpack.c.b16 %v622, %v621
      %v630 = vpack.c.b16 %v624, %v623
      %v631 = vpack.c.b16 %v626, %v625
      %v632 = vpack.c.b16 %v628, %v627
      %v638 = vsel %vm395, %v605, 0
      %v641 = vsel %vm395, %v606, 0
      %v644 = vsel %vm395, %v607, 0
      %v647 = vsel %vm395, %v608, 0
      %v650 = vsel %vm395, %v609, 0
      %v653 = vsel %vm395, %v610, 0
      %v656 = vsel %vm395, %v611, 0
      %v659 = vsel %vm395, %v612, 0
      %661 = vmatprep.subr.bf16.mxu0 0
      %662 = vmatpush1.bf16.msra.mxu0 %v629
      %663 = vmatprep.subr.bf16.mxu0 0
      %664 = vmatpush1.bf16.msra.mxu0 %v630
      %665 = vmatprep.subr.bf16.mxu0 0
      %666 = vmatpush1.bf16.msra.mxu0 %v631
      %667 = vmatprep.subr.bf16.mxu0 0
      %668 = vmatpush1.bf16.msra.mxu0 %v632
      %669 = vmatprep.subr.bf16.mxu0 0
      %670 = vmatpush1.bf16.msra.mxu0 0
      %671 = vmatprep.subr.bf16.mxu0 0
      %672 = vmatpush1.bf16.msra.mxu0 0
      %673 = vmatprep.subr.bf16.mxu0 0
      %674 = vmatpush1.bf16.msra.mxu0 0
      %675 = vmatprep.subr.bf16.mxu0 0
      %676 = vmatpush1.bf16.msra.mxu0 0
      %677 = vmatprep.subr.bf16.mxu0 0
      %678 = vmatpush1.bf16.msra.mxu0 0
      %679 = vmatprep.subr.bf16.mxu0 0
      %680 = vmatpush1.bf16.msra.mxu0 0
      %681 = vmatprep.subr.bf16.mxu0 0
      %682 = vmatpush1.bf16.msra.mxu0 0
      %683 = vmatprep.subr.bf16.mxu0 0
      %684 = vmatpush1.bf16.msra.mxu0 0
      %685 = vmatprep.subr.bf16.mxu0 0
      %686 = vmatpush1.bf16.msra.mxu0 0
      %687 = vmatprep.subr.bf16.mxu0 0
      %688 = vmatpush1.bf16.msra.mxu0 0
      %689 = vmatprep.subr.bf16.mxu0 0
      %690 = vmatpush1.bf16.msra.mxu0 0
      %691 = vmatprep.subr.bf16.mxu0 0
      %692 = vmatpush1.bf16.msra.mxu0 0
      %693 = vmatprep.mubr.bf16.mxu0 0
      %694 = vmatmul.mubr.bf16.gmra.mrb[0].mxu0 %v638
      %v695 = vpop.f32.mrb[0].mxu0
      %v696 = vadd.f32 0.0, %v695
      %v697 = vpop.f32.mrb[0].mxu0
      %v698 = vpop.f32.mrb[0].mxu0
      %v699 = vadd.f32 0.0, %v698
      %v700 = vpop.f32.mrb[0].mxu0
      %701 = vmatprep.mubr.bf16.mxu0 0
      %702 = vmatmul.mubr.bf16.gmra.mrb[0].mxu0 %v641
      %v703 = vpop.f32.mrb[0].mxu0
      %v704 = vadd.f32 0.0, %v703
      %v705 = vpop.f32.mrb[0].mxu0
      %v706 = vpop.f32.mrb[0].mxu0
      %v707 = vadd.f32 0.0, %v706
      %v708 = vpop.f32.mrb[0].mxu0
      %709 = vmatprep.mubr.bf16.mxu0 0
      %710 = vmatmul.mubr.bf16.gmra.mrb[0].mxu0 %v644
      %v711 = vpop.f32.mrb[0].mxu0
      %v712 = vadd.f32 0.0, %v711
      %v713 = vpop.f32.mrb[0].mxu0
      %v714 = vpop.f32.mrb[0].mxu0
      %v715 = vadd.f32 0.0, %v714
      %v716 = vpop.f32.mrb[0].mxu0
      %717 = vmatprep.mubr.bf16.mxu0 0
      %718 = vmatmul.mubr.bf16.gmra.mrb[0].mxu0 %v647
      %v719 = vpop.f32.mrb[0].mxu0
      %v720 = vadd.f32 0.0, %v719
      %v721 = vpop.f32.mrb[0].mxu0
      %v722 = vpop.f32.mrb[0].mxu0
      %v723 = vadd.f32 0.0, %v722
      %v724 = vpop.f32.mrb[0].mxu0
      %725 = vmatprep.mubr.bf16.mxu0 0
      %726 = vmatmul.mubr.bf16.gmra.mrb[0].mxu0 %v650
      %v727 = vpop.f32.mrb[0].mxu0
      %v728 = vadd.f32 0.0, %v727
      %v729 = vpop.f32.mrb[0].mxu0
      %v730 = vpop.f32.mrb[0].mxu0
      %v731 = vadd.f32 0.0, %v730
      %v732 = vpop.f32.mrb[0].mxu0
      %733 = vmatprep.mubr.bf16.mxu0 0
      %734 = vmatmul.mubr.bf16.gmra.mrb[0].mxu0 %v653
      %v735 = vpop.f32.mrb[0].mxu0
      %v736 = vadd.f32 0.0, %v735
      %v737 = vpop.f32.mrb[0].mxu0
      %v738 = vpop.f32.mrb[0].mxu0
      %v739 = vadd.f32 0.0, %v738
      %v740 = vpop.f32.mrb[0].mxu0
      %741 = vmatprep.mubr.bf16.mxu0 0
      %742 = vmatmul.mubr.bf16.gmra.mrb[0].mxu0 %v656
      %v743 = vpop.f32.mrb[0].mxu0
      %v744 = vadd.f32 0.0, %v743
      %v745 = vpop.f32.mrb[0].mxu0
      %v746 = vpop.f32.mrb[0].mxu0
      %v747 = vadd.f32 0.0, %v746
      %v748 = vpop.f32.mrb[0].mxu0
      %749 = vmatprep.mubr.bf16.mxu0 0
      %750 = vmatmul.mubr.bf16.gmra.mrb[0].mxu0 %v659
      %v751 = vpop.f32.mrb[0].mxu0
      %v752 = vadd.f32 0.0, %v751
      %v753 = vpop.f32.mrb[0].mxu0
      %v754 = vpop.f32.mrb[0].mxu0
      %v755 = vadd.f32 0.0, %v754
      %v756 = vpop.f32.mrb[0].mxu0
      %757 = vdwg.mxu0
      %v758 = vmax.f32 %v696, 0.0
      %v759 = vmax.f32 %v699, 0.0
      %v760 = vmax.f32 %v704, 0.0
      %v761 = vmax.f32 %v707, 0.0
      %v762 = vmax.f32 %v712, 0.0
      %v763 = vmax.f32 %v715, 0.0
      %v764 = vmax.f32 %v720, 0.0
      %v765 = vmax.f32 %v723, 0.0
      %v766 = vmax.f32 %v728, 0.0
      %v767 = vmax.f32 %v731, 0.0
      %v768 = vmax.f32 %v736, 0.0
      %v769 = vmax.f32 %v739, 0.0
      %v770 = vmax.f32 %v744, 0.0
      %v771 = vmax.f32 %v747, 0.0
      %v772 = vmax.f32 %v752, 0.0
      %v773 = vmax.f32 %v755, 0.0
      %774 = vst [vmem:[#allocation2 + $0x80] sm:$0xff] %v758
      %775 = vst [vmem:[#allocation2 + $0x88] sm:$0xff] %v759
      %776 = vst [vmem:[#allocation2 + $0x90] sm:$0xff] %v760
      %777 = vst [vmem:[#allocation2 + $0x98] sm:$0xff] %v761
      %778 = vst [vmem:[#allocation2 + $0xa0] sm:$0xff] %v762
      %779 = vst [vmem:[#allocation2 + $0xa8] sm:$0xff] %v763
      %780 = vst [vmem:[#allocation2 + $0xb0] sm:$0xff] %v764
      %781 = vst [vmem:[#allocation2 + $0xb8] sm:$0xff] %v765
      %782 = vst [vmem:[#allocation2 + $0xc0] sm:$0xff] %v766
      %783 = vst [vmem:[#allocation2 + $0xc8] sm:$0xff] %v767
      %784 = vst [vmem:[#allocation2 + $0xd0] sm:$0xff] %v768
      %785 = vst [vmem:[#allocation2 + $0xd8] sm:$0xff] %v769
      %786 = vst [vmem:[#allocation2 + $0xe0] sm:$0xff] %v770
      %787 = vst [vmem:[#allocation2 + $0xe8] sm:$0xff] %v771
      %788 = vst [vmem:[#allocation2 + $0xf0] sm:$0xff] %v772
      %789 = vst [vmem:[#allocation2 + $0xf8] sm:$0xff] %v773
      %v790 = vld [vmem:[%s300 + $0x80] sm:$0xf]
      %v791 = vld [vmem:[%s300 + $0x84] sm:$0xf]
      %v792 = vld [vmem:[%s300 + $0x88] sm:$0xf]
      %v793 = vld [vmem:[%s300 + $0x8c] sm:$0xf]
      %v794 = vld [vmem:[%s300 + $0x90] sm:$0xf]
      %v795 = vld [vmem:[%s300 + $0x94] sm:$0xf]
      %v796 = vld [vmem:[%s300 + $0x98] sm:$0xf]
      %v797 = vld [vmem:[%s300 + $0x9c] sm:$0xf]
      %v798 = vld [vmem:[%s300 + $0xa0] sm:$0xf]
      %v799 = vld [vmem:[%s300 + $0xa4] sm:$0xf]
      %v800 = vld [vmem:[%s300 + $0xa8] sm:$0xf]
      %v801 = vld [vmem:[%s300 + $0xac] sm:$0xf]
      %v802 = vld [vmem:[%s300 + $0xb0] sm:$0xf]
      %v803 = vld [vmem:[%s300 + $0xb4] sm:$0xf]
      %v804 = vld [vmem:[%s1] sm:$0xf]
      %v805 = vld [vmem:[%s1 + $0x4] sm:$0xf]
      %v806 = vld [vmem:[%s1 + $0x8] sm:$0xf]
      %v807 = vld [vmem:[%s1 + $0xc] sm:$0xf]
      %v808 = vld [vmem:[%s1 + $0x10] sm:$0xf]
      %v809 = vld [vmem:[%s1 + $0x14] sm:$0xf]
      %v810 = vld [vmem:[%s1 + $0x18] sm:$0xf]
      %v811 = vld [vmem:[%s1 + $0x1c] sm:$0xf]
      %v826 = vunpack.c.l.b16 %v790
      %v827 = vunpack.c.l.b16 %v791
      %v828 = vunpack.c.l.b16 %v792
      %v829 = vunpack.c.l.b16 %v793
      %v830 = vunpack.c.l.b16 %v794
      %v831 = vunpack.c.l.b16 %v795
      %v832 = vunpack.c.l.b16 %v796
      %v833 = vunpack.c.l.b16 %v797
      %v834 = vunpack.c.l.b16 %v798
      %v835 = vunpack.c.l.b16 %v799
      %v836 = vunpack.c.l.b16 %v800
      %v837 = vunpack.c.l.b16 %v801
      %v838 = vunpack.c.l.b16 %v802
      %v839 = vunpack.c.l.b16 %v803
      %v840 = vpack.c.b16 %v827, %v826
      %v841 = vpack.c.b16 %v829, %v828
      %v842 = vpack.c.b16 %v831, %v830
      %v843 = vpack.c.b16 %v833, %v832
      %v844 = vpack.c.b16 %v835, %v834
      %v845 = vpack.c.b16 %v837, %v836
      %v846 = vpack.c.b16 %v839, %v838
      %v855 = vunpack.c.l.b16 %v804
      %v856 = vunpack.c.l.b16 %v805
      %v857 = vunpack.c.l.b16 %v806
      %v858 = vunpack.c.l.b16 %v807
      %v859 = vunpack.c.l.b16 %v808
      %v860 = vunpack.c.l.b16 %v809
      %v861 = vunpack.c.l.b16 %v810
      %v862 = vunpack.c.l.b16 %v811
      %v863 = vpack.c.b16 %v856, %v855
      %v864 = vpack.c.b16 %v858, %v857
      %v865 = vpack.c.b16 %v860, %v859
      %v866 = vpack.c.b16 %v862, %v861
      %v872 = vsel %vm395, %v840, 0
      %v875 = vsel %vm395, %v841, 0
      %v878 = vsel %vm395, %v842, 0
      %v881 = vsel %vm395, %v843, 0
      %v884 = vsel %vm395, %v844, 0
      %v887 = vsel %vm395, %v845, 0
      %v890 = vsel %vm395, %v846, 0
      %892 = vmatprep.subr.bf16.mxu0 0
      %893 = vmatpush1.bf16.msra.mxu0 %v863
      %894 = vmatprep.subr.bf16.mxu0 0
      %895 = vmatpush1.bf16.msra.mxu0 %v864
      %896 = vmatprep.subr.bf16.mxu0 0
      %897 = vmatpush1.bf16.msra.mxu0 %v865
      %898 = vmatprep.subr.bf16.mxu0 0
      %899 = vmatpush1.bf16.msra.mxu0 %v866
      %900 = vmatprep.subr.bf16.mxu0 0
      %901 = vmatpush1.bf16.msra.mxu0 0
      %902 = vmatprep.subr.bf16.mxu0 0
      %903 = vmatpush1.bf16.msra.mxu0 0
      %904 = vmatprep.subr.bf16.mxu0 0
      %905 = vmatpush1.bf16.msra.mxu0 0
      %906 = vmatprep.subr.bf16.mxu0 0
      %907 = vmatpush1.bf16.msra.mxu0 0
      %908 = vmatprep.subr.bf16.mxu0 0
      %909 = vmatpush1.bf16.msra.mxu0 0
      %910 = vmatprep.subr.bf16.mxu0 0
      %911 = vmatpush1.bf16.msra.mxu0 0
      %912 = vmatprep.subr.bf16.mxu0 0
      %913 = vmatpush1.bf16.msra.mxu0 0
      %914 = vmatprep.subr.bf16.mxu0 0
      %915 = vmatpush1.bf16.msra.mxu0 0
      %916 = vmatprep.subr.bf16.mxu0 0
      %917 = vmatpush1.bf16.msra.mxu0 0
      %918 = vmatprep.subr.bf16.mxu0 0
      %919 = vmatpush1.bf16.msra.mxu0 0
      %920 = vmatprep.subr.bf16.mxu0 0
      %921 = vmatpush1.bf16.msra.mxu0 0
      %922 = vmatprep.subr.bf16.mxu0 0
      %923 = vmatpush1.bf16.msra.mxu0 0
      %924 = vmatprep.mubr.bf16.mxu0 0
      %925 = vmatmul.mubr.bf16.gmra.mrb[0].mxu0 %v872
      %v926 = vpop.f32.mrb[0].mxu0
      %v927 = vadd.f32 0.0, %v926
      %v928 = vpop.f32.mrb[0].mxu0
      %v929 = vpop.f32.mrb[0].mxu0
      %v930 = vadd.f32 0.0, %v929
      %v931 = vpop.f32.mrb[0].mxu0
      %932 = vmatprep.mubr.bf16.mxu0 0
      %933 = vmatmul.mubr.bf16.gmra.mrb[0].mxu0 %v875
      %v934 = vpop.f32.mrb[0].mxu0
      %v935 = vadd.f32 0.0, %v934
      %v936 = vpop.f32.mrb[0].mxu0
      %v937 = vpop.f32.mrb[0].mxu0
      %v938 = vadd.f32 0.0, %v937
      %v939 = vpop.f32.mrb[0].mxu0
      %940 = vmatprep.mubr.bf16.mxu0 0
      %941 = vmatmul.mubr.bf16.gmra.mrb[0].mxu0 %v878
      %v942 = vpop.f32.mrb[0].mxu0
      %v943 = vadd.f32 0.0, %v942
      %v944 = vpop.f32.mrb[0].mxu0
      %v945 = vpop.f32.mrb[0].mxu0
      %v946 = vadd.f32 0.0, %v945
      %v947 = vpop.f32.mrb[0].mxu0
      %948 = vmatprep.mubr.bf16.mxu0 0
      %949 = vmatmul.mubr.bf16.gmra.mrb[0].mxu0 %v881
      %v950 = vpop.f32.mrb[0].mxu0
      %v951 = vadd.f32 0.0, %v950
      %v952 = vpop.f32.mrb[0].mxu0
      %v953 = vpop.f32.mrb[0].mxu0
      %v954 = vadd.f32 0.0, %v953
      %v955 = vpop.f32.mrb[0].mxu0
      %956 = vmatprep.mubr.bf16.mxu0 0
      %957 = vmatmul.mubr.bf16.gmra.mrb[0].mxu0 %v884
      %v958 = vpop.f32.mrb[0].mxu0
      %v959 = vadd.f32 0.0, %v958
      %v960 = vpop.f32.mrb[0].mxu0
      %v961 = vpop.f32.mrb[0].mxu0
      %v962 = vadd.f32 0.0, %v961
      %v963 = vpop.f32.mrb[0].mxu0
      %964 = vmatprep.mubr.bf16.mxu0 0
      %965 = vmatmul.mubr.bf16.gmra.mrb[0].mxu0 %v887
      %v966 = vpop.f32.mrb[0].mxu0
      %v967 = vadd.f32 0.0, %v966
      %v968 = vpop.f32.mrb[0].mxu0
      %v969 = vpop.f32.mrb[0].mxu0
      %v970 = vadd.f32 0.0, %v969
      %v971 = vpop.f32.mrb[0].mxu0
      %972 = vmatprep.mubr.bf16.mxu0 0
      %973 = vmatmul.mubr.bf16.gmra.mrb[0].mxu0 %v890
      %v974 = vpop.f32.mrb[0].mxu0
      %v975 = vadd.f32 0.0, %v974
      %v976 = vpop.f32.mrb[0].mxu0
      %v977 = vpop.f32.mrb[0].mxu0
      %v978 = vadd.f32 0.0, %v977
      %v979 = vpop.f32.mrb[0].mxu0
      %980 = vdwg.mxu0
      %v981 = vmax.f32 %v927, 0.0
      %v982 = vmax.f32 %v930, 0.0
      %v983 = vmax.f32 %v935, 0.0
      %v984 = vmax.f32 %v938, 0.0
      %v985 = vmax.f32 %v943, 0.0
      %v986 = vmax.f32 %v946, 0.0
      %v987 = vmax.f32 %v951, 0.0
      %v988 = vmax.f32 %v954, 0.0
      %v989 = vmax.f32 %v959, 0.0
      %v990 = vmax.f32 %v962, 0.0
      %v991 = vmax.f32 %v967, 0.0
      %v992 = vmax.f32 %v970, 0.0
      %v993 = vmax.f32 %v975, 0.0
      %v994 = vmax.f32 %v978, 0.0
      %995 = vst [vmem:[#allocation2 + $0x100] sm:$0xff] %v981
      %996 = vst [vmem:[#allocation2 + $0x108] sm:$0xff] %v982
      %997 = vst [vmem:[#allocation2 + $0x110] sm:$0xff] %v983
      %998 = vst [vmem:[#allocation2 + $0x118] sm:$0xff] %v984
      %999 = vst [vmem:[#allocation2 + $0x120] sm:$0xff] %v985
      %1000 = vst [vmem:[#allocation2 + $0x128] sm:$0xff] %v986
      %1001 = vst [vmem:[#allocation2 + $0x130] sm:$0xff] %v987
      %1002 = vst [vmem:[#allocation2 + $0x138] sm:$0xff] %v988
      %1003 = vst [vmem:[#allocation2 + $0x140] sm:$0xff] %v989
      %1004 = vst [vmem:[#allocation2 + $0x148] sm:$0xff] %v990
      %1005 = vst [vmem:[#allocation2 + $0x150] sm:$0xff] %v991
      %1006 = vst [vmem:[#allocation2 + $0x158] sm:$0xff] %v992
      %1007 = vst [vmem:[#allocation2 + $0x160] sm:$0xff] %v993
      %1008 = vst [vmem:[#allocation2 + $0x168] sm:$0xff] %v994
      %v1009 = vld [vmem:[#allocation2] sm:$0xff]
      %v1010 = vld [vmem:[#allocation2 + $0x8] sm:$0xff]
      %v1011 = vld [vmem:[#allocation2 + $0x10] sm:$0xff]
      %v1012 = vld [vmem:[#allocation2 + $0x18] sm:$0xff]
      %v1013 = vld [vmem:[#allocation2 + $0x20] sm:$0xff]
      %v1014 = vld [vmem:[#allocation2 + $0x28] sm:$0xff]
      %v1015 = vld [vmem:[#allocation2 + $0x30] sm:$0xff]
      %v1016 = vld [vmem:[#allocation2 + $0x38] sm:$0xff]
      %v1017 = vld [vmem:[#allocation2 + $0x40] sm:$0xff]
      %v1018 = vld [vmem:[#allocation2 + $0x48] sm:$0xff]
      %v1019 = vld [vmem:[#allocation2 + $0x50] sm:$0xff]
      %v1020 = vld [vmem:[#allocation2 + $0x58] sm:$0xff]
      %v1021 = vld [vmem:[#allocation2 + $0x60] sm:$0xff]
      %v1022 = vld [vmem:[#allocation2 + $0x68] sm:$0xff]
      %v1023 = vld [vmem:[#allocation2 + $0x70] sm:$0xff]
      %v1024 = vld [vmem:[#allocation2 + $0x78] sm:$0xff]
      %v1025 = vpack.c.bf16 %v1010, %v1009
      %v1026 = vpack.c.bf16 %v1012, %v1011
      %v1027 = vpack.c.bf16 %v1014, %v1013
      %v1028 = vpack.c.bf16 %v1016, %v1015
      %v1029 = vpack.c.bf16 %v1018, %v1017
      %v1030 = vpack.c.bf16 %v1020, %v1019
      %v1031 = vpack.c.bf16 %v1022, %v1021
      %v1032 = vpack.c.bf16 %v1024, %v1023
      %v1033 = vld [vmem:[%s2] sm:$0xf]
      %v1034 = vld [vmem:[%s2 + $0x4] sm:$0xf]
      %v1035 = vld [vmem:[#allocation2 + $0x1] sm:$0xff]
      %v1036 = vld [vmem:[#allocation2 + $0x9] sm:$0xff]
      %v1037 = vld [vmem:[#allocation2 + $0x11] sm:$0xff]
      %v1038 = vld [vmem:[#allocation2 + $0x19] sm:$0xff]
      %v1039 = vld [vmem:[#allocation2 + $0x21] sm:$0xff]
      %v1040 = vld [vmem:[#allocation2 + $0x29] sm:$0xff]
      %v1041 = vld [vmem:[#allocation2 + $0x31] sm:$0xff]
      %v1042 = vld [vmem:[#allocation2 + $0x39] sm:$0xff]
      %v1043 = vld [vmem:[#allocation2 + $0x41] sm:$0xff]
      %v1044 = vld [vmem:[#allocation2 + $0x49] sm:$0xff]
      %v1045 = vld [vmem:[#allocation2 + $0x51] sm:$0xff]
      %v1046 = vld [vmem:[#allocation2 + $0x59] sm:$0xff]
      %v1047 = vld [vmem:[#allocation2 + $0x61] sm:$0xff]
      %v1048 = vld [vmem:[#allocation2 + $0x69] sm:$0xff]
      %v1049 = vld [vmem:[#allocation2 + $0x71] sm:$0xff]
      %v1050 = vld [vmem:[#allocation2 + $0x79] sm:$0xff]
      %v1051 = vpack.c.bf16 %v1036, %v1035
      %v1052 = vpack.c.bf16 %v1038, %v1037
      %v1053 = vpack.c.bf16 %v1040, %v1039
      %v1054 = vpack.c.bf16 %v1042, %v1041
      %v1055 = vpack.c.bf16 %v1044, %v1043
      %v1056 = vpack.c.bf16 %v1046, %v1045
      %v1057 = vpack.c.bf16 %v1048, %v1047
      %v1058 = vpack.c.bf16 %v1050, %v1049
      %s1059 = scalar_lea.vmem %s2, 8
      %v1060 = vld [vmem:[%s1059] sm:$0xf]
      %v1061 = vld [vmem:[%s1059 + $0x4] sm:$0xf]
      %v1064 = vunpack.c.l.b16 %v1060
      %v1065 = vunpack.c.l.b16 %v1061
      %v1066 = vpack.c.b16 %v1065, %v1064
      %vm1068 = vcmask 130048
      %v1070 = vsel %vm1068, %v1051, 0
      %v1073 = vsel %vm1068, %v1052, 0
      %v1076 = vsel %vm1068, %v1053, 0
      %v1079 = vsel %vm1068, %v1054, 0
      %v1082 = vsel %vm1068, %v1055, 0
      %v1085 = vsel %vm1068, %v1056, 0
      %v1088 = vsel %vm1068, %v1057, 0
      %v1091 = vsel %vm1068, %v1058, 0
      %1093 = vmatprep.subr.bf16.mxu0 0
      %1094 = vmatpush1.bf16.msra.mxu0 %v1066
      %1095 = vmatprep.subr.bf16.mxu0 0
      %1096 = vmatpush1.bf16.msra.mxu0 0
      %1097 = vmatprep.subr.bf16.mxu0 0
      %1098 = vmatpush1.bf16.msra.mxu0 0
      %1099 = vmatprep.subr.bf16.mxu0 0
      %1100 = vmatpush1.bf16.msra.mxu0 0
      %1101 = vmatprep.subr.bf16.mxu0 0
      %1102 = vmatpush1.bf16.msra.mxu0 0
      %1103 = vmatprep.subr.bf16.mxu0 0
      %1104 = vmatpush1.bf16.msra.mxu0 0
      %1105 = vmatprep.subr.bf16.mxu0 0
      %1106 = vmatpush1.bf16.msra.mxu0 0
      %1107 = vmatprep.subr.bf16.mxu0 0
      %1108 = vmatpush1.bf16.msra.mxu0 0
      %1109 = vmatprep.subr.bf16.mxu0 0
      %1110 = vmatpush1.bf16.msra.mxu0 0
      %1111 = vmatprep.subr.bf16.mxu0 0
      %1112 = vmatpush1.bf16.msra.mxu0 0
      %1113 = vmatprep.subr.bf16.mxu0 0
      %1114 = vmatpush1.bf16.msra.mxu0 0
      %1115 = vmatprep.subr.bf16.mxu0 0
      %1116 = vmatpush1.bf16.msra.mxu0 0
      %1117 = vmatprep.subr.bf16.mxu0 0
      %1118 = vmatpush1.bf16.msra.mxu0 0
      %1119 = vmatprep.subr.bf16.mxu0 0
      %1120 = vmatpush1.bf16.msra.mxu0 0
      %1121 = vmatprep.subr.bf16.mxu0 0
      %1122 = vmatpush1.bf16.msra.mxu0 0
      %1123 = vmatprep.subr.bf16.mxu0 0
      %1124 = vmatpush1.bf16.msra.mxu0 0
      %1125 = vmatprep.mubr.bf16.mxu0 0
      %1126 = vmatmul.mubr.bf16.gmra.mrb[0].mxu0 %v1070
      %v1127 = vpop.f32.mrb[0].mxu0
      %v1128 = vadd.f32 0.0, %v1127
      %v1129 = vpop.f32.mrb[0].mxu0
      %v1130 = vpop.f32.mrb[0].mxu0
      %v1131 = vadd.f32 0.0, %v1130
      %v1132 = vpop.f32.mrb[0].mxu0
      %1133 = vmatprep.mubr.bf16.mxu0 0
      %1134 = vmatmul.mubr.bf16.gmra.mrb[0].mxu0 %v1073
      %v1135 = vpop.f32.mrb[0].mxu0
      %v1136 = vadd.f32 0.0, %v1135
      %v1137 = vpop.f32.mrb[0].mxu0
      %v1138 = vpop.f32.mrb[0].mxu0
      %v1139 = vadd.f32 0.0, %v1138
      %v1140 = vpop.f32.mrb[0].mxu0
      %1141 = vmatprep.mubr.bf16.mxu0 0
      %1142 = vmatmul.mubr.bf16.gmra.mrb[0].mxu0 %v1076
      %v1143 = vpop.f32.mrb[0].mxu0
      %v1144 = vadd.f32 0.0, %v1143
      %v1145 = vpop.f32.mrb[0].mxu0
      %v1146 = vpop.f32.mrb[0].mxu0
      %v1147 = vadd.f32 0.0, %v1146
      %v1148 = vpop.f32.mrb[0].mxu0
      %1149 = vmatprep.mubr.bf16.mxu0 0
      %1150 = vmatmul.mubr.bf16.gmra.mrb[0].mxu0 %v1079
      %v1151 = vpop.f32.mrb[0].mxu0
      %v1152 = vadd.f32 0.0, %v1151
      %v1153 = vpop.f32.mrb[0].mxu0
      %v1154 = vpop.f32.mrb[0].mxu0
      %v1155 = vadd.f32 0.0, %v1154
      %v1156 = vpop.f32.mrb[0].mxu0
      %1157 = vmatprep.mubr.bf16.mxu0 0
      %1158 = vmatmul.mubr.bf16.gmra.mrb[0].mxu0 %v1082
      %v1159 = vpop.f32.mrb[0].mxu0
      %v1160 = vadd.f32 0.0, %v1159
      %v1161 = vpop.f32.mrb[0].mxu0
      %v1162 = vpop.f32.mrb[0].mxu0
      %v1163 = vadd.f32 0.0, %v1162
      %v1164 = vpop.f32.mrb[0].mxu0
      %1165 = vmatprep.mubr.bf16.mxu0 0
      %1166 = vmatmul.mubr.bf16.gmra.mrb[0].mxu0 %v1085
      %v1167 = vpop.f32.mrb[0].mxu0
      %v1168 = vadd.f32 0.0, %v1167
      %v1169 = vpop.f32.mrb[0].mxu0
      %v1170 = vpop.f32.mrb[0].mxu0
      %v1171 = vadd.f32 0.0, %v1170
      %v1172 = vpop.f32.mrb[0].mxu0
      %1173 = vmatprep.mubr.bf16.mxu0 0
      %1174 = vmatmul.mubr.bf16.gmra.mrb[0].mxu0 %v1088
      %v1175 = vpop.f32.mrb[0].mxu0
      %v1176 = vadd.f32 0.0, %v1175
      %v1177 = vpop.f32.mrb[0].mxu0
      %v1178 = vpop.f32.mrb[0].mxu0
      %v1179 = vadd.f32 0.0, %v1178
      %v1180 = vpop.f32.mrb[0].mxu0
      %1181 = vmatprep.mubr.bf16.mxu0 0
      %1182 = vmatmul.mubr.bf16.gmra.mrb[0].mxu0 %v1091
      %v1183 = vpop.f32.mrb[0].mxu0
      %v1184 = vadd.f32 0.0, %v1183
      %v1185 = vpop.f32.mrb[0].mxu0
      %v1186 = vpop.f32.mrb[0].mxu0
      %v1187 = vadd.f32 0.0, %v1186
      %v1188 = vpop.f32.mrb[0].mxu0
      %1189 = vdwg.mxu0
      %v1192 = vunpack.c.l.b16 %v1033
      %v1193 = vunpack.c.l.b16 %v1034
      %v1194 = vpack.c.b16 %v1193, %v1192
      %v1197 = vsel %vm1068, %v1025, 0
      %v1200 = vsel %vm1068, %v1026, 0
      %v1203 = vsel %vm1068, %v1027, 0
      %v1206 = vsel %vm1068, %v1028, 0
      %v1209 = vsel %vm1068, %v1029, 0
      %v1212 = vsel %vm1068, %v1030, 0
      %v1215 = vsel %vm1068, %v1031, 0
      %v1218 = vsel %vm1068, %v1032, 0
      %1220 = vmatprep.subr.bf16.mxu0 0
      %1221 = vmatpush1.bf16.msra.mxu0 %v1194
      %1222 = vmatprep.subr.bf16.mxu0 0
      %1223 = vmatpush1.bf16.msra.mxu0 0
      %1224 = vmatprep.subr.bf16.mxu0 0
      %1225 = vmatpush1.bf16.msra.mxu0 0
      %1226 = vmatprep.subr.bf16.mxu0 0
      %1227 = vmatpush1.bf16.msra.mxu0 0
      %1228 = vmatprep.subr.bf16.mxu0 0
      %1229 = vmatpush1.bf16.msra.mxu0 0
      %1230 = vmatprep.subr.bf16.mxu0 0
      %1231 = vmatpush1.bf16.msra.mxu0 0
      %1232 = vmatprep.subr.bf16.mxu0 0
      %1233 = vmatpush1.bf16.msra.mxu0 0
      %1234 = vmatprep.subr.bf16.mxu0 0
      %1235 = vmatpush1.bf16.msra.mxu0 0
      %1236 = vmatprep.subr.bf16.mxu0 0
      %1237 = vmatpush1.bf16.msra.mxu0 0
      %1238 = vmatprep.subr.bf16.mxu0 0
      %1239 = vmatpush1.bf16.msra.mxu0 0
      %1240 = vmatprep.subr.bf16.mxu0 0
      %1241 = vmatpush1.bf16.msra.mxu0 0
      %1242 = vmatprep.subr.bf16.mxu0 0
      %1243 = vmatpush1.bf16.msra.mxu0 0
      %1244 = vmatprep.subr.bf16.mxu0 0
      %1245 = vmatpush1.bf16.msra.mxu0 0
      %1246 = vmatprep.subr.bf16.mxu0 0
      %1247 = vmatpush1.bf16.msra.mxu0 0
      %1248 = vmatprep.subr.bf16.mxu0 0
      %1249 = vmatpush1.bf16.msra.mxu0 0
      %1250 = vmatprep.subr.bf16.mxu0 0
      %1251 = vmatpush1.bf16.msra.mxu0 0
      %1252 = vmatprep.mubr.bf16.mxu0 0
      %1253 = vmatmul.mubr.bf16.gmra.mrb[0].mxu0 %v1197
      %v1254 = vpop.f32.mrb[0].mxu0
      %v1255 = vadd.f32 %v1128, %v1254
      %v1256 = vpop.f32.mrb[0].mxu0
      %v1257 = vpop.f32.mrb[0].mxu0
      %v1258 = vadd.f32 %v1131, %v1257
      %v1259 = vpop.f32.mrb[0].mxu0
      %1260 = vmatprep.mubr.bf16.mxu0 0
      %1261 = vmatmul.mubr.bf16.gmra.mrb[0].mxu0 %v1200
      %v1262 = vpop.f32.mrb[0].mxu0
      %v1263 = vadd.f32 %v1136, %v1262
      %v1264 = vpop.f32.mrb[0].mxu0
      %v1265 = vpop.f32.mrb[0].mxu0
      %v1266 = vadd.f32 %v1139, %v1265
      %v1267 = vpop.f32.mrb[0].mxu0
      %1268 = vmatprep.mubr.bf16.mxu0 0
      %1269 = vmatmul.mubr.bf16.gmra.mrb[0].mxu0 %v1203
      %v1270 = vpop.f32.mrb[0].mxu0
      %v1271 = vadd.f32 %v1144, %v1270
      %v1272 = vpop.f32.mrb[0].mxu0
      %v1273 = vpop.f32.mrb[0].mxu0
      %v1274 = vadd.f32 %v1147, %v1273
      %v1275 = vpop.f32.mrb[0].mxu0
      %1276 = vmatprep.mubr.bf16.mxu0 0
      %1277 = vmatmul.mubr.bf16.gmra.mrb[0].mxu0 %v1206
      %v1278 = vpop.f32.mrb[0].mxu0
      %v1279 = vadd.f32 %v1152, %v1278
      %v1280 = vpop.f32.mrb[0].mxu0
      %v1281 = vpop.f32.mrb[0].mxu0
      %v1282 = vadd.f32 %v1155, %v1281
      %v1283 = vpop.f32.mrb[0].mxu0
      %1284 = vmatprep.mubr.bf16.mxu0 0
      %1285 = vmatmul.mubr.bf16.gmra.mrb[0].mxu0 %v1209
      %v1286 = vpop.f32.mrb[0].mxu0
      %v1287 = vadd.f32 %v1160, %v1286
      %v1288 = vpop.f32.mrb[0].mxu0
      %v1289 = vpop.f32.mrb[0].mxu0
      %v1290 = vadd.f32 %v1163, %v1289
      %v1291 = vpop.f32.mrb[0].mxu0
      %1292 = vmatprep.mubr.bf16.mxu0 0
      %1293 = vmatmul.mubr.bf16.gmra.mrb[0].mxu0 %v1212
      %v1294 = vpop.f32.mrb[0].mxu0
      %v1295 = vadd.f32 %v1168, %v1294
      %v1296 = vpop.f32.mrb[0].mxu0
      %v1297 = vpop.f32.mrb[0].mxu0
      %v1298 = vadd.f32 %v1171, %v1297
      %v1299 = vpop.f32.mrb[0].mxu0
      %1300 = vmatprep.mubr.bf16.mxu0 0
      %1301 = vmatmul.mubr.bf16.gmra.mrb[0].mxu0 %v1215
      %v1302 = vpop.f32.mrb[0].mxu0
      %v1303 = vadd.f32 %v1176, %v1302
      %v1304 = vpop.f32.mrb[0].mxu0
      %v1305 = vpop.f32.mrb[0].mxu0
      %v1306 = vadd.f32 %v1179, %v1305
      %v1307 = vpop.f32.mrb[0].mxu0
      %1308 = vmatprep.mubr.bf16.mxu0 0
      %1309 = vmatmul.mubr.bf16.gmra.mrb[0].mxu0 %v1218
      %v1310 = vpop.f32.mrb[0].mxu0
      %v1311 = vadd.f32 %v1184, %v1310
      %v1312 = vpop.f32.mrb[0].mxu0
      %v1313 = vpop.f32.mrb[0].mxu0
      %v1314 = vadd.f32 %v1187, %v1313
      %v1315 = vpop.f32.mrb[0].mxu0
      %1316 = vdwg.mxu0
      %v1317 = vld [vmem:[#allocation2 + $0x2] sm:$0xff]
      %v1318 = vld [vmem:[#allocation2 + $0xa] sm:$0xff]
      %v1319 = vld [vmem:[#allocation2 + $0x12] sm:$0xff]
      %v1320 = vld [vmem:[#allocation2 + $0x1a] sm:$0xff]
      %v1321 = vld [vmem:[#allocation2 + $0x22] sm:$0xff]
      %v1322 = vld [vmem:[#allocation2 + $0x2a] sm:$0xff]
      %v1323 = vld [vmem:[#allocation2 + $0x32] sm:$0xff]
      %v1324 = vld [vmem:[#allocation2 + $0x3a] sm:$0xff]
      %v1325 = vld [vmem:[#allocation2 + $0x42] sm:$0xff]
      %v1326 = vld [vmem:[#allocation2 + $0x4a] sm:$0xff]
      %v1327 = vld [vmem:[#allocation2 + $0x52] sm:$0xff]
      %v1328 = vld [vmem:[#allocation2 + $0x5a] sm:$0xff]
      %v1329 = vld [vmem:[#allocation2 + $0x62] sm:$0xff]
      %v1330 = vld [vmem:[#allocation2 + $0x6a] sm:$0xff]
      %v1331 = vld [vmem:[#allocation2 + $0x72] sm:$0xff]
      %v1332 = vld [vmem:[#allocation2 + $0x7a] sm:$0xff]
      %v1333 = vpack.c.bf16 %v1318, %v1317
      %v1334 = vpack.c.bf16 %v1320, %v1319
      %v1335 = vpack.c.bf16 %v1322, %v1321
      %v1336 = vpack.c.bf16 %v1324, %v1323
      %v1337 = vpack.c.bf16 %v1326, %v1325
      %v1338 = vpack.c.bf16 %v1328, %v1327
      %v1339 = vpack.c.bf16 %v1330, %v1329
      %v1340 = vpack.c.bf16 %v1332, %v1331
      %s1341 = scalar_lea.vmem %s2, 16
      %v1342 = vld [vmem:[%s1341] sm:$0xf]
      %v1343 = vld [vmem:[%s1341 + $0x4] sm:$0xf]
      %v1346 = vunpack.c.l.b16 %v1342
      %v1347 = vunpack.c.l.b16 %v1343
      %v1348 = vpack.c.b16 %v1347, %v1346
      %v1351 = vsel %vm1068, %v1333, 0
      %v1354 = vsel %vm1068, %v1334, 0
      %v1357 = vsel %vm1068, %v1335, 0
      %v1360 = vsel %vm1068, %v1336, 0
      %v1363 = vsel %vm1068, %v1337, 0
      %v1366 = vsel %vm1068, %v1338, 0
      %v1369 = vsel %vm1068, %v1339, 0
      %v1372 = vsel %vm1068, %v1340, 0
      %1374 = vmatprep.subr.bf16.mxu0 0
      %1375 = vmatpush1.bf16.msra.mxu0 %v1348
      %1376 = vmatprep.subr.bf16.mxu0 0
      %1377 = vmatpush1.bf16.msra.mxu0 0
      %1378 = vmatprep.subr.bf16.mxu0 0
      %1379 = vmatpush1.bf16.msra.mxu0 0
      %1380 = vmatprep.subr.bf16.mxu0 0
      %1381 = vmatpush1.bf16.msra.mxu0 0
      %1382 = vmatprep.subr.bf16.mxu0 0
      %1383 = vmatpush1.bf16.msra.mxu0 0
      %1384 = vmatprep.subr.bf16.mxu0 0
      %1385 = vmatpush1.bf16.msra.mxu0 0
      %1386 = vmatprep.subr.bf16.mxu0 0
      %1387 = vmatpush1.bf16.msra.mxu0 0
      %1388 = vmatprep.subr.bf16.mxu0 0
      %1389 = vmatpush1.bf16.msra.mxu0 0
      %1390 = vmatprep.subr.bf16.mxu0 0
      %1391 = vmatpush1.bf16.msra.mxu0 0
      %1392 = vmatprep.subr.bf16.mxu0 0
      %1393 = vmatpush1.bf16.msra.mxu0 0
      %1394 = vmatprep.subr.bf16.mxu0 0
      %1395 = vmatpush1.bf16.msra.mxu0 0
      %1396 = vmatprep.subr.bf16.mxu0 0
      %1397 = vmatpush1.bf16.msra.mxu0 0
      %1398 = vmatprep.subr.bf16.mxu0 0
      %1399 = vmatpush1.bf16.msra.mxu0 0
      %1400 = vmatprep.subr.bf16.mxu0 0
      %1401 = vmatpush1.bf16.msra.mxu0 0
      %1402 = vmatprep.subr.bf16.mxu0 0
      %1403 = vmatpush1.bf16.msra.mxu0 0
      %1404 = vmatprep.subr.bf16.mxu0 0
      %1405 = vmatpush1.bf16.msra.mxu0 0
      %1406 = vmatprep.mubr.bf16.mxu0 0
      %1407 = vmatmul.mubr.bf16.gmra.mrb[0].mxu0 %v1351
      %v1408 = vpop.f32.mrb[0].mxu0
      %v1409 = vadd.f32 0.0, %v1408
      %v1410 = vpop.f32.mrb[0].mxu0
      %v1411 = vpop.f32.mrb[0].mxu0
      %v1412 = vadd.f32 0.0, %v1411
      %v1413 = vpop.f32.mrb[0].mxu0
      %1414 = vmatprep.mubr.bf16.mxu0 0
      %1415 = vmatmul.mubr.bf16.gmra.mrb[0].mxu0 %v1354
      %v1416 = vpop.f32.mrb[0].mxu0
      %v1417 = vadd.f32 0.0, %v1416
      %v1418 = vpop.f32.mrb[0].mxu0
      %v1419 = vpop.f32.mrb[0].mxu0
      %v1420 = vadd.f32 0.0, %v1419
      %v1421 = vpop.f32.mrb[0].mxu0
      %1422 = vmatprep.mubr.bf16.mxu0 0
      %1423 = vmatmul.mubr.bf16.gmra.mrb[0].mxu0 %v1357
      %v1424 = vpop.f32.mrb[0].mxu0
      %v1425 = vadd.f32 0.0, %v1424
      %v1426 = vpop.f32.mrb[0].mxu0
      %v1427 = vpop.f32.mrb[0].mxu0
      %v1428 = vadd.f32 0.0, %v1427
      %v1429 = vpop.f32.mrb[0].mxu0
      %1430 = vmatprep.mubr.bf16.mxu0 0
      %1431 = vmatmul.mubr.bf16.gmra.mrb[0].mxu0 %v1360
      %v1432 = vpop.f32.mrb[0].mxu0
      %v1433 = vadd.f32 0.0, %v1432
      %v1434 = vpop.f32.mrb[0].mxu0
      %v1435 = vpop.f32.mrb[0].mxu0
      %v1436 = vadd.f32 0.0, %v1435
      %v1437 = vpop.f32.mrb[0].mxu0
      %1438 = vmatprep.mubr.bf16.mxu0 0
      %1439 = vmatmul.mubr.bf16.gmra.mrb[0].mxu0 %v1363
      %v1440 = vpop.f32.mrb[0].mxu0
      %v1441 = vadd.f32 0.0, %v1440
      %v1442 = vpop.f32.mrb[0].mxu0
      %v1443 = vpop.f32.mrb[0].mxu0
      %v1444 = vadd.f32 0.0, %v1443
      %v1445 = vpop.f32.mrb[0].mxu0
      %1446 = vmatprep.mubr.bf16.mxu0 0
      %1447 = vmatmul.mubr.bf16.gmra.mrb[0].mxu0 %v1366
      %v1448 = vpop.f32.mrb[0].mxu0
      %v1449 = vadd.f32 0.0, %v1448
      %v1450 = vpop.f32.mrb[0].mxu0
      %v1451 = vpop.f32.mrb[0].mxu0
      %v1452 = vadd.f32 0.0, %v1451
      %v1453 = vpop.f32.mrb[0].mxu0
      %1454 = vmatprep.mubr.bf16.mxu0 0
      %1455 = vmatmul.mubr.bf16.gmra.mrb[0].mxu0 %v1369
      %v1456 = vpop.f32.mrb[0].mxu0
      %v1457 = vadd.f32 0.0, %v1456
      %v1458 = vpop.f32.mrb[0].mxu0
      %v1459 = vpop.f32.mrb[0].mxu0
      %v1460 = vadd.f32 0.0, %v1459
      %v1461 = vpop.f32.mrb[0].mxu0
      %1462 = vmatprep.mubr.bf16.mxu0 0
      %1463 = vmatmul.mubr.bf16.gmra.mrb[0].mxu0 %v1372
      %v1464 = vpop.f32.mrb[0].mxu0
      %v1465 = vadd.f32 0.0, %v1464
      %v1466 = vpop.f32.mrb[0].mxu0
      %v1467 = vpop.f32.mrb[0].mxu0
      %v1468 = vadd.f32 0.0, %v1467
      %v1469 = vpop.f32.mrb[0].mxu0
      %1470 = vdwg.mxu0
      %v1471 = vadd.f32 %v1255, %v1409
      %v1472 = vadd.f32 %v1258, %v1412
      %v1473 = vadd.f32 %v1263, %v1417
      %v1474 = vadd.f32 %v1266, %v1420
      %v1475 = vadd.f32 %v1271, %v1425
      %v1476 = vadd.f32 %v1274, %v1428
      %v1477 = vadd.f32 %v1279, %v1433
      %v1478 = vadd.f32 %v1282, %v1436
      %v1479 = vadd.f32 %v1287, %v1441
      %v1480 = vadd.f32 %v1290, %v1444
      %v1481 = vadd.f32 %v1295, %v1449
      %v1482 = vadd.f32 %v1298, %v1452
      %v1483 = vadd.f32 %v1303, %v1457
      %v1484 = vadd.f32 %v1306, %v1460
      %v1485 = vadd.f32 %v1311, %v1465
      %v1486 = vadd.f32 %v1314, %v1468
      %v1487 = vld [vmem:[#allocation2 + $0x12] sm:$0xff]
      %v1488 = vld [vmem:[#allocation2 + $0x1a] sm:$0xff]
      %v1489 = vld [vmem:[#allocation2 + $0x22] sm:$0xff]
      %v1490 = vld [vmem:[#allocation2 + $0x2a] sm:$0xff]
      %v1491 = vld [vmem:[#allocation2 + $0x32] sm:$0xff]
      %v1492 = vld [vmem:[#allocation2 + $0x3a] sm:$0xff]
      %v1493 = vld [vmem:[#allocation2 + $0x42] sm:$0xff]
      %v1494 = vld [vmem:[#allocation2 + $0x4a] sm:$0xff]
      %v1495 = vld [vmem:[#allocation2 + $0x52] sm:$0xff]
      %v1496 = vld [vmem:[#allocation2 + $0x5a] sm:$0xff]
      %v1497 = vld [vmem:[#allocation2 + $0x62] sm:$0xff]
      %v1498 = vld [vmem:[#allocation2 + $0x6a] sm:$0xff]
      %v1499 = vld [vmem:[#allocation2 + $0x72] sm:$0xff]
      %v1500 = vld [vmem:[#allocation2 + $0x7a] sm:$0xff]
      %v1501 = vld [vmem:[#allocation2 + $0x82] sm:$0xff]
      %v1502 = vld [vmem:[#allocation2 + $0x8a] sm:$0xff]
      %v1503 = vpack.c.bf16 %v1488, %v1487
      %v1504 = vpack.c.bf16 %v1490, %v1489
      %v1505 = vpack.c.bf16 %v1492, %v1491
      %v1506 = vpack.c.bf16 %v1494, %v1493
      %v1507 = vpack.c.bf16 %v1496, %v1495
      %v1508 = vpack.c.bf16 %v1498, %v1497
      %v1509 = vpack.c.bf16 %v1500, %v1499
      %v1510 = vpack.c.bf16 %v1502, %v1501
      %s1511 = scalar_lea.vmem %s2, 24
      %v1512 = vld [vmem:[%s1511] sm:$0xf]
      %v1513 = vld [vmem:[%s1511 + $0x4] sm:$0xf]
      %v1516 = vunpack.c.l.b16 %v1512
      %v1517 = vunpack.c.l.b16 %v1513
      %v1518 = vpack.c.b16 %v1517, %v1516
      %v1521 = vsel %vm1068, %v1503, 0
      %v1524 = vsel %vm1068, %v1504, 0
      %v1527 = vsel %vm1068, %v1505, 0
      %v1530 = vsel %vm1068, %v1506, 0
      %v1533 = vsel %vm1068, %v1507, 0
      %v1536 = vsel %vm1068, %v1508, 0
      %v1539 = vsel %vm1068, %v1509, 0
      %v1542 = vsel %vm1068, %v1510, 0
      %1544 = vmatprep.subr.bf16.mxu0 0
      %1545 = vmatpush1.bf16.msra.mxu0 %v1518
      %1546 = vmatprep.subr.bf16.mxu0 0
      %1547 = vmatpush1.bf16.msra.mxu0 0
      %1548 = vmatprep.subr.bf16.mxu0 0
      %1549 = vmatpush1.bf16.msra.mxu0 0
      %1550 = vmatprep.subr.bf16.mxu0 0
      %1551 = vmatpush1.bf16.msra.mxu0 0
      %1552 = vmatprep.subr.bf16.mxu0 0
      %1553 = vmatpush1.bf16.msra.mxu0 0
      %1554 = vmatprep.subr.bf16.mxu0 0
      %1555 = vmatpush1.bf16.msra.mxu0 0
      %1556 = vmatprep.subr.bf16.mxu0 0
      %1557 = vmatpush1.bf16.msra.mxu0 0
      %1558 = vmatprep.subr.bf16.mxu0 0
      %1559 = vmatpush1.bf16.msra.mxu0 0
      %1560 = vmatprep.subr.bf16.mxu0 0
      %1561 = vmatpush1.bf16.msra.mxu0 0
      %1562 = vmatprep.subr.bf16.mxu0 0
      %1563 = vmatpush1.bf16.msra.mxu0 0
      %1564 = vmatprep.subr.bf16.mxu0 0
      %1565 = vmatpush1.bf16.msra.mxu0 0
      %1566 = vmatprep.subr.bf16.mxu0 0
      %1567 = vmatpush1.bf16.msra.mxu0 0
      %1568 = vmatprep.subr.bf16.mxu0 0
      %1569 = vmatpush1.bf16.msra.mxu0 0
      %1570 = vmatprep.subr.bf16.mxu0 0
      %1571 = vmatpush1.bf16.msra.mxu0 0
      %1572 = vmatprep.subr.bf16.mxu0 0
      %1573 = vmatpush1.bf16.msra.mxu0 0
      %1574 = vmatprep.subr.bf16.mxu0 0
      %1575 = vmatpush1.bf16.msra.mxu0 0
      %1576 = vmatprep.mubr.bf16.mxu0 0
      %1577 = vmatmul.mubr.bf16.gmra.mrb[0].mxu0 %v1521
      %v1578 = vpop.f32.mrb[0].mxu0
      %v1579 = vadd.f32 0.0, %v1578
      %v1580 = vpop.f32.mrb[0].mxu0
      %v1581 = vpop.f32.mrb[0].mxu0
      %v1582 = vadd.f32 0.0, %v1581
      %v1583 = vpop.f32.mrb[0].mxu0
      %1584 = vmatprep.mubr.bf16.mxu0 0
      %1585 = vmatmul.mubr.bf16.gmra.mrb[0].mxu0 %v1524
      %v1586 = vpop.f32.mrb[0].mxu0
      %v1587 = vadd.f32 0.0, %v1586
      %v1588 = vpop.f32.mrb[0].mxu0
      %v1589 = vpop.f32.mrb[0].mxu0
      %v1590 = vadd.f32 0.0, %v1589
      %v1591 = vpop.f32.mrb[0].mxu0
      %1592 = vmatprep.mubr.bf16.mxu0 0
      %1593 = vmatmul.mubr.bf16.gmra.mrb[0].mxu0 %v1527
      %v1594 = vpop.f32.mrb[0].mxu0
      %v1595 = vadd.f32 0.0, %v1594
      %v1596 = vpop.f32.mrb[0].mxu0
      %v1597 = vpop.f32.mrb[0].mxu0
      %v1598 = vadd.f32 0.0, %v1597
      %v1599 = vpop.f32.mrb[0].mxu0
      %1600 = vmatprep.mubr.bf16.mxu0 0
      %1601 = vmatmul.mubr.bf16.gmra.mrb[0].mxu0 %v1530
      %v1602 = vpop.f32.mrb[0].mxu0
      %v1603 = vadd.f32 0.0, %v1602
      %v1604 = vpop.f32.mrb[0].mxu0
      %v1605 = vpop.f32.mrb[0].mxu0
      %v1606 = vadd.f32 0.0, %v1605
      %v1607 = vpop.f32.mrb[0].mxu0
      %1608 = vmatprep.mubr.bf16.mxu0 0
      %1609 = vmatmul.mubr.bf16.gmra.mrb[0].mxu0 %v1533
      %v1610 = vpop.f32.mrb[0].mxu0
      %v1611 = vadd.f32 0.0, %v1610
      %v1612 = vpop.f32.mrb[0].mxu0
      %v1613 = vpop.f32.mrb[0].mxu0
      %v1614 = vadd.f32 0.0, %v1613
      %v1615 = vpop.f32.mrb[0].mxu0
      %1616 = vmatprep.mubr.bf16.mxu0 0
      %1617 = vmatmul.mubr.bf16.gmra.mrb[0].mxu0 %v1536
      %v1618 = vpop.f32.mrb[0].mxu0
      %v1619 = vadd.f32 0.0, %v1618
      %v1620 = vpop.f32.mrb[0].mxu0
      %v1621 = vpop.f32.mrb[0].mxu0
      %v1622 = vadd.f32 0.0, %v1621
      %v1623 = vpop.f32.mrb[0].mxu0
      %1624 = vmatprep.mubr.bf16.mxu0 0
      %1625 = vmatmul.mubr.bf16.gmra.mrb[0].mxu0 %v1539
      %v1626 = vpop.f32.mrb[0].mxu0
      %v1627 = vadd.f32 0.0, %v1626
      %v1628 = vpop.f32.mrb[0].mxu0
      %v1629 = vpop.f32.mrb[0].mxu0
      %v1630 = vadd.f32 0.0, %v1629
      %v1631 = vpop.f32.mrb[0].mxu0
      %1632 = vmatprep.mubr.bf16.mxu0 0
      %1633 = vmatmul.mubr.bf16.gmra.mrb[0].mxu0 %v1542
      %v1634 = vpop.f32.mrb[0].mxu0
      %v1635 = vadd.f32 0.0, %v1634
      %v1636 = vpop.f32.mrb[0].mxu0
      %v1637 = vpop.f32.mrb[0].mxu0
      %v1638 = vadd.f32 0.0, %v1637
      %v1639 = vpop.f32.mrb[0].mxu0
      %1640 = vdwg.mxu0
      %v1641 = vadd.f32 %v1471, %v1579
      %v1642 = vadd.f32 %v1472, %v1582
      %v1643 = vadd.f32 %v1473, %v1587
      %v1644 = vadd.f32 %v1474, %v1590
      %v1645 = vadd.f32 %v1475, %v1595
      %v1646 = vadd.f32 %v1476, %v1598
      %v1647 = vadd.f32 %v1477, %v1603
      %v1648 = vadd.f32 %v1478, %v1606
      %v1649 = vadd.f32 %v1479, %v1611
      %v1650 = vadd.f32 %v1480, %v1614
      %v1651 = vadd.f32 %v1481, %v1619
      %v1652 = vadd.f32 %v1482, %v1622
      %v1653 = vadd.f32 %v1483, %v1627
      %v1654 = vadd.f32 %v1484, %v1630
      %v1655 = vadd.f32 %v1485, %v1635
      %v1656 = vadd.f32 %v1486, %v1638
      %v1657 = vld [vmem:[#allocation2 + $0x13] sm:$0xff]
      %v1658 = vld [vmem:[#allocation2 + $0x1b] sm:$0xff]
      %v1659 = vld [vmem:[#allocation2 + $0x23] sm:$0xff]
      %v1660 = vld [vmem:[#allocation2 + $0x2b] sm:$0xff]
      %v1661 = vld [vmem:[#allocation2 + $0x33] sm:$0xff]
      %v1662 = vld [vmem:[#allocation2 + $0x3b] sm:$0xff]
      %v1663 = vld [vmem:[#allocation2 + $0x43] sm:$0xff]
      %v1664 = vld [vmem:[#allocation2 + $0x4b] sm:$0xff]
      %v1665 = vld [vmem:[#allocation2 + $0x53] sm:$0xff]
      %v1666 = vld [vmem:[#allocation2 + $0x5b] sm:$0xff]
      %v1667 = vld [vmem:[#allocation2 + $0x63] sm:$0xff]
      %v1668 = vld [vmem:[#allocation2 + $0x6b] sm:$0xff]
      %v1669 = vld [vmem:[#allocation2 + $0x73] sm:$0xff]
      %v1670 = vld [vmem:[#allocation2 + $0x7b] sm:$0xff]
      %v1671 = vld [vmem:[#allocation2 + $0x83] sm:$0xff]
      %v1672 = vld [vmem:[#allocation2 + $0x8b] sm:$0xff]
      %v1673 = vpack.c.bf16 %v1658, %v1657
      %v1674 = vpack.c.bf16 %v1660, %v1659
      %v1675 = vpack.c.bf16 %v1662, %v1661
      %v1676 = vpack.c.bf16 %v1664, %v1663
      %v1677 = vpack.c.bf16 %v1666, %v1665
      %v1678 = vpack.c.bf16 %v1668, %v1667
      %v1679 = vpack.c.bf16 %v1670, %v1669
      %v1680 = vpack.c.bf16 %v1672, %v1671
      %s1681 = scalar_lea.vmem %s2, 32
      %v1682 = vld [vmem:[%s1681] sm:$0xf]
      %v1683 = vld [vmem:[%s1681 + $0x4] sm:$0xf]
      %v1686 = vunpack.c.l.b16 %v1682
      %v1687 = vunpack.c.l.b16 %v1683
      %v1688 = vpack.c.b16 %v1687, %v1686
      %v1691 = vsel %vm1068, %v1673, 0
      %v1694 = vsel %vm1068, %v1674, 0
      %v1697 = vsel %vm1068, %v1675, 0
      %v1700 = vsel %vm1068, %v1676, 0
      %v1703 = vsel %vm1068, %v1677, 0
      %v1706 = vsel %vm1068, %v1678, 0
      %v1709 = vsel %vm1068, %v1679, 0
      %v1712 = vsel %vm1068, %v1680, 0
      %1714 = vmatprep.subr.bf16.mxu0 0
      %1715 = vmatpush1.bf16.msra.mxu0 %v1688
      %1716 = vmatprep.subr.bf16.mxu0 0
      %1717 = vmatpush1.bf16.msra.mxu0 0
      %1718 = vmatprep.subr.bf16.mxu0 0
      %1719 = vmatpush1.bf16.msra.mxu0 0
      %1720 = vmatprep.subr.bf16.mxu0 0
      %1721 = vmatpush1.bf16.msra.mxu0 0
      %1722 = vmatprep.subr.bf16.mxu0 0
      %1723 = vmatpush1.bf16.msra.mxu0 0
      %1724 = vmatprep.subr.bf16.mxu0 0
      %1725 = vmatpush1.bf16.msra.mxu0 0
      %1726 = vmatprep.subr.bf16.mxu0 0
      %1727 = vmatpush1.bf16.msra.mxu0 0
      %1728 = vmatprep.subr.bf16.mxu0 0
      %1729 = vmatpush1.bf16.msra.mxu0 0
      %1730 = vmatprep.subr.bf16.mxu0 0
      %1731 = vmatpush1.bf16.msra.mxu0 0
      %1732 = vmatprep.subr.bf16.mxu0 0
      %1733 = vmatpush1.bf16.msra.mxu0 0
      %1734 = vmatprep.subr.bf16.mxu0 0
      %1735 = vmatpush1.bf16.msra.mxu0 0
      %1736 = vmatprep.subr.bf16.mxu0 0
      %1737 = vmatpush1.bf16.msra.mxu0 0
      %1738 = vmatprep.subr.bf16.mxu0 0
      %1739 = vmatpush1.bf16.msra.mxu0 0
      %1740 = vmatprep.subr.bf16.mxu0 0
      %1741 = vmatpush1.bf16.msra.mxu0 0
      %1742 = vmatprep.subr.bf16.mxu0 0
      %1743 = vmatpush1.bf16.msra.mxu0 0
      %1744 = vmatprep.subr.bf16.mxu0 0
      %1745 = vmatpush1.bf16.msra.mxu0 0
      %1746 = vmatprep.mubr.bf16.mxu0 0
      %1747 = vmatmul.mubr.bf16.gmra.mrb[0].mxu0 %v1691
      %v1748 = vpop.f32.mrb[0].mxu0
      %v1749 = vadd.f32 0.0, %v1748
      %v1750 = vpop.f32.mrb[0].mxu0
      %v1751 = vpop.f32.mrb[0].mxu0
      %v1752 = vadd.f32 0.0, %v1751
      %v1753 = vpop.f32.mrb[0].mxu0
      %1754 = vmatprep.mubr.bf16.mxu0 0
      %1755 = vmatmul.mubr.bf16.gmra.mrb[0].mxu0 %v1694
      %v1756 = vpop.f32.mrb[0].mxu0
      %v1757 = vadd.f32 0.0, %v1756
      %v1758 = vpop.f32.mrb[0].mxu0
      %v1759 = vpop.f32.mrb[0].mxu0
      %v1760 = vadd.f32 0.0, %v1759
      %v1761 = vpop.f32.mrb[0].mxu0
      %1762 = vmatprep.mubr.bf16.mxu0 0
      %1763 = vmatmul.mubr.bf16.gmra.mrb[0].mxu0 %v1697
      %v1764 = vpop.f32.mrb[0].mxu0
      %v1765 = vadd.f32 0.0, %v1764
      %v1766 = vpop.f32.mrb[0].mxu0
      %v1767 = vpop.f32.mrb[0].mxu0
      %v1768 = vadd.f32 0.0, %v1767
      %v1769 = vpop.f32.mrb[0].mxu0
      %1770 = vmatprep.mubr.bf16.mxu0 0
      %1771 = vmatmul.mubr.bf16.gmra.mrb[0].mxu0 %v1700
      %v1772 = vpop.f32.mrb[0].mxu0
      %v1773 = vadd.f32 0.0, %v1772
      %v1774 = vpop.f32.mrb[0].mxu0
      %v1775 = vpop.f32.mrb[0].mxu0
      %v1776 = vadd.f32 0.0, %v1775
      %v1777 = vpop.f32.mrb[0].mxu0
      %1778 = vmatprep.mubr.bf16.mxu0 0
      %1779 = vmatmul.mubr.bf16.gmra.mrb[0].mxu0 %v1703
      %v1780 = vpop.f32.mrb[0].mxu0
      %v1781 = vadd.f32 0.0, %v1780
      %v1782 = vpop.f32.mrb[0].mxu0
      %v1783 = vpop.f32.mrb[0].mxu0
      %v1784 = vadd.f32 0.0, %v1783
      %v1785 = vpop.f32.mrb[0].mxu0
      %1786 = vmatprep.mubr.bf16.mxu0 0
      %1787 = vmatmul.mubr.bf16.gmra.mrb[0].mxu0 %v1706
      %v1788 = vpop.f32.mrb[0].mxu0
      %v1789 = vadd.f32 0.0, %v1788
      %v1790 = vpop.f32.mrb[0].mxu0
      %v1791 = vpop.f32.mrb[0].mxu0
      %v1792 = vadd.f32 0.0, %v1791
      %v1793 = vpop.f32.mrb[0].mxu0
      %1794 = vmatprep.mubr.bf16.mxu0 0
      %1795 = vmatmul.mubr.bf16.gmra.mrb[0].mxu0 %v1709
      %v1796 = vpop.f32.mrb[0].mxu0
      %v1797 = vadd.f32 0.0, %v1796
      %v1798 = vpop.f32.mrb[0].mxu0
      %v1799 = vpop.f32.mrb[0].mxu0
      %v1800 = vadd.f32 0.0, %v1799
      %v1801 = vpop.f32.mrb[0].mxu0
      %1802 = vmatprep.mubr.bf16.mxu0 0
      %1803 = vmatmul.mubr.bf16.gmra.mrb[0].mxu0 %v1712
      %v1804 = vpop.f32.mrb[0].mxu0
      %v1805 = vadd.f32 0.0, %v1804
      %v1806 = vpop.f32.mrb[0].mxu0
      %v1807 = vpop.f32.mrb[0].mxu0
      %v1808 = vadd.f32 0.0, %v1807
      %v1809 = vpop.f32.mrb[0].mxu0
      %1810 = vdwg.mxu0
      %v1811 = vadd.f32 %v1641, %v1749
      %v1812 = vadd.f32 %v1642, %v1752
      %v1813 = vadd.f32 %v1643, %v1757
      %v1814 = vadd.f32 %v1644, %v1760
      %v1815 = vadd.f32 %v1645, %v1765
      %v1816 = vadd.f32 %v1646, %v1768
      %v1817 = vadd.f32 %v1647, %v1773
      %v1818 = vadd.f32 %v1648, %v1776
      %v1819 = vadd.f32 %v1649, %v1781
      %v1820 = vadd.f32 %v1650, %v1784
      %v1821 = vadd.f32 %v1651, %v1789
      %v1822 = vadd.f32 %v1652, %v1792
      %v1823 = vadd.f32 %v1653, %v1797
      %v1824 = vadd.f32 %v1654, %v1800
      %v1825 = vadd.f32 %v1655, %v1805
      %v1826 = vadd.f32 %v1656, %v1808
      %v1827 = vld [vmem:[#allocation2 + $0x14] sm:$0xff]
      %v1828 = vld [vmem:[#allocation2 + $0x1c] sm:$0xff]
      %v1829 = vld [vmem:[#allocation2 + $0x24] sm:$0xff]
      %v1830 = vld [vmem:[#allocation2 + $0x2c] sm:$0xff]
      %v1831 = vld [vmem:[#allocation2 + $0x34] sm:$0xff]
      %v1832 = vld [vmem:[#allocation2 + $0x3c] sm:$0xff]
      %v1833 = vld [vmem:[#allocation2 + $0x44] sm:$0xff]
      %v1834 = vld [vmem:[#allocation2 + $0x4c] sm:$0xff]
      %v1835 = vld [vmem:[#allocation2 + $0x54] sm:$0xff]
      %v1836 = vld [vmem:[#allocation2 + $0x5c] sm:$0xff]
      %v1837 = vld [vmem:[#allocation2 + $0x64] sm:$0xff]
      %v1838 = vld [vmem:[#allocation2 + $0x6c] sm:$0xff]
      %v1839 = vld [vmem:[#allocation2 + $0x74] sm:$0xff]
      %v1840 = vld [vmem:[#allocation2 + $0x7c] sm:$0xff]
      %v1841 = vld [vmem:[#allocation2 + $0x84] sm:$0xff]
      %v1842 = vld [vmem:[#allocation2 + $0x8c] sm:$0xff]
      %v1843 = vpack.c.bf16 %v1828, %v1827
      %v1844 = vpack.c.bf16 %v1830, %v1829
      %v1845 = vpack.c.bf16 %v1832, %v1831
      %v1846 = vpack.c.bf16 %v1834, %v1833
      %v1847 = vpack.c.bf16 %v1836, %v1835
      %v1848 = vpack.c.bf16 %v1838, %v1837
      %v1849 = vpack.c.bf16 %v1840, %v1839
      %v1850 = vpack.c.bf16 %v1842, %v1841
      %s1851 = scalar_lea.vmem %s2, 40
      %v1852 = vld [vmem:[%s1851] sm:$0xf]
      %v1853 = vld [vmem:[%s1851 + $0x4] sm:$0xf]
      %v1856 = vunpack.c.l.b16 %v1852
      %v1857 = vunpack.c.l.b16 %v1853
      %v1858 = vpack.c.b16 %v1857, %v1856
      %v1861 = vsel %vm1068, %v1843, 0
      %v1864 = vsel %vm1068, %v1844, 0
      %v1867 = vsel %vm1068, %v1845, 0
      %v1870 = vsel %vm1068, %v1846, 0
      %v1873 = vsel %vm1068, %v1847, 0
      %v1876 = vsel %vm1068, %v1848, 0
      %v1879 = vsel %vm1068, %v1849, 0
      %v1882 = vsel %vm1068, %v1850, 0
      %1884 = vmatprep.subr.bf16.mxu0 0
      %1885 = vmatpush1.bf16.msra.mxu0 %v1858
      %1886 = vmatprep.subr.bf16.mxu0 0
      %1887 = vmatpush1.bf16.msra.mxu0 0
      %1888 = vmatprep.subr.bf16.mxu0 0
      %1889 = vmatpush1.bf16.msra.mxu0 0
      %1890 = vmatprep.subr.bf16.mxu0 0
      %1891 = vmatpush1.bf16.msra.mxu0 0
      %1892 = vmatprep.subr.bf16.mxu0 0
      %1893 = vmatpush1.bf16.msra.mxu0 0
      %1894 = vmatprep.subr.bf16.mxu0 0
      %1895 = vmatpush1.bf16.msra.mxu0 0
      %1896 = vmatprep.subr.bf16.mxu0 0
      %1897 = vmatpush1.bf16.msra.mxu0 0
      %1898 = vmatprep.subr.bf16.mxu0 0
      %1899 = vmatpush1.bf16.msra.mxu0 0
      %1900 = vmatprep.subr.bf16.mxu0 0
      %1901 = vmatpush1.bf16.msra.mxu0 0
      %1902 = vmatprep.subr.bf16.mxu0 0
      %1903 = vmatpush1.bf16.msra.mxu0 0
      %1904 = vmatprep.subr.bf16.mxu0 0
      %1905 = vmatpush1.bf16.msra.mxu0 0
      %1906 = vmatprep.subr.bf16.mxu0 0
      %1907 = vmatpush1.bf16.msra.mxu0 0
      %1908 = vmatprep.subr.bf16.mxu0 0
      %1909 = vmatpush1.bf16.msra.mxu0 0
      %1910 = vmatprep.subr.bf16.mxu0 0
      %1911 = vmatpush1.bf16.msra.mxu0 0
      %1912 = vmatprep.subr.bf16.mxu0 0
      %1913 = vmatpush1.bf16.msra.mxu0 0
      %1914 = vmatprep.subr.bf16.mxu0 0
      %1915 = vmatpush1.bf16.msra.mxu0 0
      %1916 = vmatprep.mubr.bf16.mxu0 0
      %1917 = vmatmul.mubr.bf16.gmra.mrb[0].mxu0 %v1861
      %v1918 = vpop.f32.mrb[0].mxu0
      %v1919 = vadd.f32 0.0, %v1918
      %v1920 = vpop.f32.mrb[0].mxu0
      %v1921 = vpop.f32.mrb[0].mxu0
      %v1922 = vadd.f32 0.0, %v1921
      %v1923 = vpop.f32.mrb[0].mxu0
      %1924 = vmatprep.mubr.bf16.mxu0 0
      %1925 = vmatmul.mubr.bf16.gmra.mrb[0].mxu0 %v1864
      %v1926 = vpop.f32.mrb[0].mxu0
      %v1927 = vadd.f32 0.0, %v1926
      %v1928 = vpop.f32.mrb[0].mxu0
      %v1929 = vpop.f32.mrb[0].mxu0
      %v1930 = vadd.f32 0.0, %v1929
      %v1931 = vpop.f32.mrb[0].mxu0
      %1932 = vmatprep.mubr.bf16.mxu0 0
      %1933 = vmatmul.mubr.bf16.gmra.mrb[0].mxu0 %v1867
      %v1934 = vpop.f32.mrb[0].mxu0
      %v1935 = vadd.f32 0.0, %v1934
      %v1936 = vpop.f32.mrb[0].mxu0
      %v1937 = vpop.f32.mrb[0].mxu0
      %v1938 = vadd.f32 0.0, %v1937
      %v1939 = vpop.f32.mrb[0].mxu0
      %1940 = vmatprep.mubr.bf16.mxu0 0
      %1941 = vmatmul.mubr.bf16.gmra.mrb[0].mxu0 %v1870
      %v1942 = vpop.f32.mrb[0].mxu0
      %v1943 = vadd.f32 0.0, %v1942
      %v1944 = vpop.f32.mrb[0].mxu0
      %v1945 = vpop.f32.mrb[0].mxu0
      %v1946 = vadd.f32 0.0, %v1945
      %v1947 = vpop.f32.mrb[0].mxu0
      %1948 = vmatprep.mubr.bf16.mxu0 0
      %1949 = vmatmul.mubr.bf16.gmra.mrb[0].mxu0 %v1873
      %v1950 = vpop.f32.mrb[0].mxu0
      %v1951 = vadd.f32 0.0, %v1950
      %v1952 = vpop.f32.mrb[0].mxu0
      %v1953 = vpop.f32.mrb[0].mxu0
      %v1954 = vadd.f32 0.0, %v1953
      %v1955 = vpop.f32.mrb[0].mxu0
      %1956 = vmatprep.mubr.bf16.mxu0 0
      %1957 = vmatmul.mubr.bf16.gmra.mrb[0].mxu0 %v1876
      %v1958 = vpop.f32.mrb[0].mxu0
      %v1959 = vadd.f32 0.0, %v1958
      %v1960 = vpop.f32.mrb[0].mxu0
      %v1961 = vpop.f32.mrb[0].mxu0
      %v1962 = vadd.f32 0.0, %v1961
      %v1963 = vpop.f32.mrb[0].mxu0
      %1964 = vmatprep.mubr.bf16.mxu0 0
      %1965 = vmatmul.mubr.bf16.gmra.mrb[0].mxu0 %v1879
      %v1966 = vpop.f32.mrb[0].mxu0
      %v1967 = vadd.f32 0.0, %v1966
      %v1968 = vpop.f32.mrb[0].mxu0
      %v1969 = vpop.f32.mrb[0].mxu0
      %v1970 = vadd.f32 0.0, %v1969
      %v1971 = vpop.f32.mrb[0].mxu0
      %1972 = vmatprep.mubr.bf16.mxu0 0
      %1973 = vmatmul.mubr.bf16.gmra.mrb[0].mxu0 %v1882
      %v1974 = vpop.f32.mrb[0].mxu0
      %v1975 = vadd.f32 0.0, %v1974
      %v1976 = vpop.f32.mrb[0].mxu0
      %v1977 = vpop.f32.mrb[0].mxu0
      %v1978 = vadd.f32 0.0, %v1977
      %v1979 = vpop.f32.mrb[0].mxu0
      %1980 = vdwg.mxu0
      %v1981 = vadd.f32 %v1811, %v1919
      %v1982 = vadd.f32 %v1812, %v1922
      %v1983 = vadd.f32 %v1813, %v1927
      %v1984 = vadd.f32 %v1814, %v1930
      %v1985 = vadd.f32 %v1815, %v1935
      %v1986 = vadd.f32 %v1816, %v1938
      %v1987 = vadd.f32 %v1817, %v1943
      %v1988 = vadd.f32 %v1818, %v1946
      %v1989 = vadd.f32 %v1819, %v1951
      %v1990 = vadd.f32 %v1820, %v1954
      %v1991 = vadd.f32 %v1821, %v1959
      %v1992 = vadd.f32 %v1822, %v1962
      %v1993 = vadd.f32 %v1823, %v1967
      %v1994 = vadd.f32 %v1824, %v1970
      %v1995 = vadd.f32 %v1825, %v1975
      %v1996 = vadd.f32 %v1826, %v1978
      %v1997 = vld [vmem:[#allocation2 + $0x24] sm:$0xff]
      %v1998 = vld [vmem:[#allocation2 + $0x2c] sm:$0xff]
      %v1999 = vld [vmem:[#allocation2 + $0x34] sm:$0xff]
      %v2000 = vld [vmem:[#allocation2 + $0x3c] sm:$0xff]
      %v2001 = vld [vmem:[#allocation2 + $0x44] sm:$0xff]
      %v2002 = vld [vmem:[#allocation2 + $0x4c] sm:$0xff]
      %v2003 = vld [vmem:[#allocation2 + $0x54] sm:$0xff]
      %v2004 = vld [vmem:[#allocation2 + $0x5c] sm:$0xff]
      %v2005 = vld [vmem:[#allocation2 + $0x64] sm:$0xff]
      %v2006 = vld [vmem:[#allocation2 + $0x6c] sm:$0xff]
      %v2007 = vld [vmem:[#allocation2 + $0x74] sm:$0xff]
      %v2008 = vld [vmem:[#allocation2 + $0x7c] sm:$0xff]
      %v2009 = vld [vmem:[#allocation2 + $0x84] sm:$0xff]
      %v2010 = vld [vmem:[#allocation2 + $0x8c] sm:$0xff]
      %v2011 = vld [vmem:[#allocation2 + $0x94] sm:$0xff]
      %v2012 = vld [vmem:[#allocation2 + $0x9c] sm:$0xff]
      %v2013 = vpack.c.bf16 %v1998, %v1997
      %v2014 = vpack.c.bf16 %v2000, %v1999
      %v2015 = vpack.c.bf16 %v2002, %v2001
      %v2016 = vpack.c.bf16 %v2004, %v2003
      %v2017 = vpack.c.bf16 %v2006, %v2005
      %v2018 = vpack.c.bf16 %v2008, %v2007
      %v2019 = vpack.c.bf16 %v2010, %v2009
      %v2020 = vpack.c.bf16 %v2012, %v2011
      %s2021 = scalar_lea.vmem %s2, 48
      %v2022 = vld [vmem:[%s2021] sm:$0xf]
      %v2023 = vld [vmem:[%s2021 + $0x4] sm:$0xf]
      %v2026 = vunpack.c.l.b16 %v2022
      %v2027 = vunpack.c.l.b16 %v2023
      %v2028 = vpack.c.b16 %v2027, %v2026
      %v2031 = vsel %vm1068, %v2013, 0
      %v2034 = vsel %vm1068, %v2014, 0
      %v2037 = vsel %vm1068, %v2015, 0
      %v2040 = vsel %vm1068, %v2016, 0
      %v2043 = vsel %vm1068, %v2017, 0
      %v2046 = vsel %vm1068, %v2018, 0
      %v2049 = vsel %vm1068, %v2019, 0
      %v2052 = vsel %vm1068, %v2020, 0
      %2054 = vmatprep.subr.bf16.mxu0 0
      %2055 = vmatpush1.bf16.msra.mxu0 %v2028
      %2056 = vmatprep.subr.bf16.mxu0 0
      %2057 = vmatpush1.bf16.msra.mxu0 0
      %2058 = vmatprep.subr.bf16.mxu0 0
      %2059 = vmatpush1.bf16.msra.mxu0 0
      %2060 = vmatprep.subr.bf16.mxu0 0
      %2061 = vmatpush1.bf16.msra.mxu0 0
      %2062 = vmatprep.subr.bf16.mxu0 0
      %2063 = vmatpush1.bf16.msra.mxu0 0
      %2064 = vmatprep.subr.bf16.mxu0 0
      %2065 = vmatpush1.bf16.msra.mxu0 0
      %2066 = vmatprep.subr.bf16.mxu0 0
      %2067 = vmatpush1.bf16.msra.mxu0 0
      %2068 = vmatprep.subr.bf16.mxu0 0
      %2069 = vmatpush1.bf16.msra.mxu0 0
      %2070 = vmatprep.subr.bf16.mxu0 0
      %2071 = vmatpush1.bf16.msra.mxu0 0
      %2072 = vmatprep.subr.bf16.mxu0 0
      %2073 = vmatpush1.bf16.msra.mxu0 0
      %2074 = vmatprep.subr.bf16.mxu0 0
      %2075 = vmatpush1.bf16.msra.mxu0 0
      %2076 = vmatprep.subr.bf16.mxu0 0
      %2077 = vmatpush1.bf16.msra.mxu0 0
      %2078 = vmatprep.subr.bf16.mxu0 0
      %2079 = vmatpush1.bf16.msra.mxu0 0
      %2080 = vmatprep.subr.bf16.mxu0 0
      %2081 = vmatpush1.bf16.msra.mxu0 0
      %2082 = vmatprep.subr.bf16.mxu0 0
      %2083 = vmatpush1.bf16.msra.mxu0 0
      %2084 = vmatprep.subr.bf16.mxu0 0
      %2085 = vmatpush1.bf16.msra.mxu0 0
      %2086 = vmatprep.mubr.bf16.mxu0 0
      %2087 = vmatmul.mubr.bf16.gmra.mrb[0].mxu0 %v2031
      %v2088 = vpop.f32.mrb[0].mxu0
      %v2089 = vadd.f32 0.0, %v2088
      %v2090 = vpop.f32.mrb[0].mxu0
      %v2091 = vpop.f32.mrb[0].mxu0
      %v2092 = vadd.f32 0.0, %v2091
      %v2093 = vpop.f32.mrb[0].mxu0
      %2094 = vmatprep.mubr.bf16.mxu0 0
      %2095 = vmatmul.mubr.bf16.gmra.mrb[0].mxu0 %v2034
      %v2096 = vpop.f32.mrb[0].mxu0
      %v2097 = vadd.f32 0.0, %v2096
      %v2098 = vpop.f32.mrb[0].mxu0
      %v2099 = vpop.f32.mrb[0].mxu0
      %v2100 = vadd.f32 0.0, %v2099
      %v2101 = vpop.f32.mrb[0].mxu0
      %2102 = vmatprep.mubr.bf16.mxu0 0
      %2103 = vmatmul.mubr.bf16.gmra.mrb[0].mxu0 %v2037
      %v2104 = vpop.f32.mrb[0].mxu0
      %v2105 = vadd.f32 0.0, %v2104
      %v2106 = vpop.f32.mrb[0].mxu0
      %v2107 = vpop.f32.mrb[0].mxu0
      %v2108 = vadd.f32 0.0, %v2107
      %v2109 = vpop.f32.mrb[0].mxu0
      %2110 = vmatprep.mubr.bf16.mxu0 0
      %2111 = vmatmul.mubr.bf16.gmra.mrb[0].mxu0 %v2040
      %v2112 = vpop.f32.mrb[0].mxu0
      %v2113 = vadd.f32 0.0, %v2112
      %v2114 = vpop.f32.mrb[0].mxu0
      %v2115 = vpop.f32.mrb[0].mxu0
      %v2116 = vadd.f32 0.0, %v2115
      %v2117 = vpop.f32.mrb[0].mxu0
      %2118 = vmatprep.mubr.bf16.mxu0 0
      %2119 = vmatmul.mubr.bf16.gmra.mrb[0].mxu0 %v2043
      %v2120 = vpop.f32.mrb[0].mxu0
      %v2121 = vadd.f32 0.0, %v2120
      %v2122 = vpop.f32.mrb[0].mxu0
      %v2123 = vpop.f32.mrb[0].mxu0
      %v2124 = vadd.f32 0.0, %v2123
      %v2125 = vpop.f32.mrb[0].mxu0
      %2126 = vmatprep.mubr.bf16.mxu0 0
      %2127 = vmatmul.mubr.bf16.gmra.mrb[0].mxu0 %v2046
      %v2128 = vpop.f32.mrb[0].mxu0
      %v2129 = vadd.f32 0.0, %v2128
      %v2130 = vpop.f32.mrb[0].mxu0
      %v2131 = vpop.f32.mrb[0].mxu0
      %v2132 = vadd.f32 0.0, %v2131
      %v2133 = vpop.f32.mrb[0].mxu0
      %2134 = vmatprep.mubr.bf16.mxu0 0
      %2135 = vmatmul.mubr.bf16.gmra.mrb[0].mxu0 %v2049
      %v2136 = vpop.f32.mrb[0].mxu0
      %v2137 = vadd.f32 0.0, %v2136
      %v2138 = vpop.f32.mrb[0].mxu0
      %v2139 = vpop.f32.mrb[0].mxu0
      %v2140 = vadd.f32 0.0, %v2139
      %v2141 = vpop.f32.mrb[0].mxu0
      %2142 = vmatprep.mubr.bf16.mxu0 0
      %2143 = vmatmul.mubr.bf16.gmra.mrb[0].mxu0 %v2052
      %v2144 = vpop.f32.mrb[0].mxu0
      %v2145 = vadd.f32 0.0, %v2144
      %v2146 = vpop.f32.mrb[0].mxu0
      %v2147 = vpop.f32.mrb[0].mxu0
      %v2148 = vadd.f32 0.0, %v2147
      %v2149 = vpop.f32.mrb[0].mxu0
      %2150 = vdwg.mxu0
      %v2151 = vadd.f32 %v1981, %v2089
      %v2152 = vadd.f32 %v1982, %v2092
      %v2153 = vadd.f32 %v1983, %v2097
      %v2154 = vadd.f32 %v1984, %v2100
      %v2155 = vadd.f32 %v1985, %v2105
      %v2156 = vadd.f32 %v1986, %v2108
      %v2157 = vadd.f32 %v1987, %v2113
      %v2158 = vadd.f32 %v1988, %v2116
      %v2159 = vadd.f32 %v1989, %v2121
      %v2160 = vadd.f32 %v1990, %v2124
      %v2161 = vadd.f32 %v1991, %v2129
      %v2162 = vadd.f32 %v1992, %v2132
      %v2163 = vadd.f32 %v1993, %v2137
      %v2164 = vadd.f32 %v1994, %v2140
      %v2165 = vadd.f32 %v1995, %v2145
      %v2166 = vadd.f32 %v1996, %v2148
      %v2167 = vld [vmem:[#allocation2 + $0x25] sm:$0xff]
      %v2168 = vld [vmem:[#allocation2 + $0x2d] sm:$0xff]
      %v2169 = vld [vmem:[#allocation2 + $0x35] sm:$0xff]
      %v2170 = vld [vmem:[#allocation2 + $0x3d] sm:$0xff]
      %v2171 = vld [vmem:[#allocation2 + $0x45] sm:$0xff]
      %v2172 = vld [vmem:[#allocation2 + $0x4d] sm:$0xff]
      %v2173 = vld [vmem:[#allocation2 + $0x55] sm:$0xff]
      %v2174 = vld [vmem:[#allocation2 + $0x5d] sm:$0xff]
      %v2175 = vld [vmem:[#allocation2 + $0x65] sm:$0xff]
      %v2176 = vld [vmem:[#allocation2 + $0x6d] sm:$0xff]
      %v2177 = vld [vmem:[#allocation2 + $0x75] sm:$0xff]
      %v2178 = vld [vmem:[#allocation2 + $0x7d] sm:$0xff]
      %v2179 = vld [vmem:[#allocation2 + $0x85] sm:$0xff]
      %v2180 = vld [vmem:[#allocation2 + $0x8d] sm:$0xff]
      %v2181 = vld [vmem:[#allocation2 + $0x95] sm:$0xff]
      %v2182 = vld [vmem:[#allocation2 + $0x9d] sm:$0xff]
      %v2183 = vpack.c.bf16 %v2168, %v2167
      %v2184 = vpack.c.bf16 %v2170, %v2169
      %v2185 = vpack.c.bf16 %v2172, %v2171
      %v2186 = vpack.c.bf16 %v2174, %v2173
      %v2187 = vpack.c.bf16 %v2176, %v2175
      %v2188 = vpack.c.bf16 %v2178, %v2177
      %v2189 = vpack.c.bf16 %v2180, %v2179
      %v2190 = vpack.c.bf16 %v2182, %v2181
      %s2191 = scalar_lea.vmem %s2, 56
      %v2192 = vld [vmem:[%s2191] sm:$0xf]
      %v2193 = vld [vmem:[%s2191 + $0x4] sm:$0xf]
      %v2196 = vunpack.c.l.b16 %v2192
      %v2197 = vunpack.c.l.b16 %v2193
      %v2198 = vpack.c.b16 %v2197, %v2196
      %v2201 = vsel %vm1068, %v2183, 0
      %v2204 = vsel %vm1068, %v2184, 0
      %v2207 = vsel %vm1068, %v2185, 0
      %v2210 = vsel %vm1068, %v2186, 0
      %v2213 = vsel %vm1068, %v2187, 0
      %v2216 = vsel %vm1068, %v2188, 0
      %v2219 = vsel %vm1068, %v2189, 0
      %v2222 = vsel %vm1068, %v2190, 0
      %2224 = vmatprep.subr.bf16.mxu0 0
      %2225 = vmatpush1.bf16.msra.mxu0 %v2198
      %2226 = vmatprep.subr.bf16.mxu0 0
      %2227 = vmatpush1.bf16.msra.mxu0 0
      %2228 = vmatprep.subr.bf16.mxu0 0
      %2229 = vmatpush1.bf16.msra.mxu0 0
      %2230 = vmatprep.subr.bf16.mxu0 0
      %2231 = vmatpush1.bf16.msra.mxu0 0
      %2232 = vmatprep.subr.bf16.mxu0 0
      %2233 = vmatpush1.bf16.msra.mxu0 0
      %2234 = vmatprep.subr.bf16.mxu0 0
      %2235 = vmatpush1.bf16.msra.mxu0 0
      %2236 = vmatprep.subr.bf16.mxu0 0
      %2237 = vmatpush1.bf16.msra.mxu0 0
      %2238 = vmatprep.subr.bf16.mxu0 0
      %2239 = vmatpush1.bf16.msra.mxu0 0
      %2240 = vmatprep.subr.bf16.mxu0 0
      %2241 = vmatpush1.bf16.msra.mxu0 0
      %2242 = vmatprep.subr.bf16.mxu0 0
      %2243 = vmatpush1.bf16.msra.mxu0 0
      %2244 = vmatprep.subr.bf16.mxu0 0
      %2245 = vmatpush1.bf16.msra.mxu0 0
      %2246 = vmatprep.subr.bf16.mxu0 0
      %2247 = vmatpush1.bf16.msra.mxu0 0
      %2248 = vmatprep.subr.bf16.mxu0 0
      %2249 = vmatpush1.bf16.msra.mxu0 0
      %2250 = vmatprep.subr.bf16.mxu0 0
      %2251 = vmatpush1.bf16.msra.mxu0 0
      %2252 = vmatprep.subr.bf16.mxu0 0
      %2253 = vmatpush1.bf16.msra.mxu0 0
      %2254 = vmatprep.subr.bf16.mxu0 0
      %2255 = vmatpush1.bf16.msra.mxu0 0
      %2256 = vmatprep.mubr.bf16.mxu0 0
      %2257 = vmatmul.mubr.bf16.gmra.mrb[0].mxu0 %v2201
      %v2258 = vpop.f32.mrb[0].mxu0
      %v2259 = vadd.f32 0.0, %v2258
      %v2260 = vpop.f32.mrb[0].mxu0
      %v2261 = vpop.f32.mrb[0].mxu0
      %v2262 = vadd.f32 0.0, %v2261
      %v2263 = vpop.f32.mrb[0].mxu0
      %2264 = vmatprep.mubr.bf16.mxu0 0
      %2265 = vmatmul.mubr.bf16.gmra.mrb[0].mxu0 %v2204
      %v2266 = vpop.f32.mrb[0].mxu0
      %v2267 = vadd.f32 0.0, %v2266
      %v2268 = vpop.f32.mrb[0].mxu0
      %v2269 = vpop.f32.mrb[0].mxu0
      %v2270 = vadd.f32 0.0, %v2269
      %v2271 = vpop.f32.mrb[0].mxu0
      %2272 = vmatprep.mubr.bf16.mxu0 0
      %2273 = vmatmul.mubr.bf16.gmra.mrb[0].mxu0 %v2207
      %v2274 = vpop.f32.mrb[0].mxu0
      %v2275 = vadd.f32 0.0, %v2274
      %v2276 = vpop.f32.mrb[0].mxu0
      %v2277 = vpop.f32.mrb[0].mxu0
      %v2278 = vadd.f32 0.0, %v2277
      %v2279 = vpop.f32.mrb[0].mxu0
      %2280 = vmatprep.mubr.bf16.mxu0 0
      %2281 = vmatmul.mubr.bf16.gmra.mrb[0].mxu0 %v2210
      %v2282 = vpop.f32.mrb[0].mxu0
      %v2283 = vadd.f32 0.0, %v2282
      %v2284 = vpop.f32.mrb[0].mxu0
      %v2285 = vpop.f32.mrb[0].mxu0
      %v2286 = vadd.f32 0.0, %v2285
      %v2287 = vpop.f32.mrb[0].mxu0
      %2288 = vmatprep.mubr.bf16.mxu0 0
      %2289 = vmatmul.mubr.bf16.gmra.mrb[0].mxu0 %v2213
      %v2290 = vpop.f32.mrb[0].mxu0
      %v2291 = vadd.f32 0.0, %v2290
      %v2292 = vpop.f32.mrb[0].mxu0
      %v2293 = vpop.f32.mrb[0].mxu0
      %v2294 = vadd.f32 0.0, %v2293
      %v2295 = vpop.f32.mrb[0].mxu0
      %2296 = vmatprep.mubr.bf16.mxu0 0
      %2297 = vmatmul.mubr.bf16.gmra.mrb[0].mxu0 %v2216
      %v2298 = vpop.f32.mrb[0].mxu0
      %v2299 = vadd.f32 0.0, %v2298
      %v2300 = vpop.f32.mrb[0].mxu0
      %v2301 = vpop.f32.mrb[0].mxu0
      %v2302 = vadd.f32 0.0, %v2301
      %v2303 = vpop.f32.mrb[0].mxu0
      %2304 = vmatprep.mubr.bf16.mxu0 0
      %2305 = vmatmul.mubr.bf16.gmra.mrb[0].mxu0 %v2219
      %v2306 = vpop.f32.mrb[0].mxu0
      %v2307 = vadd.f32 0.0, %v2306
      %v2308 = vpop.f32.mrb[0].mxu0
      %v2309 = vpop.f32.mrb[0].mxu0
      %v2310 = vadd.f32 0.0, %v2309
      %v2311 = vpop.f32.mrb[0].mxu0
      %2312 = vmatprep.mubr.bf16.mxu0 0
      %2313 = vmatmul.mubr.bf16.gmra.mrb[0].mxu0 %v2222
      %v2314 = vpop.f32.mrb[0].mxu0
      %v2315 = vadd.f32 0.0, %v2314
      %v2316 = vpop.f32.mrb[0].mxu0
      %v2317 = vpop.f32.mrb[0].mxu0
      %v2318 = vadd.f32 0.0, %v2317
      %v2319 = vpop.f32.mrb[0].mxu0
      %2320 = vdwg.mxu0
      %v2321 = vadd.f32 %v2151, %v2259
      %v2322 = vadd.f32 %v2152, %v2262
      %v2323 = vadd.f32 %v2153, %v2267
      %v2324 = vadd.f32 %v2154, %v2270
      %v2325 = vadd.f32 %v2155, %v2275
      %v2326 = vadd.f32 %v2156, %v2278
      %v2327 = vadd.f32 %v2157, %v2283
      %v2328 = vadd.f32 %v2158, %v2286
      %v2329 = vadd.f32 %v2159, %v2291
      %v2330 = vadd.f32 %v2160, %v2294
      %v2331 = vadd.f32 %v2161, %v2299
      %v2332 = vadd.f32 %v2162, %v2302
      %v2333 = vadd.f32 %v2163, %v2307
      %v2334 = vadd.f32 %v2164, %v2310
      %v2335 = vadd.f32 %v2165, %v2315
      %v2336 = vadd.f32 %v2166, %v2318
      %v2337 = vld [vmem:[#allocation2 + $0x26] sm:$0xff]
      %v2338 = vld [vmem:[#allocation2 + $0x2e] sm:$0xff]
      %v2339 = vld [vmem:[#allocation2 + $0x36] sm:$0xff]
      %v2340 = vld [vmem:[#allocation2 + $0x3e] sm:$0xff]
      %v2341 = vld [vmem:[#allocation2 + $0x46] sm:$0xff]
      %v2342 = vld [vmem:[#allocation2 + $0x4e] sm:$0xff]
      %v2343 = vld [vmem:[#allocation2 + $0x56] sm:$0xff]
      %v2344 = vld [vmem:[#allocation2 + $0x5e] sm:$0xff]
      %v2345 = vld [vmem:[#allocation2 + $0x66] sm:$0xff]
      %v2346 = vld [vmem:[#allocation2 + $0x6e] sm:$0xff]
      %v2347 = vld [vmem:[#allocation2 + $0x76] sm:$0xff]
      %v2348 = vld [vmem:[#allocation2 + $0x7e] sm:$0xff]
      %v2349 = vld [vmem:[#allocation2 + $0x86] sm:$0xff]
      %v2350 = vld [vmem:[#allocation2 + $0x8e] sm:$0xff]
      %v2351 = vld [vmem:[#allocation2 + $0x96] sm:$0xff]
      %v2352 = vld [vmem:[#allocation2 + $0x9e] sm:$0xff]
      %v2353 = vpack.c.bf16 %v2338, %v2337
      %v2354 = vpack.c.bf16 %v2340, %v2339
      %v2355 = vpack.c.bf16 %v2342, %v2341
      %v2356 = vpack.c.bf16 %v2344, %v2343
      %v2357 = vpack.c.bf16 %v2346, %v2345
      %v2358 = vpack.c.bf16 %v2348, %v2347
      %v2359 = vpack.c.bf16 %v2350, %v2349
      %v2360 = vpack.c.bf16 %v2352, %v2351
      %s2361 = scalar_lea.vmem %s2, 64
      %v2362 = vld [vmem:[%s2361] sm:$0xf]
      %v2363 = vld [vmem:[%s2361 + $0x4] sm:$0xf]
      %v2366 = vunpack.c.l.b16 %v2362
      %v2367 = vunpack.c.l.b16 %v2363
      %v2368 = vpack.c.b16 %v2367, %v2366
      %v2371 = vsel %vm1068, %v2353, 0
      %v2374 = vsel %vm1068, %v2354, 0
      %v2377 = vsel %vm1068, %v2355, 0
      %v2380 = vsel %vm1068, %v2356, 0
      %v2383 = vsel %vm1068, %v2357, 0
      %v2386 = vsel %vm1068, %v2358, 0
      %v2389 = vsel %vm1068, %v2359, 0
      %v2392 = vsel %vm1068, %v2360, 0
      %2394 = vmatprep.subr.bf16.mxu0 0
      %2395 = vmatpush1.bf16.msra.mxu0 %v2368
      %2396 = vmatprep.subr.bf16.mxu0 0
      %2397 = vmatpush1.bf16.msra.mxu0 0
      %2398 = vmatprep.subr.bf16.mxu0 0
      %2399 = vmatpush1.bf16.msra.mxu0 0
      %2400 = vmatprep.subr.bf16.mxu0 0
      %2401 = vmatpush1.bf16.msra.mxu0 0
      %2402 = vmatprep.subr.bf16.mxu0 0
      %2403 = vmatpush1.bf16.msra.mxu0 0
      %2404 = vmatprep.subr.bf16.mxu0 0
      %2405 = vmatpush1.bf16.msra.mxu0 0
      %2406 = vmatprep.subr.bf16.mxu0 0
      %2407 = vmatpush1.bf16.msra.mxu0 0
      %2408 = vmatprep.subr.bf16.mxu0 0
      %2409 = vmatpush1.bf16.msra.mxu0 0
      %2410 = vmatprep.subr.bf16.mxu0 0
      %2411 = vmatpush1.bf16.msra.mxu0 0
      %2412 = vmatprep.subr.bf16.mxu0 0
      %2413 = vmatpush1.bf16.msra.mxu0 0
      %2414 = vmatprep.subr.bf16.mxu0 0
      %2415 = vmatpush1.bf16.msra.mxu0 0
      %2416 = vmatprep.subr.bf16.mxu0 0
      %2417 = vmatpush1.bf16.msra.mxu0 0
      %2418 = vmatprep.subr.bf16.mxu0 0
      %2419 = vmatpush1.bf16.msra.mxu0 0
      %2420 = vmatprep.subr.bf16.mxu0 0
      %2421 = vmatpush1.bf16.msra.mxu0 0
      %2422 = vmatprep.subr.bf16.mxu0 0
      %2423 = vmatpush1.bf16.msra.mxu0 0
      %2424 = vmatprep.subr.bf16.mxu0 0
      %2425 = vmatpush1.bf16.msra.mxu0 0
      %2426 = vmatprep.mubr.bf16.mxu0 0
      %2427 = vmatmul.mubr.bf16.gmra.mrb[0].mxu0 %v2371
      %v2428 = vpop.f32.mrb[0].mxu0
      %v2429 = vadd.f32 0.0, %v2428
      %v2430 = vpop.f32.mrb[0].mxu0
      %v2431 = vpop.f32.mrb[0].mxu0
      %v2432 = vadd.f32 0.0, %v2431
      %v2433 = vpop.f32.mrb[0].mxu0
      %2434 = vmatprep.mubr.bf16.mxu0 0
      %2435 = vmatmul.mubr.bf16.gmra.mrb[0].mxu0 %v2374
      %v2436 = vpop.f32.mrb[0].mxu0
      %v2437 = vadd.f32 0.0, %v2436
      %v2438 = vpop.f32.mrb[0].mxu0
      %v2439 = vpop.f32.mrb[0].mxu0
      %v2440 = vadd.f32 0.0, %v2439
      %v2441 = vpop.f32.mrb[0].mxu0
      %2442 = vmatprep.mubr.bf16.mxu0 0
      %2443 = vmatmul.mubr.bf16.gmra.mrb[0].mxu0 %v2377
      %v2444 = vpop.f32.mrb[0].mxu0
      %v2445 = vadd.f32 0.0, %v2444
      %v2446 = vpop.f32.mrb[0].mxu0
      %v2447 = vpop.f32.mrb[0].mxu0
      %v2448 = vadd.f32 0.0, %v2447
      %v2449 = vpop.f32.mrb[0].mxu0
      %2450 = vmatprep.mubr.bf16.mxu0 0
      %2451 = vmatmul.mubr.bf16.gmra.mrb[0].mxu0 %v2380
      %v2452 = vpop.f32.mrb[0].mxu0
      %v2453 = vadd.f32 0.0, %v2452
      %v2454 = vpop.f32.mrb[0].mxu0
      %v2455 = vpop.f32.mrb[0].mxu0
      %v2456 = vadd.f32 0.0, %v2455
      %v2457 = vpop.f32.mrb[0].mxu0
      %2458 = vmatprep.mubr.bf16.mxu0 0
      %2459 = vmatmul.mubr.bf16.gmra.mrb[0].mxu0 %v2383
      %v2460 = vpop.f32.mrb[0].mxu0
      %v2461 = vadd.f32 0.0, %v2460
      %v2462 = vpop.f32.mrb[0].mxu0
      %v2463 = vpop.f32.mrb[0].mxu0
      %v2464 = vadd.f32 0.0, %v2463
      %v2465 = vpop.f32.mrb[0].mxu0
      %2466 = vmatprep.mubr.bf16.mxu0 0
      %2467 = vmatmul.mubr.bf16.gmra.mrb[0].mxu0 %v2386
      %v2468 = vpop.f32.mrb[0].mxu0
      %v2469 = vadd.f32 0.0, %v2468
      %v2470 = vpop.f32.mrb[0].mxu0
      %v2471 = vpop.f32.mrb[0].mxu0
      %v2472 = vadd.f32 0.0, %v2471
      %v2473 = vpop.f32.mrb[0].mxu0
      %2474 = vmatprep.mubr.bf16.mxu0 0
      %2475 = vmatmul.mubr.bf16.gmra.mrb[0].mxu0 %v2389
      %v2476 = vpop.f32.mrb[0].mxu0
      %v2477 = vadd.f32 0.0, %v2476
      %v2478 = vpop.f32.mrb[0].mxu0
      %v2479 = vpop.f32.mrb[0].mxu0
      %v2480 = vadd.f32 0.0, %v2479
      %v2481 = vpop.f32.mrb[0].mxu0
      %2482 = vmatprep.mubr.bf16.mxu0 0
      %2483 = vmatmul.mubr.bf16.gmra.mrb[0].mxu0 %v2392
      %v2484 = vpop.f32.mrb[0].mxu0
      %v2485 = vadd.f32 0.0, %v2484
      %v2486 = vpop.f32.mrb[0].mxu0
      %v2487 = vpop.f32.mrb[0].mxu0
      %v2488 = vadd.f32 0.0, %v2487
      %v2489 = vpop.f32.mrb[0].mxu0
      %2490 = vdwg.mxu0
      %v2491 = vadd.f32 %v2321, %v2429
      %v2492 = vadd.f32 %v2322, %v2432
      %v2493 = vadd.f32 %v2323, %v2437
      %v2494 = vadd.f32 %v2324, %v2440
      %v2495 = vadd.f32 %v2325, %v2445
      %v2496 = vadd.f32 %v2326, %v2448
      %v2497 = vadd.f32 %v2327, %v2453
      %v2498 = vadd.f32 %v2328, %v2456
      %v2499 = vadd.f32 %v2329, %v2461
      %v2500 = vadd.f32 %v2330, %v2464
      %v2501 = vadd.f32 %v2331, %v2469
      %v2502 = vadd.f32 %v2332, %v2472
      %v2503 = vadd.f32 %v2333, %v2477
      %v2504 = vadd.f32 %v2334, %v2480
      %v2505 = vadd.f32 %v2335, %v2485
      %v2506 = vadd.f32 %v2336, %v2488
      %v2507 = vmax.f32 %v2491, 0.0
      %v2508 = vmax.f32 %v2492, 0.0
      %v2509 = vmax.f32 %v2493, 0.0
      %v2510 = vmax.f32 %v2494, 0.0
      %v2511 = vmax.f32 %v2495, 0.0
      %v2512 = vmax.f32 %v2496, 0.0
      %v2513 = vmax.f32 %v2497, 0.0
      %v2514 = vmax.f32 %v2498, 0.0
      %v2515 = vmax.f32 %v2499, 0.0
      %v2516 = vmax.f32 %v2500, 0.0
      %v2517 = vmax.f32 %v2501, 0.0
      %v2518 = vmax.f32 %v2502, 0.0
      %v2519 = vmax.f32 %v2503, 0.0
      %v2520 = vmax.f32 %v2504, 0.0
      %v2521 = vmax.f32 %v2505, 0.0
      %v2522 = vmax.f32 %v2506, 0.0
      %v2523 = vpack.c.bf16 %v2508, %v2507
      %v2524 = vpack.c.bf16 %v2510, %v2509
      %v2525 = vpack.c.bf16 %v2512, %v2511
      %v2526 = vpack.c.bf16 %v2514, %v2513
      %v2527 = vpack.c.bf16 %v2516, %v2515
      %v2528 = vpack.c.bf16 %v2518, %v2517
      %v2529 = vpack.c.bf16 %v2520, %v2519
      %v2530 = vpack.c.bf16 %v2522, %v2521
      %2531 = vst [vmem:[#allocation3] sm:$0xff] %v2523
      %2532 = vst [vmem:[#allocation3 + $0x8] sm:$0xff] %v2524
      %2533 = vst [vmem:[#allocation3 + $0x10] sm:$0xff] %v2525
      %2534 = vst [vmem:[#allocation3 + $0x18] sm:$0xff] %v2526
      %2535 = vst [vmem:[#allocation3 + $0x20] sm:$0xff] %v2527
      %2536 = vst [vmem:[#allocation3 + $0x28] sm:$0xff] %v2528
      %2537 = vst [vmem:[#allocation3 + $0x30] sm:$0xff] %v2529
      %2538 = vst [vmem:[#allocation3 + $0x38] sm:$0xff] %v2530
      %v2539 = vld [vmem:[#allocation2 + $0x80] sm:$0xff]
      %v2540 = vld [vmem:[#allocation2 + $0x88] sm:$0xff]
      %v2541 = vld [vmem:[#allocation2 + $0x90] sm:$0xff]
      %v2542 = vld [vmem:[#allocation2 + $0x98] sm:$0xff]
      %v2543 = vld [vmem:[#allocation2 + $0xa0] sm:$0xff]
      %v2544 = vld [vmem:[#allocation2 + $0xa8] sm:$0xff]
      %v2545 = vld [vmem:[#allocation2 + $0xb0] sm:$0xff]
      %v2546 = vld [vmem:[#allocation2 + $0xb8] sm:$0xff]
      %v2547 = vld [vmem:[#allocation2 + $0xc0] sm:$0xff]
      %v2548 = vld [vmem:[#allocation2 + $0xc8] sm:$0xff]
      %v2549 = vld [vmem:[#allocation2 + $0xd0] sm:$0xff]
      %v2550 = vld [vmem:[#allocation2 + $0xd8] sm:$0xff]
      %v2551 = vld [vmem:[#allocation2 + $0xe0] sm:$0xff]
      %v2552 = vld [vmem:[#allocation2 + $0xe8] sm:$0xff]
      %v2553 = vld [vmem:[#allocation2 + $0xf0] sm:$0xff]
      %v2554 = vld [vmem:[#allocation2 + $0xf8] sm:$0xff]
      %v2555 = vpack.c.bf16 %v2540, %v2539
      %v2556 = vpack.c.bf16 %v2542, %v2541
      %v2557 = vpack.c.bf16 %v2544, %v2543
      %v2558 = vpack.c.bf16 %v2546, %v2545
      %v2559 = vpack.c.bf16 %v2548, %v2547
      %v2560 = vpack.c.bf16 %v2550, %v2549
      %v2561 = vpack.c.bf16 %v2552, %v2551
      %v2562 = vpack.c.bf16 %v2554, %v2553
      %v2563 = vld [vmem:[%s2] sm:$0xf]
      %v2564 = vld [vmem:[%s2 + $0x4] sm:$0xf]
      %v2565 = vld [vmem:[#allocation2 + $0x81] sm:$0xff]
      %v2566 = vld [vmem:[#allocation2 + $0x89] sm:$0xff]
      %v2567 = vld [vmem:[#allocation2 + $0x91] sm:$0xff]
      %v2568 = vld [vmem:[#allocation2 + $0x99] sm:$0xff]
      %v2569 = vld [vmem:[#allocation2 + $0xa1] sm:$0xff]
      %v2570 = vld [vmem:[#allocation2 + $0xa9] sm:$0xff]
      %v2571 = vld [vmem:[#allocation2 + $0xb1] sm:$0xff]
      %v2572 = vld [vmem:[#allocation2 + $0xb9] sm:$0xff]
      %v2573 = vld [vmem:[#allocation2 + $0xc1] sm:$0xff]
      %v2574 = vld [vmem:[#allocation2 + $0xc9] sm:$0xff]
      %v2575 = vld [vmem:[#allocation2 + $0xd1] sm:$0xff]
      %v2576 = vld [vmem:[#allocation2 + $0xd9] sm:$0xff]
      %v2577 = vld [vmem:[#allocation2 + $0xe1] sm:$0xff]
      %v2578 = vld [vmem:[#allocation2 + $0xe9] sm:$0xff]
      %v2579 = vld [vmem:[#allocation2 + $0xf1] sm:$0xff]
      %v2580 = vld [vmem:[#allocation2 + $0xf9] sm:$0xff]
      %v2581 = vpack.c.bf16 %v2566, %v2565
      %v2582 = vpack.c.bf16 %v2568, %v2567
      %v2583 = vpack.c.bf16 %v2570, %v2569
      %v2584 = vpack.c.bf16 %v2572, %v2571
      %v2585 = vpack.c.bf16 %v2574, %v2573
      %v2586 = vpack.c.bf16 %v2576, %v2575
      %v2587 = vpack.c.bf16 %v2578, %v2577
      %v2588 = vpack.c.bf16 %v2580, %v2579
      %v2589 = vld [vmem:[%s1059] sm:$0xf]
      %v2590 = vld [vmem:[%s1059 + $0x4] sm:$0xf]
      %v2593 = vunpack.c.l.b16 %v2589
      %v2594 = vunpack.c.l.b16 %v2590
      %v2595 = vpack.c.b16 %v2594, %v2593
      %v2598 = vsel %vm1068, %v2581, 0
      %v2601 = vsel %vm1068, %v2582, 0
      %v2604 = vsel %vm1068, %v2583, 0
      %v2607 = vsel %vm1068, %v2584, 0
      %v2610 = vsel %vm1068, %v2585, 0
      %v2613 = vsel %vm1068, %v2586, 0
      %v2616 = vsel %vm1068, %v2587, 0
      %v2619 = vsel %vm1068, %v2588, 0
      %2621 = vmatprep.subr.bf16.mxu0 0
      %2622 = vmatpush1.bf16.msra.mxu0 %v2595
      %2623 = vmatprep.subr.bf16.mxu0 0
      %2624 = vmatpush1.bf16.msra.mxu0 0
      %2625 = vmatprep.subr.bf16.mxu0 0
      %2626 = vmatpush1.bf16.msra.mxu0 0
      %2627 = vmatprep.subr.bf16.mxu0 0
      %2628 = vmatpush1.bf16.msra.mxu0 0
      %2629 = vmatprep.subr.bf16.mxu0 0
      %2630 = vmatpush1.bf16.msra.mxu0 0
      %2631 = vmatprep.subr.bf16.mxu0 0
      %2632 = vmatpush1.bf16.msra.mxu0 0
      %2633 = vmatprep.subr.bf16.mxu0 0
      %2634 = vmatpush1.bf16.msra.mxu0 0
      %2635 = vmatprep.subr.bf16.mxu0 0
      %2636 = vmatpush1.bf16.msra.mxu0 0
      %2637 = vmatprep.subr.bf16.mxu0 0
      %2638 = vmatpush1.bf16.msra.mxu0 0
      %2639 = vmatprep.subr.bf16.mxu0 0
      %2640 = vmatpush1.bf16.msra.mxu0 0
      %2641 = vmatprep.subr.bf16.mxu0 0
      %2642 = vmatpush1.bf16.msra.mxu0 0
      %2643 = vmatprep.subr.bf16.mxu0 0
      %2644 = vmatpush1.bf16.msra.mxu0 0
      %2645 = vmatprep.subr.bf16.mxu0 0
      %2646 = vmatpush1.bf16.msra.mxu0 0
      %2647 = vmatprep.subr.bf16.mxu0 0
      %2648 = vmatpush1.bf16.msra.mxu0 0
      %2649 = vmatprep.subr.bf16.mxu0 0
      %2650 = vmatpush1.bf16.msra.mxu0 0
      %2651 = vmatprep.subr.bf16.mxu0 0
      %2652 = vmatpush1.bf16.msra.mxu0 0
      %2653 = vmatprep.mubr.bf16.mxu0 0
      %2654 = vmatmul.mubr.bf16.gmra.mrb[0].mxu0 %v2598
      %v2655 = vpop.f32.mrb[0].mxu0
      %v2656 = vadd.f32 0.0, %v2655
      %v2657 = vpop.f32.mrb[0].mxu0
      %v2658 = vpop.f32.mrb[0].mxu0
      %v2659 = vadd.f32 0.0, %v2658
      %v2660 = vpop.f32.mrb[0].mxu0
      %2661 = vmatprep.mubr.bf16.mxu0 0
      %2662 = vmatmul.mubr.bf16.gmra.mrb[0].mxu0 %v2601
      %v2663 = vpop.f32.mrb[0].mxu0
      %v2664 = vadd.f32 0.0, %v2663
      %v2665 = vpop.f32.mrb[0].mxu0
      %v2666 = vpop.f32.mrb[0].mxu0
      %v2667 = vadd.f32 0.0, %v2666
      %v2668 = vpop.f32.mrb[0].mxu0
      %2669 = vmatprep.mubr.bf16.mxu0 0
      %2670 = vmatmul.mubr.bf16.gmra.mrb[0].mxu0 %v2604
      %v2671 = vpop.f32.mrb[0].mxu0
      %v2672 = vadd.f32 0.0, %v2671
      %v2673 = vpop.f32.mrb[0].mxu0
      %v2674 = vpop.f32.mrb[0].mxu0
      %v2675 = vadd.f32 0.0, %v2674
      %v2676 = vpop.f32.mrb[0].mxu0
      %2677 = vmatprep.mubr.bf16.mxu0 0
      %2678 = vmatmul.mubr.bf16.gmra.mrb[0].mxu0 %v2607
      %v2679 = vpop.f32.mrb[0].mxu0
      %v2680 = vadd.f32 0.0, %v2679
      %v2681 = vpop.f32.mrb[0].mxu0
      %v2682 = vpop.f32.mrb[0].mxu0
      %v2683 = vadd.f32 0.0, %v2682
      %v2684 = vpop.f32.mrb[0].mxu0
      %2685 = vmatprep.mubr.bf16.mxu0 0
      %2686 = vmatmul.mubr.bf16.gmra.mrb[0].mxu0 %v2610
      %v2687 = vpop.f32.mrb[0].mxu0
      %v2688 = vadd.f32 0.0, %v2687
      %v2689 = vpop.f32.mrb[0].mxu0
      %v2690 = vpop.f32.mrb[0].mxu0
      %v2691 = vadd.f32 0.0, %v2690
      %v2692 = vpop.f32.mrb[0].mxu0
      %2693 = vmatprep.mubr.bf16.mxu0 0
      %2694 = vmatmul.mubr.bf16.gmra.mrb[0].mxu0 %v2613
      %v2695 = vpop.f32.mrb[0].mxu0
      %v2696 = vadd.f32 0.0, %v2695
      %v2697 = vpop.f32.mrb[0].mxu0
      %v2698 = vpop.f32.mrb[0].mxu0
      %v2699 = vadd.f32 0.0, %v2698
      %v2700 = vpop.f32.mrb[0].mxu0
      %2701 = vmatprep.mubr.bf16.mxu0 0
      %2702 = vmatmul.mubr.bf16.gmra.mrb[0].mxu0 %v2616
      %v2703 = vpop.f32.mrb[0].mxu0
      %v2704 = vadd.f32 0.0, %v2703
      %v2705 = vpop.f32.mrb[0].mxu0
      %v2706 = vpop.f32.mrb[0].mxu0
      %v2707 = vadd.f32 0.0, %v2706
      %v2708 = vpop.f32.mrb[0].mxu0
      %2709 = vmatprep.mubr.bf16.mxu0 0
      %2710 = vmatmul.mubr.bf16.gmra.mrb[0].mxu0 %v2619
      %v2711 = vpop.f32.mrb[0].mxu0
      %v2712 = vadd.f32 0.0, %v2711
      %v2713 = vpop.f32.mrb[0].mxu0
      %v2714 = vpop.f32.mrb[0].mxu0
      %v2715 = vadd.f32 0.0, %v2714
      %v2716 = vpop.f32.mrb[0].mxu0
      %2717 = vdwg.mxu0
      %v2720 = vunpack.c.l.b16 %v2563
      %v2721 = vunpack.c.l.b16 %v2564
      %v2722 = vpack.c.b16 %v2721, %v2720
      %v2725 = vsel %vm1068, %v2555, 0
      %v2728 = vsel %vm1068, %v2556, 0
      %v2731 = vsel %vm1068, %v2557, 0
      %v2734 = vsel %vm1068, %v2558, 0
      %v2737 = vsel %vm1068, %v2559, 0
      %v2740 = vsel %vm1068, %v2560, 0
      %v2743 = vsel %vm1068, %v2561, 0
      %v2746 = vsel %vm1068, %v2562, 0
      %2748 = vmatprep.subr.bf16.mxu0 0
      %2749 = vmatpush1.bf16.msra.mxu0 %v2722
      %2750 = vmatprep.subr.bf16.mxu0 0
      %2751 = vmatpush1.bf16.msra.mxu0 0
      %2752 = vmatprep.subr.bf16.mxu0 0
      %2753 = vmatpush1.bf16.msra.mxu0 0
      %2754 = vmatprep.subr.bf16.mxu0 0
      %2755 = vmatpush1.bf16.msra.mxu0 0
      %2756 = vmatprep.subr.bf16.mxu0 0
      %2757 = vmatpush1.bf16.msra.mxu0 0
      %2758 = vmatprep.subr.bf16.mxu0 0
      %2759 = vmatpush1.bf16.msra.mxu0 0
      %2760 = vmatprep.subr.bf16.mxu0 0
      %2761 = vmatpush1.bf16.msra.mxu0 0
      %2762 = vmatprep.subr.bf16.mxu0 0
      %2763 = vmatpush1.bf16.msra.mxu0 0
      %2764 = vmatprep.subr.bf16.mxu0 0
      %2765 = vmatpush1.bf16.msra.mxu0 0
      %2766 = vmatprep.subr.bf16.mxu0 0
      %2767 = vmatpush1.bf16.msra.mxu0 0
      %2768 = vmatprep.subr.bf16.mxu0 0
      %2769 = vmatpush1.bf16.msra.mxu0 0
      %2770 = vmatprep.subr.bf16.mxu0 0
      %2771 = vmatpush1.bf16.msra.mxu0 0
      %2772 = vmatprep.subr.bf16.mxu0 0
      %2773 = vmatpush1.bf16.msra.mxu0 0
      %2774 = vmatprep.subr.bf16.mxu0 0
      %2775 = vmatpush1.bf16.msra.mxu0 0
      %2776 = vmatprep.subr.bf16.mxu0 0
      %2777 = vmatpush1.bf16.msra.mxu0 0
      %2778 = vmatprep.subr.bf16.mxu0 0
      %2779 = vmatpush1.bf16.msra.mxu0 0
      %2780 = vmatprep.mubr.bf16.mxu0 0
      %2781 = vmatmul.mubr.bf16.gmra.mrb[0].mxu0 %v2725
      %v2782 = vpop.f32.mrb[0].mxu0
      %v2783 = vadd.f32 %v2656, %v2782
      %v2784 = vpop.f32.mrb[0].mxu0
      %v2785 = vpop.f32.mrb[0].mxu0
      %v2786 = vadd.f32 %v2659, %v2785
      %v2787 = vpop.f32.mrb[0].mxu0
      %2788 = vmatprep.mubr.bf16.mxu0 0
      %2789 = vmatmul.mubr.bf16.gmra.mrb[0].mxu0 %v2728
      %v2790 = vpop.f32.mrb[0].mxu0
      %v2791 = vadd.f32 %v2664, %v2790
      %v2792 = vpop.f32.mrb[0].mxu0
      %v2793 = vpop.f32.mrb[0].mxu0
      %v2794 = vadd.f32 %v2667, %v2793
      %v2795 = vpop.f32.mrb[0].mxu0
      %2796 = vmatprep.mubr.bf16.mxu0 0
      %2797 = vmatmul.mubr.bf16.gmra.mrb[0].mxu0 %v2731
      %v2798 = vpop.f32.mrb[0].mxu0
      %v2799 = vadd.f32 %v2672, %v2798
      %v2800 = vpop.f32.mrb[0].mxu0
      %v2801 = vpop.f32.mrb[0].mxu0
      %v2802 = vadd.f32 %v2675, %v2801
      %v2803 = vpop.f32.mrb[0].mxu0
      %2804 = vmatprep.mubr.bf16.mxu0 0
      %2805 = vmatmul.mubr.bf16.gmra.mrb[0].mxu0 %v2734
      %v2806 = vpop.f32.mrb[0].mxu0
      %v2807 = vadd.f32 %v2680, %v2806
      %v2808 = vpop.f32.mrb[0].mxu0
      %v2809 = vpop.f32.mrb[0].mxu0
      %v2810 = vadd.f32 %v2683, %v2809
      %v2811 = vpop.f32.mrb[0].mxu0
      %2812 = vmatprep.mubr.bf16.mxu0 0
      %2813 = vmatmul.mubr.bf16.gmra.mrb[0].mxu0 %v2737
      %v2814 = vpop.f32.mrb[0].mxu0
      %v2815 = vadd.f32 %v2688, %v2814
      %v2816 = vpop.f32.mrb[0].mxu0
      %v2817 = vpop.f32.mrb[0].mxu0
      %v2818 = vadd.f32 %v2691, %v2817
      %v2819 = vpop.f32.mrb[0].mxu0
      %2820 = vmatprep.mubr.bf16.mxu0 0
      %2821 = vmatmul.mubr.bf16.gmra.mrb[0].mxu0 %v2740
      %v2822 = vpop.f32.mrb[0].mxu0
      %v2823 = vadd.f32 %v2696, %v2822
      %v2824 = vpop.f32.mrb[0].mxu0
      %v2825 = vpop.f32.mrb[0].mxu0
      %v2826 = vadd.f32 %v2699, %v2825
      %v2827 = vpop.f32.mrb[0].mxu0
      %2828 = vmatprep.mubr.bf16.mxu0 0
      %2829 = vmatmul.mubr.bf16.gmra.mrb[0].mxu0 %v2743
      %v2830 = vpop.f32.mrb[0].mxu0
      %v2831 = vadd.f32 %v2704, %v2830
      %v2832 = vpop.f32.mrb[0].mxu0
      %v2833 = vpop.f32.mrb[0].mxu0
      %v2834 = vadd.f32 %v2707, %v2833
      %v2835 = vpop.f32.mrb[0].mxu0
      %2836 = vmatprep.mubr.bf16.mxu0 0
      %2837 = vmatmul.mubr.bf16.gmra.mrb[0].mxu0 %v2746
      %v2838 = vpop.f32.mrb[0].mxu0
      %v2839 = vadd.f32 %v2712, %v2838
      %v2840 = vpop.f32.mrb[0].mxu0
      %v2841 = vpop.f32.mrb[0].mxu0
      %v2842 = vadd.f32 %v2715, %v2841
      %v2843 = vpop.f32.mrb[0].mxu0
      %2844 = vdwg.mxu0
      %v2845 = vld [vmem:[#allocation2 + $0x82] sm:$0xff]
      %v2846 = vld [vmem:[#allocation2 + $0x8a] sm:$0xff]
      %v2847 = vld [vmem:[#allocation2 + $0x92] sm:$0xff]
      %v2848 = vld [vmem:[#allocation2 + $0x9a] sm:$0xff]
      %v2849 = vld [vmem:[#allocation2 + $0xa2] sm:$0xff]
      %v2850 = vld [vmem:[#allocation2 + $0xaa] sm:$0xff]
      %v2851 = vld [vmem:[#allocation2 + $0xb2] sm:$0xff]
      %v2852 = vld [vmem:[#allocation2 + $0xba] sm:$0xff]
      %v2853 = vld [vmem:[#allocation2 + $0xc2] sm:$0xff]
      %v2854 = vld [vmem:[#allocation2 + $0xca] sm:$0xff]
      %v2855 = vld [vmem:[#allocation2 + $0xd2] sm:$0xff]
      %v2856 = vld [vmem:[#allocation2 + $0xda] sm:$0xff]
      %v2857 = vld [vmem:[#allocation2 + $0xe2] sm:$0xff]
      %v2858 = vld [vmem:[#allocation2 + $0xea] sm:$0xff]
      %v2859 = vld [vmem:[#allocation2 + $0xf2] sm:$0xff]
      %v2860 = vld [vmem:[#allocation2 + $0xfa] sm:$0xff]
      %v2861 = vpack.c.bf16 %v2846, %v2845
      %v2862 = vpack.c.bf16 %v2848, %v2847
      %v2863 = vpack.c.bf16 %v2850, %v2849
      %v2864 = vpack.c.bf16 %v2852, %v2851
      %v2865 = vpack.c.bf16 %v2854, %v2853
      %v2866 = vpack.c.bf16 %v2856, %v2855
      %v2867 = vpack.c.bf16 %v2858, %v2857
      %v2868 = vpack.c.bf16 %v2860, %v2859
      %v2869 = vld [vmem:[%s1341] sm:$0xf]
      %v2870 = vld [vmem:[%s1341 + $0x4] sm:$0xf]
      %v2873 = vunpack.c.l.b16 %v2869
      %v2874 = vunpack.c.l.b16 %v2870
      %v2875 = vpack.c.b16 %v2874, %v2873
      %v2878 = vsel %vm1068, %v2861, 0
      %v2881 = vsel %vm1068, %v2862, 0
      %v2884 = vsel %vm1068, %v2863, 0
      %v2887 = vsel %vm1068, %v2864, 0
      %v2890 = vsel %vm1068, %v2865, 0
      %v2893 = vsel %vm1068, %v2866, 0
      %v2896 = vsel %vm1068, %v2867, 0
      %v2899 = vsel %vm1068, %v2868, 0
      %2901 = vmatprep.subr.bf16.mxu0 0
      %2902 = vmatpush1.bf16.msra.mxu0 %v2875
      %2903 = vmatprep.subr.bf16.mxu0 0
      %2904 = vmatpush1.bf16.msra.mxu0 0
      %2905 = vmatprep.subr.bf16.mxu0 0
      %2906 = vmatpush1.bf16.msra.mxu0 0
      %2907 = vmatprep.subr.bf16.mxu0 0
      %2908 = vmatpush1.bf16.msra.mxu0 0
      %2909 = vmatprep.subr.bf16.mxu0 0
      %2910 = vmatpush1.bf16.msra.mxu0 0
      %2911 = vmatprep.subr.bf16.mxu0 0
      %2912 = vmatpush1.bf16.msra.mxu0 0
      %2913 = vmatprep.subr.bf16.mxu0 0
      %2914 = vmatpush1.bf16.msra.mxu0 0
      %2915 = vmatprep.subr.bf16.mxu0 0
      %2916 = vmatpush1.bf16.msra.mxu0 0
      %2917 = vmatprep.subr.bf16.mxu0 0
      %2918 = vmatpush1.bf16.msra.mxu0 0
      %2919 = vmatprep.subr.bf16.mxu0 0
      %2920 = vmatpush1.bf16.msra.mxu0 0
      %2921 = vmatprep.subr.bf16.mxu0 0
      %2922 = vmatpush1.bf16.msra.mxu0 0
      %2923 = vmatprep.subr.bf16.mxu0 0
      %2924 = vmatpush1.bf16.msra.mxu0 0
      %2925 = vmatprep.subr.bf16.mxu0 0
      %2926 = vmatpush1.bf16.msra.mxu0 0
      %2927 = vmatprep.subr.bf16.mxu0 0
      %2928 = vmatpush1.bf16.msra.mxu0 0
      %2929 = vmatprep.subr.bf16.mxu0 0
      %2930 = vmatpush1.bf16.msra.mxu0 0
      %2931 = vmatprep.subr.bf16.mxu0 0
      %2932 = vmatpush1.bf16.msra.mxu0 0
      %2933 = vmatprep.mubr.bf16.mxu0 0
      %2934 = vmatmul.mubr.bf16.gmra.mrb[0].mxu0 %v2878
      %v2935 = vpop.f32.mrb[0].mxu0
      %v2936 = vadd.f32 0.0, %v2935
      %v2937 = vpop.f32.mrb[0].mxu0
      %v2938 = vpop.f32.mrb[0].mxu0
      %v2939 = vadd.f32 0.0, %v2938
      %v2940 = vpop.f32.mrb[0].mxu0
      %2941 = vmatprep.mubr.bf16.mxu0 0
      %2942 = vmatmul.mubr.bf16.gmra.mrb[0].mxu0 %v2881
      %v2943 = vpop.f32.mrb[0].mxu0
      %v2944 = vadd.f32 0.0, %v2943
      %v2945 = vpop.f32.mrb[0].mxu0
      %v2946 = vpop.f32.mrb[0].mxu0
      %v2947 = vadd.f32 0.0, %v2946
      %v2948 = vpop.f32.mrb[0].mxu0
      %2949 = vmatprep.mubr.bf16.mxu0 0
      %2950 = vmatmul.mubr.bf16.gmra.mrb[0].mxu0 %v2884
      %v2951 = vpop.f32.mrb[0].mxu0
      %v2952 = vadd.f32 0.0, %v2951
      %v2953 = vpop.f32.mrb[0].mxu0
      %v2954 = vpop.f32.mrb[0].mxu0
      %v2955 = vadd.f32 0.0, %v2954
      %v2956 = vpop.f32.mrb[0].mxu0
      %2957 = vmatprep.mubr.bf16.mxu0 0
      %2958 = vmatmul.mubr.bf16.gmra.mrb[0].mxu0 %v2887
      %v2959 = vpop.f32.mrb[0].mxu0
      %v2960 = vadd.f32 0.0, %v2959
      %v2961 = vpop.f32.mrb[0].mxu0
      %v2962 = vpop.f32.mrb[0].mxu0
      %v2963 = vadd.f32 0.0, %v2962
      %v2964 = vpop.f32.mrb[0].mxu0
      %2965 = vmatprep.mubr.bf16.mxu0 0
      %2966 = vmatmul.mubr.bf16.gmra.mrb[0].mxu0 %v2890
      %v2967 = vpop.f32.mrb[0].mxu0
      %v2968 = vadd.f32 0.0, %v2967
      %v2969 = vpop.f32.mrb[0].mxu0
      %v2970 = vpop.f32.mrb[0].mxu0
      %v2971 = vadd.f32 0.0, %v2970
      %v2972 = vpop.f32.mrb[0].mxu0
      %2973 = vmatprep.mubr.bf16.mxu0 0
      %2974 = vmatmul.mubr.bf16.gmra.mrb[0].mxu0 %v2893
      %v2975 = vpop.f32.mrb[0].mxu0
      %v2976 = vadd.f32 0.0, %v2975
      %v2977 = vpop.f32.mrb[0].mxu0
      %v2978 = vpop.f32.mrb[0].mxu0
      %v2979 = vadd.f32 0.0, %v2978
      %v2980 = vpop.f32.mrb[0].mxu0
      %2981 = vmatprep.mubr.bf16.mxu0 0
      %2982 = vmatmul.mubr.bf16.gmra.mrb[0].mxu0 %v2896
      %v2983 = vpop.f32.mrb[0].mxu0
      %v2984 = vadd.f32 0.0, %v2983
      %v2985 = vpop.f32.mrb[0].mxu0
      %v2986 = vpop.f32.mrb[0].mxu0
      %v2987 = vadd.f32 0.0, %v2986
      %v2988 = vpop.f32.mrb[0].mxu0
      %2989 = vmatprep.mubr.bf16.mxu0 0
      %2990 = vmatmul.mubr.bf16.gmra.mrb[0].mxu0 %v2899
      %v2991 = vpop.f32.mrb[0].mxu0
      %v2992 = vadd.f32 0.0, %v2991
      %v2993 = vpop.f32.mrb[0].mxu0
      %v2994 = vpop.f32.mrb[0].mxu0
      %v2995 = vadd.f32 0.0, %v2994
      %v2996 = vpop.f32.mrb[0].mxu0
      %2997 = vdwg.mxu0
      %v2998 = vadd.f32 %v2783, %v2936
      %v2999 = vadd.f32 %v2786, %v2939
      %v3000 = vadd.f32 %v2791, %v2944
      %v3001 = vadd.f32 %v2794, %v2947
      %v3002 = vadd.f32 %v2799, %v2952
      %v3003 = vadd.f32 %v2802, %v2955
      %v3004 = vadd.f32 %v2807, %v2960
      %v3005 = vadd.f32 %v2810, %v2963
      %v3006 = vadd.f32 %v2815, %v2968
      %v3007 = vadd.f32 %v2818, %v2971
      %v3008 = vadd.f32 %v2823, %v2976
      %v3009 = vadd.f32 %v2826, %v2979
      %v3010 = vadd.f32 %v2831, %v2984
      %v3011 = vadd.f32 %v2834, %v2987
      %v3012 = vadd.f32 %v2839, %v2992
      %v3013 = vadd.f32 %v2842, %v2995
      %v3014 = vld [vmem:[#allocation2 + $0x92] sm:$0xff]
      %v3015 = vld [vmem:[#allocation2 + $0x9a] sm:$0xff]
      %v3016 = vld [vmem:[#allocation2 + $0xa2] sm:$0xff]
      %v3017 = vld [vmem:[#allocation2 + $0xaa] sm:$0xff]
      %v3018 = vld [vmem:[#allocation2 + $0xb2] sm:$0xff]
      %v3019 = vld [vmem:[#allocation2 + $0xba] sm:$0xff]
      %v3020 = vld [vmem:[#allocation2 + $0xc2] sm:$0xff]
      %v3021 = vld [vmem:[#allocation2 + $0xca] sm:$0xff]
      %v3022 = vld [vmem:[#allocation2 + $0xd2] sm:$0xff]
      %v3023 = vld [vmem:[#allocation2 + $0xda] sm:$0xff]
      %v3024 = vld [vmem:[#allocation2 + $0xe2] sm:$0xff]
      %v3025 = vld [vmem:[#allocation2 + $0xea] sm:$0xff]
      %v3026 = vld [vmem:[#allocation2 + $0xf2] sm:$0xff]
      %v3027 = vld [vmem:[#allocation2 + $0xfa] sm:$0xff]
      %v3028 = vld [vmem:[#allocation2 + $0x102] sm:$0xff]
      %v3029 = vld [vmem:[#allocation2 + $0x10a] sm:$0xff]
      %v3030 = vpack.c.bf16 %v3015, %v3014
      %v3031 = vpack.c.bf16 %v3017, %v3016
      %v3032 = vpack.c.bf16 %v3019, %v3018
      %v3033 = vpack.c.bf16 %v3021, %v3020
      %v3034 = vpack.c.bf16 %v3023, %v3022
      %v3035 = vpack.c.bf16 %v3025, %v3024
      %v3036 = vpack.c.bf16 %v3027, %v3026
      %v3037 = vpack.c.bf16 %v3029, %v3028
      %v3038 = vld [vmem:[%s1511] sm:$0xf]
      %v3039 = vld [vmem:[%s1511 + $0x4] sm:$0xf]
      %v3042 = vunpack.c.l.b16 %v3038
      %v3043 = vunpack.c.l.b16 %v3039
      %v3044 = vpack.c.b16 %v3043, %v3042
      %v3047 = vsel %vm1068, %v3030, 0
      %v3050 = vsel %vm1068, %v3031, 0
      %v3053 = vsel %vm1068, %v3032, 0
      %v3056 = vsel %vm1068, %v3033, 0
      %v3059 = vsel %vm1068, %v3034, 0
      %v3062 = vsel %vm1068, %v3035, 0
      %v3065 = vsel %vm1068, %v3036, 0
      %v3068 = vsel %vm1068, %v3037, 0
      %3070 = vmatprep.subr.bf16.mxu0 0
      %3071 = vmatpush1.bf16.msra.mxu0 %v3044
      %3072 = vmatprep.subr.bf16.mxu0 0
      %3073 = vmatpush1.bf16.msra.mxu0 0
      %3074 = vmatprep.subr.bf16.mxu0 0
      %3075 = vmatpush1.bf16.msra.mxu0 0
      %3076 = vmatprep.subr.bf16.mxu0 0
      %3077 = vmatpush1.bf16.msra.mxu0 0
      %3078 = vmatprep.subr.bf16.mxu0 0
      %3079 = vmatpush1.bf16.msra.mxu0 0
      %3080 = vmatprep.subr.bf16.mxu0 0
      %3081 = vmatpush1.bf16.msra.mxu0 0
      %3082 = vmatprep.subr.bf16.mxu0 0
      %3083 = vmatpush1.bf16.msra.mxu0 0
      %3084 = vmatprep.subr.bf16.mxu0 0
      %3085 = vmatpush1.bf16.msra.mxu0 0
      %3086 = vmatprep.subr.bf16.mxu0 0
      %3087 = vmatpush1.bf16.msra.mxu0 0
      %3088 = vmatprep.subr.bf16.mxu0 0
      %3089 = vmatpush1.bf16.msra.mxu0 0
      %3090 = vmatprep.subr.bf16.mxu0 0
      %3091 = vmatpush1.bf16.msra.mxu0 0
      %3092 = vmatprep.subr.bf16.mxu0 0
      %3093 = vmatpush1.bf16.msra.mxu0 0
      %3094 = vmatprep.subr.bf16.mxu0 0
      %3095 = vmatpush1.bf16.msra.mxu0 0
      %3096 = vmatprep.subr.bf16.mxu0 0
      %3097 = vmatpush1.bf16.msra.mxu0 0
      %3098 = vmatprep.subr.bf16.mxu0 0
      %3099 = vmatpush1.bf16.msra.mxu0 0
      %3100 = vmatprep.subr.bf16.mxu0 0
      %3101 = vmatpush1.bf16.msra.mxu0 0
      %3102 = vmatprep.mubr.bf16.mxu0 0
      %3103 = vmatmul.mubr.bf16.gmra.mrb[0].mxu0 %v3047
      %v3104 = vpop.f32.mrb[0].mxu0
      %v3105 = vadd.f32 0.0, %v3104
      %v3106 = vpop.f32.mrb[0].mxu0
      %v3107 = vpop.f32.mrb[0].mxu0
      %v3108 = vadd.f32 0.0, %v3107
      %v3109 = vpop.f32.mrb[0].mxu0
      %3110 = vmatprep.mubr.bf16.mxu0 0
      %3111 = vmatmul.mubr.bf16.gmra.mrb[0].mxu0 %v3050
      %v3112 = vpop.f32.mrb[0].mxu0
      %v3113 = vadd.f32 0.0, %v3112
      %v3114 = vpop.f32.mrb[0].mxu0
      %v3115 = vpop.f32.mrb[0].mxu0
      %v3116 = vadd.f32 0.0, %v3115
      %v3117 = vpop.f32.mrb[0].mxu0
      %3118 = vmatprep.mubr.bf16.mxu0 0
      %3119 = vmatmul.mubr.bf16.gmra.mrb[0].mxu0 %v3053
      %v3120 = vpop.f32.mrb[0].mxu0
      %v3121 = vadd.f32 0.0, %v3120
      %v3122 = vpop.f32.mrb[0].mxu0
      %v3123 = vpop.f32.mrb[0].mxu0
      %v3124 = vadd.f32 0.0, %v3123
      %v3125 = vpop.f32.mrb[0].mxu0
      %3126 = vmatprep.mubr.bf16.mxu0 0
      %3127 = vmatmul.mubr.bf16.gmra.mrb[0].mxu0 %v3056
      %v3128 = vpop.f32.mrb[0].mxu0
      %v3129 = vadd.f32 0.0, %v3128
      %v3130 = vpop.f32.mrb[0].mxu0
      %v3131 = vpop.f32.mrb[0].mxu0
      %v3132 = vadd.f32 0.0, %v3131
      %v3133 = vpop.f32.mrb[0].mxu0
      %3134 = vmatprep.mubr.bf16.mxu0 0
      %3135 = vmatmul.mubr.bf16.gmra.mrb[0].mxu0 %v3059
      %v3136 = vpop.f32.mrb[0].mxu0
      %v3137 = vadd.f32 0.0, %v3136
      %v3138 = vpop.f32.mrb[0].mxu0
      %v3139 = vpop.f32.mrb[0].mxu0
      %v3140 = vadd.f32 0.0, %v3139
      %v3141 = vpop.f32.mrb[0].mxu0
      %3142 = vmatprep.mubr.bf16.mxu0 0
      %3143 = vmatmul.mubr.bf16.gmra.mrb[0].mxu0 %v3062
      %v3144 = vpop.f32.mrb[0].mxu0
      %v3145 = vadd.f32 0.0, %v3144
      %v3146 = vpop.f32.mrb[0].mxu0
      %v3147 = vpop.f32.mrb[0].mxu0
      %v3148 = vadd.f32 0.0, %v3147
      %v3149 = vpop.f32.mrb[0].mxu0
      %3150 = vmatprep.mubr.bf16.mxu0 0
      %3151 = vmatmul.mubr.bf16.gmra.mrb[0].mxu0 %v3065
      %v3152 = vpop.f32.mrb[0].mxu0
      %v3153 = vadd.f32 0.0, %v3152
      %v3154 = vpop.f32.mrb[0].mxu0
      %v3155 = vpop.f32.mrb[0].mxu0
      %v3156 = vadd.f32 0.0, %v3155
      %v3157 = vpop.f32.mrb[0].mxu0
      %3158 = vmatprep.mubr.bf16.mxu0 0
      %3159 = vmatmul.mubr.bf16.gmra.mrb[0].mxu0 %v3068
      %v3160 = vpop.f32.mrb[0].mxu0
      %v3161 = vadd.f32 0.0, %v3160
      %v3162 = vpop.f32.mrb[0].mxu0
      %v3163 = vpop.f32.mrb[0].mxu0
      %v3164 = vadd.f32 0.0, %v3163
      %v3165 = vpop.f32.mrb[0].mxu0
      %3166 = vdwg.mxu0
      %v3167 = vadd.f32 %v2998, %v3105
      %v3168 = vadd.f32 %v2999, %v3108
      %v3169 = vadd.f32 %v3000, %v3113
      %v3170 = vadd.f32 %v3001, %v3116
      %v3171 = vadd.f32 %v3002, %v3121
      %v3172 = vadd.f32 %v3003, %v3124
      %v3173 = vadd.f32 %v3004, %v3129
      %v3174 = vadd.f32 %v3005, %v3132
      %v3175 = vadd.f32 %v3006, %v3137
      %v3176 = vadd.f32 %v3007, %v3140
      %v3177 = vadd.f32 %v3008, %v3145
      %v3178 = vadd.f32 %v3009, %v3148
      %v3179 = vadd.f32 %v3010, %v3153
      %v3180 = vadd.f32 %v3011, %v3156
      %v3181 = vadd.f32 %v3012, %v3161
      %v3182 = vadd.f32 %v3013, %v3164
      %v3183 = vld [vmem:[#allocation2 + $0x93] sm:$0xff]
      %v3184 = vld [vmem:[#allocation2 + $0x9b] sm:$0xff]
      %v3185 = vld [vmem:[#allocation2 + $0xa3] sm:$0xff]
      %v3186 = vld [vmem:[#allocation2 + $0xab] sm:$0xff]
      %v3187 = vld [vmem:[#allocation2 + $0xb3] sm:$0xff]
      %v3188 = vld [vmem:[#allocation2 + $0xbb] sm:$0xff]
      %v3189 = vld [vmem:[#allocation2 + $0xc3] sm:$0xff]
      %v3190 = vld [vmem:[#allocation2 + $0xcb] sm:$0xff]
      %v3191 = vld [vmem:[#allocation2 + $0xd3] sm:$0xff]
      %v3192 = vld [vmem:[#allocation2 + $0xdb] sm:$0xff]
      %v3193 = vld [vmem:[#allocation2 + $0xe3] sm:$0xff]
      %v3194 = vld [vmem:[#allocation2 + $0xeb] sm:$0xff]
      %v3195 = vld [vmem:[#allocation2 + $0xf3] sm:$0xff]
      %v3196 = vld [vmem:[#allocation2 + $0xfb] sm:$0xff]
      %v3197 = vld [vmem:[#allocation2 + $0x103] sm:$0xff]
      %v3198 = vld [vmem:[#allocation2 + $0x10b] sm:$0xff]
      %v3199 = vpack.c.bf16 %v3184, %v3183
      %v3200 = vpack.c.bf16 %v3186, %v3185
      %v3201 = vpack.c.bf16 %v3188, %v3187
      %v3202 = vpack.c.bf16 %v3190, %v3189
      %v3203 = vpack.c.bf16 %v3192, %v3191
      %v3204 = vpack.c.bf16 %v3194, %v3193
      %v3205 = vpack.c.bf16 %v3196, %v3195
      %v3206 = vpack.c.bf16 %v3198, %v3197
      %v3207 = vld [vmem:[%s1681] sm:$0xf]
      %v3208 = vld [vmem:[%s1681 + $0x4] sm:$0xf]
      %v3211 = vunpack.c.l.b16 %v3207
      %v3212 = vunpack.c.l.b16 %v3208
      %v3213 = vpack.c.b16 %v3212, %v3211
      %v3216 = vsel %vm1068, %v3199, 0
      %v3219 = vsel %vm1068, %v3200, 0
      %v3222 = vsel %vm1068, %v3201, 0
      %v3225 = vsel %vm1068, %v3202, 0
      %v3228 = vsel %vm1068, %v3203, 0
      %v3231 = vsel %vm1068, %v3204, 0
      %v3234 = vsel %vm1068, %v3205, 0
      %v3237 = vsel %vm1068, %v3206, 0
      %3239 = vmatprep.subr.bf16.mxu0 0
      %3240 = vmatpush1.bf16.msra.mxu0 %v3213
      %3241 = vmatprep.subr.bf16.mxu0 0
      %3242 = vmatpush1.bf16.msra.mxu0 0
      %3243 = vmatprep.subr.bf16.mxu0 0
      %3244 = vmatpush1.bf16.msra.mxu0 0
      %3245 = vmatprep.subr.bf16.mxu0 0
      %3246 = vmatpush1.bf16.msra.mxu0 0
      %3247 = vmatprep.subr.bf16.mxu0 0
      %3248 = vmatpush1.bf16.msra.mxu0 0
      %3249 = vmatprep.subr.bf16.mxu0 0
      %3250 = vmatpush1.bf16.msra.mxu0 0
      %3251 = vmatprep.subr.bf16.mxu0 0
      %3252 = vmatpush1.bf16.msra.mxu0 0
      %3253 = vmatprep.subr.bf16.mxu0 0
      %3254 = vmatpush1.bf16.msra.mxu0 0
      %3255 = vmatprep.subr.bf16.mxu0 0
      %3256 = vmatpush1.bf16.msra.mxu0 0
      %3257 = vmatprep.subr.bf16.mxu0 0
      %3258 = vmatpush1.bf16.msra.mxu0 0
      %3259 = vmatprep.subr.bf16.mxu0 0
      %3260 = vmatpush1.bf16.msra.mxu0 0
      %3261 = vmatprep.subr.bf16.mxu0 0
      %3262 = vmatpush1.bf16.msra.mxu0 0
      %3263 = vmatprep.subr.bf16.mxu0 0
      %3264 = vmatpush1.bf16.msra.mxu0 0
      %3265 = vmatprep.subr.bf16.mxu0 0
      %3266 = vmatpush1.bf16.msra.mxu0 0
      %3267 = vmatprep.subr.bf16.mxu0 0
      %3268 = vmatpush1.bf16.msra.mxu0 0
      %3269 = vmatprep.subr.bf16.mxu0 0
      %3270 = vmatpush1.bf16.msra.mxu0 0
      %3271 = vmatprep.mubr.bf16.mxu0 0
      %3272 = vmatmul.mubr.bf16.gmra.mrb[0].mxu0 %v3216
      %v3273 = vpop.f32.mrb[0].mxu0
      %v3274 = vadd.f32 0.0, %v3273
      %v3275 = vpop.f32.mrb[0].mxu0
      %v3276 = vpop.f32.mrb[0].mxu0
      %v3277 = vadd.f32 0.0, %v3276
      %v3278 = vpop.f32.mrb[0].mxu0
      %3279 = vmatprep.mubr.bf16.mxu0 0
      %3280 = vmatmul.mubr.bf16.gmra.mrb[0].mxu0 %v3219
      %v3281 = vpop.f32.mrb[0].mxu0
      %v3282 = vadd.f32 0.0, %v3281
      %v3283 = vpop.f32.mrb[0].mxu0
      %v3284 = vpop.f32.mrb[0].mxu0
      %v3285 = vadd.f32 0.0, %v3284
      %v3286 = vpop.f32.mrb[0].mxu0
      %3287 = vmatprep.mubr.bf16.mxu0 0
      %3288 = vmatmul.mubr.bf16.gmra.mrb[0].mxu0 %v3222
      %v3289 = vpop.f32.mrb[0].mxu0
      %v3290 = vadd.f32 0.0, %v3289
      %v3291 = vpop.f32.mrb[0].mxu0
      %v3292 = vpop.f32.mrb[0].mxu0
      %v3293 = vadd.f32 0.0, %v3292
      %v3294 = vpop.f32.mrb[0].mxu0
      %3295 = vmatprep.mubr.bf16.mxu0 0
      %3296 = vmatmul.mubr.bf16.gmra.mrb[0].mxu0 %v3225
      %v3297 = vpop.f32.mrb[0].mxu0
      %v3298 = vadd.f32 0.0, %v3297
      %v3299 = vpop.f32.mrb[0].mxu0
      %v3300 = vpop.f32.mrb[0].mxu0
      %v3301 = vadd.f32 0.0, %v3300
      %v3302 = vpop.f32.mrb[0].mxu0
      %3303 = vmatprep.mubr.bf16.mxu0 0
      %3304 = vmatmul.mubr.bf16.gmra.mrb[0].mxu0 %v3228
      %v3305 = vpop.f32.mrb[0].mxu0
      %v3306 = vadd.f32 0.0, %v3305
      %v3307 = vpop.f32.mrb[0].mxu0
      %v3308 = vpop.f32.mrb[0].mxu0
      %v3309 = vadd.f32 0.0, %v3308
      %v3310 = vpop.f32.mrb[0].mxu0
      %3311 = vmatprep.mubr.bf16.mxu0 0
      %3312 = vmatmul.mubr.bf16.gmra.mrb[0].mxu0 %v3231
      %v3313 = vpop.f32.mrb[0].mxu0
      %v3314 = vadd.f32 0.0, %v3313
      %v3315 = vpop.f32.mrb[0].mxu0
      %v3316 = vpop.f32.mrb[0].mxu0
      %v3317 = vadd.f32 0.0, %v3316
      %v3318 = vpop.f32.mrb[0].mxu0
      %3319 = vmatprep.mubr.bf16.mxu0 0
      %3320 = vmatmul.mubr.bf16.gmra.mrb[0].mxu0 %v3234
      %v3321 = vpop.f32.mrb[0].mxu0
      %v3322 = vadd.f32 0.0, %v3321
      %v3323 = vpop.f32.mrb[0].mxu0
      %v3324 = vpop.f32.mrb[0].mxu0
      %v3325 = vadd.f32 0.0, %v3324
      %v3326 = vpop.f32.mrb[0].mxu0
      %3327 = vmatprep.mubr.bf16.mxu0 0
      %3328 = vmatmul.mubr.bf16.gmra.mrb[0].mxu0 %v3237
      %v3329 = vpop.f32.mrb[0].mxu0
      %v3330 = vadd.f32 0.0, %v3329
      %v3331 = vpop.f32.mrb[0].mxu0
      %v3332 = vpop.f32.mrb[0].mxu0
      %v3333 = vadd.f32 0.0, %v3332
      %v3334 = vpop.f32.mrb[0].mxu0
      %3335 = vdwg.mxu0
      %v3336 = vadd.f32 %v3167, %v3274
      %v3337 = vadd.f32 %v3168, %v3277
      %v3338 = vadd.f32 %v3169, %v3282
      %v3339 = vadd.f32 %v3170, %v3285
      %v3340 = vadd.f32 %v3171, %v3290
      %v3341 = vadd.f32 %v3172, %v3293
      %v3342 = vadd.f32 %v3173, %v3298
      %v3343 = vadd.f32 %v3174, %v3301
      %v3344 = vadd.f32 %v3175, %v3306
      %v3345 = vadd.f32 %v3176, %v3309
      %v3346 = vadd.f32 %v3177, %v3314
      %v3347 = vadd.f32 %v3178, %v3317
      %v3348 = vadd.f32 %v3179, %v3322
      %v3349 = vadd.f32 %v3180, %v3325
      %v3350 = vadd.f32 %v3181, %v3330
      %v3351 = vadd.f32 %v3182, %v3333
      %v3352 = vld [vmem:[#allocation2 + $0x94] sm:$0xff]
      %v3353 = vld [vmem:[#allocation2 + $0x9c] sm:$0xff]
      %v3354 = vld [vmem:[#allocation2 + $0xa4] sm:$0xff]
      %v3355 = vld [vmem:[#allocation2 + $0xac] sm:$0xff]
      %v3356 = vld [vmem:[#allocation2 + $0xb4] sm:$0xff]
      %v3357 = vld [vmem:[#allocation2 + $0xbc] sm:$0xff]
      %v3358 = vld [vmem:[#allocation2 + $0xc4] sm:$0xff]
      %v3359 = vld [vmem:[#allocation2 + $0xcc] sm:$0xff]
      %v3360 = vld [vmem:[#allocation2 + $0xd4] sm:$0xff]
      %v3361 = vld [vmem:[#allocation2 + $0xdc] sm:$0xff]
      %v3362 = vld [vmem:[#allocation2 + $0xe4] sm:$0xff]
      %v3363 = vld [vmem:[#allocation2 + $0xec] sm:$0xff]
      %v3364 = vld [vmem:[#allocation2 + $0xf4] sm:$0xff]
      %v3365 = vld [vmem:[#allocation2 + $0xfc] sm:$0xff]
      %v3366 = vld [vmem:[#allocation2 + $0x104] sm:$0xff]
      %v3367 = vld [vmem:[#allocation2 + $0x10c] sm:$0xff]
      %v3368 = vpack.c.bf16 %v3353, %v3352
      %v3369 = vpack.c.bf16 %v3355, %v3354
      %v3370 = vpack.c.bf16 %v3357, %v3356
      %v3371 = vpack.c.bf16 %v3359, %v3358
      %v3372 = vpack.c.bf16 %v3361, %v3360
      %v3373 = vpack.c.bf16 %v3363, %v3362
      %v3374 = vpack.c.bf16 %v3365, %v3364
      %v3375 = vpack.c.bf16 %v3367, %v3366
      %v3376 = vld [vmem:[%s1851] sm:$0xf]
      %v3377 = vld [vmem:[%s1851 + $0x4] sm:$0xf]
      %v3380 = vunpack.c.l.b16 %v3376
      %v3381 = vunpack.c.l.b16 %v3377
      %v3382 = vpack.c.b16 %v3381, %v3380
      %v3385 = vsel %vm1068, %v3368, 0
      %v3388 = vsel %vm1068, %v3369, 0
      %v3391 = vsel %vm1068, %v3370, 0
      %v3394 = vsel %vm1068, %v3371, 0
      %v3397 = vsel %vm1068, %v3372, 0
      %v3400 = vsel %vm1068, %v3373, 0
      %v3403 = vsel %vm1068, %v3374, 0
      %v3406 = vsel %vm1068, %v3375, 0
      %3408 = vmatprep.subr.bf16.mxu0 0
      %3409 = vmatpush1.bf16.msra.mxu0 %v3382
      %3410 = vmatprep.subr.bf16.mxu0 0
      %3411 = vmatpush1.bf16.msra.mxu0 0
      %3412 = vmatprep.subr.bf16.mxu0 0
      %3413 = vmatpush1.bf16.msra.mxu0 0
      %3414 = vmatprep.subr.bf16.mxu0 0
      %3415 = vmatpush1.bf16.msra.mxu0 0
      %3416 = vmatprep.subr.bf16.mxu0 0
      %3417 = vmatpush1.bf16.msra.mxu0 0
      %3418 = vmatprep.subr.bf16.mxu0 0
      %3419 = vmatpush1.bf16.msra.mxu0 0
      %3420 = vmatprep.subr.bf16.mxu0 0
      %3421 = vmatpush1.bf16.msra.mxu0 0
      %3422 = vmatprep.subr.bf16.mxu0 0
      %3423 = vmatpush1.bf16.msra.mxu0 0
      %3424 = vmatprep.subr.bf16.mxu0 0
      %3425 = vmatpush1.bf16.msra.mxu0 0
      %3426 = vmatprep.subr.bf16.mxu0 0
      %3427 = vmatpush1.bf16.msra.mxu0 0
      %3428 = vmatprep.subr.bf16.mxu0 0
      %3429 = vmatpush1.bf16.msra.mxu0 0
      %3430 = vmatprep.subr.bf16.mxu0 0
      %3431 = vmatpush1.bf16.msra.mxu0 0
      %3432 = vmatprep.subr.bf16.mxu0 0
      %3433 = vmatpush1.bf16.msra.mxu0 0
      %3434 = vmatprep.subr.bf16.mxu0 0
      %3435 = vmatpush1.bf16.msra.mxu0 0
      %3436 = vmatprep.subr.bf16.mxu0 0
      %3437 = vmatpush1.bf16.msra.mxu0 0
      %3438 = vmatprep.subr.bf16.mxu0 0
      %3439 = vmatpush1.bf16.msra.mxu0 0
      %3440 = vmatprep.mubr.bf16.mxu0 0
      %3441 = vmatmul.mubr.bf16.gmra.mrb[0].mxu0 %v3385
      %v3442 = vpop.f32.mrb[0].mxu0
      %v3443 = vadd.f32 0.0, %v3442
      %v3444 = vpop.f32.mrb[0].mxu0
      %v3445 = vpop.f32.mrb[0].mxu0
      %v3446 = vadd.f32 0.0, %v3445
      %v3447 = vpop.f32.mrb[0].mxu0
      %3448 = vmatprep.mubr.bf16.mxu0 0
      %3449 = vmatmul.mubr.bf16.gmra.mrb[0].mxu0 %v3388
      %v3450 = vpop.f32.mrb[0].mxu0
      %v3451 = vadd.f32 0.0, %v3450
      %v3452 = vpop.f32.mrb[0].mxu0
      %v3453 = vpop.f32.mrb[0].mxu0
      %v3454 = vadd.f32 0.0, %v3453
      %v3455 = vpop.f32.mrb[0].mxu0
      %3456 = vmatprep.mubr.bf16.mxu0 0
      %3457 = vmatmul.mubr.bf16.gmra.mrb[0].mxu0 %v3391
      %v3458 = vpop.f32.mrb[0].mxu0
      %v3459 = vadd.f32 0.0, %v3458
      %v3460 = vpop.f32.mrb[0].mxu0
      %v3461 = vpop.f32.mrb[0].mxu0
      %v3462 = vadd.f32 0.0, %v3461
      %v3463 = vpop.f32.mrb[0].mxu0
      %3464 = vmatprep.mubr.bf16.mxu0 0
      %3465 = vmatmul.mubr.bf16.gmra.mrb[0].mxu0 %v3394
      %v3466 = vpop.f32.mrb[0].mxu0
      %v3467 = vadd.f32 0.0, %v3466
      %v3468 = vpop.f32.mrb[0].mxu0
      %v3469 = vpop.f32.mrb[0].mxu0
      %v3470 = vadd.f32 0.0, %v3469
      %v3471 = vpop.f32.mrb[0].mxu0
      %3472 = vmatprep.mubr.bf16.mxu0 0
      %3473 = vmatmul.mubr.bf16.gmra.mrb[0].mxu0 %v3397
      %v3474 = vpop.f32.mrb[0].mxu0
      %v3475 = vadd.f32 0.0, %v3474
      %v3476 = vpop.f32.mrb[0].mxu0
      %v3477 = vpop.f32.mrb[0].mxu0
      %v3478 = vadd.f32 0.0, %v3477
      %v3479 = vpop.f32.mrb[0].mxu0
      %3480 = vmatprep.mubr.bf16.mxu0 0
      %3481 = vmatmul.mubr.bf16.gmra.mrb[0].mxu0 %v3400
      %v3482 = vpop.f32.mrb[0].mxu0
      %v3483 = vadd.f32 0.0, %v3482
      %v3484 = vpop.f32.mrb[0].mxu0
      %v3485 = vpop.f32.mrb[0].mxu0
      %v3486 = vadd.f32 0.0, %v3485
      %v3487 = vpop.f32.mrb[0].mxu0
      %3488 = vmatprep.mubr.bf16.mxu0 0
      %3489 = vmatmul.mubr.bf16.gmra.mrb[0].mxu0 %v3403
      %v3490 = vpop.f32.mrb[0].mxu0
      %v3491 = vadd.f32 0.0, %v3490
      %v3492 = vpop.f32.mrb[0].mxu0
      %v3493 = vpop.f32.mrb[0].mxu0
      %v3494 = vadd.f32 0.0, %v3493
      %v3495 = vpop.f32.mrb[0].mxu0
      %3496 = vmatprep.mubr.bf16.mxu0 0
      %3497 = vmatmul.mubr.bf16.gmra.mrb[0].mxu0 %v3406
      %v3498 = vpop.f32.mrb[0].mxu0
      %v3499 = vadd.f32 0.0, %v3498
      %v3500 = vpop.f32.mrb[0].mxu0
      %v3501 = vpop.f32.mrb[0].mxu0
      %v3502 = vadd.f32 0.0, %v3501
      %v3503 = vpop.f32.mrb[0].mxu0
      %3504 = vdwg.mxu0
      %v3505 = vadd.f32 %v3336, %v3443
      %v3506 = vadd.f32 %v3337, %v3446
      %v3507 = vadd.f32 %v3338, %v3451
      %v3508 = vadd.f32 %v3339, %v3454
      %v3509 = vadd.f32 %v3340, %v3459
      %v3510 = vadd.f32 %v3341, %v3462
      %v3511 = vadd.f32 %v3342, %v3467
      %v3512 = vadd.f32 %v3343, %v3470
      %v3513 = vadd.f32 %v3344, %v3475
      %v3514 = vadd.f32 %v3345, %v3478
      %v3515 = vadd.f32 %v3346, %v3483
      %v3516 = vadd.f32 %v3347, %v3486
      %v3517 = vadd.f32 %v3348, %v3491
      %v3518 = vadd.f32 %v3349, %v3494
      %v3519 = vadd.f32 %v3350, %v3499
      %v3520 = vadd.f32 %v3351, %v3502
      %v3521 = vld [vmem:[#allocation2 + $0xa4] sm:$0xff]
      %v3522 = vld [vmem:[#allocation2 + $0xac] sm:$0xff]
      %v3523 = vld [vmem:[#allocation2 + $0xb4] sm:$0xff]
      %v3524 = vld [vmem:[#allocation2 + $0xbc] sm:$0xff]
      %v3525 = vld [vmem:[#allocation2 + $0xc4] sm:$0xff]
      %v3526 = vld [vmem:[#allocation2 + $0xcc] sm:$0xff]
      %v3527 = vld [vmem:[#allocation2 + $0xd4] sm:$0xff]
      %v3528 = vld [vmem:[#allocation2 + $0xdc] sm:$0xff]
      %v3529 = vld [vmem:[#allocation2 + $0xe4] sm:$0xff]
      %v3530 = vld [vmem:[#allocation2 + $0xec] sm:$0xff]
      %v3531 = vld [vmem:[#allocation2 + $0xf4] sm:$0xff]
      %v3532 = vld [vmem:[#allocation2 + $0xfc] sm:$0xff]
      %v3533 = vld [vmem:[#allocation2 + $0x104] sm:$0xff]
      %v3534 = vld [vmem:[#allocation2 + $0x10c] sm:$0xff]
      %v3535 = vld [vmem:[#allocation2 + $0x114] sm:$0xff]
      %v3536 = vld [vmem:[#allocation2 + $0x11c] sm:$0xff]
      %v3537 = vpack.c.bf16 %v3522, %v3521
      %v3538 = vpack.c.bf16 %v3524, %v3523
      %v3539 = vpack.c.bf16 %v3526, %v3525
      %v3540 = vpack.c.bf16 %v3528, %v3527
      %v3541 = vpack.c.bf16 %v3530, %v3529
      %v3542 = vpack.c.bf16 %v3532, %v3531
      %v3543 = vpack.c.bf16 %v3534, %v3533
      %v3544 = vpack.c.bf16 %v3536, %v3535
      %v3545 = vld [vmem:[%s2021] sm:$0xf]
      %v3546 = vld [vmem:[%s2021 + $0x4] sm:$0xf]
      %v3549 = vunpack.c.l.b16 %v3545
      %v3550 = vunpack.c.l.b16 %v3546
      %v3551 = vpack.c.b16 %v3550, %v3549
      %v3554 = vsel %vm1068, %v3537, 0
      %v3557 = vsel %vm1068, %v3538, 0
      %v3560 = vsel %vm1068, %v3539, 0
      %v3563 = vsel %vm1068, %v3540, 0
      %v3566 = vsel %vm1068, %v3541, 0
      %v3569 = vsel %vm1068, %v3542, 0
      %v3572 = vsel %vm1068, %v3543, 0
      %v3575 = vsel %vm1068, %v3544, 0
      %3577 = vmatprep.subr.bf16.mxu0 0
      %3578 = vmatpush1.bf16.msra.mxu0 %v3551
      %3579 = vmatprep.subr.bf16.mxu0 0
      %3580 = vmatpush1.bf16.msra.mxu0 0
      %3581 = vmatprep.subr.bf16.mxu0 0
      %3582 = vmatpush1.bf16.msra.mxu0 0
      %3583 = vmatprep.subr.bf16.mxu0 0
      %3584 = vmatpush1.bf16.msra.mxu0 0
      %3585 = vmatprep.subr.bf16.mxu0 0
      %3586 = vmatpush1.bf16.msra.mxu0 0
      %3587 = vmatprep.subr.bf16.mxu0 0
      %3588 = vmatpush1.bf16.msra.mxu0 0
      %3589 = vmatprep.subr.bf16.mxu0 0
      %3590 = vmatpush1.bf16.msra.mxu0 0
      %3591 = vmatprep.subr.bf16.mxu0 0
      %3592 = vmatpush1.bf16.msra.mxu0 0
      %3593 = vmatprep.subr.bf16.mxu0 0
      %3594 = vmatpush1.bf16.msra.mxu0 0
      %3595 = vmatprep.subr.bf16.mxu0 0
      %3596 = vmatpush1.bf16.msra.mxu0 0
      %3597 = vmatprep.subr.bf16.mxu0 0
      %3598 = vmatpush1.bf16.msra.mxu0 0
      %3599 = vmatprep.subr.bf16.mxu0 0
      %3600 = vmatpush1.bf16.msra.mxu0 0
      %3601 = vmatprep.subr.bf16.mxu0 0
      %3602 = vmatpush1.bf16.msra.mxu0 0
      %3603 = vmatprep.subr.bf16.mxu0 0
      %3604 = vmatpush1.bf16.msra.mxu0 0
      %3605 = vmatprep.subr.bf16.mxu0 0
      %3606 = vmatpush1.bf16.msra.mxu0 0
      %3607 = vmatprep.subr.bf16.mxu0 0
      %3608 = vmatpush1.bf16.msra.mxu0 0
      %3609 = vmatprep.mubr.bf16.mxu0 0
      %3610 = vmatmul.mubr.bf16.gmra.mrb[0].mxu0 %v3554
      %v3611 = vpop.f32.mrb[0].mxu0
      %v3612 = vadd.f32 0.0, %v3611
      %v3613 = vpop.f32.mrb[0].mxu0
      %v3614 = vpop.f32.mrb[0].mxu0
      %v3615 = vadd.f32 0.0, %v3614
      %v3616 = vpop.f32.mrb[0].mxu0
      %3617 = vmatprep.mubr.bf16.mxu0 0
      %3618 = vmatmul.mubr.bf16.gmra.mrb[0].mxu0 %v3557
      %v3619 = vpop.f32.mrb[0].mxu0
      %v3620 = vadd.f32 0.0, %v3619
      %v3621 = vpop.f32.mrb[0].mxu0
      %v3622 = vpop.f32.mrb[0].mxu0
      %v3623 = vadd.f32 0.0, %v3622
      %v3624 = vpop.f32.mrb[0].mxu0
      %3625 = vmatprep.mubr.bf16.mxu0 0
      %3626 = vmatmul.mubr.bf16.gmra.mrb[0].mxu0 %v3560
      %v3627 = vpop.f32.mrb[0].mxu0
      %v3628 = vadd.f32 0.0, %v3627
      %v3629 = vpop.f32.mrb[0].mxu0
      %v3630 = vpop.f32.mrb[0].mxu0
      %v3631 = vadd.f32 0.0, %v3630
      %v3632 = vpop.f32.mrb[0].mxu0
      %3633 = vmatprep.mubr.bf16.mxu0 0
      %3634 = vmatmul.mubr.bf16.gmra.mrb[0].mxu0 %v3563
      %v3635 = vpop.f32.mrb[0].mxu0
      %v3636 = vadd.f32 0.0, %v3635
      %v3637 = vpop.f32.mrb[0].mxu0
      %v3638 = vpop.f32.mrb[0].mxu0
      %v3639 = vadd.f32 0.0, %v3638
      %v3640 = vpop.f32.mrb[0].mxu0
      %3641 = vmatprep.mubr.bf16.mxu0 0
      %3642 = vmatmul.mubr.bf16.gmra.mrb[0].mxu0 %v3566
      %v3643 = vpop.f32.mrb[0].mxu0
      %v3644 = vadd.f32 0.0, %v3643
      %v3645 = vpop.f32.mrb[0].mxu0
      %v3646 = vpop.f32.mrb[0].mxu0
      %v3647 = vadd.f32 0.0, %v3646
      %v3648 = vpop.f32.mrb[0].mxu0
      %3649 = vmatprep.mubr.bf16.mxu0 0
      %3650 = vmatmul.mubr.bf16.gmra.mrb[0].mxu0 %v3569
      %v3651 = vpop.f32.mrb[0].mxu0
      %v3652 = vadd.f32 0.0, %v3651
      %v3653 = vpop.f32.mrb[0].mxu0
      %v3654 = vpop.f32.mrb[0].mxu0
      %v3655 = vadd.f32 0.0, %v3654
      %v3656 = vpop.f32.mrb[0].mxu0
      %3657 = vmatprep.mubr.bf16.mxu0 0
      %3658 = vmatmul.mubr.bf16.gmra.mrb[0].mxu0 %v3572
      %v3659 = vpop.f32.mrb[0].mxu0
      %v3660 = vadd.f32 0.0, %v3659
      %v3661 = vpop.f32.mrb[0].mxu0
      %v3662 = vpop.f32.mrb[0].mxu0
      %v3663 = vadd.f32 0.0, %v3662
      %v3664 = vpop.f32.mrb[0].mxu0
      %3665 = vmatprep.mubr.bf16.mxu0 0
      %3666 = vmatmul.mubr.bf16.gmra.mrb[0].mxu0 %v3575
      %v3667 = vpop.f32.mrb[0].mxu0
      %v3668 = vadd.f32 0.0, %v3667
      %v3669 = vpop.f32.mrb[0].mxu0
      %v3670 = vpop.f32.mrb[0].mxu0
      %v3671 = vadd.f32 0.0, %v3670
      %v3672 = vpop.f32.mrb[0].mxu0
      %3673 = vdwg.mxu0
      %v3674 = vadd.f32 %v3505, %v3612
      %v3675 = vadd.f32 %v3506, %v3615
      %v3676 = vadd.f32 %v3507, %v3620
      %v3677 = vadd.f32 %v3508, %v3623
      %v3678 = vadd.f32 %v3509, %v3628
      %v3679 = vadd.f32 %v3510, %v3631
      %v3680 = vadd.f32 %v3511, %v3636
      %v3681 = vadd.f32 %v3512, %v3639
      %v3682 = vadd.f32 %v3513, %v3644
      %v3683 = vadd.f32 %v3514, %v3647
      %v3684 = vadd.f32 %v3515, %v3652
      %v3685 = vadd.f32 %v3516, %v3655
      %v3686 = vadd.f32 %v3517, %v3660
      %v3687 = vadd.f32 %v3518, %v3663
      %v3688 = vadd.f32 %v3519, %v3668
      %v3689 = vadd.f32 %v3520, %v3671
      %v3690 = vld [vmem:[#allocation2 + $0xa5] sm:$0xff]
      %v3691 = vld [vmem:[#allocation2 + $0xad] sm:$0xff]
      %v3692 = vld [vmem:[#allocation2 + $0xb5] sm:$0xff]
      %v3693 = vld [vmem:[#allocation2 + $0xbd] sm:$0xff]
      %v3694 = vld [vmem:[#allocation2 + $0xc5] sm:$0xff]
      %v3695 = vld [vmem:[#allocation2 + $0xcd] sm:$0xff]
      %v3696 = vld [vmem:[#allocation2 + $0xd5] sm:$0xff]
      %v3697 = vld [vmem:[#allocation2 + $0xdd] sm:$0xff]
      %v3698 = vld [vmem:[#allocation2 + $0xe5] sm:$0xff]
      %v3699 = vld [vmem:[#allocation2 + $0xed] sm:$0xff]
      %v3700 = vld [vmem:[#allocation2 + $0xf5] sm:$0xff]
      %v3701 = vld [vmem:[#allocation2 + $0xfd] sm:$0xff]
      %v3702 = vld [vmem:[#allocation2 + $0x105] sm:$0xff]
      %v3703 = vld [vmem:[#allocation2 + $0x10d] sm:$0xff]
      %v3704 = vld [vmem:[#allocation2 + $0x115] sm:$0xff]
      %v3705 = vld [vmem:[#allocation2 + $0x11d] sm:$0xff]
      %v3706 = vpack.c.bf16 %v3691, %v3690
      %v3707 = vpack.c.bf16 %v3693, %v3692
      %v3708 = vpack.c.bf16 %v3695, %v3694
      %v3709 = vpack.c.bf16 %v3697, %v3696
      %v3710 = vpack.c.bf16 %v3699, %v3698
      %v3711 = vpack.c.bf16 %v3701, %v3700
      %v3712 = vpack.c.bf16 %v3703, %v3702
      %v3713 = vpack.c.bf16 %v3705, %v3704
      %v3714 = vld [vmem:[%s2191] sm:$0xf]
      %v3715 = vld [vmem:[%s2191 + $0x4] sm:$0xf]
      %v3718 = vunpack.c.l.b16 %v3714
      %v3719 = vunpack.c.l.b16 %v3715
      %v3720 = vpack.c.b16 %v3719, %v3718
      %v3723 = vsel %vm1068, %v3706, 0
      %v3726 = vsel %vm1068, %v3707, 0
      %v3729 = vsel %vm1068, %v3708, 0
      %v3732 = vsel %vm1068, %v3709, 0
      %v3735 = vsel %vm1068, %v3710, 0
      %v3738 = vsel %vm1068, %v3711, 0
      %v3741 = vsel %vm1068, %v3712, 0
      %v3744 = vsel %vm1068, %v3713, 0
      %3746 = vmatprep.subr.bf16.mxu0 0
      %3747 = vmatpush1.bf16.msra.mxu0 %v3720
      %3748 = vmatprep.subr.bf16.mxu0 0
      %3749 = vmatpush1.bf16.msra.mxu0 0
      %3750 = vmatprep.subr.bf16.mxu0 0
      %3751 = vmatpush1.bf16.msra.mxu0 0
      %3752 = vmatprep.subr.bf16.mxu0 0
      %3753 = vmatpush1.bf16.msra.mxu0 0
      %3754 = vmatprep.subr.bf16.mxu0 0
      %3755 = vmatpush1.bf16.msra.mxu0 0
      %3756 = vmatprep.subr.bf16.mxu0 0
      %3757 = vmatpush1.bf16.msra.mxu0 0
      %3758 = vmatprep.subr.bf16.mxu0 0
      %3759 = vmatpush1.bf16.msra.mxu0 0
      %3760 = vmatprep.subr.bf16.mxu0 0
      %3761 = vmatpush1.bf16.msra.mxu0 0
      %3762 = vmatprep.subr.bf16.mxu0 0
      %3763 = vmatpush1.bf16.msra.mxu0 0
      %3764 = vmatprep.subr.bf16.mxu0 0
      %3765 = vmatpush1.bf16.msra.mxu0 0
      %3766 = vmatprep.subr.bf16.mxu0 0
      %3767 = vmatpush1.bf16.msra.mxu0 0
      %3768 = vmatprep.subr.bf16.mxu0 0
      %3769 = vmatpush1.bf16.msra.mxu0 0
      %3770 = vmatprep.subr.bf16.mxu0 0
      %3771 = vmatpush1.bf16.msra.mxu0 0
      %3772 = vmatprep.subr.bf16.mxu0 0
      %3773 = vmatpush1.bf16.msra.mxu0 0
      %3774 = vmatprep.subr.bf16.mxu0 0
      %3775 = vmatpush1.bf16.msra.mxu0 0
      %3776 = vmatprep.subr.bf16.mxu0 0
      %3777 = vmatpush1.bf16.msra.mxu0 0
      %3778 = vmatprep.mubr.bf16.mxu0 0
      %3779 = vmatmul.mubr.bf16.gmra.mrb[0].mxu0 %v3723
      %v3780 = vpop.f32.mrb[0].mxu0
      %v3781 = vadd.f32 0.0, %v3780
      %v3782 = vpop.f32.mrb[0].mxu0
      %v3783 = vpop.f32.mrb[0].mxu0
      %v3784 = vadd.f32 0.0, %v3783
      %v3785 = vpop.f32.mrb[0].mxu0
      %3786 = vmatprep.mubr.bf16.mxu0 0
      %3787 = vmatmul.mubr.bf16.gmra.mrb[0].mxu0 %v3726
      %v3788 = vpop.f32.mrb[0].mxu0
      %v3789 = vadd.f32 0.0, %v3788
      %v3790 = vpop.f32.mrb[0].mxu0
      %v3791 = vpop.f32.mrb[0].mxu0
      %v3792 = vadd.f32 0.0, %v3791
      %v3793 = vpop.f32.mrb[0].mxu0
      %3794 = vmatprep.mubr.bf16.mxu0 0
      %3795 = vmatmul.mubr.bf16.gmra.mrb[0].mxu0 %v3729
      %v3796 = vpop.f32.mrb[0].mxu0
      %v3797 = vadd.f32 0.0, %v3796
      %v3798 = vpop.f32.mrb[0].mxu0
      %v3799 = vpop.f32.mrb[0].mxu0
      %v3800 = vadd.f32 0.0, %v3799
      %v3801 = vpop.f32.mrb[0].mxu0
      %3802 = vmatprep.mubr.bf16.mxu0 0
      %3803 = vmatmul.mubr.bf16.gmra.mrb[0].mxu0 %v3732
      %v3804 = vpop.f32.mrb[0].mxu0
      %v3805 = vadd.f32 0.0, %v3804
      %v3806 = vpop.f32.mrb[0].mxu0
      %v3807 = vpop.f32.mrb[0].mxu0
      %v3808 = vadd.f32 0.0, %v3807
      %v3809 = vpop.f32.mrb[0].mxu0
      %3810 = vmatprep.mubr.bf16.mxu0 0
      %3811 = vmatmul.mubr.bf16.gmra.mrb[0].mxu0 %v3735
      %v3812 = vpop.f32.mrb[0].mxu0
      %v3813 = vadd.f32 0.0, %v3812
      %v3814 = vpop.f32.mrb[0].mxu0
      %v3815 = vpop.f32.mrb[0].mxu0
      %v3816 = vadd.f32 0.0, %v3815
      %v3817 = vpop.f32.mrb[0].mxu0
      %3818 = vmatprep.mubr.bf16.mxu0 0
      %3819 = vmatmul.mubr.bf16.gmra.mrb[0].mxu0 %v3738
      %v3820 = vpop.f32.mrb[0].mxu0
      %v3821 = vadd.f32 0.0, %v3820
      %v3822 = vpop.f32.mrb[0].mxu0
      %v3823 = vpop.f32.mrb[0].mxu0
      %v3824 = vadd.f32 0.0, %v3823
      %v3825 = vpop.f32.mrb[0].mxu0
      %3826 = vmatprep.mubr.bf16.mxu0 0
      %3827 = vmatmul.mubr.bf16.gmra.mrb[0].mxu0 %v3741
      %v3828 = vpop.f32.mrb[0].mxu0
      %v3829 = vadd.f32 0.0, %v3828
      %v3830 = vpop.f32.mrb[0].mxu0
      %v3831 = vpop.f32.mrb[0].mxu0
      %v3832 = vadd.f32 0.0, %v3831
      %v3833 = vpop.f32.mrb[0].mxu0
      %3834 = vmatprep.mubr.bf16.mxu0 0
      %3835 = vmatmul.mubr.bf16.gmra.mrb[0].mxu0 %v3744
      %v3836 = vpop.f32.mrb[0].mxu0
      %v3837 = vadd.f32 0.0, %v3836
      %v3838 = vpop.f32.mrb[0].mxu0
      %v3839 = vpop.f32.mrb[0].mxu0
      %v3840 = vadd.f32 0.0, %v3839
      %v3841 = vpop.f32.mrb[0].mxu0
      %3842 = vdwg.mxu0
      %v3843 = vadd.f32 %v3674, %v3781
      %v3844 = vadd.f32 %v3675, %v3784
      %v3845 = vadd.f32 %v3676, %v3789
      %v3846 = vadd.f32 %v3677, %v3792
      %v3847 = vadd.f32 %v3678, %v3797
      %v3848 = vadd.f32 %v3679, %v3800
      %v3849 = vadd.f32 %v3680, %v3805
      %v3850 = vadd.f32 %v3681, %v3808
      %v3851 = vadd.f32 %v3682, %v3813
      %v3852 = vadd.f32 %v3683, %v3816
      %v3853 = vadd.f32 %v3684, %v3821
      %v3854 = vadd.f32 %v3685, %v3824
      %v3855 = vadd.f32 %v3686, %v3829
      %v3856 = vadd.f32 %v3687, %v3832
      %v3857 = vadd.f32 %v3688, %v3837
      %v3858 = vadd.f32 %v3689, %v3840
      %v3859 = vld [vmem:[#allocation2 + $0xa6] sm:$0xff]
      %v3860 = vld [vmem:[#allocation2 + $0xae] sm:$0xff]
      %v3861 = vld [vmem:[#allocation2 + $0xb6] sm:$0xff]
      %v3862 = vld [vmem:[#allocation2 + $0xbe] sm:$0xff]
      %v3863 = vld [vmem:[#allocation2 + $0xc6] sm:$0xff]
      %v3864 = vld [vmem:[#allocation2 + $0xce] sm:$0xff]
      %v3865 = vld [vmem:[#allocation2 + $0xd6] sm:$0xff]
      %v3866 = vld [vmem:[#allocation2 + $0xde] sm:$0xff]
      %v3867 = vld [vmem:[#allocation2 + $0xe6] sm:$0xff]
      %v3868 = vld [vmem:[#allocation2 + $0xee] sm:$0xff]
      %v3869 = vld [vmem:[#allocation2 + $0xf6] sm:$0xff]
      %v3870 = vld [vmem:[#allocation2 + $0xfe] sm:$0xff]
      %v3871 = vld [vmem:[#allocation2 + $0x106] sm:$0xff]
      %v3872 = vld [vmem:[#allocation2 + $0x10e] sm:$0xff]
      %v3873 = vld [vmem:[#allocation2 + $0x116] sm:$0xff]
      %v3874 = vld [vmem:[#allocation2 + $0x11e] sm:$0xff]
      %v3875 = vpack.c.bf16 %v3860, %v3859
      %v3876 = vpack.c.bf16 %v3862, %v3861
      %v3877 = vpack.c.bf16 %v3864, %v3863
      %v3878 = vpack.c.bf16 %v3866, %v3865
      %v3879 = vpack.c.bf16 %v3868, %v3867
      %v3880 = vpack.c.bf16 %v3870, %v3869
      %v3881 = vpack.c.bf16 %v3872, %v3871
      %v3882 = vpack.c.bf16 %v3874, %v3873
      %v3883 = vld [vmem:[%s2361] sm:$0xf]
      %v3884 = vld [vmem:[%s2361 + $0x4] sm:$0xf]
      %v3887 = vunpack.c.l.b16 %v3883
      %v3888 = vunpack.c.l.b16 %v3884
      %v3889 = vpack.c.b16 %v3888, %v3887
      %v3892 = vsel %vm1068, %v3875, 0
      %v3895 = vsel %vm1068, %v3876, 0
      %v3898 = vsel %vm1068, %v3877, 0
      %v3901 = vsel %vm1068, %v3878, 0
      %v3904 = vsel %vm1068, %v3879, 0
      %v3907 = vsel %vm1068, %v3880, 0
      %v3910 = vsel %vm1068, %v3881, 0
      %v3913 = vsel %vm1068, %v3882, 0
      %3915 = vmatprep.subr.bf16.mxu0 0
      %3916 = vmatpush1.bf16.msra.mxu0 %v3889
      %3917 = vmatprep.subr.bf16.mxu0 0
      %3918 = vmatpush1.bf16.msra.mxu0 0
      %3919 = vmatprep.subr.bf16.mxu0 0
      %3920 = vmatpush1.bf16.msra.mxu0 0
      %3921 = vmatprep.subr.bf16.mxu0 0
      %3922 = vmatpush1.bf16.msra.mxu0 0
      %3923 = vmatprep.subr.bf16.mxu0 0
      %3924 = vmatpush1.bf16.msra.mxu0 0
      %3925 = vmatprep.subr.bf16.mxu0 0
      %3926 = vmatpush1.bf16.msra.mxu0 0
      %3927 = vmatprep.subr.bf16.mxu0 0
      %3928 = vmatpush1.bf16.msra.mxu0 0
      %3929 = vmatprep.subr.bf16.mxu0 0
      %3930 = vmatpush1.bf16.msra.mxu0 0
      %3931 = vmatprep.subr.bf16.mxu0 0
      %3932 = vmatpush1.bf16.msra.mxu0 0
      %3933 = vmatprep.subr.bf16.mxu0 0
      %3934 = vmatpush1.bf16.msra.mxu0 0
      %3935 = vmatprep.subr.bf16.mxu0 0
      %3936 = vmatpush1.bf16.msra.mxu0 0
      %3937 = vmatprep.subr.bf16.mxu0 0
      %3938 = vmatpush1.bf16.msra.mxu0 0
      %3939 = vmatprep.subr.bf16.mxu0 0
      %3940 = vmatpush1.bf16.msra.mxu0 0
      %3941 = vmatprep.subr.bf16.mxu0 0
      %3942 = vmatpush1.bf16.msra.mxu0 0
      %3943 = vmatprep.subr.bf16.mxu0 0
      %3944 = vmatpush1.bf16.msra.mxu0 0
      %3945 = vmatprep.subr.bf16.mxu0 0
      %3946 = vmatpush1.bf16.msra.mxu0 0
      %3947 = vmatprep.mubr.bf16.mxu0 0
      %3948 = vmatmul.mubr.bf16.gmra.mrb[0].mxu0 %v3892
      %v3949 = vpop.f32.mrb[0].mxu0
      %v3950 = vadd.f32 0.0, %v3949
      %v3951 = vpop.f32.mrb[0].mxu0
      %v3952 = vpop.f32.mrb[0].mxu0
      %v3953 = vadd.f32 0.0, %v3952
      %v3954 = vpop.f32.mrb[0].mxu0
      %3955 = vmatprep.mubr.bf16.mxu0 0
      %3956 = vmatmul.mubr.bf16.gmra.mrb[0].mxu0 %v3895
      %v3957 = vpop.f32.mrb[0].mxu0
      %v3958 = vadd.f32 0.0, %v3957
      %v3959 = vpop.f32.mrb[0].mxu0
      %v3960 = vpop.f32.mrb[0].mxu0
      %v3961 = vadd.f32 0.0, %v3960
      %v3962 = vpop.f32.mrb[0].mxu0
      %3963 = vmatprep.mubr.bf16.mxu0 0
      %3964 = vmatmul.mubr.bf16.gmra.mrb[0].mxu0 %v3898
      %v3965 = vpop.f32.mrb[0].mxu0
      %v3966 = vadd.f32 0.0, %v3965
      %v3967 = vpop.f32.mrb[0].mxu0
      %v3968 = vpop.f32.mrb[0].mxu0
      %v3969 = vadd.f32 0.0, %v3968
      %v3970 = vpop.f32.mrb[0].mxu0
      %3971 = vmatprep.mubr.bf16.mxu0 0
      %3972 = vmatmul.mubr.bf16.gmra.mrb[0].mxu0 %v3901
      %v3973 = vpop.f32.mrb[0].mxu0
      %v3974 = vadd.f32 0.0, %v3973
      %v3975 = vpop.f32.mrb[0].mxu0
      %v3976 = vpop.f32.mrb[0].mxu0
      %v3977 = vadd.f32 0.0, %v3976
      %v3978 = vpop.f32.mrb[0].mxu0
      %3979 = vmatprep.mubr.bf16.mxu0 0
      %3980 = vmatmul.mubr.bf16.gmra.mrb[0].mxu0 %v3904
      %v3981 = vpop.f32.mrb[0].mxu0
      %v3982 = vadd.f32 0.0, %v3981
      %v3983 = vpop.f32.mrb[0].mxu0
      %v3984 = vpop.f32.mrb[0].mxu0
      %v3985 = vadd.f32 0.0, %v3984
      %v3986 = vpop.f32.mrb[0].mxu0
      %3987 = vmatprep.mubr.bf16.mxu0 0
      %3988 = vmatmul.mubr.bf16.gmra.mrb[0].mxu0 %v3907
      %v3989 = vpop.f32.mrb[0].mxu0
      %v3990 = vadd.f32 0.0, %v3989
      %v3991 = vpop.f32.mrb[0].mxu0
      %v3992 = vpop.f32.mrb[0].mxu0
      %v3993 = vadd.f32 0.0, %v3992
      %v3994 = vpop.f32.mrb[0].mxu0
      %3995 = vmatprep.mubr.bf16.mxu0 0
      %3996 = vmatmul.mubr.bf16.gmra.mrb[0].mxu0 %v3910
      %v3997 = vpop.f32.mrb[0].mxu0
      %v3998 = vadd.f32 0.0, %v3997
      %v3999 = vpop.f32.mrb[0].mxu0
      %v4000 = vpop.f32.mrb[0].mxu0
      %v4001 = vadd.f32 0.0, %v4000
      %v4002 = vpop.f32.mrb[0].mxu0
      %4003 = vmatprep.mubr.bf16.mxu0 0
      %4004 = vmatmul.mubr.bf16.gmra.mrb[0].mxu0 %v3913
      %v4005 = vpop.f32.mrb[0].mxu0
      %v4006 = vadd.f32 0.0, %v4005
      %v4007 = vpop.f32.mrb[0].mxu0
      %v4008 = vpop.f32.mrb[0].mxu0
      %v4009 = vadd.f32 0.0, %v4008
      %v4010 = vpop.f32.mrb[0].mxu0
      %4011 = vdwg.mxu0
      %v4012 = vadd.f32 %v3843, %v3950
      %v4013 = vadd.f32 %v3844, %v3953
      %v4014 = vadd.f32 %v3845, %v3958
      %v4015 = vadd.f32 %v3846, %v3961
      %v4016 = vadd.f32 %v3847, %v3966
      %v4017 = vadd.f32 %v3848, %v3969
      %v4018 = vadd.f32 %v3849, %v3974
      %v4019 = vadd.f32 %v3850, %v3977
      %v4020 = vadd.f32 %v3851, %v3982
      %v4021 = vadd.f32 %v3852, %v3985
      %v4022 = vadd.f32 %v3853, %v3990
      %v4023 = vadd.f32 %v3854, %v3993
      %v4024 = vadd.f32 %v3855, %v3998
      %v4025 = vadd.f32 %v3856, %v4001
      %v4026 = vadd.f32 %v3857, %v4006
      %v4027 = vadd.f32 %v3858, %v4009
      %v4028 = vmax.f32 %v4012, 0.0
      %v4029 = vmax.f32 %v4013, 0.0
      %v4030 = vmax.f32 %v4014, 0.0
      %v4031 = vmax.f32 %v4015, 0.0
      %v4032 = vmax.f32 %v4016, 0.0
      %v4033 = vmax.f32 %v4017, 0.0
      %v4034 = vmax.f32 %v4018, 0.0
      %v4035 = vmax.f32 %v4019, 0.0
      %v4036 = vmax.f32 %v4020, 0.0
      %v4037 = vmax.f32 %v4021, 0.0
      %v4038 = vmax.f32 %v4022, 0.0
      %v4039 = vmax.f32 %v4023, 0.0
      %v4040 = vmax.f32 %v4024, 0.0
      %v4041 = vmax.f32 %v4025, 0.0
      %v4042 = vmax.f32 %v4026, 0.0
      %v4043 = vmax.f32 %v4027, 0.0
      %v4044 = vpack.c.bf16 %v4029, %v4028
      %v4045 = vpack.c.bf16 %v4031, %v4030
      %v4046 = vpack.c.bf16 %v4033, %v4032
      %v4047 = vpack.c.bf16 %v4035, %v4034
      %v4048 = vpack.c.bf16 %v4037, %v4036
      %v4049 = vpack.c.bf16 %v4039, %v4038
      %v4050 = vpack.c.bf16 %v4041, %v4040
      %v4051 = vpack.c.bf16 %v4043, %v4042
      %4052 = vst [vmem:[#allocation3 + $0x40] sm:$0xff] %v4044
      %4053 = vst [vmem:[#allocation3 + $0x48] sm:$0xff] %v4045
      %4054 = vst [vmem:[#allocation3 + $0x50] sm:$0xff] %v4046
      %4055 = vst [vmem:[#allocation3 + $0x58] sm:$0xff] %v4047
      %4056 = vst [vmem:[#allocation3 + $0x60] sm:$0xff] %v4048
      %4057 = vst [vmem:[#allocation3 + $0x68] sm:$0xff] %v4049
      %4058 = vst [vmem:[#allocation3 + $0x70] sm:$0xff] %v4050
      %4059 = vst [vmem:[#allocation3 + $0x78] sm:$0xff] %v4051
      %v4060 = vld [vmem:[#allocation2 + $0x100] sm:$0xff]
      %v4061 = vld [vmem:[#allocation2 + $0x108] sm:$0xff]
      %v4062 = vld [vmem:[#allocation2 + $0x110] sm:$0xff]
      %v4063 = vld [vmem:[#allocation2 + $0x118] sm:$0xff]
      %v4064 = vpack.c.bf16 %v4061, %v4060
      %v4065 = vpack.c.bf16 %v4063, %v4062
      %v4066 = vld [vmem:[%s2] sm:$0xf]
      %v4067 = vld [vmem:[%s2 + $0x4] sm:$0xf]
      %v4068 = vld [vmem:[#allocation2 + $0x101] sm:$0xff]
      %v4069 = vld [vmem:[#allocation2 + $0x109] sm:$0xff]
      %v4070 = vld [vmem:[#allocation2 + $0x111] sm:$0xff]
      %v4071 = vld [vmem:[#allocation2 + $0x119] sm:$0xff]
      %v4072 = vpack.c.bf16 %v4069, %v4068
      %v4073 = vpack.c.bf16 %v4071, %v4070
      %v4074 = vld [vmem:[%s1059] sm:$0xf]
      %v4075 = vld [vmem:[%s1059 + $0x4] sm:$0xf]
      %v4078 = vunpack.c.l.b16 %v4074
      %v4079 = vunpack.c.l.b16 %v4075
      %v4080 = vpack.c.b16 %v4079, %v4078
      %v4083 = vsel %vm1068, %v4072, 0
      %v4086 = vsel %vm1068, %v4073, 0
      %4088 = vmatprep.subr.bf16.mxu0 0
      %4089 = vmatpush1.bf16.msra.mxu0 %v4080
      %4090 = vmatprep.subr.bf16.mxu0 0
      %4091 = vmatpush1.bf16.msra.mxu0 0
      %4092 = vmatprep.subr.bf16.mxu0 0
      %4093 = vmatpush1.bf16.msra.mxu0 0
      %4094 = vmatprep.subr.bf16.mxu0 0
      %4095 = vmatpush1.bf16.msra.mxu0 0
      %4096 = vmatprep.subr.bf16.mxu0 0
      %4097 = vmatpush1.bf16.msra.mxu0 0
      %4098 = vmatprep.subr.bf16.mxu0 0
      %4099 = vmatpush1.bf16.msra.mxu0 0
      %4100 = vmatprep.subr.bf16.mxu0 0
      %4101 = vmatpush1.bf16.msra.mxu0 0
      %4102 = vmatprep.subr.bf16.mxu0 0
      %4103 = vmatpush1.bf16.msra.mxu0 0
      %4104 = vmatprep.subr.bf16.mxu0 0
      %4105 = vmatpush1.bf16.msra.mxu0 0
      %4106 = vmatprep.subr.bf16.mxu0 0
      %4107 = vmatpush1.bf16.msra.mxu0 0
      %4108 = vmatprep.subr.bf16.mxu0 0
      %4109 = vmatpush1.bf16.msra.mxu0 0
      %4110 = vmatprep.subr.bf16.mxu0 0
      %4111 = vmatpush1.bf16.msra.mxu0 0
      %4112 = vmatprep.subr.bf16.mxu0 0
      %4113 = vmatpush1.bf16.msra.mxu0 0
      %4114 = vmatprep.subr.bf16.mxu0 0
      %4115 = vmatpush1.bf16.msra.mxu0 0
      %4116 = vmatprep.subr.bf16.mxu0 0
      %4117 = vmatpush1.bf16.msra.mxu0 0
      %4118 = vmatprep.subr.bf16.mxu0 0
      %4119 = vmatpush1.bf16.msra.mxu0 0
      %4120 = vmatprep.mubr.bf16.mxu0 0
      %4121 = vmatmul.mubr.bf16.gmra.mrb[0].mxu0 %v4083
      %v4122 = vpop.f32.mrb[0].mxu0
      %v4123 = vadd.f32 0.0, %v4122
      %v4124 = vpop.f32.mrb[0].mxu0
      %v4125 = vpop.f32.mrb[0].mxu0
      %v4126 = vadd.f32 0.0, %v4125
      %v4127 = vpop.f32.mrb[0].mxu0
      %4128 = vmatprep.mubr.bf16.mxu0 0
      %4129 = vmatmul.mubr.bf16.gmra.mrb[0].mxu0 %v4086
      %v4130 = vpop.f32.mrb[0].mxu0
      %v4131 = vadd.f32 0.0, %v4130
      %v4132 = vpop.f32.mrb[0].mxu0
      %v4133 = vpop.f32.mrb[0].mxu0
      %v4134 = vadd.f32 0.0, %v4133
      %v4135 = vpop.f32.mrb[0].mxu0
      %4136 = vdwg.mxu0
      %v4139 = vunpack.c.l.b16 %v4066
      %v4140 = vunpack.c.l.b16 %v4067
      %v4141 = vpack.c.b16 %v4140, %v4139
      %v4144 = vsel %vm1068, %v4064, 0
      %v4147 = vsel %vm1068, %v4065, 0
      %4149 = vmatprep.subr.bf16.mxu0 0
      %4150 = vmatpush1.bf16.msra.mxu0 %v4141
      %4151 = vmatprep.subr.bf16.mxu0 0
      %4152 = vmatpush1.bf16.msra.mxu0 0
      %4153 = vmatprep.subr.bf16.mxu0 0
      %4154 = vmatpush1.bf16.msra.mxu0 0
      %4155 = vmatprep.subr.bf16.mxu0 0
      %4156 = vmatpush1.bf16.msra.mxu0 0
      %4157 = vmatprep.subr.bf16.mxu0 0
      %4158 = vmatpush1.bf16.msra.mxu0 0
      %4159 = vmatprep.subr.bf16.mxu0 0
      %4160 = vmatpush1.bf16.msra.mxu0 0
      %4161 = vmatprep.subr.bf16.mxu0 0
      %4162 = vmatpush1.bf16.msra.mxu0 0
      %4163 = vmatprep.subr.bf16.mxu0 0
      %4164 = vmatpush1.bf16.msra.mxu0 0
      %4165 = vmatprep.subr.bf16.mxu0 0
      %4166 = vmatpush1.bf16.msra.mxu0 0
      %4167 = vmatprep.subr.bf16.mxu0 0
      %4168 = vmatpush1.bf16.msra.mxu0 0
      %4169 = vmatprep.subr.bf16.mxu0 0
      %4170 = vmatpush1.bf16.msra.mxu0 0
      %4171 = vmatprep.subr.bf16.mxu0 0
      %4172 = vmatpush1.bf16.msra.mxu0 0
      %4173 = vmatprep.subr.bf16.mxu0 0
      %4174 = vmatpush1.bf16.msra.mxu0 0
      %4175 = vmatprep.subr.bf16.mxu0 0
      %4176 = vmatpush1.bf16.msra.mxu0 0
      %4177 = vmatprep.subr.bf16.mxu0 0
      %4178 = vmatpush1.bf16.msra.mxu0 0
      %4179 = vmatprep.subr.bf16.mxu0 0
      %4180 = vmatpush1.bf16.msra.mxu0 0
      %4181 = vmatprep.mubr.bf16.mxu0 0
      %4182 = vmatmul.mubr.bf16.gmra.mrb[0].mxu0 %v4144
      %v4183 = vpop.f32.mrb[0].mxu0
      %v4184 = vadd.f32 %v4123, %v4183
      %v4185 = vpop.f32.mrb[0].mxu0
      %v4186 = vpop.f32.mrb[0].mxu0
      %v4187 = vadd.f32 %v4126, %v4186
      %v4188 = vpop.f32.mrb[0].mxu0
      %4189 = vmatprep.mubr.bf16.mxu0 0
      %4190 = vmatmul.mubr.bf16.gmra.mrb[0].mxu0 %v4147
      %v4191 = vpop.f32.mrb[0].mxu0
      %v4192 = vadd.f32 %v4131, %v4191
      %v4193 = vpop.f32.mrb[0].mxu0
      %v4194 = vpop.f32.mrb[0].mxu0
      %v4195 = vadd.f32 %v4134, %v4194
      %v4196 = vpop.f32.mrb[0].mxu0
      %4197 = vdwg.mxu0
      %v4198 = vld [vmem:[#allocation2 + $0x102] sm:$0xff]
      %v4199 = vld [vmem:[#allocation2 + $0x10a] sm:$0xff]
      %v4200 = vld [vmem:[#allocation2 + $0x112] sm:$0xff]
      %v4201 = vld [vmem:[#allocation2 + $0x11a] sm:$0xff]
      %v4202 = vpack.c.bf16 %v4199, %v4198
      %v4203 = vpack.c.bf16 %v4201, %v4200
      %v4204 = vld [vmem:[%s1341] sm:$0xf]
      %v4205 = vld [vmem:[%s1341 + $0x4] sm:$0xf]
      %v4208 = vunpack.c.l.b16 %v4204
      %v4209 = vunpack.c.l.b16 %v4205
      %v4210 = vpack.c.b16 %v4209, %v4208
      %v4213 = vsel %vm1068, %v4202, 0
      %v4216 = vsel %vm1068, %v4203, 0
      %4218 = vmatprep.subr.bf16.mxu0 0
      %4219 = vmatpush1.bf16.msra.mxu0 %v4210
      %4220 = vmatprep.subr.bf16.mxu0 0
      %4221 = vmatpush1.bf16.msra.mxu0 0
      %4222 = vmatprep.subr.bf16.mxu0 0
      %4223 = vmatpush1.bf16.msra.mxu0 0
      %4224 = vmatprep.subr.bf16.mxu0 0
      %4225 = vmatpush1.bf16.msra.mxu0 0
      %4226 = vmatprep.subr.bf16.mxu0 0
      %4227 = vmatpush1.bf16.msra.mxu0 0
      %4228 = vmatprep.subr.bf16.mxu0 0
      %4229 = vmatpush1.bf16.msra.mxu0 0
      %4230 = vmatprep.subr.bf16.mxu0 0
      %4231 = vmatpush1.bf16.msra.mxu0 0
      %4232 = vmatprep.subr.bf16.mxu0 0
      %4233 = vmatpush1.bf16.msra.mxu0 0
      %4234 = vmatprep.subr.bf16.mxu0 0
      %4235 = vmatpush1.bf16.msra.mxu0 0
      %4236 = vmatprep.subr.bf16.mxu0 0
      %4237 = vmatpush1.bf16.msra.mxu0 0
      %4238 = vmatprep.subr.bf16.mxu0 0
      %4239 = vmatpush1.bf16.msra.mxu0 0
      %4240 = vmatprep.subr.bf16.mxu0 0
      %4241 = vmatpush1.bf16.msra.mxu0 0
      %4242 = vmatprep.subr.bf16.mxu0 0
      %4243 = vmatpush1.bf16.msra.mxu0 0
      %4244 = vmatprep.subr.bf16.mxu0 0
      %4245 = vmatpush1.bf16.msra.mxu0 0
      %4246 = vmatprep.subr.bf16.mxu0 0
      %4247 = vmatpush1.bf16.msra.mxu0 0
      %4248 = vmatprep.subr.bf16.mxu0 0
      %4249 = vmatpush1.bf16.msra.mxu0 0
      %4250 = vmatprep.mubr.bf16.mxu0 0
      %4251 = vmatmul.mubr.bf16.gmra.mrb[0].mxu0 %v4213
      %v4252 = vpop.f32.mrb[0].mxu0
      %v4253 = vadd.f32 0.0, %v4252
      %v4254 = vpop.f32.mrb[0].mxu0
      %v4255 = vpop.f32.mrb[0].mxu0
      %v4256 = vadd.f32 0.0, %v4255
      %v4257 = vpop.f32.mrb[0].mxu0
      %4258 = vmatprep.mubr.bf16.mxu0 0
      %4259 = vmatmul.mubr.bf16.gmra.mrb[0].mxu0 %v4216
      %v4260 = vpop.f32.mrb[0].mxu0
      %v4261 = vadd.f32 0.0, %v4260
      %v4262 = vpop.f32.mrb[0].mxu0
      %v4263 = vpop.f32.mrb[0].mxu0
      %v4264 = vadd.f32 0.0, %v4263
      %v4265 = vpop.f32.mrb[0].mxu0
      %4266 = vdwg.mxu0
      %v4267 = vadd.f32 %v4184, %v4253
      %v4268 = vadd.f32 %v4187, %v4256
      %v4269 = vadd.f32 %v4192, %v4261
      %v4270 = vadd.f32 %v4195, %v4264
      %v4271 = vld [vmem:[#allocation2 + $0x112] sm:$0xff]
      %v4272 = vld [vmem:[#allocation2 + $0x11a] sm:$0xff]
      %v4273 = vld [vmem:[#allocation2 + $0x122] sm:$0xff]
      %v4274 = vld [vmem:[#allocation2 + $0x12a] sm:$0xff]
      %v4275 = vpack.c.bf16 %v4272, %v4271
      %v4276 = vpack.c.bf16 %v4274, %v4273
      %v4277 = vld [vmem:[%s1511] sm:$0xf]
      %v4278 = vld [vmem:[%s1511 + $0x4] sm:$0xf]
      %v4281 = vunpack.c.l.b16 %v4277
      %v4282 = vunpack.c.l.b16 %v4278
      %v4283 = vpack.c.b16 %v4282, %v4281
      %v4286 = vsel %vm1068, %v4275, 0
      %v4289 = vsel %vm1068, %v4276, 0
      %4291 = vmatprep.subr.bf16.mxu0 0
      %4292 = vmatpush1.bf16.msra.mxu0 %v4283
      %4293 = vmatprep.subr.bf16.mxu0 0
      %4294 = vmatpush1.bf16.msra.mxu0 0
      %4295 = vmatprep.subr.bf16.mxu0 0
      %4296 = vmatpush1.bf16.msra.mxu0 0
      %4297 = vmatprep.subr.bf16.mxu0 0
      %4298 = vmatpush1.bf16.msra.mxu0 0
      %4299 = vmatprep.subr.bf16.mxu0 0
      %4300 = vmatpush1.bf16.msra.mxu0 0
      %4301 = vmatprep.subr.bf16.mxu0 0
      %4302 = vmatpush1.bf16.msra.mxu0 0
      %4303 = vmatprep.subr.bf16.mxu0 0
      %4304 = vmatpush1.bf16.msra.mxu0 0
      %4305 = vmatprep.subr.bf16.mxu0 0
      %4306 = vmatpush1.bf16.msra.mxu0 0
      %4307 = vmatprep.subr.bf16.mxu0 0
      %4308 = vmatpush1.bf16.msra.mxu0 0
      %4309 = vmatprep.subr.bf16.mxu0 0
      %4310 = vmatpush1.bf16.msra.mxu0 0
      %4311 = vmatprep.subr.bf16.mxu0 0
      %4312 = vmatpush1.bf16.msra.mxu0 0
      %4313 = vmatprep.subr.bf16.mxu0 0
      %4314 = vmatpush1.bf16.msra.mxu0 0
      %4315 = vmatprep.subr.bf16.mxu0 0
      %4316 = vmatpush1.bf16.msra.mxu0 0
      %4317 = vmatprep.subr.bf16.mxu0 0
      %4318 = vmatpush1.bf16.msra.mxu0 0
      %4319 = vmatprep.subr.bf16.mxu0 0
      %4320 = vmatpush1.bf16.msra.mxu0 0
      %4321 = vmatprep.subr.bf16.mxu0 0
      %4322 = vmatpush1.bf16.msra.mxu0 0
      %4323 = vmatprep.mubr.bf16.mxu0 0
      %4324 = vmatmul.mubr.bf16.gmra.mrb[0].mxu0 %v4286
      %v4325 = vpop.f32.mrb[0].mxu0
      %v4326 = vadd.f32 0.0, %v4325
      %v4327 = vpop.f32.mrb[0].mxu0
      %v4328 = vpop.f32.mrb[0].mxu0
      %v4329 = vadd.f32 0.0, %v4328
      %v4330 = vpop.f32.mrb[0].mxu0
      %4331 = vmatprep.mubr.bf16.mxu0 0
      %4332 = vmatmul.mubr.bf16.gmra.mrb[0].mxu0 %v4289
      %v4333 = vpop.f32.mrb[0].mxu0
      %v4334 = vadd.f32 0.0, %v4333
      %v4335 = vpop.f32.mrb[0].mxu0
      %v4336 = vpop.f32.mrb[0].mxu0
      %v4337 = vadd.f32 0.0, %v4336
      %v4338 = vpop.f32.mrb[0].mxu0
      %4339 = vdwg.mxu0
      %v4340 = vadd.f32 %v4267, %v4326
      %v4341 = vadd.f32 %v4268, %v4329
      %v4342 = vadd.f32 %v4269, %v4334
      %v4343 = vadd.f32 %v4270, %v4337
      %v4344 = vld [vmem:[#allocation2 + $0x113] sm:$0xff]
      %v4345 = vld [vmem:[#allocation2 + $0x11b] sm:$0xff]
      %v4346 = vld [vmem:[#allocation2 + $0x123] sm:$0xff]
      %v4347 = vld [vmem:[#allocation2 + $0x12b] sm:$0xff]
      %v4348 = vpack.c.bf16 %v4345, %v4344
      %v4349 = vpack.c.bf16 %v4347, %v4346
      %v4350 = vld [vmem:[%s1681] sm:$0xf]
      %v4351 = vld [vmem:[%s1681 + $0x4] sm:$0xf]
      %v4354 = vunpack.c.l.b16 %v4350
      %v4355 = vunpack.c.l.b16 %v4351
      %v4356 = vpack.c.b16 %v4355, %v4354
      %v4359 = vsel %vm1068, %v4348, 0
      %v4362 = vsel %vm1068, %v4349, 0
      %4364 = vmatprep.subr.bf16.mxu0 0
      %4365 = vmatpush1.bf16.msra.mxu0 %v4356
      %4366 = vmatprep.subr.bf16.mxu0 0
      %4367 = vmatpush1.bf16.msra.mxu0 0
      %4368 = vmatprep.subr.bf16.mxu0 0
      %4369 = vmatpush1.bf16.msra.mxu0 0
      %4370 = vmatprep.subr.bf16.mxu0 0
      %4371 = vmatpush1.bf16.msra.mxu0 0
      %4372 = vmatprep.subr.bf16.mxu0 0
      %4373 = vmatpush1.bf16.msra.mxu0 0
      %4374 = vmatprep.subr.bf16.mxu0 0
      %4375 = vmatpush1.bf16.msra.mxu0 0
      %4376 = vmatprep.subr.bf16.mxu0 0
      %4377 = vmatpush1.bf16.msra.mxu0 0
      %4378 = vmatprep.subr.bf16.mxu0 0
      %4379 = vmatpush1.bf16.msra.mxu0 0
      %4380 = vmatprep.subr.bf16.mxu0 0
      %4381 = vmatpush1.bf16.msra.mxu0 0
      %4382 = vmatprep.subr.bf16.mxu0 0
      %4383 = vmatpush1.bf16.msra.mxu0 0
      %4384 = vmatprep.subr.bf16.mxu0 0
      %4385 = vmatpush1.bf16.msra.mxu0 0
      %4386 = vmatprep.subr.bf16.mxu0 0
      %4387 = vmatpush1.bf16.msra.mxu0 0
      %4388 = vmatprep.subr.bf16.mxu0 0
      %4389 = vmatpush1.bf16.msra.mxu0 0
      %4390 = vmatprep.subr.bf16.mxu0 0
      %4391 = vmatpush1.bf16.msra.mxu0 0
      %4392 = vmatprep.subr.bf16.mxu0 0
      %4393 = vmatpush1.bf16.msra.mxu0 0
      %4394 = vmatprep.subr.bf16.mxu0 0
      %4395 = vmatpush1.bf16.msra.mxu0 0
      %4396 = vmatprep.mubr.bf16.mxu0 0
      %4397 = vmatmul.mubr.bf16.gmra.mrb[0].mxu0 %v4359
      %v4398 = vpop.f32.mrb[0].mxu0
      %v4399 = vadd.f32 0.0, %v4398
      %v4400 = vpop.f32.mrb[0].mxu0
      %v4401 = vpop.f32.mrb[0].mxu0
      %v4402 = vadd.f32 0.0, %v4401
      %v4403 = vpop.f32.mrb[0].mxu0
      %4404 = vmatprep.mubr.bf16.mxu0 0
      %4405 = vmatmul.mubr.bf16.gmra.mrb[0].mxu0 %v4362
      %v4406 = vpop.f32.mrb[0].mxu0
      %v4407 = vadd.f32 0.0, %v4406
      %v4408 = vpop.f32.mrb[0].mxu0
      %v4409 = vpop.f32.mrb[0].mxu0
      %v4410 = vadd.f32 0.0, %v4409
      %v4411 = vpop.f32.mrb[0].mxu0
      %4412 = vdwg.mxu0
      %v4413 = vadd.f32 %v4340, %v4399
      %v4414 = vadd.f32 %v4341, %v4402
      %v4415 = vadd.f32 %v4342, %v4407
      %v4416 = vadd.f32 %v4343, %v4410
      %v4417 = vld [vmem:[#allocation2 + $0x114] sm:$0xff]
      %v4418 = vld [vmem:[#allocation2 + $0x11c] sm:$0xff]
      %v4419 = vld [vmem:[#allocation2 + $0x124] sm:$0xff]
      %v4420 = vld [vmem:[#allocation2 + $0x12c] sm:$0xff]
      %v4421 = vpack.c.bf16 %v4418, %v4417
      %v4422 = vpack.c.bf16 %v4420, %v4419
      %v4423 = vld [vmem:[%s1851] sm:$0xf]
      %v4424 = vld [vmem:[%s1851 + $0x4] sm:$0xf]
      %v4427 = vunpack.c.l.b16 %v4423
      %v4428 = vunpack.c.l.b16 %v4424
      %v4429 = vpack.c.b16 %v4428, %v4427
      %v4432 = vsel %vm1068, %v4421, 0
      %v4435 = vsel %vm1068, %v4422, 0
      %4437 = vmatprep.subr.bf16.mxu0 0
      %4438 = vmatpush1.bf16.msra.mxu0 %v4429
      %4439 = vmatprep.subr.bf16.mxu0 0
      %4440 = vmatpush1.bf16.msra.mxu0 0
      %4441 = vmatprep.subr.bf16.mxu0 0
      %4442 = vmatpush1.bf16.msra.mxu0 0
      %4443 = vmatprep.subr.bf16.mxu0 0
      %4444 = vmatpush1.bf16.msra.mxu0 0
      %4445 = vmatprep.subr.bf16.mxu0 0
      %4446 = vmatpush1.bf16.msra.mxu0 0
      %4447 = vmatprep.subr.bf16.mxu0 0
      %4448 = vmatpush1.bf16.msra.mxu0 0
      %4449 = vmatprep.subr.bf16.mxu0 0
      %4450 = vmatpush1.bf16.msra.mxu0 0
      %4451 = vmatprep.subr.bf16.mxu0 0
      %4452 = vmatpush1.bf16.msra.mxu0 0
      %4453 = vmatprep.subr.bf16.mxu0 0
      %4454 = vmatpush1.bf16.msra.mxu0 0
      %4455 = vmatprep.subr.bf16.mxu0 0
      %4456 = vmatpush1.bf16.msra.mxu0 0
      %4457 = vmatprep.subr.bf16.mxu0 0
      %4458 = vmatpush1.bf16.msra.mxu0 0
      %4459 = vmatprep.subr.bf16.mxu0 0
      %4460 = vmatpush1.bf16.msra.mxu0 0
      %4461 = vmatprep.subr.bf16.mxu0 0
      %4462 = vmatpush1.bf16.msra.mxu0 0
      %4463 = vmatprep.subr.bf16.mxu0 0
      %4464 = vmatpush1.bf16.msra.mxu0 0
      %4465 = vmatprep.subr.bf16.mxu0 0
      %4466 = vmatpush1.bf16.msra.mxu0 0
      %4467 = vmatprep.subr.bf16.mxu0 0
      %4468 = vmatpush1.bf16.msra.mxu0 0
      %4469 = vmatprep.mubr.bf16.mxu0 0
      %4470 = vmatmul.mubr.bf16.gmra.mrb[0].mxu0 %v4432
      %v4471 = vpop.f32.mrb[0].mxu0
      %v4472 = vadd.f32 0.0, %v4471
      %v4473 = vpop.f32.mrb[0].mxu0
      %v4474 = vpop.f32.mrb[0].mxu0
      %v4475 = vadd.f32 0.0, %v4474
      %v4476 = vpop.f32.mrb[0].mxu0
      %4477 = vmatprep.mubr.bf16.mxu0 0
      %4478 = vmatmul.mubr.bf16.gmra.mrb[0].mxu0 %v4435
      %v4479 = vpop.f32.mrb[0].mxu0
      %v4480 = vadd.f32 0.0, %v4479
      %v4481 = vpop.f32.mrb[0].mxu0
      %v4482 = vpop.f32.mrb[0].mxu0
      %v4483 = vadd.f32 0.0, %v4482
      %v4484 = vpop.f32.mrb[0].mxu0
      %4485 = vdwg.mxu0
      %v4486 = vadd.f32 %v4413, %v4472
      %v4487 = vadd.f32 %v4414, %v4475
      %v4488 = vadd.f32 %v4415, %v4480
      %v4489 = vadd.f32 %v4416, %v4483
      %v4490 = vld [vmem:[#allocation2 + $0x124] sm:$0xff]
      %v4491 = vld [vmem:[#allocation2 + $0x12c] sm:$0xff]
      %v4492 = vld [vmem:[#allocation2 + $0x134] sm:$0xff]
      %v4493 = vld [vmem:[#allocation2 + $0x13c] sm:$0xff]
      %v4494 = vpack.c.bf16 %v4491, %v4490
      %v4495 = vpack.c.bf16 %v4493, %v4492
      %v4496 = vld [vmem:[%s2021] sm:$0xf]
      %v4497 = vld [vmem:[%s2021 + $0x4] sm:$0xf]
      %v4500 = vunpack.c.l.b16 %v4496
      %v4501 = vunpack.c.l.b16 %v4497
      %v4502 = vpack.c.b16 %v4501, %v4500
      %v4505 = vsel %vm1068, %v4494, 0
      %v4508 = vsel %vm1068, %v4495, 0
      %4510 = vmatprep.subr.bf16.mxu0 0
      %4511 = vmatpush1.bf16.msra.mxu0 %v4502
      %4512 = vmatprep.subr.bf16.mxu0 0
      %4513 = vmatpush1.bf16.msra.mxu0 0
      %4514 = vmatprep.subr.bf16.mxu0 0
      %4515 = vmatpush1.bf16.msra.mxu0 0
      %4516 = vmatprep.subr.bf16.mxu0 0
      %4517 = vmatpush1.bf16.msra.mxu0 0
      %4518 = vmatprep.subr.bf16.mxu0 0
      %4519 = vmatpush1.bf16.msra.mxu0 0
      %4520 = vmatprep.subr.bf16.mxu0 0
      %4521 = vmatpush1.bf16.msra.mxu0 0
      %4522 = vmatprep.subr.bf16.mxu0 0
      %4523 = vmatpush1.bf16.msra.mxu0 0
      %4524 = vmatprep.subr.bf16.mxu0 0
      %4525 = vmatpush1.bf16.msra.mxu0 0
      %4526 = vmatprep.subr.bf16.mxu0 0
      %4527 = vmatpush1.bf16.msra.mxu0 0
      %4528 = vmatprep.subr.bf16.mxu0 0
      %4529 = vmatpush1.bf16.msra.mxu0 0
      %4530 = vmatprep.subr.bf16.mxu0 0
      %4531 = vmatpush1.bf16.msra.mxu0 0
      %4532 = vmatprep.subr.bf16.mxu0 0
      %4533 = vmatpush1.bf16.msra.mxu0 0
      %4534 = vmatprep.subr.bf16.mxu0 0
      %4535 = vmatpush1.bf16.msra.mxu0 0
      %4536 = vmatprep.subr.bf16.mxu0 0
      %4537 = vmatpush1.bf16.msra.mxu0 0
      %4538 = vmatprep.subr.bf16.mxu0 0
      %4539 = vmatpush1.bf16.msra.mxu0 0
      %4540 = vmatprep.subr.bf16.mxu0 0
      %4541 = vmatpush1.bf16.msra.mxu0 0
      %4542 = vmatprep.mubr.bf16.mxu0 0
      %4543 = vmatmul.mubr.bf16.gmra.mrb[0].mxu0 %v4505
      %v4544 = vpop.f32.mrb[0].mxu0
      %v4545 = vadd.f32 0.0, %v4544
      %v4546 = vpop.f32.mrb[0].mxu0
      %v4547 = vpop.f32.mrb[0].mxu0
      %v4548 = vadd.f32 0.0, %v4547
      %v4549 = vpop.f32.mrb[0].mxu0
      %4550 = vmatprep.mubr.bf16.mxu0 0
      %4551 = vmatmul.mubr.bf16.gmra.mrb[0].mxu0 %v4508
      %v4552 = vpop.f32.mrb[0].mxu0
      %v4553 = vadd.f32 0.0, %v4552
      %v4554 = vpop.f32.mrb[0].mxu0
      %v4555 = vpop.f32.mrb[0].mxu0
      %v4556 = vadd.f32 0.0, %v4555
      %v4557 = vpop.f32.mrb[0].mxu0
      %4558 = vdwg.mxu0
      %v4559 = vadd.f32 %v4486, %v4545
      %v4560 = vadd.f32 %v4487, %v4548
      %v4561 = vadd.f32 %v4488, %v4553
      %v4562 = vadd.f32 %v4489, %v4556
      %v4563 = vld [vmem:[#allocation2 + $0x125] sm:$0xff]
      %v4564 = vld [vmem:[#allocation2 + $0x12d] sm:$0xff]
      %v4565 = vld [vmem:[#allocation2 + $0x135] sm:$0xff]
      %v4566 = vld [vmem:[#allocation2 + $0x13d] sm:$0xff]
      %v4567 = vpack.c.bf16 %v4564, %v4563
      %v4568 = vpack.c.bf16 %v4566, %v4565
      %v4569 = vld [vmem:[%s2191] sm:$0xf]
      %v4570 = vld [vmem:[%s2191 + $0x4] sm:$0xf]
      %v4573 = vunpack.c.l.b16 %v4569
      %v4574 = vunpack.c.l.b16 %v4570
      %v4575 = vpack.c.b16 %v4574, %v4573
      %v4578 = vsel %vm1068, %v4567, 0
      %v4581 = vsel %vm1068, %v4568, 0
      %4583 = vmatprep.subr.bf16.mxu0 0
      %4584 = vmatpush1.bf16.msra.mxu0 %v4575
      %4585 = vmatprep.subr.bf16.mxu0 0
      %4586 = vmatpush1.bf16.msra.mxu0 0
      %4587 = vmatprep.subr.bf16.mxu0 0
      %4588 = vmatpush1.bf16.msra.mxu0 0
      %4589 = vmatprep.subr.bf16.mxu0 0
      %4590 = vmatpush1.bf16.msra.mxu0 0
      %4591 = vmatprep.subr.bf16.mxu0 0
      %4592 = vmatpush1.bf16.msra.mxu0 0
      %4593 = vmatprep.subr.bf16.mxu0 0
      %4594 = vmatpush1.bf16.msra.mxu0 0
      %4595 = vmatprep.subr.bf16.mxu0 0
      %4596 = vmatpush1.bf16.msra.mxu0 0
      %4597 = vmatprep.subr.bf16.mxu0 0
      %4598 = vmatpush1.bf16.msra.mxu0 0
      %4599 = vmatprep.subr.bf16.mxu0 0
      %4600 = vmatpush1.bf16.msra.mxu0 0
      %4601 = vmatprep.subr.bf16.mxu0 0
      %4602 = vmatpush1.bf16.msra.mxu0 0
      %4603 = vmatprep.subr.bf16.mxu0 0
      %4604 = vmatpush1.bf16.msra.mxu0 0
      %4605 = vmatprep.subr.bf16.mxu0 0
      %4606 = vmatpush1.bf16.msra.mxu0 0
      %4607 = vmatprep.subr.bf16.mxu0 0
      %4608 = vmatpush1.bf16.msra.mxu0 0
      %4609 = vmatprep.subr.bf16.mxu0 0
      %4610 = vmatpush1.bf16.msra.mxu0 0
      %4611 = vmatprep.subr.bf16.mxu0 0
      %4612 = vmatpush1.bf16.msra.mxu0 0
      %4613 = vmatprep.subr.bf16.mxu0 0
      %4614 = vmatpush1.bf16.msra.mxu0 0
      %4615 = vmatprep.mubr.bf16.mxu0 0
      %4616 = vmatmul.mubr.bf16.gmra.mrb[0].mxu0 %v4578
      %v4617 = vpop.f32.mrb[0].mxu0
      %v4618 = vadd.f32 0.0, %v4617
      %v4619 = vpop.f32.mrb[0].mxu0
      %v4620 = vpop.f32.mrb[0].mxu0
      %v4621 = vadd.f32 0.0, %v4620
      %v4622 = vpop.f32.mrb[0].mxu0
      %4623 = vmatprep.mubr.bf16.mxu0 0
      %4624 = vmatmul.mubr.bf16.gmra.mrb[0].mxu0 %v4581
      %v4625 = vpop.f32.mrb[0].mxu0
      %v4626 = vadd.f32 0.0, %v4625
      %v4627 = vpop.f32.mrb[0].mxu0
      %v4628 = vpop.f32.mrb[0].mxu0
      %v4629 = vadd.f32 0.0, %v4628
      %v4630 = vpop.f32.mrb[0].mxu0
      %4631 = vdwg.mxu0
      %v4632 = vadd.f32 %v4559, %v4618
      %v4633 = vadd.f32 %v4560, %v4621
      %v4634 = vadd.f32 %v4561, %v4626
      %v4635 = vadd.f32 %v4562, %v4629
      %v4636 = vld [vmem:[#allocation2 + $0x126] sm:$0xff]
      %v4637 = vld [vmem:[#allocation2 + $0x12e] sm:$0xff]
      %v4638 = vld [vmem:[#allocation2 + $0x136] sm:$0xff]
      %v4639 = vld [vmem:[#allocation2 + $0x13e] sm:$0xff]
      %v4640 = vpack.c.bf16 %v4637, %v4636
      %v4641 = vpack.c.bf16 %v4639, %v4638
      %v4642 = vld [vmem:[%s2361] sm:$0xf]
      %v4643 = vld [vmem:[%s2361 + $0x4] sm:$0xf]
      %v4646 = vunpack.c.l.b16 %v4642
      %v4647 = vunpack.c.l.b16 %v4643
      %v4648 = vpack.c.b16 %v4647, %v4646
      %v4651 = vsel %vm1068, %v4640, 0
      %v4654 = vsel %vm1068, %v4641, 0
      %4656 = vmatprep.subr.bf16.mxu0 0
      %4657 = vmatpush1.bf16.msra.mxu0 %v4648
      %4658 = vmatprep.subr.bf16.mxu0 0
      %4659 = vmatpush1.bf16.msra.mxu0 0
      %4660 = vmatprep.subr.bf16.mxu0 0
      %4661 = vmatpush1.bf16.msra.mxu0 0
      %4662 = vmatprep.subr.bf16.mxu0 0
      %4663 = vmatpush1.bf16.msra.mxu0 0
      %4664 = vmatprep.subr.bf16.mxu0 0
      %4665 = vmatpush1.bf16.msra.mxu0 0
      %4666 = vmatprep.subr.bf16.mxu0 0
      %4667 = vmatpush1.bf16.msra.mxu0 0
      %4668 = vmatprep.subr.bf16.mxu0 0
      %4669 = vmatpush1.bf16.msra.mxu0 0
      %4670 = vmatprep.subr.bf16.mxu0 0
      %4671 = vmatpush1.bf16.msra.mxu0 0
      %4672 = vmatprep.subr.bf16.mxu0 0
      %4673 = vmatpush1.bf16.msra.mxu0 0
      %4674 = vmatprep.subr.bf16.mxu0 0
      %4675 = vmatpush1.bf16.msra.mxu0 0
      %4676 = vmatprep.subr.bf16.mxu0 0
      %4677 = vmatpush1.bf16.msra.mxu0 0
      %4678 = vmatprep.subr.bf16.mxu0 0
      %4679 = vmatpush1.bf16.msra.mxu0 0
      %4680 = vmatprep.subr.bf16.mxu0 0
      %4681 = vmatpush1.bf16.msra.mxu0 0
      %4682 = vmatprep.subr.bf16.mxu0 0
      %4683 = vmatpush1.bf16.msra.mxu0 0
      %4684 = vmatprep.subr.bf16.mxu0 0
      %4685 = vmatpush1.bf16.msra.mxu0 0
      %4686 = vmatprep.subr.bf16.mxu0 0
      %4687 = vmatpush1.bf16.msra.mxu0 0
      %4688 = vmatprep.mubr.bf16.mxu0 0
      %4689 = vmatmul.mubr.bf16.gmra.mrb[0].mxu0 %v4651
      %v4690 = vpop.f32.mrb[0].mxu0
      %v4691 = vadd.f32 0.0, %v4690
      %v4692 = vpop.f32.mrb[0].mxu0
      %v4693 = vpop.f32.mrb[0].mxu0
      %v4694 = vadd.f32 0.0, %v4693
      %v4695 = vpop.f32.mrb[0].mxu0
      %4696 = vmatprep.mubr.bf16.mxu0 0
      %4697 = vmatmul.mubr.bf16.gmra.mrb[0].mxu0 %v4654
      %v4698 = vpop.f32.mrb[0].mxu0
      %v4699 = vadd.f32 0.0, %v4698
      %v4700 = vpop.f32.mrb[0].mxu0
      %v4701 = vpop.f32.mrb[0].mxu0
      %v4702 = vadd.f32 0.0, %v4701
      %v4703 = vpop.f32.mrb[0].mxu0
      %4704 = vdwg.mxu0
      %v4705 = vadd.f32 %v4632, %v4691
      %v4706 = vadd.f32 %v4633, %v4694
      %v4707 = vadd.f32 %v4634, %v4699
      %v4708 = vadd.f32 %v4635, %v4702
      %v4709 = vmax.f32 %v4705, 0.0
      %v4710 = vmax.f32 %v4706, 0.0
      %v4711 = vmax.f32 %v4707, 0.0
      %v4712 = vmax.f32 %v4708, 0.0
      %v4713 = vpack.c.bf16 %v4710, %v4709
      %v4714 = vpack.c.bf16 %v4712, %v4711
      %4715 = vst [vmem:[#allocation3 + $0x80] sm:$0xff] %v4713
      %4716 = vst [vmem:[#allocation3 + $0x88] sm:$0xff] %v4714
      %v4717 = vld [vmem:[%s3] sm:$0xff]
      %v4718 = vld [vmem:[%s3 + $0x8] sm:$0xf]
      %v4719 = vld [vmem:[%s3 + $0xc] sm:$0xff]
      %v4720 = vld [vmem:[%s3 + $0x14] sm:$0xf]
      %v4721 = vld [vmem:[%s3 + $0x18] sm:$0xff]
      %v4722 = vld [vmem:[%s3 + $0x20] sm:$0xf]
      %v4723 = vld [vmem:[%s3 + $0x24] sm:$0xff]
      %v4724 = vld [vmem:[%s3 + $0x2c] sm:$0xf]
      %v4725 = vld [vmem:[%s3 + $0x30] sm:$0xff]
      %v4726 = vld [vmem:[%s3 + $0x38] sm:$0xf]
      %v4727 = vld [vmem:[%s3 + $0x3c] sm:$0xff]
      %v4728 = vld [vmem:[%s3 + $0x44] sm:$0xf]
      %v4729 = vld [vmem:[%s3 + $0x48] sm:$0xff]
      %v4730 = vld [vmem:[%s3 + $0x50] sm:$0xf]
      %v4731 = vld [vmem:[%s3 + $0x54] sm:$0xff]
      %v4732 = vld [vmem:[%s3 + $0x5c] sm:$0xf]
      %v4733 = vld [vmem:[%s3 + $0x60] sm:$0xff]
      %v4734 = vld [vmem:[%s3 + $0x68] sm:$0xf]
      %v4735 = vld [vmem:[%s3 + $0x6c] sm:$0xff]
      %v4736 = vld [vmem:[%s3 + $0x74] sm:$0xf]
      %v4737 = vld [vmem:[%s3 + $0x78] sm:$0xff]
      %v4738 = vld [vmem:[%s3 + $0x80] sm:$0xf]
      %v4739 = vld [vmem:[%s3 + $0x84] sm:$0xff]
      %v4740 = vld [vmem:[%s3 + $0x8c] sm:$0xf]
      %v4741 = vld [vmem:[%s3 + $0x90] sm:$0xff]
      %v4742 = vld [vmem:[%s3 + $0x98] sm:$0xf]
      %v4743 = vld [vmem:[#allocation3] sm:$0xff]
      %v4744 = vld [vmem:[#allocation3 + $0x8] sm:$0xff]
      %v4745 = vld [vmem:[#allocation3 + $0x10] sm:$0xff]
      %v4746 = vld [vmem:[#allocation3 + $0x18] sm:$0xff]
      %v4747 = vld [vmem:[#allocation3 + $0x20] sm:$0xff]
      %v4748 = vld [vmem:[#allocation3 + $0x28] sm:$0xff]
      %v4749 = vld [vmem:[#allocation3 + $0x30] sm:$0xff]
      %v4750 = vld [vmem:[#allocation3 + $0x38] sm:$0xff]
      %v4751 = vld [vmem:[#allocation3 + $0x40] sm:$0xff]
      %v4752 = vld [vmem:[#allocation3 + $0x48] sm:$0xff]
      %v4753 = vld [vmem:[#allocation3 + $0x50] sm:$0xff]
      %v4754 = vld [vmem:[#allocation3 + $0x58] sm:$0xff]
      %v4755 = vld [vmem:[#allocation3 + $0x60] sm:$0xff]
      %v4756 = vld [vmem:[#allocation3 + $0x68] sm:$0xff]
      %v4757 = vld [vmem:[#allocation3 + $0x70] sm:$0xff]
      %v4758 = vld [vmem:[#allocation3 + $0x78] sm:$0xff]
      %v4759 = vld [vmem:[#allocation3 + $0x80] sm:$0xff]
      %v4760 = vld [vmem:[#allocation3 + $0x88] sm:$0xff]
      %v4787 = vunpack.c.l.b16 %v4717
      %v4788 = vunpack.c.h.b16 %v4717
      %v4789 = vunpack.c.l.b16 %v4718
      %v4790 = vunpack.c.l.b16 %v4719
      %v4791 = vunpack.c.h.b16 %v4719
      %v4792 = vunpack.c.l.b16 %v4720
      %v4793 = vunpack.c.l.b16 %v4721
      %v4794 = vunpack.c.h.b16 %v4721
      %v4795 = vunpack.c.l.b16 %v4722
      %v4796 = vunpack.c.l.b16 %v4723
      %v4797 = vunpack.c.h.b16 %v4723
      %v4798 = vunpack.c.l.b16 %v4724
      %v4799 = vunpack.c.l.b16 %v4725
      %v4800 = vunpack.c.h.b16 %v4725
      %v4801 = vunpack.c.l.b16 %v4726
      %v4802 = vunpack.c.l.b16 %v4727
      %v4803 = vunpack.c.h.b16 %v4727
      %v4804 = vunpack.c.l.b16 %v4728
      %v4805 = vunpack.c.l.b16 %v4729
      %v4806 = vunpack.c.h.b16 %v4729
      %v4807 = vunpack.c.l.b16 %v4730
      %v4808 = vunpack.c.l.b16 %v4731
      %v4809 = vunpack.c.h.b16 %v4731
      %v4810 = vunpack.c.l.b16 %v4732
      %v4811 = vunpack.c.l.b16 %v4733
      %v4812 = vunpack.c.h.b16 %v4733
      %v4813 = vunpack.c.l.b16 %v4734
      %v4814 = vunpack.c.l.b16 %v4735
      %v4815 = vunpack.c.h.b16 %v4735
      %v4816 = vunpack.c.l.b16 %v4736
      %v4817 = vunpack.c.l.b16 %v4737
      %v4818 = vunpack.c.h.b16 %v4737
      %v4819 = vunpack.c.l.b16 %v4738
      %v4820 = vunpack.c.l.b16 %v4739
      %v4821 = vunpack.c.h.b16 %v4739
      %v4822 = vunpack.c.l.b16 %v4740
      %v4823 = vunpack.c.l.b16 %v4741
      %v4824 = vunpack.c.h.b16 %v4741
      %v4825 = vunpack.c.l.b16 %v4742
      %v4826 = vpack.c.b16 %v4790, %v4787
      %v4827 = vpack.c.b16 %v4791, %v4788
      %v4828 = vpack.c.b16 %v4792, %v4789
      %v4829 = vpack.c.b16 %v4796, %v4793
      %v4830 = vpack.c.b16 %v4797, %v4794
      %v4831 = vpack.c.b16 %v4798, %v4795
      %v4832 = vpack.c.b16 %v4802, %v4799
      %v4833 = vpack.c.b16 %v4803, %v4800
      %v4834 = vpack.c.b16 %v4804, %v4801
      %v4835 = vpack.c.b16 %v4808, %v4805
      %v4836 = vpack.c.b16 %v4809, %v4806
      %v4837 = vpack.c.b16 %v4810, %v4807
      %v4838 = vpack.c.b16 %v4814, %v4811
      %v4839 = vpack.c.b16 %v4815, %v4812
      %v4840 = vpack.c.b16 %v4816, %v4813
      %v4841 = vpack.c.b16 %v4820, %v4817
      %v4842 = vpack.c.b16 %v4821, %v4818
      %v4843 = vpack.c.b16 %v4822, %v4819
      %v4844 = vpack.c.b16 %v4823, %v4823
      %v4845 = vpack.c.b16 %v4824, %v4824
      %v4846 = vpack.c.b16 %v4825, %v4825
      %vm4861 = vcmask 261120
      %v4863 = vsel %vm4861, %v4828, 0
      %v4866 = vsel %vm4861, %v4831, 0
      %v4869 = vsel %vm4861, %v4834, 0
      %v4872 = vsel %vm4861, %v4837, 0
      %v4875 = vsel %vm4861, %v4840, 0
      %v4878 = vsel %vm4861, %v4843, 0
      %v4881 = vsel %vm4861, %v4846, 0
      %4883 = vmatprep.subr.bf16.mxu0 0
      %4884 = vmatpush1.bf16.msra.mxu0 %v4743
      %4885 = vmatprep.subr.bf16.mxu0 0
      %4886 = vmatpush1.bf16.msra.mxu0 %v4744
      %4887 = vmatprep.subr.bf16.mxu0 0
      %4888 = vmatpush1.bf16.msra.mxu0 %v4745
      %4889 = vmatprep.subr.bf16.mxu0 0
      %4890 = vmatpush1.bf16.msra.mxu0 %v4746
      %4891 = vmatprep.subr.bf16.mxu0 0
      %4892 = vmatpush1.bf16.msra.mxu0 %v4747
      %4893 = vmatprep.subr.bf16.mxu0 0
      %4894 = vmatpush1.bf16.msra.mxu0 %v4748
      %4895 = vmatprep.subr.bf16.mxu0 0
      %4896 = vmatpush1.bf16.msra.mxu0 %v4749
      %4897 = vmatprep.subr.bf16.mxu0 0
      %4898 = vmatpush1.bf16.msra.mxu0 %v4750
      %4899 = vmatprep.subr.bf16.mxu0 0
      %4900 = vmatpush1.bf16.msra.mxu0 %v4751
      %4901 = vmatprep.subr.bf16.mxu0 0
      %4902 = vmatpush1.bf16.msra.mxu0 %v4752
      %4903 = vmatprep.subr.bf16.mxu0 0
      %4904 = vmatpush1.bf16.msra.mxu0 %v4753
      %4905 = vmatprep.subr.bf16.mxu0 0
      %4906 = vmatpush1.bf16.msra.mxu0 %v4754
      %4907 = vmatprep.subr.bf16.mxu0 0
      %4908 = vmatpush1.bf16.msra.mxu0 %v4755
      %4909 = vmatprep.subr.bf16.mxu0 0
      %4910 = vmatpush1.bf16.msra.mxu0 %v4756
      %4911 = vmatprep.subr.bf16.mxu0 0
      %4912 = vmatpush1.bf16.msra.mxu0 %v4757
      %4913 = vmatprep.subr.bf16.mxu0 0
      %4914 = vmatpush1.bf16.msra.mxu0 %v4758
      %4915 = vmatprep.mubr.bf16.mxu0 %v4827
      %4916 = vmatmul.mubr.bf16.gmra.mrb[0].mxu0 %v4826
      %v4917 = vpop.f32.mrb[0].mxu0
      %v4918 = vadd.f32 0.0, %v4917
      %v4919 = vpop.f32.mrb[0].mxu0
      %v4920 = vpop.f32.mrb[0].mxu0
      %v4921 = vadd.f32 0.0, %v4920
      %v4922 = vpop.f32.mrb[0].mxu0
      %4923 = vmatprep.mubr.bf16.mxu0 %v4830
      %4924 = vmatmul.mubr.bf16.gmra.mrb[0].mxu0 %v4829
      %v4925 = vpop.f32.mrb[0].mxu0
      %v4926 = vadd.f32 0.0, %v4925
      %v4927 = vpop.f32.mrb[0].mxu0
      %v4928 = vpop.f32.mrb[0].mxu0
      %v4929 = vadd.f32 0.0, %v4928
      %v4930 = vpop.f32.mrb[0].mxu0
      %4931 = vmatprep.mubr.bf16.mxu0 %v4833
      %4932 = vmatmul.mubr.bf16.gmra.mrb[0].mxu0 %v4832
      %v4933 = vpop.f32.mrb[0].mxu0
      %v4934 = vadd.f32 0.0, %v4933
      %v4935 = vpop.f32.mrb[0].mxu0
      %v4936 = vpop.f32.mrb[0].mxu0
      %v4937 = vadd.f32 0.0, %v4936
      %v4938 = vpop.f32.mrb[0].mxu0
      %4939 = vmatprep.mubr.bf16.mxu0 %v4836
      %4940 = vmatmul.mubr.bf16.gmra.mrb[0].mxu0 %v4835
      %v4941 = vpop.f32.mrb[0].mxu0
      %v4942 = vadd.f32 0.0, %v4941
      %v4943 = vpop.f32.mrb[0].mxu0
      %v4944 = vpop.f32.mrb[0].mxu0
      %v4945 = vadd.f32 0.0, %v4944
      %v4946 = vpop.f32.mrb[0].mxu0
      %4947 = vmatprep.mubr.bf16.mxu0 %v4839
      %4948 = vmatmul.mubr.bf16.gmra.mrb[0].mxu0 %v4838
      %v4949 = vpop.f32.mrb[0].mxu0
      %v4950 = vadd.f32 0.0, %v4949
      %v4951 = vpop.f32.mrb[0].mxu0
      %v4952 = vpop.f32.mrb[0].mxu0
      %v4953 = vadd.f32 0.0, %v4952
      %v4954 = vpop.f32.mrb[0].mxu0
      %4955 = vmatprep.mubr.bf16.mxu0 %v4842
      %4956 = vmatmul.mubr.bf16.gmra.mrb[0].mxu0 %v4841
      %v4957 = vpop.f32.mrb[0].mxu0
      %v4958 = vadd.f32 0.0, %v4957
      %v4959 = vpop.f32.mrb[0].mxu0
      %v4960 = vpop.f32.mrb[0].mxu0
      %v4961 = vadd.f32 0.0, %v4960
      %v4962 = vpop.f32.mrb[0].mxu0
      %4963 = vmatprep.mubr.bf16.mxu0 %v4845
      %4964 = vmatmul.mubr.bf16.gmra.mrb[0].mxu0 %v4844
      %v4965 = vpop.f32.mrb[0].mxu0
      %v4966 = vadd.f32 0.0, %v4965
      %v4967 = vpop.f32.mrb[0].mxu0
      %v4968 = vpop.f32.mrb[0].mxu0
      %v4969 = vpop.f32.mrb[0].mxu0
      %4970 = vdwg.mxu0
      %4971 = vmatprep.subr.bf16.mxu0 0
      %4972 = vmatpush1.bf16.msra.mxu0 %v4759
      %4973 = vmatprep.subr.bf16.mxu0 0
      %4974 = vmatpush1.bf16.msra.mxu0 %v4760
      %4975 = vmatprep.subr.bf16.mxu0 0
      %4976 = vmatpush1.bf16.msra.mxu0 0
      %4977 = vmatprep.subr.bf16.mxu0 0
      %4978 = vmatpush1.bf16.msra.mxu0 0
      %4979 = vmatprep.subr.bf16.mxu0 0
      %4980 = vmatpush1.bf16.msra.mxu0 0
      %4981 = vmatprep.subr.bf16.mxu0 0
      %4982 = vmatpush1.bf16.msra.mxu0 0
      %4983 = vmatprep.subr.bf16.mxu0 0
      %4984 = vmatpush1.bf16.msra.mxu0 0
      %4985 = vmatprep.subr.bf16.mxu0 0
      %4986 = vmatpush1.bf16.msra.mxu0 0
      %4987 = vmatprep.subr.bf16.mxu0 0
      %4988 = vmatpush1.bf16.msra.mxu0 0
      %4989 = vmatprep.subr.bf16.mxu0 0
      %4990 = vmatpush1.bf16.msra.mxu0 0
      %4991 = vmatprep.subr.bf16.mxu0 0
      %4992 = vmatpush1.bf16.msra.mxu0 0
      %4993 = vmatprep.subr.bf16.mxu0 0
      %4994 = vmatpush1.bf16.msra.mxu0 0
      %4995 = vmatprep.subr.bf16.mxu0 0
      %4996 = vmatpush1.bf16.msra.mxu0 0
      %4997 = vmatprep.subr.bf16.mxu0 0
      %4998 = vmatpush1.bf16.msra.mxu0 0
      %4999 = vmatprep.subr.bf16.mxu0 0
      %5000 = vmatpush1.bf16.msra.mxu0 0
      %5001 = vmatprep.subr.bf16.mxu0 0
      %5002 = vmatpush1.bf16.msra.mxu0 0
      %5003 = vmatprep.mubr.bf16.mxu0 0
      %5004 = vmatmul.mubr.bf16.gmra.mrb[0].mxu0 %v4863
      %v5005 = vpop.f32.mrb[0].mxu0
      %v5006 = vadd.f32 %v4918, %v5005
      %v5007 = vpop.f32.mrb[0].mxu0
      %v5008 = vpop.f32.mrb[0].mxu0
      %v5009 = vadd.f32 %v4921, %v5008
      %v5010 = vpop.f32.mrb[0].mxu0
      %5011 = vmatprep.mubr.bf16.mxu0 0
      %5012 = vmatmul.mubr.bf16.gmra.mrb[0].mxu0 %v4866
      %v5013 = vpop.f32.mrb[0].mxu0
      %v5014 = vadd.f32 %v4926, %v5013
      %v5015 = vpop.f32.mrb[0].mxu0
      %v5016 = vpop.f32.mrb[0].mxu0
      %v5017 = vadd.f32 %v4929, %v5016
      %v5018 = vpop.f32.mrb[0].mxu0
      %5019 = vmatprep.mubr.bf16.mxu0 0
      %5020 = vmatmul.mubr.bf16.gmra.mrb[0].mxu0 %v4869
      %v5021 = vpop.f32.mrb[0].mxu0
      %v5022 = vadd.f32 %v4934, %v5021
      %v5023 = vpop.f32.mrb[0].mxu0
      %v5024 = vpop.f32.mrb[0].mxu0
      %v5025 = vadd.f32 %v4937, %v5024
      %v5026 = vpop.f32.mrb[0].mxu0
      %5027 = vmatprep.mubr.bf16.mxu0 0
      %5028 = vmatmul.mubr.bf16.gmra.mrb[0].mxu0 %v4872
      %v5029 = vpop.f32.mrb[0].mxu0
      %v5030 = vadd.f32 %v4942, %v5029
      %v5031 = vpop.f32.mrb[0].mxu0
      %v5032 = vpop.f32.mrb[0].mxu0
      %v5033 = vadd.f32 %v4945, %v5032
      %v5034 = vpop.f32.mrb[0].mxu0
      %5035 = vmatprep.mubr.bf16.mxu0 0
      %5036 = vmatmul.mubr.bf16.gmra.mrb[0].mxu0 %v4875
      %v5037 = vpop.f32.mrb[0].mxu0
      %v5038 = vadd.f32 %v4950, %v5037
      %v5039 = vpop.f32.mrb[0].mxu0
      %v5040 = vpop.f32.mrb[0].mxu0
      %v5041 = vadd.f32 %v4953, %v5040
      %v5042 = vpop.f32.mrb[0].mxu0
      %5043 = vmatprep.mubr.bf16.mxu0 0
      %5044 = vmatmul.mubr.bf16.gmra.mrb[0].mxu0 %v4878
      %v5045 = vpop.f32.mrb[0].mxu0
      %v5046 = vadd.f32 %v4958, %v5045
      %v5047 = vpop.f32.mrb[0].mxu0
      %v5048 = vpop.f32.mrb[0].mxu0
      %v5049 = vadd.f32 %v4961, %v5048
      %v5050 = vpop.f32.mrb[0].mxu0
      %5051 = vmatprep.mubr.bf16.mxu0 0
      %5052 = vmatmul.mubr.bf16.gmra.mrb[0].mxu0 %v4881
      %v5053 = vpop.f32.mrb[0].mxu0
      %v5054 = vadd.f32 %v4966, %v5053
      %v5055 = vpop.f32.mrb[0].mxu0
      %v5056 = vpop.f32.mrb[0].mxu0
      %v5057 = vpop.f32.mrb[0].mxu0
      %5058 = vdwg.mxu0
      %5059 = vst [vmem:[#allocation4] sm:$0xff] %v5006
      %5060 = vst [vmem:[#allocation4 + $0x8] sm:$0xff] %v5009
      %5061 = vst [vmem:[#allocation4 + $0x10] sm:$0xff] %v5014
      %5062 = vst [vmem:[#allocation4 + $0x18] sm:$0xff] %v5017
      %5063 = vst [vmem:[#allocation4 + $0x20] sm:$0xff] %v5022
      %5064 = vst [vmem:[#allocation4 + $0x28] sm:$0xff] %v5025
      %5065 = vst [vmem:[#allocation4 + $0x30] sm:$0xff] %v5030
      %5066 = vst [vmem:[#allocation4 + $0x38] sm:$0xff] %v5033
      %5067 = vst [vmem:[#allocation4 + $0x40] sm:$0xff] %v5038
      %5068 = vst [vmem:[#allocation4 + $0x48] sm:$0xff] %v5041
      %5069 = vst [vmem:[#allocation4 + $0x50] sm:$0xff] %v5046
      %5070 = vst [vmem:[#allocation4 + $0x58] sm:$0xff] %v5049
      %5071 = vst [vmem:[#allocation4 + $0x60] sm:$0xff] %v5054
      %v5072 = vld [vmem:[#allocation4] sm:$0xff]
      %v5073 = vld [vmem:[#allocation4 + $0x8] sm:$0xff]
      %v5074 = vld [vmem:[#allocation4 + $0x10] sm:$0xff]
      %v5075 = vld [vmem:[#allocation4 + $0x18] sm:$0xff]
      %v5076 = vld [vmem:[#allocation4 + $0x20] sm:$0xff]
      %v5077 = vld [vmem:[#allocation4 + $0x28] sm:$0xff]
      %v5078 = vld [vmem:[#allocation4 + $0x30] sm:$0xff]
      %v5079 = vld [vmem:[#allocation4 + $0x38] sm:$0xff]
      %v5080 = vld [vmem:[#allocation4 + $0x40] sm:$0xff]
      %v5081 = vld [vmem:[#allocation4 + $0x48] sm:$0xff]
      %v5082 = vpack.c.bf16 %v5073, %v5072
      %v5083 = vpack.c.bf16 %v5075, %v5074
      %v5084 = vpack.c.bf16 %v5077, %v5076
      %v5085 = vpack.c.bf16 %v5079, %v5078
      %v5086 = vpack.c.bf16 %v5081, %v5080
      %v5087 = vld [vmem:[%s4] sm:$0xf]
      %v5088 = vld [vmem:[%s4 + $0x4] sm:$0xf]
      %v5089 = vld [vmem:[#allocation4 + $0x1] sm:$0xff]
      %v5090 = vld [vmem:[#allocation4 + $0x9] sm:$0xff]
      %v5091 = vld [vmem:[#allocation4 + $0x11] sm:$0xff]
      %v5092 = vld [vmem:[#allocation4 + $0x19] sm:$0xff]
      %v5093 = vld [vmem:[#allocation4 + $0x21] sm:$0xff]
      %v5094 = vld [vmem:[#allocation4 + $0x29] sm:$0xff]
      %v5095 = vld [vmem:[#allocation4 + $0x31] sm:$0xff]
      %v5096 = vld [vmem:[#allocation4 + $0x39] sm:$0xff]
      %v5097 = vld [vmem:[#allocation4 + $0x41] sm:$0xff]
      %v5098 = vld [vmem:[#allocation4 + $0x49] sm:$0xff]
      %v5099 = vpack.c.bf16 %v5090, %v5089
      %v5100 = vpack.c.bf16 %v5092, %v5091
      %v5101 = vpack.c.bf16 %v5094, %v5093
      %v5102 = vpack.c.bf16 %v5096, %v5095
      %v5103 = vpack.c.bf16 %v5098, %v5097
      %s5104 = scalar_lea.vmem %s4, 8
      %v5105 = vld [vmem:[%s5104] sm:$0xf]
      %v5106 = vld [vmem:[%s5104 + $0x4] sm:$0xf]
      %v5109 = vunpack.c.l.b16 %v5105
      %v5110 = vunpack.c.l.b16 %v5106
      %v5111 = vpack.c.b16 %v5110, %v5109
      %v5114 = vsel %vm1068, %v5099, 0
      %v5117 = vsel %vm1068, %v5100, 0
      %v5120 = vsel %vm1068, %v5101, 0
      %v5123 = vsel %vm1068, %v5102, 0
      %v5126 = vsel %vm1068, %v5103, 0
      %5128 = vmatprep.subr.bf16.mxu0 0
      %5129 = vmatpush1.bf16.msra.mxu0 %v5111
      %5130 = vmatprep.subr.bf16.mxu0 0
      %5131 = vmatpush1.bf16.msra.mxu0 0
      %5132 = vmatprep.subr.bf16.mxu0 0
      %5133 = vmatpush1.bf16.msra.mxu0 0
      %5134 = vmatprep.subr.bf16.mxu0 0
      %5135 = vmatpush1.bf16.msra.mxu0 0
      %5136 = vmatprep.subr.bf16.mxu0 0
      %5137 = vmatpush1.bf16.msra.mxu0 0
      %5138 = vmatprep.subr.bf16.mxu0 0
      %5139 = vmatpush1.bf16.msra.mxu0 0
      %5140 = vmatprep.subr.bf16.mxu0 0
      %5141 = vmatpush1.bf16.msra.mxu0 0
      %5142 = vmatprep.subr.bf16.mxu0 0
      %5143 = vmatpush1.bf16.msra.mxu0 0
      %5144 = vmatprep.subr.bf16.mxu0 0
      %5145 = vmatpush1.bf16.msra.mxu0 0
      %5146 = vmatprep.subr.bf16.mxu0 0
      %5147 = vmatpush1.bf16.msra.mxu0 0
      %5148 = vmatprep.subr.bf16.mxu0 0
      %5149 = vmatpush1.bf16.msra.mxu0 0
      %5150 = vmatprep.subr.bf16.mxu0 0
      %5151 = vmatpush1.bf16.msra.mxu0 0
      %5152 = vmatprep.subr.bf16.mxu0 0
      %5153 = vmatpush1.bf16.msra.mxu0 0
      %5154 = vmatprep.subr.bf16.mxu0 0
      %5155 = vmatpush1.bf16.msra.mxu0 0
      %5156 = vmatprep.subr.bf16.mxu0 0
      %5157 = vmatpush1.bf16.msra.mxu0 0
      %5158 = vmatprep.subr.bf16.mxu0 0
      %5159 = vmatpush1.bf16.msra.mxu0 0
      %5160 = vmatprep.mubr.bf16.mxu0 0
      %5161 = vmatmul.mubr.bf16.gmra.mrb[0].mxu0 %v5114
      %v5162 = vpop.f32.mrb[0].mxu0
      %v5163 = vadd.f32 0.0, %v5162
      %v5164 = vpop.f32.mrb[0].mxu0
      %v5165 = vpop.f32.mrb[0].mxu0
      %v5166 = vadd.f32 0.0, %v5165
      %v5167 = vpop.f32.mrb[0].mxu0
      %5168 = vmatprep.mubr.bf16.mxu0 0
      %5169 = vmatmul.mubr.bf16.gmra.mrb[0].mxu0 %v5117
      %v5170 = vpop.f32.mrb[0].mxu0
      %v5171 = vadd.f32 0.0, %v5170
      %v5172 = vpop.f32.mrb[0].mxu0
      %v5173 = vpop.f32.mrb[0].mxu0
      %v5174 = vadd.f32 0.0, %v5173
      %v5175 = vpop.f32.mrb[0].mxu0
      %5176 = vmatprep.mubr.bf16.mxu0 0
      %5177 = vmatmul.mubr.bf16.gmra.mrb[0].mxu0 %v5120
      %v5178 = vpop.f32.mrb[0].mxu0
      %v5179 = vadd.f32 0.0, %v5178
      %v5180 = vpop.f32.mrb[0].mxu0
      %v5181 = vpop.f32.mrb[0].mxu0
      %v5182 = vadd.f32 0.0, %v5181
      %v5183 = vpop.f32.mrb[0].mxu0
      %5184 = vmatprep.mubr.bf16.mxu0 0
      %5185 = vmatmul.mubr.bf16.gmra.mrb[0].mxu0 %v5123
      %v5186 = vpop.f32.mrb[0].mxu0
      %v5187 = vadd.f32 0.0, %v5186
      %v5188 = vpop.f32.mrb[0].mxu0
      %v5189 = vpop.f32.mrb[0].mxu0
      %v5190 = vadd.f32 0.0, %v5189
      %v5191 = vpop.f32.mrb[0].mxu0
      %5192 = vmatprep.mubr.bf16.mxu0 0
      %5193 = vmatmul.mubr.bf16.gmra.mrb[0].mxu0 %v5126
      %v5194 = vpop.f32.mrb[0].mxu0
      %v5195 = vadd.f32 0.0, %v5194
      %v5196 = vpop.f32.mrb[0].mxu0
      %v5197 = vpop.f32.mrb[0].mxu0
      %v5198 = vadd.f32 0.0, %v5197
      %v5199 = vpop.f32.mrb[0].mxu0
      %5200 = vdwg.mxu0
      %v5203 = vunpack.c.l.b16 %v5087
      %v5204 = vunpack.c.l.b16 %v5088
      %v5205 = vpack.c.b16 %v5204, %v5203
      %v5208 = vsel %vm1068, %v5082, 0
      %v5211 = vsel %vm1068, %v5083, 0
      %v5214 = vsel %vm1068, %v5084, 0
      %v5217 = vsel %vm1068, %v5085, 0
      %v5220 = vsel %vm1068, %v5086, 0
      %5222 = vmatprep.subr.bf16.mxu0 0
      %5223 = vmatpush1.bf16.msra.mxu0 %v5205
      %5224 = vmatprep.subr.bf16.mxu0 0
      %5225 = vmatpush1.bf16.msra.mxu0 0
      %5226 = vmatprep.subr.bf16.mxu0 0
      %5227 = vmatpush1.bf16.msra.mxu0 0
      %5228 = vmatprep.subr.bf16.mxu0 0
      %5229 = vmatpush1.bf16.msra.mxu0 0
      %5230 = vmatprep.subr.bf16.mxu0 0
      %5231 = vmatpush1.bf16.msra.mxu0 0
      %5232 = vmatprep.subr.bf16.mxu0 0
      %5233 = vmatpush1.bf16.msra.mxu0 0
      %5234 = vmatprep.subr.bf16.mxu0 0
      %5235 = vmatpush1.bf16.msra.mxu0 0
      %5236 = vmatprep.subr.bf16.mxu0 0
      %5237 = vmatpush1.bf16.msra.mxu0 0
      %5238 = vmatprep.subr.bf16.mxu0 0
      %5239 = vmatpush1.bf16.msra.mxu0 0
      %5240 = vmatprep.subr.bf16.mxu0 0
      %5241 = vmatpush1.bf16.msra.mxu0 0
      %5242 = vmatprep.subr.bf16.mxu0 0
      %5243 = vmatpush1.bf16.msra.mxu0 0
      %5244 = vmatprep.subr.bf16.mxu0 0
      %5245 = vmatpush1.bf16.msra.mxu0 0
      %5246 = vmatprep.subr.bf16.mxu0 0
      %5247 = vmatpush1.bf16.msra.mxu0 0
      %5248 = vmatprep.subr.bf16.mxu0 0
      %5249 = vmatpush1.bf16.msra.mxu0 0
      %5250 = vmatprep.subr.bf16.mxu0 0
      %5251 = vmatpush1.bf16.msra.mxu0 0
      %5252 = vmatprep.subr.bf16.mxu0 0
      %5253 = vmatpush1.bf16.msra.mxu0 0
      %5254 = vmatprep.mubr.bf16.mxu0 0
      %5255 = vmatmul.mubr.bf16.gmra.mrb[0].mxu0 %v5208
      %v5256 = vpop.f32.mrb[0].mxu0
      %v5257 = vadd.f32 %v5163, %v5256
      %v5258 = vpop.f32.mrb[0].mxu0
      %v5259 = vpop.f32.mrb[0].mxu0
      %v5260 = vadd.f32 %v5166, %v5259
      %v5261 = vpop.f32.mrb[0].mxu0
      %5262 = vmatprep.mubr.bf16.mxu0 0
      %5263 = vmatmul.mubr.bf16.gmra.mrb[0].mxu0 %v5211
      %v5264 = vpop.f32.mrb[0].mxu0
      %v5265 = vadd.f32 %v5171, %v5264
      %v5266 = vpop.f32.mrb[0].mxu0
      %v5267 = vpop.f32.mrb[0].mxu0
      %v5268 = vadd.f32 %v5174, %v5267
      %v5269 = vpop.f32.mrb[0].mxu0
      %5270 = vmatprep.mubr.bf16.mxu0 0
      %5271 = vmatmul.mubr.bf16.gmra.mrb[0].mxu0 %v5214
      %v5272 = vpop.f32.mrb[0].mxu0
      %v5273 = vadd.f32 %v5179, %v5272
      %v5274 = vpop.f32.mrb[0].mxu0
      %v5275 = vpop.f32.mrb[0].mxu0
      %v5276 = vadd.f32 %v5182, %v5275
      %v5277 = vpop.f32.mrb[0].mxu0
      %5278 = vmatprep.mubr.bf16.mxu0 0
      %5279 = vmatmul.mubr.bf16.gmra.mrb[0].mxu0 %v5217
      %v5280 = vpop.f32.mrb[0].mxu0
      %v5281 = vadd.f32 %v5187, %v5280
      %v5282 = vpop.f32.mrb[0].mxu0
      %v5283 = vpop.f32.mrb[0].mxu0
      %v5284 = vadd.f32 %v5190, %v5283
      %v5285 = vpop.f32.mrb[0].mxu0
      %5286 = vmatprep.mubr.bf16.mxu0 0
      %5287 = vmatmul.mubr.bf16.gmra.mrb[0].mxu0 %v5220
      %v5288 = vpop.f32.mrb[0].mxu0
      %v5289 = vadd.f32 %v5195, %v5288
      %v5290 = vpop.f32.mrb[0].mxu0
      %v5291 = vpop.f32.mrb[0].mxu0
      %v5292 = vadd.f32 %v5198, %v5291
      %v5293 = vpop.f32.mrb[0].mxu0
      %5294 = vdwg.mxu0
      %v5295 = vld [vmem:[#allocation4 + $0x2] sm:$0xff]
      %v5296 = vld [vmem:[#allocation4 + $0xa] sm:$0xff]
      %v5297 = vld [vmem:[#allocation4 + $0x12] sm:$0xff]
      %v5298 = vld [vmem:[#allocation4 + $0x1a] sm:$0xff]
      %v5299 = vld [vmem:[#allocation4 + $0x22] sm:$0xff]
      %v5300 = vld [vmem:[#allocation4 + $0x2a] sm:$0xff]
      %v5301 = vld [vmem:[#allocation4 + $0x32] sm:$0xff]
      %v5302 = vld [vmem:[#allocation4 + $0x3a] sm:$0xff]
      %v5303 = vld [vmem:[#allocation4 + $0x42] sm:$0xff]
      %v5304 = vld [vmem:[#allocation4 + $0x4a] sm:$0xff]
      %v5305 = vpack.c.bf16 %v5296, %v5295
      %v5306 = vpack.c.bf16 %v5298, %v5297
      %v5307 = vpack.c.bf16 %v5300, %v5299
      %v5308 = vpack.c.bf16 %v5302, %v5301
      %v5309 = vpack.c.bf16 %v5304, %v5303
      %s5310 = scalar_lea.vmem %s4, 16
      %v5311 = vld [vmem:[%s5310] sm:$0xf]
      %v5312 = vld [vmem:[%s5310 + $0x4] sm:$0xf]
      %v5315 = vunpack.c.l.b16 %v5311
      %v5316 = vunpack.c.l.b16 %v5312
      %v5317 = vpack.c.b16 %v5316, %v5315
      %v5320 = vsel %vm1068, %v5305, 0
      %v5323 = vsel %vm1068, %v5306, 0
      %v5326 = vsel %vm1068, %v5307, 0
      %v5329 = vsel %vm1068, %v5308, 0
      %v5332 = vsel %vm1068, %v5309, 0
      %5334 = vmatprep.subr.bf16.mxu0 0
      %5335 = vmatpush1.bf16.msra.mxu0 %v5317
      %5336 = vmatprep.subr.bf16.mxu0 0
      %5337 = vmatpush1.bf16.msra.mxu0 0
      %5338 = vmatprep.subr.bf16.mxu0 0
      %5339 = vmatpush1.bf16.msra.mxu0 0
      %5340 = vmatprep.subr.bf16.mxu0 0
      %5341 = vmatpush1.bf16.msra.mxu0 0
      %5342 = vmatprep.subr.bf16.mxu0 0
      %5343 = vmatpush1.bf16.msra.mxu0 0
      %5344 = vmatprep.subr.bf16.mxu0 0
      %5345 = vmatpush1.bf16.msra.mxu0 0
      %5346 = vmatprep.subr.bf16.mxu0 0
      %5347 = vmatpush1.bf16.msra.mxu0 0
      %5348 = vmatprep.subr.bf16.mxu0 0
      %5349 = vmatpush1.bf16.msra.mxu0 0
      %5350 = vmatprep.subr.bf16.mxu0 0
      %5351 = vmatpush1.bf16.msra.mxu0 0
      %5352 = vmatprep.subr.bf16.mxu0 0
      %5353 = vmatpush1.bf16.msra.mxu0 0
      %5354 = vmatprep.subr.bf16.mxu0 0
      %5355 = vmatpush1.bf16.msra.mxu0 0
      %5356 = vmatprep.subr.bf16.mxu0 0
      %5357 = vmatpush1.bf16.msra.mxu0 0
      %5358 = vmatprep.subr.bf16.mxu0 0
      %5359 = vmatpush1.bf16.msra.mxu0 0
      %5360 = vmatprep.subr.bf16.mxu0 0
      %5361 = vmatpush1.bf16.msra.mxu0 0
      %5362 = vmatprep.subr.bf16.mxu0 0
      %5363 = vmatpush1.bf16.msra.mxu0 0
      %5364 = vmatprep.subr.bf16.mxu0 0
      %5365 = vmatpush1.bf16.msra.mxu0 0
      %5366 = vmatprep.mubr.bf16.mxu0 0
      %5367 = vmatmul.mubr.bf16.gmra.mrb[0].mxu0 %v5320
      %v5368 = vpop.f32.mrb[0].mxu0
      %v5369 = vadd.f32 0.0, %v5368
      %v5370 = vpop.f32.mrb[0].mxu0
      %v5371 = vpop.f32.mrb[0].mxu0
      %v5372 = vadd.f32 0.0, %v5371
      %v5373 = vpop.f32.mrb[0].mxu0
      %5374 = vmatprep.mubr.bf16.mxu0 0
      %5375 = vmatmul.mubr.bf16.gmra.mrb[0].mxu0 %v5323
      %v5376 = vpop.f32.mrb[0].mxu0
      %v5377 = vadd.f32 0.0, %v5376
      %v5378 = vpop.f32.mrb[0].mxu0
      %v5379 = vpop.f32.mrb[0].mxu0
      %v5380 = vadd.f32 0.0, %v5379
      %v5381 = vpop.f32.mrb[0].mxu0
      %5382 = vmatprep.mubr.bf16.mxu0 0
      %5383 = vmatmul.mubr.bf16.gmra.mrb[0].mxu0 %v5326
      %v5384 = vpop.f32.mrb[0].mxu0
      %v5385 = vadd.f32 0.0, %v5384
      %v5386 = vpop.f32.mrb[0].mxu0
      %v5387 = vpop.f32.mrb[0].mxu0
      %v5388 = vadd.f32 0.0, %v5387
      %v5389 = vpop.f32.mrb[0].mxu0
      %5390 = vmatprep.mubr.bf16.mxu0 0
      %5391 = vmatmul.mubr.bf16.gmra.mrb[0].mxu0 %v5329
      %v5392 = vpop.f32.mrb[0].mxu0
      %v5393 = vadd.f32 0.0, %v5392
      %v5394 = vpop.f32.mrb[0].mxu0
      %v5395 = vpop.f32.mrb[0].mxu0
      %v5396 = vadd.f32 0.0, %v5395
      %v5397 = vpop.f32.mrb[0].mxu0
      %5398 = vmatprep.mubr.bf16.mxu0 0
      %5399 = vmatmul.mubr.bf16.gmra.mrb[0].mxu0 %v5332
      %v5400 = vpop.f32.mrb[0].mxu0
      %v5401 = vadd.f32 0.0, %v5400
      %v5402 = vpop.f32.mrb[0].mxu0
      %v5403 = vpop.f32.mrb[0].mxu0
      %v5404 = vadd.f32 0.0, %v5403
      %v5405 = vpop.f32.mrb[0].mxu0
      %5406 = vdwg.mxu0
      %v5407 = vadd.f32 %v5257, %v5369
      %v5408 = vadd.f32 %v5260, %v5372
      %v5409 = vadd.f32 %v5265, %v5377
      %v5410 = vadd.f32 %v5268, %v5380
      %v5411 = vadd.f32 %v5273, %v5385
      %v5412 = vadd.f32 %v5276, %v5388
      %v5413 = vadd.f32 %v5281, %v5393
      %v5414 = vadd.f32 %v5284, %v5396
      %v5415 = vadd.f32 %v5289, %v5401
      %v5416 = vadd.f32 %v5292, %v5404
      %v5417 = vld [vmem:[#allocation4 + $0xa] sm:$0xff]
      %v5418 = vld [vmem:[#allocation4 + $0x12] sm:$0xff]
      %v5419 = vld [vmem:[#allocation4 + $0x1a] sm:$0xff]
      %v5420 = vld [vmem:[#allocation4 + $0x22] sm:$0xff]
      %v5421 = vld [vmem:[#allocation4 + $0x2a] sm:$0xff]
      %v5422 = vld [vmem:[#allocation4 + $0x32] sm:$0xff]
      %v5423 = vld [vmem:[#allocation4 + $0x3a] sm:$0xff]
      %v5424 = vld [vmem:[#allocation4 + $0x42] sm:$0xff]
      %v5425 = vld [vmem:[#allocation4 + $0x4a] sm:$0xff]
      %v5426 = vld [vmem:[#allocation4 + $0x52] sm:$0xff]
      %v5427 = vpack.c.bf16 %v5418, %v5417
      %v5428 = vpack.c.bf16 %v5420, %v5419
      %v5429 = vpack.c.bf16 %v5422, %v5421
      %v5430 = vpack.c.bf16 %v5424, %v5423
      %v5431 = vpack.c.bf16 %v5426, %v5425
      %s5432 = scalar_lea.vmem %s4, 24
      %v5433 = vld [vmem:[%s5432] sm:$0xf]
      %v5434 = vld [vmem:[%s5432 + $0x4] sm:$0xf]
      %v5437 = vunpack.c.l.b16 %v5433
      %v5438 = vunpack.c.l.b16 %v5434
      %v5439 = vpack.c.b16 %v5438, %v5437
      %v5442 = vsel %vm1068, %v5427, 0
      %v5445 = vsel %vm1068, %v5428, 0
      %v5448 = vsel %vm1068, %v5429, 0
      %v5451 = vsel %vm1068, %v5430, 0
      %v5454 = vsel %vm1068, %v5431, 0
      %5456 = vmatprep.subr.bf16.mxu0 0
      %5457 = vmatpush1.bf16.msra.mxu0 %v5439
      %5458 = vmatprep.subr.bf16.mxu0 0
      %5459 = vmatpush1.bf16.msra.mxu0 0
      %5460 = vmatprep.subr.bf16.mxu0 0
      %5461 = vmatpush1.bf16.msra.mxu0 0
      %5462 = vmatprep.subr.bf16.mxu0 0
      %5463 = vmatpush1.bf16.msra.mxu0 0
      %5464 = vmatprep.subr.bf16.mxu0 0
      %5465 = vmatpush1.bf16.msra.mxu0 0
      %5466 = vmatprep.subr.bf16.mxu0 0
      %5467 = vmatpush1.bf16.msra.mxu0 0
      %5468 = vmatprep.subr.bf16.mxu0 0
      %5469 = vmatpush1.bf16.msra.mxu0 0
      %5470 = vmatprep.subr.bf16.mxu0 0
      %5471 = vmatpush1.bf16.msra.mxu0 0
      %5472 = vmatprep.subr.bf16.mxu0 0
      %5473 = vmatpush1.bf16.msra.mxu0 0
      %5474 = vmatprep.subr.bf16.mxu0 0
      %5475 = vmatpush1.bf16.msra.mxu0 0
      %5476 = vmatprep.subr.bf16.mxu0 0
      %5477 = vmatpush1.bf16.msra.mxu0 0
      %5478 = vmatprep.subr.bf16.mxu0 0
      %5479 = vmatpush1.bf16.msra.mxu0 0
      %5480 = vmatprep.subr.bf16.mxu0 0
      %5481 = vmatpush1.bf16.msra.mxu0 0
      %5482 = vmatprep.subr.bf16.mxu0 0
      %5483 = vmatpush1.bf16.msra.mxu0 0
      %5484 = vmatprep.subr.bf16.mxu0 0
      %5485 = vmatpush1.bf16.msra.mxu0 0
      %5486 = vmatprep.subr.bf16.mxu0 0
      %5487 = vmatpush1.bf16.msra.mxu0 0
      %5488 = vmatprep.mubr.bf16.mxu0 0
      %5489 = vmatmul.mubr.bf16.gmra.mrb[0].mxu0 %v5442
      %v5490 = vpop.f32.mrb[0].mxu0
      %v5491 = vadd.f32 0.0, %v5490
      %v5492 = vpop.f32.mrb[0].mxu0
      %v5493 = vpop.f32.mrb[0].mxu0
      %v5494 = vadd.f32 0.0, %v5493
      %v5495 = vpop.f32.mrb[0].mxu0
      %5496 = vmatprep.mubr.bf16.mxu0 0
      %5497 = vmatmul.mubr.bf16.gmra.mrb[0].mxu0 %v5445
      %v5498 = vpop.f32.mrb[0].mxu0
      %v5499 = vadd.f32 0.0, %v5498
      %v5500 = vpop.f32.mrb[0].mxu0
      %v5501 = vpop.f32.mrb[0].mxu0
      %v5502 = vadd.f32 0.0, %v5501
      %v5503 = vpop.f32.mrb[0].mxu0
      %5504 = vmatprep.mubr.bf16.mxu0 0
      %5505 = vmatmul.mubr.bf16.gmra.mrb[0].mxu0 %v5448
      %v5506 = vpop.f32.mrb[0].mxu0
      %v5507 = vadd.f32 0.0, %v5506
      %v5508 = vpop.f32.mrb[0].mxu0
      %v5509 = vpop.f32.mrb[0].mxu0
      %v5510 = vadd.f32 0.0, %v5509
      %v5511 = vpop.f32.mrb[0].mxu0
      %5512 = vmatprep.mubr.bf16.mxu0 0
      %5513 = vmatmul.mubr.bf16.gmra.mrb[0].mxu0 %v5451
      %v5514 = vpop.f32.mrb[0].mxu0
      %v5515 = vadd.f32 0.0, %v5514
      %v5516 = vpop.f32.mrb[0].mxu0
      %v5517 = vpop.f32.mrb[0].mxu0
      %v5518 = vadd.f32 0.0, %v5517
      %v5519 = vpop.f32.mrb[0].mxu0
      %5520 = vmatprep.mubr.bf16.mxu0 0
      %5521 = vmatmul.mubr.bf16.gmra.mrb[0].mxu0 %v5454
      %v5522 = vpop.f32.mrb[0].mxu0
      %v5523 = vadd.f32 0.0, %v5522
      %v5524 = vpop.f32.mrb[0].mxu0
      %v5525 = vpop.f32.mrb[0].mxu0
      %v5526 = vadd.f32 0.0, %v5525
      %v5527 = vpop.f32.mrb[0].mxu0
      %5528 = vdwg.mxu0
      %v5529 = vadd.f32 %v5407, %v5491
      %v5530 = vadd.f32 %v5408, %v5494
      %v5531 = vadd.f32 %v5409, %v5499
      %v5532 = vadd.f32 %v5410, %v5502
      %v5533 = vadd.f32 %v5411, %v5507
      %v5534 = vadd.f32 %v5412, %v5510
      %v5535 = vadd.f32 %v5413, %v5515
      %v5536 = vadd.f32 %v5414, %v5518
      %v5537 = vadd.f32 %v5415, %v5523
      %v5538 = vadd.f32 %v5416, %v5526
      %v5539 = vld [vmem:[#allocation4 + $0xb] sm:$0xff]
      %v5540 = vld [vmem:[#allocation4 + $0x13] sm:$0xff]
      %v5541 = vld [vmem:[#allocation4 + $0x1b] sm:$0xff]
      %v5542 = vld [vmem:[#allocation4 + $0x23] sm:$0xff]
      %v5543 = vld [vmem:[#allocation4 + $0x2b] sm:$0xff]
      %v5544 = vld [vmem:[#allocation4 + $0x33] sm:$0xff]
      %v5545 = vld [vmem:[#allocation4 + $0x3b] sm:$0xff]
      %v5546 = vld [vmem:[#allocation4 + $0x43] sm:$0xff]
      %v5547 = vld [vmem:[#allocation4 + $0x4b] sm:$0xff]
      %v5548 = vld [vmem:[#allocation4 + $0x53] sm:$0xff]
      %v5549 = vpack.c.bf16 %v5540, %v5539
      %v5550 = vpack.c.bf16 %v5542, %v5541
      %v5551 = vpack.c.bf16 %v5544, %v5543
      %v5552 = vpack.c.bf16 %v5546, %v5545
      %v5553 = vpack.c.bf16 %v5548, %v5547
      %s5554 = scalar_lea.vmem %s4, 32
      %v5555 = vld [vmem:[%s5554] sm:$0xf]
      %v5556 = vld [vmem:[%s5554 + $0x4] sm:$0xf]
      %v5559 = vunpack.c.l.b16 %v5555
      %v5560 = vunpack.c.l.b16 %v5556
      %v5561 = vpack.c.b16 %v5560, %v5559
      %v5564 = vsel %vm1068, %v5549, 0
      %v5567 = vsel %vm1068, %v5550, 0
      %v5570 = vsel %vm1068, %v5551, 0
      %v5573 = vsel %vm1068, %v5552, 0
      %v5576 = vsel %vm1068, %v5553, 0
      %5578 = vmatprep.subr.bf16.mxu0 0
      %5579 = vmatpush1.bf16.msra.mxu0 %v5561
      %5580 = vmatprep.subr.bf16.mxu0 0
      %5581 = vmatpush1.bf16.msra.mxu0 0
      %5582 = vmatprep.subr.bf16.mxu0 0
      %5583 = vmatpush1.bf16.msra.mxu0 0
      %5584 = vmatprep.subr.bf16.mxu0 0
      %5585 = vmatpush1.bf16.msra.mxu0 0
      %5586 = vmatprep.subr.bf16.mxu0 0
      %5587 = vmatpush1.bf16.msra.mxu0 0
      %5588 = vmatprep.subr.bf16.mxu0 0
      %5589 = vmatpush1.bf16.msra.mxu0 0
      %5590 = vmatprep.subr.bf16.mxu0 0
      %5591 = vmatpush1.bf16.msra.mxu0 0
      %5592 = vmatprep.subr.bf16.mxu0 0
      %5593 = vmatpush1.bf16.msra.mxu0 0
      %5594 = vmatprep.subr.bf16.mxu0 0
      %5595 = vmatpush1.bf16.msra.mxu0 0
      %5596 = vmatprep.subr.bf16.mxu0 0
      %5597 = vmatpush1.bf16.msra.mxu0 0
      %5598 = vmatprep.subr.bf16.mxu0 0
      %5599 = vmatpush1.bf16.msra.mxu0 0
      %5600 = vmatprep.subr.bf16.mxu0 0
      %5601 = vmatpush1.bf16.msra.mxu0 0
      %5602 = vmatprep.subr.bf16.mxu0 0
      %5603 = vmatpush1.bf16.msra.mxu0 0
      %5604 = vmatprep.subr.bf16.mxu0 0
      %5605 = vmatpush1.bf16.msra.mxu0 0
      %5606 = vmatprep.subr.bf16.mxu0 0
      %5607 = vmatpush1.bf16.msra.mxu0 0
      %5608 = vmatprep.subr.bf16.mxu0 0
      %5609 = vmatpush1.bf16.msra.mxu0 0
      %5610 = vmatprep.mubr.bf16.mxu0 0
      %5611 = vmatmul.mubr.bf16.gmra.mrb[0].mxu0 %v5564
      %v5612 = vpop.f32.mrb[0].mxu0
      %v5613 = vadd.f32 0.0, %v5612
      %v5614 = vpop.f32.mrb[0].mxu0
      %v5615 = vpop.f32.mrb[0].mxu0
      %v5616 = vadd.f32 0.0, %v5615
      %v5617 = vpop.f32.mrb[0].mxu0
      %5618 = vmatprep.mubr.bf16.mxu0 0
      %5619 = vmatmul.mubr.bf16.gmra.mrb[0].mxu0 %v5567
      %v5620 = vpop.f32.mrb[0].mxu0
      %v5621 = vadd.f32 0.0, %v5620
      %v5622 = vpop.f32.mrb[0].mxu0
      %v5623 = vpop.f32.mrb[0].mxu0
      %v5624 = vadd.f32 0.0, %v5623
      %v5625 = vpop.f32.mrb[0].mxu0
      %5626 = vmatprep.mubr.bf16.mxu0 0
      %5627 = vmatmul.mubr.bf16.gmra.mrb[0].mxu0 %v5570
      %v5628 = vpop.f32.mrb[0].mxu0
      %v5629 = vadd.f32 0.0, %v5628
      %v5630 = vpop.f32.mrb[0].mxu0
      %v5631 = vpop.f32.mrb[0].mxu0
      %v5632 = vadd.f32 0.0, %v5631
      %v5633 = vpop.f32.mrb[0].mxu0
      %5634 = vmatprep.mubr.bf16.mxu0 0
      %5635 = vmatmul.mubr.bf16.gmra.mrb[0].mxu0 %v5573
      %v5636 = vpop.f32.mrb[0].mxu0
      %v5637 = vadd.f32 0.0, %v5636
      %v5638 = vpop.f32.mrb[0].mxu0
      %v5639 = vpop.f32.mrb[0].mxu0
      %v5640 = vadd.f32 0.0, %v5639
      %v5641 = vpop.f32.mrb[0].mxu0
      %5642 = vmatprep.mubr.bf16.mxu0 0
      %5643 = vmatmul.mubr.bf16.gmra.mrb[0].mxu0 %v5576
      %v5644 = vpop.f32.mrb[0].mxu0
      %v5645 = vadd.f32 0.0, %v5644
      %v5646 = vpop.f32.mrb[0].mxu0
      %v5647 = vpop.f32.mrb[0].mxu0
      %v5648 = vadd.f32 0.0, %v5647
      %v5649 = vpop.f32.mrb[0].mxu0
      %5650 = vdwg.mxu0
      %v5651 = vadd.f32 %v5529, %v5613
      %v5652 = vadd.f32 %v5530, %v5616
      %v5653 = vadd.f32 %v5531, %v5621
      %v5654 = vadd.f32 %v5532, %v5624
      %v5655 = vadd.f32 %v5533, %v5629
      %v5656 = vadd.f32 %v5534, %v5632
      %v5657 = vadd.f32 %v5535, %v5637
      %v5658 = vadd.f32 %v5536, %v5640
      %v5659 = vadd.f32 %v5537, %v5645
      %v5660 = vadd.f32 %v5538, %v5648
      %v5661 = vld [vmem:[#allocation4 + $0xc] sm:$0xff]
      %v5662 = vld [vmem:[#allocation4 + $0x14] sm:$0xff]
      %v5663 = vld [vmem:[#allocation4 + $0x1c] sm:$0xff]
      %v5664 = vld [vmem:[#allocation4 + $0x24] sm:$0xff]
      %v5665 = vld [vmem:[#allocation4 + $0x2c] sm:$0xff]
      %v5666 = vld [vmem:[#allocation4 + $0x34] sm:$0xff]
      %v5667 = vld [vmem:[#allocation4 + $0x3c] sm:$0xff]
      %v5668 = vld [vmem:[#allocation4 + $0x44] sm:$0xff]
      %v5669 = vld [vmem:[#allocation4 + $0x4c] sm:$0xff]
      %v5670 = vld [vmem:[#allocation4 + $0x54] sm:$0xff]
      %v5671 = vpack.c.bf16 %v5662, %v5661
      %v5672 = vpack.c.bf16 %v5664, %v5663
      %v5673 = vpack.c.bf16 %v5666, %v5665
      %v5674 = vpack.c.bf16 %v5668, %v5667
      %v5675 = vpack.c.bf16 %v5670, %v5669
      %s5676 = scalar_lea.vmem %s4, 40
      %v5677 = vld [vmem:[%s5676] sm:$0xf]
      %v5678 = vld [vmem:[%s5676 + $0x4] sm:$0xf]
      %v5681 = vunpack.c.l.b16 %v5677
      %v5682 = vunpack.c.l.b16 %v5678
      %v5683 = vpack.c.b16 %v5682, %v5681
      %v5686 = vsel %vm1068, %v5671, 0
      %v5689 = vsel %vm1068, %v5672, 0
      %v5692 = vsel %vm1068, %v5673, 0
      %v5695 = vsel %vm1068, %v5674, 0
      %v5698 = vsel %vm1068, %v5675, 0
      %5700 = vmatprep.subr.bf16.mxu0 0
      %5701 = vmatpush1.bf16.msra.mxu0 %v5683
      %5702 = vmatprep.subr.bf16.mxu0 0
      %5703 = vmatpush1.bf16.msra.mxu0 0
      %5704 = vmatprep.subr.bf16.mxu0 0
      %5705 = vmatpush1.bf16.msra.mxu0 0
      %5706 = vmatprep.subr.bf16.mxu0 0
      %5707 = vmatpush1.bf16.msra.mxu0 0
      %5708 = vmatprep.subr.bf16.mxu0 0
      %5709 = vmatpush1.bf16.msra.mxu0 0
      %5710 = vmatprep.subr.bf16.mxu0 0
      %5711 = vmatpush1.bf16.msra.mxu0 0
      %5712 = vmatprep.subr.bf16.mxu0 0
      %5713 = vmatpush1.bf16.msra.mxu0 0
      %5714 = vmatprep.subr.bf16.mxu0 0
      %5715 = vmatpush1.bf16.msra.mxu0 0
      %5716 = vmatprep.subr.bf16.mxu0 0
      %5717 = vmatpush1.bf16.msra.mxu0 0
      %5718 = vmatprep.subr.bf16.mxu0 0
      %5719 = vmatpush1.bf16.msra.mxu0 0
      %5720 = vmatprep.subr.bf16.mxu0 0
      %5721 = vmatpush1.bf16.msra.mxu0 0
      %5722 = vmatprep.subr.bf16.mxu0 0
      %5723 = vmatpush1.bf16.msra.mxu0 0
      %5724 = vmatprep.subr.bf16.mxu0 0
      %5725 = vmatpush1.bf16.msra.mxu0 0
      %5726 = vmatprep.subr.bf16.mxu0 0
      %5727 = vmatpush1.bf16.msra.mxu0 0
      %5728 = vmatprep.subr.bf16.mxu0 0
      %5729 = vmatpush1.bf16.msra.mxu0 0
      %5730 = vmatprep.subr.bf16.mxu0 0
      %5731 = vmatpush1.bf16.msra.mxu0 0
      %5732 = vmatprep.mubr.bf16.mxu0 0
      %5733 = vmatmul.mubr.bf16.gmra.mrb[0].mxu0 %v5686
      %v5734 = vpop.f32.mrb[0].mxu0
      %v5735 = vadd.f32 0.0, %v5734
      %v5736 = vpop.f32.mrb[0].mxu0
      %v5737 = vpop.f32.mrb[0].mxu0
      %v5738 = vadd.f32 0.0, %v5737
      %v5739 = vpop.f32.mrb[0].mxu0
      %5740 = vmatprep.mubr.bf16.mxu0 0
      %5741 = vmatmul.mubr.bf16.gmra.mrb[0].mxu0 %v5689
      %v5742 = vpop.f32.mrb[0].mxu0
      %v5743 = vadd.f32 0.0, %v5742
      %v5744 = vpop.f32.mrb[0].mxu0
      %v5745 = vpop.f32.mrb[0].mxu0
      %v5746 = vadd.f32 0.0, %v5745
      %v5747 = vpop.f32.mrb[0].mxu0
      %5748 = vmatprep.mubr.bf16.mxu0 0
      %5749 = vmatmul.mubr.bf16.gmra.mrb[0].mxu0 %v5692
      %v5750 = vpop.f32.mrb[0].mxu0
      %v5751 = vadd.f32 0.0, %v5750
      %v5752 = vpop.f32.mrb[0].mxu0
      %v5753 = vpop.f32.mrb[0].mxu0
      %v5754 = vadd.f32 0.0, %v5753
      %v5755 = vpop.f32.mrb[0].mxu0
      %5756 = vmatprep.mubr.bf16.mxu0 0
      %5757 = vmatmul.mubr.bf16.gmra.mrb[0].mxu0 %v5695
      %v5758 = vpop.f32.mrb[0].mxu0
      %v5759 = vadd.f32 0.0, %v5758
      %v5760 = vpop.f32.mrb[0].mxu0
      %v5761 = vpop.f32.mrb[0].mxu0
      %v5762 = vadd.f32 0.0, %v5761
      %v5763 = vpop.f32.mrb[0].mxu0
      %5764 = vmatprep.mubr.bf16.mxu0 0
      %5765 = vmatmul.mubr.bf16.gmra.mrb[0].mxu0 %v5698
      %v5766 = vpop.f32.mrb[0].mxu0
      %v5767 = vadd.f32 0.0, %v5766
      %v5768 = vpop.f32.mrb[0].mxu0
      %v5769 = vpop.f32.mrb[0].mxu0
      %v5770 = vadd.f32 0.0, %v5769
      %v5771 = vpop.f32.mrb[0].mxu0
      %5772 = vdwg.mxu0
      %v5773 = vadd.f32 %v5651, %v5735
      %v5774 = vadd.f32 %v5652, %v5738
      %v5775 = vadd.f32 %v5653, %v5743
      %v5776 = vadd.f32 %v5654, %v5746
      %v5777 = vadd.f32 %v5655, %v5751
      %v5778 = vadd.f32 %v5656, %v5754
      %v5779 = vadd.f32 %v5657, %v5759
      %v5780 = vadd.f32 %v5658, %v5762
      %v5781 = vadd.f32 %v5659, %v5767
      %v5782 = vadd.f32 %v5660, %v5770
      %v5783 = vld [vmem:[#allocation4 + $0x14] sm:$0xff]
      %v5784 = vld [vmem:[#allocation4 + $0x1c] sm:$0xff]
      %v5785 = vld [vmem:[#allocation4 + $0x24] sm:$0xff]
      %v5786 = vld [vmem:[#allocation4 + $0x2c] sm:$0xff]
      %v5787 = vld [vmem:[#allocation4 + $0x34] sm:$0xff]
      %v5788 = vld [vmem:[#allocation4 + $0x3c] sm:$0xff]
      %v5789 = vld [vmem:[#allocation4 + $0x44] sm:$0xff]
      %v5790 = vld [vmem:[#allocation4 + $0x4c] sm:$0xff]
      %v5791 = vld [vmem:[#allocation4 + $0x54] sm:$0xff]
      %v5792 = vld [vmem:[#allocation4 + $0x5c] sm:$0xff]
      %v5793 = vpack.c.bf16 %v5784, %v5783
      %v5794 = vpack.c.bf16 %v5786, %v5785
      %v5795 = vpack.c.bf16 %v5788, %v5787
      %v5796 = vpack.c.bf16 %v5790, %v5789
      %v5797 = vpack.c.bf16 %v5792, %v5791
      %s5798 = scalar_lea.vmem %s4, 48
      %v5799 = vld [vmem:[%s5798] sm:$0xf]
      %v5800 = vld [vmem:[%s5798 + $0x4] sm:$0xf]
      %v5803 = vunpack.c.l.b16 %v5799
      %v5804 = vunpack.c.l.b16 %v5800
      %v5805 = vpack.c.b16 %v5804, %v5803
      %v5808 = vsel %vm1068, %v5793, 0
      %v5811 = vsel %vm1068, %v5794, 0
      %v5814 = vsel %vm1068, %v5795, 0
      %v5817 = vsel %vm1068, %v5796, 0
      %v5820 = vsel %vm1068, %v5797, 0
      %5822 = vmatprep.subr.bf16.mxu0 0
      %5823 = vmatpush1.bf16.msra.mxu0 %v5805
      %5824 = vmatprep.subr.bf16.mxu0 0
      %5825 = vmatpush1.bf16.msra.mxu0 0
      %5826 = vmatprep.subr.bf16.mxu0 0
      %5827 = vmatpush1.bf16.msra.mxu0 0
      %5828 = vmatprep.subr.bf16.mxu0 0
      %5829 = vmatpush1.bf16.msra.mxu0 0
      %5830 = vmatprep.subr.bf16.mxu0 0
      %5831 = vmatpush1.bf16.msra.mxu0 0
      %5832 = vmatprep.subr.bf16.mxu0 0
      %5833 = vmatpush1.bf16.msra.mxu0 0
      %5834 = vmatprep.subr.bf16.mxu0 0
      %5835 = vmatpush1.bf16.msra.mxu0 0
      %5836 = vmatprep.subr.bf16.mxu0 0
      %5837 = vmatpush1.bf16.msra.mxu0 0
      %5838 = vmatprep.subr.bf16.mxu0 0
      %5839 = vmatpush1.bf16.msra.mxu0 0
      %5840 = vmatprep.subr.bf16.mxu0 0
      %5841 = vmatpush1.bf16.msra.mxu0 0
      %5842 = vmatprep.subr.bf16.mxu0 0
      %5843 = vmatpush1.bf16.msra.mxu0 0
      %5844 = vmatprep.subr.bf16.mxu0 0
      %5845 = vmatpush1.bf16.msra.mxu0 0
      %5846 = vmatprep.subr.bf16.mxu0 0
      %5847 = vmatpush1.bf16.msra.mxu0 0
      %5848 = vmatprep.subr.bf16.mxu0 0
      %5849 = vmatpush1.bf16.msra.mxu0 0
      %5850 = vmatprep.subr.bf16.mxu0 0
      %5851 = vmatpush1.bf16.msra.mxu0 0
      %5852 = vmatprep.subr.bf16.mxu0 0
      %5853 = vmatpush1.bf16.msra.mxu0 0
      %5854 = vmatprep.mubr.bf16.mxu0 0
      %5855 = vmatmul.mubr.bf16.gmra.mrb[0].mxu0 %v5808
      %v5856 = vpop.f32.mrb[0].mxu0
      %v5857 = vadd.f32 0.0, %v5856
      %v5858 = vpop.f32.mrb[0].mxu0
      %v5859 = vpop.f32.mrb[0].mxu0
      %v5860 = vadd.f32 0.0, %v5859
      %v5861 = vpop.f32.mrb[0].mxu0
      %5862 = vmatprep.mubr.bf16.mxu0 0
      %5863 = vmatmul.mubr.bf16.gmra.mrb[0].mxu0 %v5811
      %v5864 = vpop.f32.mrb[0].mxu0
      %v5865 = vadd.f32 0.0, %v5864
      %v5866 = vpop.f32.mrb[0].mxu0
      %v5867 = vpop.f32.mrb[0].mxu0
      %v5868 = vadd.f32 0.0, %v5867
      %v5869 = vpop.f32.mrb[0].mxu0
      %5870 = vmatprep.mubr.bf16.mxu0 0
      %5871 = vmatmul.mubr.bf16.gmra.mrb[0].mxu0 %v5814
      %v5872 = vpop.f32.mrb[0].mxu0
      %v5873 = vadd.f32 0.0, %v5872
      %v5874 = vpop.f32.mrb[0].mxu0
      %v5875 = vpop.f32.mrb[0].mxu0
      %v5876 = vadd.f32 0.0, %v5875
      %v5877 = vpop.f32.mrb[0].mxu0
      %5878 = vmatprep.mubr.bf16.mxu0 0
      %5879 = vmatmul.mubr.bf16.gmra.mrb[0].mxu0 %v5817
      %v5880 = vpop.f32.mrb[0].mxu0
      %v5881 = vadd.f32 0.0, %v5880
      %v5882 = vpop.f32.mrb[0].mxu0
      %v5883 = vpop.f32.mrb[0].mxu0
      %v5884 = vadd.f32 0.0, %v5883
      %v5885 = vpop.f32.mrb[0].mxu0
      %5886 = vmatprep.mubr.bf16.mxu0 0
      %5887 = vmatmul.mubr.bf16.gmra.mrb[0].mxu0 %v5820
      %v5888 = vpop.f32.mrb[0].mxu0
      %v5889 = vadd.f32 0.0, %v5888
      %v5890 = vpop.f32.mrb[0].mxu0
      %v5891 = vpop.f32.mrb[0].mxu0
      %v5892 = vadd.f32 0.0, %v5891
      %v5893 = vpop.f32.mrb[0].mxu0
      %5894 = vdwg.mxu0
      %v5895 = vadd.f32 %v5773, %v5857
      %v5896 = vadd.f32 %v5774, %v5860
      %v5897 = vadd.f32 %v5775, %v5865
      %v5898 = vadd.f32 %v5776, %v5868
      %v5899 = vadd.f32 %v5777, %v5873
      %v5900 = vadd.f32 %v5778, %v5876
      %v5901 = vadd.f32 %v5779, %v5881
      %v5902 = vadd.f32 %v5780, %v5884
      %v5903 = vadd.f32 %v5781, %v5889
      %v5904 = vadd.f32 %v5782, %v5892
      %v5905 = vld [vmem:[#allocation4 + $0x15] sm:$0xff]
      %v5906 = vld [vmem:[#allocation4 + $0x1d] sm:$0xff]
      %v5907 = vld [vmem:[#allocation4 + $0x25] sm:$0xff]
      %v5908 = vld [vmem:[#allocation4 + $0x2d] sm:$0xff]
      %v5909 = vld [vmem:[#allocation4 + $0x35] sm:$0xff]
      %v5910 = vld [vmem:[#allocation4 + $0x3d] sm:$0xff]
      %v5911 = vld [vmem:[#allocation4 + $0x45] sm:$0xff]
      %v5912 = vld [vmem:[#allocation4 + $0x4d] sm:$0xff]
      %v5913 = vld [vmem:[#allocation4 + $0x55] sm:$0xff]
      %v5914 = vld [vmem:[#allocation4 + $0x5d] sm:$0xff]
      %v5915 = vpack.c.bf16 %v5906, %v5905
      %v5916 = vpack.c.bf16 %v5908, %v5907
      %v5917 = vpack.c.bf16 %v5910, %v5909
      %v5918 = vpack.c.bf16 %v5912, %v5911
      %v5919 = vpack.c.bf16 %v5914, %v5913
      %s5920 = scalar_lea.vmem %s4, 56
      %v5921 = vld [vmem:[%s5920] sm:$0xf]
      %v5922 = vld [vmem:[%s5920 + $0x4] sm:$0xf]
      %v5925 = vunpack.c.l.b16 %v5921
      %v5926 = vunpack.c.l.b16 %v5922
      %v5927 = vpack.c.b16 %v5926, %v5925
      %v5930 = vsel %vm1068, %v5915, 0
      %v5933 = vsel %vm1068, %v5916, 0
      %v5936 = vsel %vm1068, %v5917, 0
      %v5939 = vsel %vm1068, %v5918, 0
      %v5942 = vsel %vm1068, %v5919, 0
      %5944 = vmatprep.subr.bf16.mxu0 0
      %5945 = vmatpush1.bf16.msra.mxu0 %v5927
      %5946 = vmatprep.subr.bf16.mxu0 0
      %5947 = vmatpush1.bf16.msra.mxu0 0
      %5948 = vmatprep.subr.bf16.mxu0 0
      %5949 = vmatpush1.bf16.msra.mxu0 0
      %5950 = vmatprep.subr.bf16.mxu0 0
      %5951 = vmatpush1.bf16.msra.mxu0 0
      %5952 = vmatprep.subr.bf16.mxu0 0
      %5953 = vmatpush1.bf16.msra.mxu0 0
      %5954 = vmatprep.subr.bf16.mxu0 0
      %5955 = vmatpush1.bf16.msra.mxu0 0
      %5956 = vmatprep.subr.bf16.mxu0 0
      %5957 = vmatpush1.bf16.msra.mxu0 0
      %5958 = vmatprep.subr.bf16.mxu0 0
      %5959 = vmatpush1.bf16.msra.mxu0 0
      %5960 = vmatprep.subr.bf16.mxu0 0
      %5961 = vmatpush1.bf16.msra.mxu0 0
      %5962 = vmatprep.subr.bf16.mxu0 0
      %5963 = vmatpush1.bf16.msra.mxu0 0
      %5964 = vmatprep.subr.bf16.mxu0 0
      %5965 = vmatpush1.bf16.msra.mxu0 0
      %5966 = vmatprep.subr.bf16.mxu0 0
      %5967 = vmatpush1.bf16.msra.mxu0 0
      %5968 = vmatprep.subr.bf16.mxu0 0
      %5969 = vmatpush1.bf16.msra.mxu0 0
      %5970 = vmatprep.subr.bf16.mxu0 0
      %5971 = vmatpush1.bf16.msra.mxu0 0
      %5972 = vmatprep.subr.bf16.mxu0 0
      %5973 = vmatpush1.bf16.msra.mxu0 0
      %5974 = vmatprep.subr.bf16.mxu0 0
      %5975 = vmatpush1.bf16.msra.mxu0 0
      %5976 = vmatprep.mubr.bf16.mxu0 0
      %5977 = vmatmul.mubr.bf16.gmra.mrb[0].mxu0 %v5930
      %v5978 = vpop.f32.mrb[0].mxu0
      %v5979 = vadd.f32 0.0, %v5978
      %v5980 = vpop.f32.mrb[0].mxu0
      %v5981 = vpop.f32.mrb[0].mxu0
      %v5982 = vadd.f32 0.0, %v5981
      %v5983 = vpop.f32.mrb[0].mxu0
      %5984 = vmatprep.mubr.bf16.mxu0 0
      %5985 = vmatmul.mubr.bf16.gmra.mrb[0].mxu0 %v5933
      %v5986 = vpop.f32.mrb[0].mxu0
      %v5987 = vadd.f32 0.0, %v5986
      %v5988 = vpop.f32.mrb[0].mxu0
      %v5989 = vpop.f32.mrb[0].mxu0
      %v5990 = vadd.f32 0.0, %v5989
      %v5991 = vpop.f32.mrb[0].mxu0
      %5992 = vmatprep.mubr.bf16.mxu0 0
      %5993 = vmatmul.mubr.bf16.gmra.mrb[0].mxu0 %v5936
      %v5994 = vpop.f32.mrb[0].mxu0
      %v5995 = vadd.f32 0.0, %v5994
      %v5996 = vpop.f32.mrb[0].mxu0
      %v5997 = vpop.f32.mrb[0].mxu0
      %v5998 = vadd.f32 0.0, %v5997
      %v5999 = vpop.f32.mrb[0].mxu0
      %6000 = vmatprep.mubr.bf16.mxu0 0
      %6001 = vmatmul.mubr.bf16.gmra.mrb[0].mxu0 %v5939
      %v6002 = vpop.f32.mrb[0].mxu0
      %v6003 = vadd.f32 0.0, %v6002
      %v6004 = vpop.f32.mrb[0].mxu0
      %v6005 = vpop.f32.mrb[0].mxu0
      %v6006 = vadd.f32 0.0, %v6005
      %v6007 = vpop.f32.mrb[0].mxu0
      %6008 = vmatprep.mubr.bf16.mxu0 0
      %6009 = vmatmul.mubr.bf16.gmra.mrb[0].mxu0 %v5942
      %v6010 = vpop.f32.mrb[0].mxu0
      %v6011 = vadd.f32 0.0, %v6010
      %v6012 = vpop.f32.mrb[0].mxu0
      %v6013 = vpop.f32.mrb[0].mxu0
      %v6014 = vadd.f32 0.0, %v6013
      %v6015 = vpop.f32.mrb[0].mxu0
      %6016 = vdwg.mxu0
      %v6017 = vadd.f32 %v5895, %v5979
      %v6018 = vadd.f32 %v5896, %v5982
      %v6019 = vadd.f32 %v5897, %v5987
      %v6020 = vadd.f32 %v5898, %v5990
      %v6021 = vadd.f32 %v5899, %v5995
      %v6022 = vadd.f32 %v5900, %v5998
      %v6023 = vadd.f32 %v5901, %v6003
      %v6024 = vadd.f32 %v5902, %v6006
      %v6025 = vadd.f32 %v5903, %v6011
      %v6026 = vadd.f32 %v5904, %v6014
      %v6027 = vld [vmem:[#allocation4 + $0x16] sm:$0xff]
      %v6028 = vld [vmem:[#allocation4 + $0x1e] sm:$0xff]
      %v6029 = vld [vmem:[#allocation4 + $0x26] sm:$0xff]
      %v6030 = vld [vmem:[#allocation4 + $0x2e] sm:$0xff]
      %v6031 = vld [vmem:[#allocation4 + $0x36] sm:$0xff]
      %v6032 = vld [vmem:[#allocation4 + $0x3e] sm:$0xff]
      %v6033 = vld [vmem:[#allocation4 + $0x46] sm:$0xff]
      %v6034 = vld [vmem:[#allocation4 + $0x4e] sm:$0xff]
      %v6035 = vld [vmem:[#allocation4 + $0x56] sm:$0xff]
      %v6036 = vld [vmem:[#allocation4 + $0x5e] sm:$0xff]
      %v6037 = vpack.c.bf16 %v6028, %v6027
      %v6038 = vpack.c.bf16 %v6030, %v6029
      %v6039 = vpack.c.bf16 %v6032, %v6031
      %v6040 = vpack.c.bf16 %v6034, %v6033
      %v6041 = vpack.c.bf16 %v6036, %v6035
      %s6042 = scalar_lea.vmem %s4, 64
      %v6043 = vld [vmem:[%s6042] sm:$0xf]
      %v6044 = vld [vmem:[%s6042 + $0x4] sm:$0xf]
      %v6047 = vunpack.c.l.b16 %v6043
      %v6048 = vunpack.c.l.b16 %v6044
      %v6049 = vpack.c.b16 %v6048, %v6047
      %v6052 = vsel %vm1068, %v6037, 0
      %v6055 = vsel %vm1068, %v6038, 0
      %v6058 = vsel %vm1068, %v6039, 0
      %v6061 = vsel %vm1068, %v6040, 0
      %v6064 = vsel %vm1068, %v6041, 0
      %6066 = vmatprep.subr.bf16.mxu0 0
      %6067 = vmatpush1.bf16.msra.mxu0 %v6049
      %6068 = vmatprep.subr.bf16.mxu0 0
      %6069 = vmatpush1.bf16.msra.mxu0 0
      %6070 = vmatprep.subr.bf16.mxu0 0
      %6071 = vmatpush1.bf16.msra.mxu0 0
      %6072 = vmatprep.subr.bf16.mxu0 0
      %6073 = vmatpush1.bf16.msra.mxu0 0
      %6074 = vmatprep.subr.bf16.mxu0 0
      %6075 = vmatpush1.bf16.msra.mxu0 0
      %6076 = vmatprep.subr.bf16.mxu0 0
      %6077 = vmatpush1.bf16.msra.mxu0 0
      %6078 = vmatprep.subr.bf16.mxu0 0
      %6079 = vmatpush1.bf16.msra.mxu0 0
      %6080 = vmatprep.subr.bf16.mxu0 0
      %6081 = vmatpush1.bf16.msra.mxu0 0
      %6082 = vmatprep.subr.bf16.mxu0 0
      %6083 = vmatpush1.bf16.msra.mxu0 0
      %6084 = vmatprep.subr.bf16.mxu0 0
      %6085 = vmatpush1.bf16.msra.mxu0 0
      %6086 = vmatprep.subr.bf16.mxu0 0
      %6087 = vmatpush1.bf16.msra.mxu0 0
      %6088 = vmatprep.subr.bf16.mxu0 0
      %6089 = vmatpush1.bf16.msra.mxu0 0
      %6090 = vmatprep.subr.bf16.mxu0 0
      %6091 = vmatpush1.bf16.msra.mxu0 0
      %6092 = vmatprep.subr.bf16.mxu0 0
      %6093 = vmatpush1.bf16.msra.mxu0 0
      %6094 = vmatprep.subr.bf16.mxu0 0
      %6095 = vmatpush1.bf16.msra.mxu0 0
      %6096 = vmatprep.subr.bf16.mxu0 0
      %6097 = vmatpush1.bf16.msra.mxu0 0
      %6098 = vmatprep.mubr.bf16.mxu0 0
      %6099 = vmatmul.mubr.bf16.gmra.mrb[0].mxu0 %v6052
      %v6100 = vpop.f32.mrb[0].mxu0
      %v6101 = vadd.f32 0.0, %v6100
      %v6102 = vpop.f32.mrb[0].mxu0
      %v6103 = vpop.f32.mrb[0].mxu0
      %v6104 = vadd.f32 0.0, %v6103
      %v6105 = vpop.f32.mrb[0].mxu0
      %6106 = vmatprep.mubr.bf16.mxu0 0
      %6107 = vmatmul.mubr.bf16.gmra.mrb[0].mxu0 %v6055
      %v6108 = vpop.f32.mrb[0].mxu0
      %v6109 = vadd.f32 0.0, %v6108
      %v6110 = vpop.f32.mrb[0].mxu0
      %v6111 = vpop.f32.mrb[0].mxu0
      %v6112 = vadd.f32 0.0, %v6111
      %v6113 = vpop.f32.mrb[0].mxu0
      %6114 = vmatprep.mubr.bf16.mxu0 0
      %6115 = vmatmul.mubr.bf16.gmra.mrb[0].mxu0 %v6058
      %v6116 = vpop.f32.mrb[0].mxu0
      %v6117 = vadd.f32 0.0, %v6116
      %v6118 = vpop.f32.mrb[0].mxu0
      %v6119 = vpop.f32.mrb[0].mxu0
      %v6120 = vadd.f32 0.0, %v6119
      %v6121 = vpop.f32.mrb[0].mxu0
      %6122 = vmatprep.mubr.bf16.mxu0 0
      %6123 = vmatmul.mubr.bf16.gmra.mrb[0].mxu0 %v6061
      %v6124 = vpop.f32.mrb[0].mxu0
      %v6125 = vadd.f32 0.0, %v6124
      %v6126 = vpop.f32.mrb[0].mxu0
      %v6127 = vpop.f32.mrb[0].mxu0
      %v6128 = vadd.f32 0.0, %v6127
      %v6129 = vpop.f32.mrb[0].mxu0
      %6130 = vmatprep.mubr.bf16.mxu0 0
      %6131 = vmatmul.mubr.bf16.gmra.mrb[0].mxu0 %v6064
      %v6132 = vpop.f32.mrb[0].mxu0
      %v6133 = vadd.f32 0.0, %v6132
      %v6134 = vpop.f32.mrb[0].mxu0
      %v6135 = vpop.f32.mrb[0].mxu0
      %v6136 = vadd.f32 0.0, %v6135
      %v6137 = vpop.f32.mrb[0].mxu0
      %6138 = vdwg.mxu0
      %v6139 = vadd.f32 %v6017, %v6101
      %v6140 = vadd.f32 %v6018, %v6104
      %v6141 = vadd.f32 %v6019, %v6109
      %v6142 = vadd.f32 %v6020, %v6112
      %v6143 = vadd.f32 %v6021, %v6117
      %v6144 = vadd.f32 %v6022, %v6120
      %v6145 = vadd.f32 %v6023, %v6125
      %v6146 = vadd.f32 %v6024, %v6128
      %v6147 = vadd.f32 %v6025, %v6133
      %v6148 = vadd.f32 %v6026, %v6136
      %v6149 = vmax.f32 %v6139, 0.0
      %v6150 = vmax.f32 %v6140, 0.0
      %v6151 = vmax.f32 %v6141, 0.0
      %v6152 = vmax.f32 %v6142, 0.0
      %v6153 = vmax.f32 %v6143, 0.0
      %v6154 = vmax.f32 %v6144, 0.0
      %v6155 = vmax.f32 %v6145, 0.0
      %v6156 = vmax.f32 %v6146, 0.0
      %v6157 = vmax.f32 %v6147, 0.0
      %v6158 = vmax.f32 %v6148, 0.0
      %v6159 = vpack.c.bf16 %v6150, %v6149
      %v6160 = vpack.c.bf16 %v6152, %v6151
      %v6161 = vpack.c.bf16 %v6154, %v6153
      %v6162 = vpack.c.bf16 %v6156, %v6155
      %v6163 = vpack.c.bf16 %v6158, %v6157
      %v6164 = vld [vmem:[%s5] sm:$0xf]
      %v6165 = vld [vmem:[%s5 + $0x4] sm:$0xf]
      %v6168 = vunpack.c.l.b16 %v6164
      %v6169 = vunpack.c.l.b16 %v6165
      %v6170 = vpack.c.b16 %v6169, %v6168
      %vm6171 = vcmask 654336
      %v6173 = vsel %vm6171, %v6170, 0
      %6175 = vmatprep.subr.bf16.mxu0 0
      %6176 = vmatpush1.bf16.msra.mxu0 %v6159
      %6177 = vmatprep.subr.bf16.mxu0 0
      %6178 = vmatpush1.bf16.msra.mxu0 %v6160
      %6179 = vmatprep.subr.bf16.mxu0 0
      %6180 = vmatpush1.bf16.msra.mxu0 %v6161
      %6181 = vmatprep.subr.bf16.mxu0 0
      %6182 = vmatpush1.bf16.msra.mxu0 %v6162
      %6183 = vmatprep.subr.bf16.mxu0 0
      %6184 = vmatpush1.bf16.msra.mxu0 %v6163
      %6185 = vmatprep.subr.bf16.mxu0 0
      %6186 = vmatpush1.bf16.msra.mxu0 0
      %6187 = vmatprep.subr.bf16.mxu0 0
      %6188 = vmatpush1.bf16.msra.mxu0 0
      %6189 = vmatprep.subr.bf16.mxu0 0
      %6190 = vmatpush1.bf16.msra.mxu0 0
      %6191 = vmatprep.subr.bf16.mxu0 0
      %6192 = vmatpush1.bf16.msra.mxu0 0
      %6193 = vmatprep.subr.bf16.mxu0 0
      %6194 = vmatpush1.bf16.msra.mxu0 0
      %6195 = vmatprep.subr.bf16.mxu0 0
      %6196 = vmatpush1.bf16.msra.mxu0 0
      %6197 = vmatprep.subr.bf16.mxu0 0
      %6198 = vmatpush1.bf16.msra.mxu0 0
      %6199 = vmatprep.subr.bf16.mxu0 0
      %6200 = vmatpush1.bf16.msra.mxu0 0
      %6201 = vmatprep.subr.bf16.mxu0 0
      %6202 = vmatpush1.bf16.msra.mxu0 0
      %6203 = vmatprep.subr.bf16.mxu0 0
      %6204 = vmatpush1.bf16.msra.mxu0 0
      %6205 = vmatprep.subr.bf16.mxu0 0
      %6206 = vmatpush1.bf16.msra.mxu0 0
      %6207 = vmatprep.mubr.bf16.mxu0 0
      %6208 = vmatmul.mubr.bf16.gmra.mrb[0].mxu0 %v6173
      %v6209 = vpop.f32.mrb[0].mxu0
      %v6210 = vadd.f32 0.0, %v6209
      %v6211 = vpop.f32.mrb[0].mxu0
      %v6212 = vpop.f32.mrb[0].mxu0
      %v6213 = vadd.f32 0.0, %v6212
      %v6214 = vpop.f32.mrb[0].mxu0
      %6215 = vdwg.mxu0
      %v6216 = vpack.c.bf16 %v6210, %v6210
      %v6217 = vld [vmem:[%s6] sm:$0xff]
      %s6218 = scalar_lea.vmem %s6, 8
      %v6219 = vld [vmem:[%s6218] sm:$0xff]
      %v6221 = vshrl.u32 %v6216, 16
      %v6224 = vunpack.c.l.b16 %v6219
      %v6225 = vunpack.c.h.b16 %v6219
      %v6226 = vpack.c.b16 %v6224, %v6224
      %v6227 = vpack.c.b16 %v6225, %v6225
      %vm6228 = vcmask 64512
      %v6230 = vsel %vm6228, %v6221, 0
      %vm6232 = vcmask 1043456
      %v6234 = vsel %vm6232, %v6226, 0
      %v6237 = vsel %vm6232, %v6227, 0
      %6239 = vmatprep.subr.bf16.mxu0 %v6237
      %6240 = vmatpush1.bf16.msra.mxu0 %v6234
      %6241 = vmatprep.subr.bf16.mxu0 0
      %6242 = vmatpush1.bf16.msra.mxu0 0
      %6243 = vmatprep.subr.bf16.mxu0 0
      %6244 = vmatpush1.bf16.msra.mxu0 0
      %6245 = vmatprep.subr.bf16.mxu0 0
      %6246 = vmatpush1.bf16.msra.mxu0 0
      %6247 = vmatprep.subr.bf16.mxu0 0
      %6248 = vmatpush1.bf16.msra.mxu0 0
      %6249 = vmatprep.subr.bf16.mxu0 0
      %6250 = vmatpush1.bf16.msra.mxu0 0
      %6251 = vmatprep.subr.bf16.mxu0 0
      %6252 = vmatpush1.bf16.msra.mxu0 0
      %6253 = vmatprep.subr.bf16.mxu0 0
      %6254 = vmatpush1.bf16.msra.mxu0 0
      %6255 = vmatprep.subr.bf16.mxu0 0
      %6256 = vmatpush1.bf16.msra.mxu0 0
      %6257 = vmatprep.subr.bf16.mxu0 0
      %6258 = vmatpush1.bf16.msra.mxu0 0
      %6259 = vmatprep.subr.bf16.mxu0 0
      %6260 = vmatpush1.bf16.msra.mxu0 0
      %6261 = vmatprep.subr.bf16.mxu0 0
      %6262 = vmatpush1.bf16.msra.mxu0 0
      %6263 = vmatprep.subr.bf16.mxu0 0
      %6264 = vmatpush1.bf16.msra.mxu0 0
      %6265 = vmatprep.subr.bf16.mxu0 0
      %6266 = vmatpush1.bf16.msra.mxu0 0
      %6267 = vmatprep.subr.bf16.mxu0 0
      %6268 = vmatpush1.bf16.msra.mxu0 0
      %6269 = vmatprep.subr.bf16.mxu0 0
      %6270 = vmatpush1.bf16.msra.mxu0 0
      %6271 = vmatprep.mubr.bf16.mxu0 0
      %6272 = vmatmul.mubr.bf16.gmra.mrb[0].mxu0 %v6230
      %v6273 = vpop.f32.mrb[0].mxu0
      %v6274 = vadd.f32 0.0, %v6273
      %v6275 = vpop.f32.mrb[0].mxu0
      %v6276 = vadd.f32 0.0, %v6275
      %v6277 = vpop.f32.mrb[0].mxu0
      %v6278 = vpop.f32.mrb[0].mxu0
      %6279 = vdwg.mxu0
      %v6281 = vunpack.c.l.b16 %v6217
      %v6282 = vunpack.c.h.b16 %v6217
      %v6283 = vpack.c.b16 %v6281, %v6281
      %v6284 = vpack.c.b16 %v6282, %v6282
      %v6285 = vsel %vm6228, %v6216, 0
      %v6288 = vsel %vm6232, %v6283, 0
      %v6291 = vsel %vm6232, %v6284, 0
      %6293 = vmatprep.subr.bf16.mxu0 %v6291
      %6294 = vmatpush1.bf16.msra.mxu0 %v6288
      %6295 = vmatprep.subr.bf16.mxu0 0
      %6296 = vmatpush1.bf16.msra.mxu0 0
      %6297 = vmatprep.subr.bf16.mxu0 0
      %6298 = vmatpush1.bf16.msra.mxu0 0
      %6299 = vmatprep.subr.bf16.mxu0 0
      %6300 = vmatpush1.bf16.msra.mxu0 0
      %6301 = vmatprep.subr.bf16.mxu0 0
      %6302 = vmatpush1.bf16.msra.mxu0 0
      %6303 = vmatprep.subr.bf16.mxu0 0
      %6304 = vmatpush1.bf16.msra.mxu0 0
      %6305 = vmatprep.subr.bf16.mxu0 0
      %6306 = vmatpush1.bf16.msra.mxu0 0
      %6307 = vmatprep.subr.bf16.mxu0 0
      %6308 = vmatpush1.bf16.msra.mxu0 0
      %6309 = vmatprep.subr.bf16.mxu0 0
      %6310 = vmatpush1.bf16.msra.mxu0 0
      %6311 = vmatprep.subr.bf16.mxu0 0
      %6312 = vmatpush1.bf16.msra.mxu0 0
      %6313 = vmatprep.subr.bf16.mxu0 0
      %6314 = vmatpush1.bf16.msra.mxu0 0
      %6315 = vmatprep.subr.bf16.mxu0 0
      %6316 = vmatpush1.bf16.msra.mxu0 0
      %6317 = vmatprep.subr.bf16.mxu0 0
      %6318 = vmatpush1.bf16.msra.mxu0 0
      %6319 = vmatprep.subr.bf16.mxu0 0
      %6320 = vmatpush1.bf16.msra.mxu0 0
      %6321 = vmatprep.subr.bf16.mxu0 0
      %6322 = vmatpush1.bf16.msra.mxu0 0
      %6323 = vmatprep.subr.bf16.mxu0 0
      %6324 = vmatpush1.bf16.msra.mxu0 0
      %6325 = vmatprep.mubr.bf16.mxu0 0
      %6326 = vmatmul.mubr.bf16.gmra.mrb[0].mxu0 %v6285
      %v6327 = vpop.f32.mrb[0].mxu0
      %v6328 = vadd.f32 %v6274, %v6327
      %v6329 = vpop.f32.mrb[0].mxu0
      %v6330 = vadd.f32 %v6276, %v6329
      %v6331 = vpop.f32.mrb[0].mxu0
      %v6332 = vpop.f32.mrb[0].mxu0
      %6333 = vdwg.mxu0
      %s6334 = scalar_lea.vmem %s6, 16
      %v6335 = vld [vmem:[%s6334] sm:$0xff]
      %v6337 = vrot.slane %v6216, 1
      %v6339 = vunpack.c.l.b16 %v6335
      %v6340 = vunpack.c.h.b16 %v6335
      %v6341 = vpack.c.b16 %v6339, %v6339
      %v6342 = vpack.c.b16 %v6340, %v6340
      %v6344 = vsel %vm6228, %v6337, 0
      %v6347 = vsel %vm6232, %v6341, 0
      %v6350 = vsel %vm6232, %v6342, 0
      %6352 = vmatprep.subr.bf16.mxu0 %v6350
      %6353 = vmatpush1.bf16.msra.mxu0 %v6347
      %6354 = vmatprep.subr.bf16.mxu0 0
      %6355 = vmatpush1.bf16.msra.mxu0 0
      %6356 = vmatprep.subr.bf16.mxu0 0
      %6357 = vmatpush1.bf16.msra.mxu0 0
      %6358 = vmatprep.subr.bf16.mxu0 0
      %6359 = vmatpush1.bf16.msra.mxu0 0
      %6360 = vmatprep.subr.bf16.mxu0 0
      %6361 = vmatpush1.bf16.msra.mxu0 0
      %6362 = vmatprep.subr.bf16.mxu0 0
      %6363 = vmatpush1.bf16.msra.mxu0 0
      %6364 = vmatprep.subr.bf16.mxu0 0
      %6365 = vmatpush1.bf16.msra.mxu0 0
      %6366 = vmatprep.subr.bf16.mxu0 0
      %6367 = vmatpush1.bf16.msra.mxu0 0
      %6368 = vmatprep.subr.bf16.mxu0 0
      %6369 = vmatpush1.bf16.msra.mxu0 0
      %6370 = vmatprep.subr.bf16.mxu0 0
      %6371 = vmatpush1.bf16.msra.mxu0 0
      %6372 = vmatprep.subr.bf16.mxu0 0
      %6373 = vmatpush1.bf16.msra.mxu0 0
      %6374 = vmatprep.subr.bf16.mxu0 0
      %6375 = vmatpush1.bf16.msra.mxu0 0
      %6376 = vmatprep.subr.bf16.mxu0 0
      %6377 = vmatpush1.bf16.msra.mxu0 0
      %6378 = vmatprep.subr.bf16.mxu0 0
      %6379 = vmatpush1.bf16.msra.mxu0 0
      %6380 = vmatprep.subr.bf16.mxu0 0
      %6381 = vmatpush1.bf16.msra.mxu0 0
      %6382 = vmatprep.subr.bf16.mxu0 0
      %6383 = vmatpush1.bf16.msra.mxu0 0
      %6384 = vmatprep.mubr.bf16.mxu0 0
      %6385 = vmatmul.mubr.bf16.gmra.mrb[0].mxu0 %v6344
      %v6386 = vpop.f32.mrb[0].mxu0
      %v6387 = vadd.f32 0.0, %v6386
      %v6388 = vpop.f32.mrb[0].mxu0
      %v6389 = vadd.f32 0.0, %v6388
      %v6390 = vpop.f32.mrb[0].mxu0
      %v6391 = vpop.f32.mrb[0].mxu0
      %6392 = vdwg.mxu0
      %v6393 = vadd.f32 %v6328, %v6387
      %v6394 = vadd.f32 %v6330, %v6389
      %s6395 = scalar_lea.vmem %s6, 24
      %v6396 = vld [vmem:[%s6395] sm:$0xff]
      %v6397 = vrot.slane %v6221, 1
      %v6399 = vunpack.c.l.b16 %v6396
      %v6400 = vunpack.c.h.b16 %v6396
      %v6401 = vpack.c.b16 %v6399, %v6399
      %v6402 = vpack.c.b16 %v6400, %v6400
      %v6404 = vsel %vm6228, %v6397, 0
      %v6407 = vsel %vm6232, %v6401, 0
      %v6410 = vsel %vm6232, %v6402, 0
      %6412 = vmatprep.subr.bf16.mxu0 %v6410
      %6413 = vmatpush1.bf16.msra.mxu0 %v6407
      %6414 = vmatprep.subr.bf16.mxu0 0
      %6415 = vmatpush1.bf16.msra.mxu0 0
      %6416 = vmatprep.subr.bf16.mxu0 0
      %6417 = vmatpush1.bf16.msra.mxu0 0
      %6418 = vmatprep.subr.bf16.mxu0 0
      %6419 = vmatpush1.bf16.msra.mxu0 0
      %6420 = vmatprep.subr.bf16.mxu0 0
      %6421 = vmatpush1.bf16.msra.mxu0 0
      %6422 = vmatprep.subr.bf16.mxu0 0
      %6423 = vmatpush1.bf16.msra.mxu0 0
      %6424 = vmatprep.subr.bf16.mxu0 0
      %6425 = vmatpush1.bf16.msra.mxu0 0
      %6426 = vmatprep.subr.bf16.mxu0 0
      %6427 = vmatpush1.bf16.msra.mxu0 0
      %6428 = vmatprep.subr.bf16.mxu0 0
      %6429 = vmatpush1.bf16.msra.mxu0 0
      %6430 = vmatprep.subr.bf16.mxu0 0
      %6431 = vmatpush1.bf16.msra.mxu0 0
      %6432 = vmatprep.subr.bf16.mxu0 0
      %6433 = vmatpush1.bf16.msra.mxu0 0
      %6434 = vmatprep.subr.bf16.mxu0 0
      %6435 = vmatpush1.bf16.msra.mxu0 0
      %6436 = vmatprep.subr.bf16.mxu0 0
      %6437 = vmatpush1.bf16.msra.mxu0 0
      %6438 = vmatprep.subr.bf16.mxu0 0
      %6439 = vmatpush1.bf16.msra.mxu0 0
      %6440 = vmatprep.subr.bf16.mxu0 0
      %6441 = vmatpush1.bf16.msra.mxu0 0
      %6442 = vmatprep.subr.bf16.mxu0 0
      %6443 = vmatpush1.bf16.msra.mxu0 0
      %6444 = vmatprep.mubr.bf16.mxu0 0
      %6445 = vmatmul.mubr.bf16.gmra.mrb[0].mxu0 %v6404
      %v6446 = vpop.f32.mrb[0].mxu0
      %v6447 = vadd.f32 0.0, %v6446
      %v6448 = vpop.f32.mrb[0].mxu0
      %v6449 = vadd.f32 0.0, %v6448
      %v6450 = vpop.f32.mrb[0].mxu0
      %v6451 = vpop.f32.mrb[0].mxu0
      %6452 = vdwg.mxu0
      %v6453 = vadd.f32 %v6393, %v6447
      %v6454 = vadd.f32 %v6394, %v6449
      %s6455 = scalar_lea.vmem %s6, 32
      %v6456 = vld [vmem:[%s6455] sm:$0xff]
      %v6457 = vrot.slane %v6216, 2
      %v6459 = vunpack.c.l.b16 %v6456
      %v6460 = vunpack.c.h.b16 %v6456
      %v6461 = vpack.c.b16 %v6459, %v6459
      %v6462 = vpack.c.b16 %v6460, %v6460
      %v6464 = vsel %vm6228, %v6457, 0
      %v6467 = vsel %vm6232, %v6461, 0
      %v6470 = vsel %vm6232, %v6462, 0
      %6472 = vmatprep.subr.bf16.mxu0 %v6470
      %6473 = vmatpush1.bf16.msra.mxu0 %v6467
      %6474 = vmatprep.subr.bf16.mxu0 0
      %6475 = vmatpush1.bf16.msra.mxu0 0
      %6476 = vmatprep.subr.bf16.mxu0 0
      %6477 = vmatpush1.bf16.msra.mxu0 0
      %6478 = vmatprep.subr.bf16.mxu0 0
      %6479 = vmatpush1.bf16.msra.mxu0 0
      %6480 = vmatprep.subr.bf16.mxu0 0
      %6481 = vmatpush1.bf16.msra.mxu0 0
      %6482 = vmatprep.subr.bf16.mxu0 0
      %6483 = vmatpush1.bf16.msra.mxu0 0
      %6484 = vmatprep.subr.bf16.mxu0 0
      %6485 = vmatpush1.bf16.msra.mxu0 0
      %6486 = vmatprep.subr.bf16.mxu0 0
      %6487 = vmatpush1.bf16.msra.mxu0 0
      %6488 = vmatprep.subr.bf16.mxu0 0
      %6489 = vmatpush1.bf16.msra.mxu0 0
      %6490 = vmatprep.subr.bf16.mxu0 0
      %6491 = vmatpush1.bf16.msra.mxu0 0
      %6492 = vmatprep.subr.bf16.mxu0 0
      %6493 = vmatpush1.bf16.msra.mxu0 0
      %6494 = vmatprep.subr.bf16.mxu0 0
      %6495 = vmatpush1.bf16.msra.mxu0 0
      %6496 = vmatprep.subr.bf16.mxu0 0
      %6497 = vmatpush1.bf16.msra.mxu0 0
      %6498 = vmatprep.subr.bf16.mxu0 0
      %6499 = vmatpush1.bf16.msra.mxu0 0
      %6500 = vmatprep.subr.bf16.mxu0 0
      %6501 = vmatpush1.bf16.msra.mxu0 0
      %6502 = vmatprep.subr.bf16.mxu0 0
      %6503 = vmatpush1.bf16.msra.mxu0 0
      %6504 = vmatprep.mubr.bf16.mxu0 0
      %6505 = vmatmul.mubr.bf16.gmra.mrb[0].mxu0 %v6464
      %v6506 = vpop.f32.mrb[0].mxu0
      %v6507 = vadd.f32 0.0, %v6506
      %v6508 = vpop.f32.mrb[0].mxu0
      %v6509 = vadd.f32 0.0, %v6508
      %v6510 = vpop.f32.mrb[0].mxu0
      %v6511 = vpop.f32.mrb[0].mxu0
      %6512 = vdwg.mxu0
      %v6513 = vadd.f32 %v6453, %v6507
      %v6514 = vadd.f32 %v6454, %v6509
      %s6515 = scalar_lea.vmem %s6, 40
      %v6516 = vld [vmem:[%s6515] sm:$0xff]
      %v6517 = vrot.slane %v6221, 2
      %v6519 = vunpack.c.l.b16 %v6516
      %v6520 = vunpack.c.h.b16 %v6516
      %v6521 = vpack.c.b16 %v6519, %v6519
      %v6522 = vpack.c.b16 %v6520, %v6520
      %v6524 = vsel %vm6228, %v6517, 0
      %v6527 = vsel %vm6232, %v6521, 0
      %v6530 = vsel %vm6232, %v6522, 0
      %6532 = vmatprep.subr.bf16.mxu0 %v6530
      %6533 = vmatpush1.bf16.msra.mxu0 %v6527
      %6534 = vmatprep.subr.bf16.mxu0 0
      %6535 = vmatpush1.bf16.msra.mxu0 0
      %6536 = vmatprep.subr.bf16.mxu0 0
      %6537 = vmatpush1.bf16.msra.mxu0 0
      %6538 = vmatprep.subr.bf16.mxu0 0
      %6539 = vmatpush1.bf16.msra.mxu0 0
      %6540 = vmatprep.subr.bf16.mxu0 0
      %6541 = vmatpush1.bf16.msra.mxu0 0
      %6542 = vmatprep.subr.bf16.mxu0 0
      %6543 = vmatpush1.bf16.msra.mxu0 0
      %6544 = vmatprep.subr.bf16.mxu0 0
      %6545 = vmatpush1.bf16.msra.mxu0 0
      %6546 = vmatprep.subr.bf16.mxu0 0
      %6547 = vmatpush1.bf16.msra.mxu0 0
      %6548 = vmatprep.subr.bf16.mxu0 0
      %6549 = vmatpush1.bf16.msra.mxu0 0
      %6550 = vmatprep.subr.bf16.mxu0 0
      %6551 = vmatpush1.bf16.msra.mxu0 0
      %6552 = vmatprep.subr.bf16.mxu0 0
      %6553 = vmatpush1.bf16.msra.mxu0 0
      %6554 = vmatprep.subr.bf16.mxu0 0
      %6555 = vmatpush1.bf16.msra.mxu0 0
      %6556 = vmatprep.subr.bf16.mxu0 0
      %6557 = vmatpush1.bf16.msra.mxu0 0
      %6558 = vmatprep.subr.bf16.mxu0 0
      %6559 = vmatpush1.bf16.msra.mxu0 0
      %6560 = vmatprep.subr.bf16.mxu0 0
      %6561 = vmatpush1.bf16.msra.mxu0 0
      %6562 = vmatprep.subr.bf16.mxu0 0
      %6563 = vmatpush1.bf16.msra.mxu0 0
      %6564 = vmatprep.mubr.bf16.mxu0 0
      %6565 = vmatmul.mubr.bf16.gmra.mrb[0].mxu0 %v6524
      %v6566 = vpop.f32.mrb[0].mxu0
      %v6567 = vadd.f32 0.0, %v6566
      %v6568 = vpop.f32.mrb[0].mxu0
      %v6569 = vadd.f32 0.0, %v6568
      %v6570 = vpop.f32.mrb[0].mxu0
      %v6571 = vpop.f32.mrb[0].mxu0
      %6572 = vdwg.mxu0
      %v6573 = vadd.f32 %v6513, %v6567
      %v6574 = vadd.f32 %v6514, %v6569
      %s6575 = scalar_lea.vmem %s6, 48
      %v6576 = vld [vmem:[%s6575] sm:$0xff]
      %v6577 = vrot.slane %v6216, 3
      %v6579 = vunpack.c.l.b16 %v6576
      %v6580 = vunpack.c.h.b16 %v6576
      %v6581 = vpack.c.b16 %v6579, %v6579
      %v6582 = vpack.c.b16 %v6580, %v6580
      %v6584 = vsel %vm6228, %v6577, 0
      %v6587 = vsel %vm6232, %v6581, 0
      %v6590 = vsel %vm6232, %v6582, 0
      %6592 = vmatprep.subr.bf16.mxu0 %v6590
      %6593 = vmatpush1.bf16.msra.mxu0 %v6587
      %6594 = vmatprep.subr.bf16.mxu0 0
      %6595 = vmatpush1.bf16.msra.mxu0 0
      %6596 = vmatprep.subr.bf16.mxu0 0
      %6597 = vmatpush1.bf16.msra.mxu0 0
      %6598 = vmatprep.subr.bf16.mxu0 0
      %6599 = vmatpush1.bf16.msra.mxu0 0
      %6600 = vmatprep.subr.bf16.mxu0 0
      %6601 = vmatpush1.bf16.msra.mxu0 0
      %6602 = vmatprep.subr.bf16.mxu0 0
      %6603 = vmatpush1.bf16.msra.mxu0 0
      %6604 = vmatprep.subr.bf16.mxu0 0
      %6605 = vmatpush1.bf16.msra.mxu0 0
      %6606 = vmatprep.subr.bf16.mxu0 0
      %6607 = vmatpush1.bf16.msra.mxu0 0
      %6608 = vmatprep.subr.bf16.mxu0 0
      %6609 = vmatpush1.bf16.msra.mxu0 0
      %6610 = vmatprep.subr.bf16.mxu0 0
      %6611 = vmatpush1.bf16.msra.mxu0 0
      %6612 = vmatprep.subr.bf16.mxu0 0
      %6613 = vmatpush1.bf16.msra.mxu0 0
      %6614 = vmatprep.subr.bf16.mxu0 0
      %6615 = vmatpush1.bf16.msra.mxu0 0
      %6616 = vmatprep.subr.bf16.mxu0 0
      %6617 = vmatpush1.bf16.msra.mxu0 0
      %6618 = vmatprep.subr.bf16.mxu0 0
      %6619 = vmatpush1.bf16.msra.mxu0 0
      %6620 = vmatprep.subr.bf16.mxu0 0
      %6621 = vmatpush1.bf16.msra.mxu0 0
      %6622 = vmatprep.subr.bf16.mxu0 0
      %6623 = vmatpush1.bf16.msra.mxu0 0
      %6624 = vmatprep.mubr.bf16.mxu0 0
      %6625 = vmatmul.mubr.bf16.gmra.mrb[0].mxu0 %v6584
      %v6626 = vpop.f32.mrb[0].mxu0
      %v6627 = vadd.f32 0.0, %v6626
      %v6628 = vpop.f32.mrb[0].mxu0
      %v6629 = vadd.f32 0.0, %v6628
      %v6630 = vpop.f32.mrb[0].mxu0
      %v6631 = vpop.f32.mrb[0].mxu0
      %6632 = vdwg.mxu0
      %v6633 = vadd.f32 %v6573, %v6627
      %v6634 = vadd.f32 %v6574, %v6629
      %s6635 = scalar_lea.vmem %s6, 56
      %v6636 = vld [vmem:[%s6635] sm:$0xff]
      %v6637 = vrot.slane %v6221, 3
      %v6639 = vunpack.c.l.b16 %v6636
      %v6640 = vunpack.c.h.b16 %v6636
      %v6641 = vpack.c.b16 %v6639, %v6639
      %v6642 = vpack.c.b16 %v6640, %v6640
      %v6644 = vsel %vm6228, %v6637, 0
      %v6647 = vsel %vm6232, %v6641, 0
      %v6650 = vsel %vm6232, %v6642, 0
      %6652 = vmatprep.subr.bf16.mxu0 %v6650
      %6653 = vmatpush1.bf16.msra.mxu0 %v6647
      %6654 = vmatprep.subr.bf16.mxu0 0
      %6655 = vmatpush1.bf16.msra.mxu0 0
      %6656 = vmatprep.subr.bf16.mxu0 0
      %6657 = vmatpush1.bf16.msra.mxu0 0
      %6658 = vmatprep.subr.bf16.mxu0 0
      %6659 = vmatpush1.bf16.msra.mxu0 0
      %6660 = vmatprep.subr.bf16.mxu0 0
      %6661 = vmatpush1.bf16.msra.mxu0 0
      %6662 = vmatprep.subr.bf16.mxu0 0
      %6663 = vmatpush1.bf16.msra.mxu0 0
      %6664 = vmatprep.subr.bf16.mxu0 0
      %6665 = vmatpush1.bf16.msra.mxu0 0
      %6666 = vmatprep.subr.bf16.mxu0 0
      %6667 = vmatpush1.bf16.msra.mxu0 0
      %6668 = vmatprep.subr.bf16.mxu0 0
      %6669 = vmatpush1.bf16.msra.mxu0 0
      %6670 = vmatprep.subr.bf16.mxu0 0
      %6671 = vmatpush1.bf16.msra.mxu0 0
      %6672 = vmatprep.subr.bf16.mxu0 0
      %6673 = vmatpush1.bf16.msra.mxu0 0
      %6674 = vmatprep.subr.bf16.mxu0 0
      %6675 = vmatpush1.bf16.msra.mxu0 0
      %6676 = vmatprep.subr.bf16.mxu0 0
      %6677 = vmatpush1.bf16.msra.mxu0 0
      %6678 = vmatprep.subr.bf16.mxu0 0
      %6679 = vmatpush1.bf16.msra.mxu0 0
      %6680 = vmatprep.subr.bf16.mxu0 0
      %6681 = vmatpush1.bf16.msra.mxu0 0
      %6682 = vmatprep.subr.bf16.mxu0 0
      %6683 = vmatpush1.bf16.msra.mxu0 0
      %6684 = vmatprep.mubr.bf16.mxu0 0
      %6685 = vmatmul.mubr.bf16.gmra.mrb[0].mxu0 %v6644
      %v6686 = vpop.f32.mrb[0].mxu0
      %v6687 = vadd.f32 0.0, %v6686
      %v6688 = vpop.f32.mrb[0].mxu0
      %v6689 = vadd.f32 0.0, %v6688
      %v6690 = vpop.f32.mrb[0].mxu0
      %v6691 = vpop.f32.mrb[0].mxu0
      %6692 = vdwg.mxu0
      %v6693 = vadd.f32 %v6633, %v6687
      %v6694 = vadd.f32 %v6634, %v6689
      %v6695 = vpack.c.bf16 %v6213, %v6213
      %s6696 = scalar_lea.vmem %s6, 64
      %v6697 = vld [vmem:[%s6696] sm:$0xff]
      %v6699 = vunpack.c.l.b16 %v6697
      %v6700 = vunpack.c.h.b16 %v6697
      %v6701 = vpack.c.b16 %v6699, %v6699
      %v6702 = vpack.c.b16 %v6700, %v6700
      %v6704 = vsel %vm6228, %v6695, 0
      %v6707 = vsel %vm6232, %v6701, 0
      %v6710 = vsel %vm6232, %v6702, 0
      %6712 = vmatprep.subr.bf16.mxu0 %v6710
      %6713 = vmatpush1.bf16.msra.mxu0 %v6707
      %6714 = vmatprep.subr.bf16.mxu0 0
      %6715 = vmatpush1.bf16.msra.mxu0 0
      %6716 = vmatprep.subr.bf16.mxu0 0
      %6717 = vmatpush1.bf16.msra.mxu0 0
      %6718 = vmatprep.subr.bf16.mxu0 0
      %6719 = vmatpush1.bf16.msra.mxu0 0
      %6720 = vmatprep.subr.bf16.mxu0 0
      %6721 = vmatpush1.bf16.msra.mxu0 0
      %6722 = vmatprep.subr.bf16.mxu0 0
      %6723 = vmatpush1.bf16.msra.mxu0 0
      %6724 = vmatprep.subr.bf16.mxu0 0
      %6725 = vmatpush1.bf16.msra.mxu0 0
      %6726 = vmatprep.subr.bf16.mxu0 0
      %6727 = vmatpush1.bf16.msra.mxu0 0
      %6728 = vmatprep.subr.bf16.mxu0 0
      %6729 = vmatpush1.bf16.msra.mxu0 0
      %6730 = vmatprep.subr.bf16.mxu0 0
      %6731 = vmatpush1.bf16.msra.mxu0 0
      %6732 = vmatprep.subr.bf16.mxu0 0
      %6733 = vmatpush1.bf16.msra.mxu0 0
      %6734 = vmatprep.subr.bf16.mxu0 0
      %6735 = vmatpush1.bf16.msra.mxu0 0
      %6736 = vmatprep.subr.bf16.mxu0 0
      %6737 = vmatpush1.bf16.msra.mxu0 0
      %6738 = vmatprep.subr.bf16.mxu0 0
      %6739 = vmatpush1.bf16.msra.mxu0 0
      %6740 = vmatprep.subr.bf16.mxu0 0
      %6741 = vmatpush1.bf16.msra.mxu0 0
      %6742 = vmatprep.subr.bf16.mxu0 0
      %6743 = vmatpush1.bf16.msra.mxu0 0
      %6744 = vmatprep.mubr.bf16.mxu0 0
      %6745 = vmatmul.mubr.bf16.gmra.mrb[0].mxu0 %v6704
      %v6746 = vpop.f32.mrb[0].mxu0
      %v6747 = vadd.f32 0.0, %v6746
      %v6748 = vpop.f32.mrb[0].mxu0
      %v6749 = vadd.f32 0.0, %v6748
      %v6750 = vpop.f32.mrb[0].mxu0
      %v6751 = vpop.f32.mrb[0].mxu0
      %6752 = vdwg.mxu0
      %v6753 = vadd.f32 %v6693, %v6747
      %v6754 = vadd.f32 %v6694, %v6749
      %s6755 = scalar_lea.vmem %s6, 72
      %v6756 = vld [vmem:[%s6755] sm:$0xff]
      %v6757 = vshrl.u32 %v6695, 16
      %v6760 = vunpack.c.l.b16 %v6756
      %v6761 = vunpack.c.h.b16 %v6756
      %v6762 = vpack.c.b16 %v6760, %v6760
      %v6763 = vpack.c.b16 %v6761, %v6761
      %v6765 = vsel %vm6228, %v6757, 0
      %v6768 = vsel %vm6232, %v6762, 0
      %v6771 = vsel %vm6232, %v6763, 0
      %6773 = vmatprep.subr.bf16.mxu0 %v6771
      %6774 = vmatpush1.bf16.msra.mxu0 %v6768
      %6775 = vmatprep.subr.bf16.mxu0 0
      %6776 = vmatpush1.bf16.msra.mxu0 0
      %6777 = vmatprep.subr.bf16.mxu0 0
      %6778 = vmatpush1.bf16.msra.mxu0 0
      %6779 = vmatprep.subr.bf16.mxu0 0
      %6780 = vmatpush1.bf16.msra.mxu0 0
      %6781 = vmatprep.subr.bf16.mxu0 0
      %6782 = vmatpush1.bf16.msra.mxu0 0
      %6783 = vmatprep.subr.bf16.mxu0 0
      %6784 = vmatpush1.bf16.msra.mxu0 0
      %6785 = vmatprep.subr.bf16.mxu0 0
      %6786 = vmatpush1.bf16.msra.mxu0 0
      %6787 = vmatprep.subr.bf16.mxu0 0
      %6788 = vmatpush1.bf16.msra.mxu0 0
      %6789 = vmatprep.subr.bf16.mxu0 0
      %6790 = vmatpush1.bf16.msra.mxu0 0
      %6791 = vmatprep.subr.bf16.mxu0 0
      %6792 = vmatpush1.bf16.msra.mxu0 0
      %6793 = vmatprep.subr.bf16.mxu0 0
      %6794 = vmatpush1.bf16.msra.mxu0 0
      %6795 = vmatprep.subr.bf16.mxu0 0
      %6796 = vmatpush1.bf16.msra.mxu0 0
      %6797 = vmatprep.subr.bf16.mxu0 0
      %6798 = vmatpush1.bf16.msra.mxu0 0
      %6799 = vmatprep.subr.bf16.mxu0 0
      %6800 = vmatpush1.bf16.msra.mxu0 0
      %6801 = vmatprep.subr.bf16.mxu0 0
      %6802 = vmatpush1.bf16.msra.mxu0 0
      %6803 = vmatprep.subr.bf16.mxu0 0
      %6804 = vmatpush1.bf16.msra.mxu0 0
      %6805 = vmatprep.mubr.bf16.mxu0 0
      %6806 = vmatmul.mubr.bf16.gmra.mrb[0].mxu0 %v6765
      %v6807 = vpop.f32.mrb[0].mxu0
      %v6808 = vadd.f32 0.0, %v6807
      %v6809 = vpop.f32.mrb[0].mxu0
      %v6810 = vadd.f32 0.0, %v6809
      %v6811 = vpop.f32.mrb[0].mxu0
      %v6812 = vpop.f32.mrb[0].mxu0
      %6813 = vdwg.mxu0
      %v6814 = vadd.f32 %v6753, %v6808
      %v6815 = vadd.f32 %v6754, %v6810
      %s6816 = scalar_lea.vmem %s6, 80
      %v6817 = vld [vmem:[%s6816] sm:$0xff]
      %v6819 = vrot.slane %v6695, 1
      %v6821 = vunpack.c.l.b16 %v6817
      %v6822 = vunpack.c.h.b16 %v6817
      %v6823 = vpack.c.b16 %v6821, %v6821
      %v6824 = vpack.c.b16 %v6822, %v6822
      %v6826 = vsel %vm6228, %v6819, 0
      %v6829 = vsel %vm6232, %v6823, 0
      %v6832 = vsel %vm6232, %v6824, 0
      %6834 = vmatprep.subr.bf16.mxu0 %v6832
      %6835 = vmatpush1.bf16.msra.mxu0 %v6829
      %6836 = vmatprep.subr.bf16.mxu0 0
      %6837 = vmatpush1.bf16.msra.mxu0 0
      %6838 = vmatprep.subr.bf16.mxu0 0
      %6839 = vmatpush1.bf16.msra.mxu0 0
      %6840 = vmatprep.subr.bf16.mxu0 0
      %6841 = vmatpush1.bf16.msra.mxu0 0
      %6842 = vmatprep.subr.bf16.mxu0 0
      %6843 = vmatpush1.bf16.msra.mxu0 0
      %6844 = vmatprep.subr.bf16.mxu0 0
      %6845 = vmatpush1.bf16.msra.mxu0 0
      %6846 = vmatprep.subr.bf16.mxu0 0
      %6847 = vmatpush1.bf16.msra.mxu0 0
      %6848 = vmatprep.subr.bf16.mxu0 0
      %6849 = vmatpush1.bf16.msra.mxu0 0
      %6850 = vmatprep.subr.bf16.mxu0 0
      %6851 = vmatpush1.bf16.msra.mxu0 0
      %6852 = vmatprep.subr.bf16.mxu0 0
      %6853 = vmatpush1.bf16.msra.mxu0 0
      %6854 = vmatprep.subr.bf16.mxu0 0
      %6855 = vmatpush1.bf16.msra.mxu0 0
      %6856 = vmatprep.subr.bf16.mxu0 0
      %6857 = vmatpush1.bf16.msra.mxu0 0
      %6858 = vmatprep.subr.bf16.mxu0 0
      %6859 = vmatpush1.bf16.msra.mxu0 0
      %6860 = vmatprep.subr.bf16.mxu0 0
      %6861 = vmatpush1.bf16.msra.mxu0 0
      %6862 = vmatprep.subr.bf16.mxu0 0
      %6863 = vmatpush1.bf16.msra.mxu0 0
      %6864 = vmatprep.subr.bf16.mxu0 0
      %6865 = vmatpush1.bf16.msra.mxu0 0
      %6866 = vmatprep.mubr.bf16.mxu0 0
      %6867 = vmatmul.mubr.bf16.gmra.mrb[0].mxu0 %v6826
      %v6868 = vpop.f32.mrb[0].mxu0
      %v6869 = vadd.f32 0.0, %v6868
      %v6870 = vpop.f32.mrb[0].mxu0
      %v6871 = vadd.f32 0.0, %v6870
      %v6872 = vpop.f32.mrb[0].mxu0
      %v6873 = vpop.f32.mrb[0].mxu0
      %6874 = vdwg.mxu0
      %v6875 = vadd.f32 %v6814, %v6869
      %v6876 = vadd.f32 %v6815, %v6871
      %s6877 = scalar_lea.vmem %s6, 88
      %v6878 = vld [vmem:[%s6877] sm:$0xff]
      %v6879 = vrot.slane %v6757, 1
      %v6881 = vunpack.c.l.b16 %v6878
      %v6882 = vunpack.c.h.b16 %v6878
      %v6883 = vpack.c.b16 %v6881, %v6881
      %v6884 = vpack.c.b16 %v6882, %v6882
      %v6886 = vsel %vm6228, %v6879, 0
      %v6889 = vsel %vm6232, %v6883, 0
      %v6892 = vsel %vm6232, %v6884, 0
      %6894 = vmatprep.subr.bf16.mxu0 %v6892
      %6895 = vmatpush1.bf16.msra.mxu0 %v6889
      %6896 = vmatprep.subr.bf16.mxu0 0
      %6897 = vmatpush1.bf16.msra.mxu0 0
      %6898 = vmatprep.subr.bf16.mxu0 0
      %6899 = vmatpush1.bf16.msra.mxu0 0
      %6900 = vmatprep.subr.bf16.mxu0 0
      %6901 = vmatpush1.bf16.msra.mxu0 0
      %6902 = vmatprep.subr.bf16.mxu0 0
      %6903 = vmatpush1.bf16.msra.mxu0 0
      %6904 = vmatprep.subr.bf16.mxu0 0
      %6905 = vmatpush1.bf16.msra.mxu0 0
      %6906 = vmatprep.subr.bf16.mxu0 0
      %6907 = vmatpush1.bf16.msra.mxu0 0
      %6908 = vmatprep.subr.bf16.mxu0 0
      %6909 = vmatpush1.bf16.msra.mxu0 0
      %6910 = vmatprep.subr.bf16.mxu0 0
      %6911 = vmatpush1.bf16.msra.mxu0 0
      %6912 = vmatprep.subr.bf16.mxu0 0
      %6913 = vmatpush1.bf16.msra.mxu0 0
      %6914 = vmatprep.subr.bf16.mxu0 0
      %6915 = vmatpush1.bf16.msra.mxu0 0
      %6916 = vmatprep.subr.bf16.mxu0 0
      %6917 = vmatpush1.bf16.msra.mxu0 0
      %6918 = vmatprep.subr.bf16.mxu0 0
      %6919 = vmatpush1.bf16.msra.mxu0 0
      %6920 = vmatprep.subr.bf16.mxu0 0
      %6921 = vmatpush1.bf16.msra.mxu0 0
      %6922 = vmatprep.subr.bf16.mxu0 0
      %6923 = vmatpush1.bf16.msra.mxu0 0
      %6924 = vmatprep.subr.bf16.mxu0 0
      %6925 = vmatpush1.bf16.msra.mxu0 0
      %6926 = vmatprep.mubr.bf16.mxu0 0
      %6927 = vmatmul.mubr.bf16.gmra.mrb[0].mxu0 %v6886
      %v6928 = vpop.f32.mrb[0].mxu0
      %v6929 = vadd.f32 0.0, %v6928
      %v6930 = vpop.f32.mrb[0].mxu0
      %v6931 = vadd.f32 0.0, %v6930
      %v6932 = vpop.f32.mrb[0].mxu0
      %v6933 = vpop.f32.mrb[0].mxu0
      %6934 = vdwg.mxu0
      %v6935 = vadd.f32 %v6875, %v6929
      %v6936 = vadd.f32 %v6876, %v6931
      %s6937 = scalar_lea.vmem %s6, 96
      %v6938 = vld [vmem:[%s6937] sm:$0xff]
      %v6939 = vrot.slane %v6695, 2
      %v6941 = vunpack.c.l.b16 %v6938
      %v6942 = vunpack.c.h.b16 %v6938
      %v6943 = vpack.c.b16 %v6941, %v6941
      %v6944 = vpack.c.b16 %v6942, %v6942
      %v6946 = vsel %vm6228, %v6939, 0
      %v6949 = vsel %vm6232, %v6943, 0
      %v6952 = vsel %vm6232, %v6944, 0
      %6954 = vmatprep.subr.bf16.mxu0 %v6952
      %6955 = vmatpush1.bf16.msra.mxu0 %v6949
      %6956 = vmatprep.subr.bf16.mxu0 0
      %6957 = vmatpush1.bf16.msra.mxu0 0
      %6958 = vmatprep.subr.bf16.mxu0 0
      %6959 = vmatpush1.bf16.msra.mxu0 0
      %6960 = vmatprep.subr.bf16.mxu0 0
      %6961 = vmatpush1.bf16.msra.mxu0 0
      %6962 = vmatprep.subr.bf16.mxu0 0
      %6963 = vmatpush1.bf16.msra.mxu0 0
      %6964 = vmatprep.subr.bf16.mxu0 0
      %6965 = vmatpush1.bf16.msra.mxu0 0
      %6966 = vmatprep.subr.bf16.mxu0 0
      %6967 = vmatpush1.bf16.msra.mxu0 0
      %6968 = vmatprep.subr.bf16.mxu0 0
      %6969 = vmatpush1.bf16.msra.mxu0 0
      %6970 = vmatprep.subr.bf16.mxu0 0
      %6971 = vmatpush1.bf16.msra.mxu0 0
      %6972 = vmatprep.subr.bf16.mxu0 0
      %6973 = vmatpush1.bf16.msra.mxu0 0
      %6974 = vmatprep.subr.bf16.mxu0 0
      %6975 = vmatpush1.bf16.msra.mxu0 0
      %6976 = vmatprep.subr.bf16.mxu0 0
      %6977 = vmatpush1.bf16.msra.mxu0 0
      %6978 = vmatprep.subr.bf16.mxu0 0
      %6979 = vmatpush1.bf16.msra.mxu0 0
      %6980 = vmatprep.subr.bf16.mxu0 0
      %6981 = vmatpush1.bf16.msra.mxu0 0
      %6982 = vmatprep.subr.bf16.mxu0 0
      %6983 = vmatpush1.bf16.msra.mxu0 0
      %6984 = vmatprep.subr.bf16.mxu0 0
      %6985 = vmatpush1.bf16.msra.mxu0 0
      %6986 = vmatprep.mubr.bf16.mxu0 0
      %6987 = vmatmul.mubr.bf16.gmra.mrb[0].mxu0 %v6946
      %v6988 = vpop.f32.mrb[0].mxu0
      %v6989 = vadd.f32 0.0, %v6988
      %v6990 = vpop.f32.mrb[0].mxu0
      %v6991 = vadd.f32 0.0, %v6990
      %v6992 = vpop.f32.mrb[0].mxu0
      %v6993 = vpop.f32.mrb[0].mxu0
      %6994 = vdwg.mxu0
      %v6995 = vadd.f32 %v6935, %v6989
      %v6996 = vadd.f32 %v6936, %v6991
      %s6997 = scalar_lea.vmem %s6, 104
      %v6998 = vld [vmem:[%s6997] sm:$0xff]
      %v6999 = vrot.slane %v6757, 2
      %v7001 = vunpack.c.l.b16 %v6998
      %v7002 = vunpack.c.h.b16 %v6998
      %v7003 = vpack.c.b16 %v7001, %v7001
      %v7004 = vpack.c.b16 %v7002, %v7002
      %v7006 = vsel %vm6228, %v6999, 0
      %v7009 = vsel %vm6232, %v7003, 0
      %v7012 = vsel %vm6232, %v7004, 0
      %7014 = vmatprep.subr.bf16.mxu0 %v7012
      %7015 = vmatpush1.bf16.msra.mxu0 %v7009
      %7016 = vmatprep.subr.bf16.mxu0 0
      %7017 = vmatpush1.bf16.msra.mxu0 0
      %7018 = vmatprep.subr.bf16.mxu0 0
      %7019 = vmatpush1.bf16.msra.mxu0 0
      %7020 = vmatprep.subr.bf16.mxu0 0
      %7021 = vmatpush1.bf16.msra.mxu0 0
      %7022 = vmatprep.subr.bf16.mxu0 0
      %7023 = vmatpush1.bf16.msra.mxu0 0
      %7024 = vmatprep.subr.bf16.mxu0 0
      %7025 = vmatpush1.bf16.msra.mxu0 0
      %7026 = vmatprep.subr.bf16.mxu0 0
      %7027 = vmatpush1.bf16.msra.mxu0 0
      %7028 = vmatprep.subr.bf16.mxu0 0
      %7029 = vmatpush1.bf16.msra.mxu0 0
      %7030 = vmatprep.subr.bf16.mxu0 0
      %7031 = vmatpush1.bf16.msra.mxu0 0
      %7032 = vmatprep.subr.bf16.mxu0 0
      %7033 = vmatpush1.bf16.msra.mxu0 0
      %7034 = vmatprep.subr.bf16.mxu0 0
      %7035 = vmatpush1.bf16.msra.mxu0 0
      %7036 = vmatprep.subr.bf16.mxu0 0
      %7037 = vmatpush1.bf16.msra.mxu0 0
      %7038 = vmatprep.subr.bf16.mxu0 0
      %7039 = vmatpush1.bf16.msra.mxu0 0
      %7040 = vmatprep.subr.bf16.mxu0 0
      %7041 = vmatpush1.bf16.msra.mxu0 0
      %7042 = vmatprep.subr.bf16.mxu0 0
      %7043 = vmatpush1.bf16.msra.mxu0 0
      %7044 = vmatprep.subr.bf16.mxu0 0
      %7045 = vmatpush1.bf16.msra.mxu0 0
      %7046 = vmatprep.mubr.bf16.mxu0 0
      %7047 = vmatmul.mubr.bf16.gmra.mrb[0].mxu0 %v7006
      %v7048 = vpop.f32.mrb[0].mxu0
      %v7049 = vadd.f32 0.0, %v7048
      %v7050 = vpop.f32.mrb[0].mxu0
      %v7051 = vadd.f32 0.0, %v7050
      %v7052 = vpop.f32.mrb[0].mxu0
      %v7053 = vpop.f32.mrb[0].mxu0
      %7054 = vdwg.mxu0
      %v7055 = vadd.f32 %v6995, %v7049
      %v7056 = vadd.f32 %v6996, %v7051
      %s7057 = scalar_lea.vmem %s6, 112
      %v7058 = vld [vmem:[%s7057] sm:$0xff]
      %v7059 = vrot.slane %v6695, 3
      %v7061 = vunpack.c.l.b16 %v7058
      %v7062 = vunpack.c.h.b16 %v7058
      %v7063 = vpack.c.b16 %v7061, %v7061
      %v7064 = vpack.c.b16 %v7062, %v7062
      %v7066 = vsel %vm6228, %v7059, 0
      %v7069 = vsel %vm6232, %v7063, 0
      %v7072 = vsel %vm6232, %v7064, 0
      %7074 = vmatprep.subr.bf16.mxu0 %v7072
      %7075 = vmatpush1.bf16.msra.mxu0 %v7069
      %7076 = vmatprep.subr.bf16.mxu0 0
      %7077 = vmatpush1.bf16.msra.mxu0 0
      %7078 = vmatprep.subr.bf16.mxu0 0
      %7079 = vmatpush1.bf16.msra.mxu0 0
      %7080 = vmatprep.subr.bf16.mxu0 0
      %7081 = vmatpush1.bf16.msra.mxu0 0
      %7082 = vmatprep.subr.bf16.mxu0 0
      %7083 = vmatpush1.bf16.msra.mxu0 0
      %7084 = vmatprep.subr.bf16.mxu0 0
      %7085 = vmatpush1.bf16.msra.mxu0 0
      %7086 = vmatprep.subr.bf16.mxu0 0
      %7087 = vmatpush1.bf16.msra.mxu0 0
      %7088 = vmatprep.subr.bf16.mxu0 0
      %7089 = vmatpush1.bf16.msra.mxu0 0
      %7090 = vmatprep.subr.bf16.mxu0 0
      %7091 = vmatpush1.bf16.msra.mxu0 0
      %7092 = vmatprep.subr.bf16.mxu0 0
      %7093 = vmatpush1.bf16.msra.mxu0 0
      %7094 = vmatprep.subr.bf16.mxu0 0
      %7095 = vmatpush1.bf16.msra.mxu0 0
      %7096 = vmatprep.subr.bf16.mxu0 0
      %7097 = vmatpush1.bf16.msra.mxu0 0
      %7098 = vmatprep.subr.bf16.mxu0 0
      %7099 = vmatpush1.bf16.msra.mxu0 0
      %7100 = vmatprep.subr.bf16.mxu0 0
      %7101 = vmatpush1.bf16.msra.mxu0 0
      %7102 = vmatprep.subr.bf16.mxu0 0
      %7103 = vmatpush1.bf16.msra.mxu0 0
      %7104 = vmatprep.subr.bf16.mxu0 0
      %7105 = vmatpush1.bf16.msra.mxu0 0
      %7106 = vmatprep.mubr.bf16.mxu0 0
      %7107 = vmatmul.mubr.bf16.gmra.mrb[0].mxu0 %v7066
      %v7108 = vpop.f32.mrb[0].mxu0
      %v7109 = vadd.f32 0.0, %v7108
      %v7110 = vpop.f32.mrb[0].mxu0
      %v7111 = vadd.f32 0.0, %v7110
      %v7112 = vpop.f32.mrb[0].mxu0
      %v7113 = vpop.f32.mrb[0].mxu0
      %7114 = vdwg.mxu0
      %v7115 = vadd.f32 %v7055, %v7109
      %v7116 = vadd.f32 %v7056, %v7111
      %s7117 = scalar_lea.vmem %s6, 120
      %v7118 = vld [vmem:[%s7117] sm:$0xff]
      %v7119 = vrot.slane %v6757, 3
      %v7121 = vunpack.c.l.b16 %v7118
      %v7122 = vunpack.c.h.b16 %v7118
      %v7123 = vpack.c.b16 %v7121, %v7121
      %v7124 = vpack.c.b16 %v7122, %v7122
      %v7126 = vsel %vm6228, %v7119, 0
      %v7129 = vsel %vm6232, %v7123, 0
      %v7132 = vsel %vm6232, %v7124, 0
      %7134 = vmatprep.subr.bf16.mxu0 %v7132
      %7135 = vmatpush1.bf16.msra.mxu0 %v7129
      %7136 = vmatprep.subr.bf16.mxu0 0
      %7137 = vmatpush1.bf16.msra.mxu0 0
      %7138 = vmatprep.subr.bf16.mxu0 0
      %7139 = vmatpush1.bf16.msra.mxu0 0
      %7140 = vmatprep.subr.bf16.mxu0 0
      %7141 = vmatpush1.bf16.msra.mxu0 0
      %7142 = vmatprep.subr.bf16.mxu0 0
      %7143 = vmatpush1.bf16.msra.mxu0 0
      %7144 = vmatprep.subr.bf16.mxu0 0
      %7145 = vmatpush1.bf16.msra.mxu0 0
      %7146 = vmatprep.subr.bf16.mxu0 0
      %7147 = vmatpush1.bf16.msra.mxu0 0
      %7148 = vmatprep.subr.bf16.mxu0 0
      %7149 = vmatpush1.bf16.msra.mxu0 0
      %7150 = vmatprep.subr.bf16.mxu0 0
      %7151 = vmatpush1.bf16.msra.mxu0 0
      %7152 = vmatprep.subr.bf16.mxu0 0
      %7153 = vmatpush1.bf16.msra.mxu0 0
      %7154 = vmatprep.subr.bf16.mxu0 0
      %7155 = vmatpush1.bf16.msra.mxu0 0
      %7156 = vmatprep.subr.bf16.mxu0 0
      %7157 = vmatpush1.bf16.msra.mxu0 0
      %7158 = vmatprep.subr.bf16.mxu0 0
      %7159 = vmatpush1.bf16.msra.mxu0 0
      %7160 = vmatprep.subr.bf16.mxu0 0
      %7161 = vmatpush1.bf16.msra.mxu0 0
      %7162 = vmatprep.subr.bf16.mxu0 0
      %7163 = vmatpush1.bf16.msra.mxu0 0
      %7164 = vmatprep.subr.bf16.mxu0 0
      %7165 = vmatpush1.bf16.msra.mxu0 0
      %7166 = vmatprep.mubr.bf16.mxu0 0
      %7167 = vmatmul.mubr.bf16.gmra.mrb[0].mxu0 %v7126
      %v7168 = vpop.f32.mrb[0].mxu0
      %v7169 = vadd.f32 0.0, %v7168
      %v7170 = vpop.f32.mrb[0].mxu0
      %v7171 = vadd.f32 0.0, %v7170
      %v7172 = vpop.f32.mrb[0].mxu0
      %v7173 = vpop.f32.mrb[0].mxu0
      %7174 = vdwg.mxu0
      %v7175 = vadd.f32 %v7115, %v7169
      %v7176 = vadd.f32 %v7116, %v7171
      %v7177 = vmax.f32 %v7175, 0.0
      %v7178 = vmax.f32 %v7176, 0.0
      %v7179 = vpack.c.bf16 %v7177, %v7177
      %v7180 = vpack.c.bf16 %v7178, %v7178
      %v7181 = vld [vmem:[%s7] sm:$0xf]
      %v7182 = vld [vmem:[%s7 + $0x4] sm:$0xf]
      %v7183 = vld [vmem:[%s7 + $0x8] sm:$0xf]
      %v7184 = vld [vmem:[%s7 + $0xc] sm:$0xf]
      %v7185 = vld [vmem:[%s7 + $0x10] sm:$0xf]
      %v7186 = vld [vmem:[%s7 + $0x14] sm:$0xf]
      %v7187 = vld [vmem:[%s7 + $0x18] sm:$0xf]
      %v7188 = vld [vmem:[%s7 + $0x1c] sm:$0xf]
      %v7189 = vld [vmem:[%s7 + $0x20] sm:$0xf]
      %v7190 = vld [vmem:[%s7 + $0x24] sm:$0xf]
      %v7191 = vld [vmem:[%s7 + $0x28] sm:$0xf]
      %v7192 = vld [vmem:[%s7 + $0x2c] sm:$0xf]
      %v7193 = vld [vmem:[%s7 + $0x30] sm:$0xf]
      %v7194 = vld [vmem:[%s7 + $0x34] sm:$0xf]
      %v7195 = vld [vmem:[%s7 + $0x38] sm:$0xf]
      %v7196 = vld [vmem:[%s7 + $0x3c] sm:$0xf]
      %v7197 = vld [vmem:[%s7 + $0x40] sm:$0xf]
      %v7198 = vld [vmem:[%s7 + $0x44] sm:$0xf]
      %v7199 = vld [vmem:[%s7 + $0x48] sm:$0xf]
      %v7200 = vld [vmem:[%s7 + $0x4c] sm:$0xf]
      %v7201 = vld [vmem:[%s7 + $0x50] sm:$0xf]
      %v7202 = vld [vmem:[%s7 + $0x54] sm:$0xf]
      %v7203 = vld [vmem:[%s7 + $0x58] sm:$0xf]
      %v7204 = vld [vmem:[%s7 + $0x5c] sm:$0xf]
      %v7205 = vld [vmem:[%s7 + $0x60] sm:$0xf]
      %v7206 = vld [vmem:[%s7 + $0x64] sm:$0xf]
      %v7207 = vld [vmem:[%s7 + $0x68] sm:$0xf]
      %v7208 = vld [vmem:[%s7 + $0x6c] sm:$0xf]
      %v7209 = vld [vmem:[%s7 + $0x70] sm:$0xf]
      %v7210 = vld [vmem:[%s7 + $0x74] sm:$0xf]
      %v7211 = vld [vmem:[%s7 + $0x78] sm:$0xf]
      %v7212 = vld [vmem:[%s7 + $0x7c] sm:$0xf]
      %v7245 = vunpack.c.l.b16 %v7181
      %v7246 = vunpack.c.l.b16 %v7182
      %v7247 = vunpack.c.l.b16 %v7183
      %v7248 = vunpack.c.l.b16 %v7184
      %v7249 = vunpack.c.l.b16 %v7185
      %v7250 = vunpack.c.l.b16 %v7186
      %v7251 = vunpack.c.l.b16 %v7187
      %v7252 = vunpack.c.l.b16 %v7188
      %v7253 = vunpack.c.l.b16 %v7189
      %v7254 = vunpack.c.l.b16 %v7190
      %v7255 = vunpack.c.l.b16 %v7191
      %v7256 = vunpack.c.l.b16 %v7192
      %v7257 = vunpack.c.l.b16 %v7193
      %v7258 = vunpack.c.l.b16 %v7194
      %v7259 = vunpack.c.l.b16 %v7195
      %v7260 = vunpack.c.l.b16 %v7196
      %v7261 = vunpack.c.l.b16 %v7197
      %v7262 = vunpack.c.l.b16 %v7198
      %v7263 = vunpack.c.l.b16 %v7199
      %v7264 = vunpack.c.l.b16 %v7200
      %v7265 = vunpack.c.l.b16 %v7201
      %v7266 = vunpack.c.l.b16 %v7202
      %v7267 = vunpack.c.l.b16 %v7203
      %v7268 = vunpack.c.l.b16 %v7204
      %v7269 = vunpack.c.l.b16 %v7205
      %v7270 = vunpack.c.l.b16 %v7206
      %v7271 = vunpack.c.l.b16 %v7207
      %v7272 = vunpack.c.l.b16 %v7208
      %v7273 = vunpack.c.l.b16 %v7209
      %v7274 = vunpack.c.l.b16 %v7210
      %v7275 = vunpack.c.l.b16 %v7211
      %v7276 = vunpack.c.l.b16 %v7212
      %v7277 = vpack.c.b16 %v7246, %v7245
      %v7278 = vpack.c.b16 %v7248, %v7247
      %v7279 = vpack.c.b16 %v7250, %v7249
      %v7280 = vpack.c.b16 %v7252, %v7251
      %v7281 = vpack.c.b16 %v7254, %v7253
      %v7282 = vpack.c.b16 %v7256, %v7255
      %v7283 = vpack.c.b16 %v7258, %v7257
      %v7284 = vpack.c.b16 %v7260, %v7259
      %v7285 = vpack.c.b16 %v7262, %v7261
      %v7286 = vpack.c.b16 %v7264, %v7263
      %v7287 = vpack.c.b16 %v7266, %v7265
      %v7288 = vpack.c.b16 %v7268, %v7267
      %v7289 = vpack.c.b16 %v7270, %v7269
      %v7290 = vpack.c.b16 %v7272, %v7271
      %v7291 = vpack.c.b16 %v7274, %v7273
      %v7292 = vpack.c.b16 %v7276, %v7275
      %7309 = vmatprep.subr.bf16.mxu0 0
      %7310 = vmatpush1.bf16.msra.mxu0 %v7277
      %7311 = vmatprep.subr.bf16.mxu0 0
      %7312 = vmatpush1.bf16.msra.mxu0 %v7278
      %7313 = vmatprep.subr.bf16.mxu0 0
      %7314 = vmatpush1.bf16.msra.mxu0 %v7279
      %7315 = vmatprep.subr.bf16.mxu0 0
      %7316 = vmatpush1.bf16.msra.mxu0 %v7280
      %7317 = vmatprep.subr.bf16.mxu0 0
      %7318 = vmatpush1.bf16.msra.mxu0 %v7281
      %7319 = vmatprep.subr.bf16.mxu0 0
      %7320 = vmatpush1.bf16.msra.mxu0 %v7282
      %7321 = vmatprep.subr.bf16.mxu0 0
      %7322 = vmatpush1.bf16.msra.mxu0 %v7283
      %7323 = vmatprep.subr.bf16.mxu0 0
      %7324 = vmatpush1.bf16.msra.mxu0 %v7284
      %7325 = vmatprep.subr.bf16.mxu0 0
      %7326 = vmatpush1.bf16.msra.mxu0 %v7285
      %7327 = vmatprep.subr.bf16.mxu0 0
      %7328 = vmatpush1.bf16.msra.mxu0 %v7286
      %7329 = vmatprep.subr.bf16.mxu0 0
      %7330 = vmatpush1.bf16.msra.mxu0 %v7287
      %7331 = vmatprep.subr.bf16.mxu0 0
      %7332 = vmatpush1.bf16.msra.mxu0 %v7288
      %7333 = vmatprep.subr.bf16.mxu0 0
      %7334 = vmatpush1.bf16.msra.mxu0 %v7289
      %7335 = vmatprep.subr.bf16.mxu0 0
      %7336 = vmatpush1.bf16.msra.mxu0 %v7290
      %7337 = vmatprep.subr.bf16.mxu0 0
      %7338 = vmatpush1.bf16.msra.mxu0 %v7291
      %7339 = vmatprep.subr.bf16.mxu0 0
      %7340 = vmatpush1.bf16.msra.mxu0 %v7292
      %7341 = vmatprep.mubr.bf16.mxu0 %v7180
      %7342 = vmatmul.mubr.bf16.gmra.mrb[0].mxu0 %v7179
      %v7343 = vpop.f32.mrb[0].mxu0
      %v7344 = vadd.f32 0.0, %v7343
      %v7345 = vpop.f32.mrb[0].mxu0
      %v7346 = vpop.f32.mrb[0].mxu0
      %v7347 = vpop.f32.mrb[0].mxu0
      %7348 = vdwg.mxu0
      %v7349 = vmax.f32 %v7344, 0.0
      %v7350 = vlaneseq
      %v7351 = vshrl.u32 %v7350, 7
      %v7352 = vsub.s32 0, %v7351
      %v7353 = vrot.slane %v7349, %v7352
      %7354 = vst [vmem:[%s305] sm:$0xff] %v7353
      %p7355 = scmp.lt.s32.totalorder %s19, 1
      %s7356 = scalar_select %p7355, %s19, 1
      %s7357 = smul.addr %s7356, 8
      %s7358 = scalar_lea.vmem %s8, %s7357
      // Predicated region
      $region53: #{proxy_ann_forward.1} parent=51 // pred_check
        %p7359 = pneg %p210
      $region54: #{proxy_ann_forward.1} parent=51 // pred_check_branch
        %7361 = sbr.rel (%p7359) target = $region56
      $region55: #{proxy_ann_forward.1} parent=51 // pred_region
        _
      $region56: #{proxy_ann_forward.1} parent=51 // pred_fallthru
        _
    $region52: #{proxy_ann_forward.1} parent=5 // pred_fallthru
      _
    %p7362 = scmp.le.s32.totalorder 2, %s14
    // Predicated region
    $region57: #{proxy_ann_forward.1} parent=5 // pred_check
      %p7363 = pneg %p7362
    $region58: #{proxy_ann_forward.1} parent=5 // pred_check_branch
      %7365 = sbr.rel (%p7363) target = $region60
    $region59: #{proxy_ann_forward.1} parent=5 // pred_region
      %s7366 = ssub.s32 %s14, 2
      // Predicated region
      $region61: #{proxy_ann_forward.1} parent=59 // pred_check
        %p7367 = pneg %p216
      $region62: #{proxy_ann_forward.1} parent=59 // pred_check_branch
        %7369 = sbr.rel (%p7367) target = $region64
      $region63: #{proxy_ann_forward.1} parent=59 // pred_region
        %p7370 = scmp.lt.s32.totalorder %s20, 1
        %s7371 = scalar_select %p7370, %s20, 1
        %s7372 = smul.addr %s7371, 8
        %s7373 = scalar_lea.vmem %s8, %s7372
      $region64: #{proxy_ann_forward.1} parent=59 // pred_fallthru
        _
    $region60: #{proxy_ann_forward.1} parent=5 // pred_fallthru
      _
  $region6: #{proxy_ann_forward.1} parent=0 // loop_footer
    %s18 = sadd.s32 1, %s14
  $region7: #{proxy_ann_forward.1} parent=0 // loop_footer_branch
    %13 = sbr.rel target = $region3
  $region8: #{proxy_ann_forward.1} parent=0 // loop_exit
    _

</llo_original>
